<compile_context>
chip_gen: v5e
topology: v5e:2x2
jax: 0.10.0
libtpu: 0.0.40
codegen_flags: <defaults>
</compile_context>

<pallas_src>
import jax
import jax.numpy as jnp
from jax.experimental import pallas as pl
from jax.experimental.pallas import tpu as pltpu


# ----------------------------------------------------------------------------
# Geometry implied by Net_ (28x28 input so that 64*12*12 = 9216 feeds fc1)
# ----------------------------------------------------------------------------
H = W = 28
KH = KW = 3
H1, W1 = H - KH + 1, W - KW + 1          # 26, 26  (conv1 output)
H2, W2 = H1 - KH + 1, W1 - KW + 1        # 24, 24  (conv2 output)
PH, PW = H2 // 2, W2 // 2                # 12, 12  (pooled output)
C1, C2 = 32, 64
FDIM = C2 * PH * PW                      # 9216
NHID, NOUT = 128, 10

SLAB = 896           # lanes reserved per image inside kernel 1 (>=784, 7*128)
OUT_S = 640          # lanes written back per image by kernel 1 (>=639, 5*128)
DMAX = 2 * W + 2     # 58: largest flat tap offset of a 3x3 kernel at row stride W


# ----------------------------------------------------------------------------
# Kernel 1: conv1 + ReLU -> conv2 + ReLU -> 2x2 maxpool (bt images per step)
# ----------------------------------------------------------------------------
def _features_kernel(x_ref, w1_ref, w2_ref, b1_ref, b2_ref, o_ref, p1_ref, p2_ref):
    """Layout: channels on sublanes, flattened spatial (row stride W=28) on
    lanes, one SLAB=896-lane slab per image.  Each conv is ONE im2col matmul:
    the 9 shifted lane-slices of the activation are stacked on sublanes in a
    VMEM scratch, giving the MXU a deep contraction (K=72 / K=288).  Lanes that
    wrap across a row end or a slab boundary hold finite garbage that is never
    read by any valid downstream position.
    """
    xs = x_ref[0]                            # (Cp, bt*SLAB)
    cp = xs.shape[0]
    nl1 = p1_ref.shape[1]                    # bt*SLAB - 58
    nl2 = p2_ref.shape[1]                    # nl1 - 58
    bt = o_ref.shape[2] // OUT_S

    # ---- conv1: (C1, 9*Cp) @ (9*Cp, nl1), single matmul over in-VMEM im2col --
    for t in range(KH * KW):
        d = (t // KW) * W + (t % KW)
        p1_ref[t * cp:(t + 1) * cp, :] = xs[:, d:d + nl1]
    h1 = jnp.dot(w1_ref[...], p1_ref[...], preferred_element_type=jnp.float32)
    h1 = jnp.maximum(h1 + b1_ref[...], 0.0)                  # (C1, nl1)

    # ---- conv2: (C2, 9*C1) @ (9*C1, nl2), single matmul over in-VMEM im2col --
    for t in range(KH * KW):
        d = (t // KW) * W + (t % KW)
        p2_ref[t * C1:(t + 1) * C1, :] = h1[:, d:d + nl2]
    h2 = jnp.dot(w2_ref[...], p2_ref[...], preferred_element_type=jnp.float32)
    h2 = jnp.maximum(h2 + b2_ref[...], 0.0)                  # (C2, nl2)

    # ---- 2x2 / stride-2 max pool, still in flat stride-W coordinates --------
    m1 = jnp.maximum(h2[:, 0:nl2 - 1], h2[:, 1:nl2])              # max over dw
    m2 = jnp.maximum(m1[:, 0:nl2 - 1 - W], m1[:, W:nl2 - 1])      # max over dh

    # ---- lane-aligned writeback: OUT_S (=640) lanes per image, pitch OUT_S ---
    # Valid pooled values sit at slab-lane f = 2*(W*po + pw), po,pw in [0,12).
    for i in range(bt):
        o_ref[0, :, i * OUT_S:(i + 1) * OUT_S] = m2[:, i * SLAB:i * SLAB + OUT_S]


def conv_features(x_g, w1m, w2m, b1c, b2c):
    G, cp, nt = x_g.shape
    bt = nt // SLAB
    nl1 = nt - DMAX
    nl2 = nl1 - DMAX
    return pl.pallas_call(
        _features_kernel,
        out_shape=jax.ShapeDtypeStruct((G, C2, bt * OUT_S), jnp.float32),
        grid=(G,),
        in_specs=[
            pl.BlockSpec((1, cp, nt), lambda g: (g, 0, 0)),
            pl.BlockSpec((C1, KH * KW * cp), lambda g: (0, 0)),
            pl.BlockSpec((C2, KH * KW * C1), lambda g: (0, 0)),
            pl.BlockSpec((C1, 1), lambda g: (0, 0)),
            pl.BlockSpec((C2, 1), lambda g: (0, 0)),
        ],
        out_specs=pl.BlockSpec((1, C2, bt * OUT_S), lambda g: (g, 0, 0)),
        scratch_shapes=[
            pltpu.VMEM((KH * KW * cp, nl1), jnp.float32),   # conv1 im2col
            pltpu.VMEM((KH * KW * C1, nl2), jnp.float32),   # conv2 im2col
        ],
        compiler_params=pltpu.CompilerParams(
            dimension_semantics=("parallel",),
            vmem_limit_bytes=48 * 1024 * 1024),
    )(x_g, w1m, w2m, b1c, b2c)


# ----------------------------------------------------------------------------
# Kernel 2: fc1 (bf16 weight, f32 acc) + ReLU + fc2   (batch-tiled, K resident)
# ----------------------------------------------------------------------------
def _mlp_kernel(x_ref, w1_ref, b1_ref, w2_ref, b2_ref, o_ref):
    x = x_ref[...].astype(jnp.bfloat16)                       # native bf16 MXU
    h = jnp.dot(x, w1_ref[...], preferred_element_type=jnp.float32)
    h = jnp.maximum(h + b1_ref[...], 0.0)
    o = jnp.dot(h, w2_ref[...], preferred_element_type=jnp.float32) + b2_ref[...]
    o_ref[...] = o.astype(o_ref.dtype)


def mlp(xf, wf1_bf16, bf1, wf2, bf2):
    B, K1 = xf.shape
    Hf = wf1_bf16.shape[1]
    O = wf2.shape[1]
    bm = B if B <= 128 else 128
    Bp = ((B + bm - 1) // bm) * bm
    if Bp != B:
        xf = jnp.pad(xf, ((0, Bp - B), (0, 0)))
    out = pl.pallas_call(
        _mlp_kernel,
        out_shape=jax.ShapeDtypeStruct((Bp, O), jnp.float32),
        grid=(Bp // bm,),
        in_specs=[
            pl.BlockSpec((bm, K1), lambda i: (i, 0)),
            pl.BlockSpec((K1, Hf), lambda i: (0, 0)),
            pl.BlockSpec((1, Hf), lambda i: (0, 0)),
            pl.BlockSpec((Hf, O), lambda i: (0, 0)),
            pl.BlockSpec((1, O), lambda i: (0, 0)),
        ],
        out_specs=pl.BlockSpec((bm, O), lambda i: (i, 0)),
        compiler_params=pltpu.CompilerParams(
            dimension_semantics=("parallel",),
            vmem_limit_bytes=48 * 1024 * 1024),
    )(xf, wf1_bf16, bf1.reshape(1, Hf), wf2, bf2.reshape(1, O))
    return out[:B]


# ----------------------------------------------------------------------------
# Parameter prep (one-time, outside the jitted forward)
# ----------------------------------------------------------------------------
def prepare_params(p, in_channels=3):
    cin = in_channels
    cp = max(8, ((cin + 7) // 8) * 8)
    # conv1 im2col matrix: w1m[o, (kh*KW+kw)*cp + c] = w1[o, c, kh, kw]
    w1m = jnp.transpose(p["w1"], (0, 2, 3, 1))
    w1m = jnp.pad(w1m, ((0, 0), (0, 0), (0, 0), (0, cp - cin)))
    w1m = w1m.reshape(C1, KH * KW * cp)
    # conv2 im2col matrix: w2m[o, (kh*KW+kw)*C1 + c] = w2[o, c, kh, kw]
    w2m = jnp.transpose(p["w2"], (0, 2, 3, 1)).reshape(C2, KH * KW * C1)
    return {
        "w1m": w1m, "w2m": w2m,
        "b1c": p["b1"].reshape(C1, 1), "b2c": p["b2"].reshape(C2, 1),
        # Weight-only bf16: halves the dominant fc1 weight DMA of kernel 2;
        # accumulation stays f32 inside the kernel.
        "wf1": p["wf1"].astype(jnp.bfloat16),
        "bf1": p["bf1"], "wf2": p["wf2"], "bf2": p["bf2"],
    }


# ----------------------------------------------------------------------------
# Net_ forward
# ----------------------------------------------------------------------------
@jax.jit
def net_forward(x_nchw, pp):
    B, Cin, Hx, Wx = x_nchw.shape
    assert Hx == H and Wx == W, "fc1=9216 requires 28x28 spatial input"
    cp = pp["w1m"].shape[1] // (KH * KW)
    assert Cin <= cp

    # Arrange input: bt images side-by-side on lanes (896-lane slabs), channels
    # on sublanes.  bt capped at 4 and chosen so the grid stays >= 2 (megacore).
    bt = max(1, min(4, B // 2))
    G = -(-B // bt)
    Bp = G * bt
    x_flat = x_nchw.reshape(B, Cin, H * W)
    x_flat = jnp.pad(x_flat, ((0, Bp - B), (0, cp - Cin), (0, SLAB - H * W)))
    x_g = (x_flat.reshape(G, bt, cp, SLAB)
                 .transpose(0, 2, 1, 3)
                 .reshape(G, cp, bt * SLAB))

    # Kernel 1: fused conv1 -> conv2 -> pool (bt images per grid step)
    m = conv_features(x_g, pp["w1m"], pp["w2m"], pp["b1c"], pp["b2c"])

    # Tiny XLA glue: un-slab and compact the stride-2 pooled lattice.  The
    # compact order equals torch's (C,H,W) flatten, so fc1 needs no permutation.
    m = (m.reshape(G, C2, bt, OUT_S).transpose(0, 2, 1, 3)
          .reshape(Bp, C2, OUT_S))[:B]
    e = m[:, :, 0::2]                                             # (B, C2, 320)
    e = jnp.pad(e, ((0, 0), (0, 0), (0, PH * W - e.shape[2])))    # (B, C2, 336)
    e = e.reshape(B, C2, PH, W)[:, :, :, :PW]                     # (B, 64, 12, 12)
    xf = e.reshape(B, FDIM)                                       # (B, 9216)

    # dropout1 / dropout2: identity at inference
    # Kernel 2: fc1 + ReLU + fc2
    return mlp(xf, pp["wf1"], pp["bf1"], pp["wf2"], pp["bf2"])    # (B, 10)


# ----------------------------------------------------------------------------
# Params / reference / self-test
# ----------------------------------------------------------------------------
def init_params(key, in_channels=3):
    ks = jax.random.split(key, 8)
    f32 = jnp.float32
    return {
        "w1": 0.05 * jax.random.normal(ks[0], (C1, in_channels, KH, KW), f32),
        "b1": 0.05 * jax.random.normal(ks[1], (C1,), f32),
        "w2": 0.05 * jax.random.normal(ks[2], (C2, C1, KH, KW), f32),
        "b2": 0.05 * jax.random.normal(ks[3], (C2,), f32),
        "wf1": 0.02 * jax.random.normal(ks[4], (FDIM, NHID), f32),
        "bf1": 0.02 * jax.random.normal(ks[5], (NHID,), f32),
        "wf2": 0.02 * jax.random.normal(ks[6], (NHID, NOUT), f32),
        "bf2": 0.02 * jax.random.normal(ks[7], (NOUT,), f32),
    }


def reference_forward(x_nchw, p):
    # Pure-JAX (f32) reference reproducing the PyTorch forward (eval mode).
    dn = ("NCHW", "OIHW", "NCHW")
    y = jax.lax.conv_general_dilated(x_nchw, p["w1"], (1, 1), "VALID",
                                     dimension_numbers=dn)
    y = jax.nn.relu(y + p["b1"][None, :, None, None])
    y = jax.lax.conv_general_dilated(y, p["w2"], (1, 1), "VALID",
                                     dimension_numbers=dn)
    y = jax.nn.relu(y + p["b2"][None, :, None, None])
    y = jax.lax.reduce_window(y, -jnp.inf, jax.lax.max,
                              (1, 1, 2, 2), (1, 1, 2, 2), "VALID")
    y = y.reshape(y.shape[0], -1)
    y = jax.nn.relu(y @ p["wf1"] + p["bf1"])
    return y @ p["wf2"] + p["bf2"]


if __name__ == "__main__":
    key = jax.random.PRNGKey(0)
    pkey, xkey = jax.random.split(key)
    params = init_params(pkey, in_channels=3)
    pp = prepare_params(params, in_channels=3)
    # 28x28 input is required so that the flattened feature size is 9216 (fc1).
    x = jax.random.normal(xkey, (2, 3, 28, 28), jnp.float32)      # NCHW, like torch

    out = jax.block_until_ready(net_forward(x, pp))
    assert out.shape == (2, 10)

    ref = reference_forward(x, params)
    # Tolerance loosened slightly vs the pure-f32 reference: fc1 weight is
    # stored bf16 (weight-only) and fc1 runs a bf16 MXU matmul with f32 acc.
    if not jnp.allclose(out, ref, atol=5e-3, rtol=2e-2):
        raise AssertionError("Pallas output mismatch vs JAX reference")

    print("KERNEL_OK")
</pallas_src>

<mosaic_0001>
module attributes {stable_mosaic.version = 11 : i64} {
  func.func @_features_kernel(%arg0: i32, %arg1: memref<1x8x896xf32, #tpu.memory_space<vmem>>, %arg2: memref<32x72xf32, #tpu.memory_space<vmem>>, %arg3: memref<64x288xf32, #tpu.memory_space<vmem>>, %arg4: memref<32x1xf32, #tpu.memory_space<vmem>>, %arg5: memref<64x1xf32, #tpu.memory_space<vmem>>, %arg6: memref<1x64x640xf32, #tpu.memory_space<vmem>>, %arg7: memref<72x838xf32, #tpu.memory_space<vmem>>, %arg8: memref<288x780xf32, #tpu.memory_space<vmem>>) attributes {dimension_semantics = [#tpu.dimension_semantics<parallel>], iteration_bounds = array<i64: 2>, scalar_prefetch = 0 : i64, scratch_operands = 2 : i64, tpu.core_type = #tpu.core_type<tc>, window_params = [{transform_indices = @transform_0, window_bounds = array<i64: 1, 8, 896>}, {pipeline_mode = #tpu.pipeline_mode<synchronous>, transform_indices = @transform_1, window_bounds = array<i64: 32, 72>}, {pipeline_mode = #tpu.pipeline_mode<synchronous>, transform_indices = @transform_2, window_bounds = array<i64: 64, 288>}, {pipeline_mode = #tpu.pipeline_mode<synchronous>, transform_indices = @transform_3, window_bounds = array<i64: 32, 1>}, {pipeline_mode = #tpu.pipeline_mode<synchronous>, transform_indices = @transform_4, window_bounds = array<i64: 64, 1>}, {transform_indices = @transform_5, window_bounds = array<i64: 1, 64, 640>}]} {
    %c0 = arith.constant 0 : index
    %c0_0 = arith.constant 0 : index
    %c0_1 = arith.constant 0 : index
    %0 = vector.load %arg1[%c0, %c0_0, %c0_1] : memref<1x8x896xf32, #tpu.memory_space<vmem>>, vector<1x8x896xf32>
    %1 = vector.shape_cast %0 : vector<1x8x896xf32> to vector<8x896xf32>
    %2 = vector.extract_strided_slice %1 {offsets = [0, 0], sizes = [8, 838], strides = [1, 1]} : vector<8x896xf32> to vector<8x838xf32>
    %c0_2 = arith.constant 0 : index
    %c0_3 = arith.constant 0 : index
    %3 = vector.load %arg7[%c0_2, %c0_3] : memref<72x838xf32, #tpu.memory_space<vmem>>, vector<8x838xf32>
    tpu.vector_store %arg7[%c0_2, %c0_3], %2 {strides = array<i32>} : memref<72x838xf32, #tpu.memory_space<vmem>>, vector<8x838xf32>,
    %4 = vector.extract_strided_slice %1 {offsets = [0, 1], sizes = [8, 838], strides = [1, 1]} : vector<8x896xf32> to vector<8x838xf32>
    %c8 = arith.constant 8 : index
    %c0_4 = arith.constant 0 : index
    %5 = vector.load %arg7[%c8, %c0_4] : memref<72x838xf32, #tpu.memory_space<vmem>>, vector<8x838xf32>
    tpu.vector_store %arg7[%c8, %c0_4], %4 {strides = array<i32>} : memref<72x838xf32, #tpu.memory_space<vmem>>, vector<8x838xf32>,
    %6 = vector.extract_strided_slice %1 {offsets = [0, 2], sizes = [8, 838], strides = [1, 1]} : vector<8x896xf32> to vector<8x838xf32>
    %c16 = arith.constant 16 : index
    %c0_5 = arith.constant 0 : index
    %7 = vector.load %arg7[%c16, %c0_5] : memref<72x838xf32, #tpu.memory_space<vmem>>, vector<8x838xf32>
    tpu.vector_store %arg7[%c16, %c0_5], %6 {strides = array<i32>} : memref<72x838xf32, #tpu.memory_space<vmem>>, vector<8x838xf32>,
    %8 = vector.extract_strided_slice %1 {offsets = [0, 28], sizes = [8, 838], strides = [1, 1]} : vector<8x896xf32> to vector<8x838xf32>
    %c24 = arith.constant 24 : index
    %c0_6 = arith.constant 0 : index
    %9 = vector.load %arg7[%c24, %c0_6] : memref<72x838xf32, #tpu.memory_space<vmem>>, vector<8x838xf32>
    tpu.vector_store %arg7[%c24, %c0_6], %8 {strides = array<i32>} : memref<72x838xf32, #tpu.memory_space<vmem>>, vector<8x838xf32>,
    %10 = vector.extract_strided_slice %1 {offsets = [0, 29], sizes = [8, 838], strides = [1, 1]} : vector<8x896xf32> to vector<8x838xf32>
    %c32 = arith.constant 32 : index
    %c0_7 = arith.constant 0 : index
    %11 = vector.load %arg7[%c32, %c0_7] : memref<72x838xf32, #tpu.memory_space<vmem>>, vector<8x838xf32>
    tpu.vector_store %arg7[%c32, %c0_7], %10 {strides = array<i32>} : memref<72x838xf32, #tpu.memory_space<vmem>>, vector<8x838xf32>,
    %12 = vector.extract_strided_slice %1 {offsets = [0, 30], sizes = [8, 838], strides = [1, 1]} : vector<8x896xf32> to vector<8x838xf32>
    %c40 = arith.constant 40 : index
    %c0_8 = arith.constant 0 : index
    %13 = vector.load %arg7[%c40, %c0_8] : memref<72x838xf32, #tpu.memory_space<vmem>>, vector<8x838xf32>
    tpu.vector_store %arg7[%c40, %c0_8], %12 {strides = array<i32>} : memref<72x838xf32, #tpu.memory_space<vmem>>, vector<8x838xf32>,
    %14 = vector.extract_strided_slice %1 {offsets = [0, 56], sizes = [8, 838], strides = [1, 1]} : vector<8x896xf32> to vector<8x838xf32>
    %c48 = arith.constant 48 : index
    %c0_9 = arith.constant 0 : index
    %15 = vector.load %arg7[%c48, %c0_9] : memref<72x838xf32, #tpu.memory_space<vmem>>, vector<8x838xf32>
    tpu.vector_store %arg7[%c48, %c0_9], %14 {strides = array<i32>} : memref<72x838xf32, #tpu.memory_space<vmem>>, vector<8x838xf32>,
    %16 = vector.extract_strided_slice %1 {offsets = [0, 57], sizes = [8, 838], strides = [1, 1]} : vector<8x896xf32> to vector<8x838xf32>
    %c56 = arith.constant 56 : index
    %c0_10 = arith.constant 0 : index
    %17 = vector.load %arg7[%c56, %c0_10] : memref<72x838xf32, #tpu.memory_space<vmem>>, vector<8x838xf32>
    tpu.vector_store %arg7[%c56, %c0_10], %16 {strides = array<i32>} : memref<72x838xf32, #tpu.memory_space<vmem>>, vector<8x838xf32>,
    %18 = vector.extract_strided_slice %1 {offsets = [0, 58], sizes = [8, 838], strides = [1, 1]} : vector<8x896xf32> to vector<8x838xf32>
    %c64 = arith.constant 64 : index
    %c0_11 = arith.constant 0 : index
    %19 = vector.load %arg7[%c64, %c0_11] : memref<72x838xf32, #tpu.memory_space<vmem>>, vector<8x838xf32>
    tpu.vector_store %arg7[%c64, %c0_11], %18 {strides = array<i32>} : memref<72x838xf32, #tpu.memory_space<vmem>>, vector<8x838xf32>,
    %c0_12 = arith.constant 0 : index
    %c0_13 = arith.constant 0 : index
    %20 = vector.load %arg2[%c0_12, %c0_13] : memref<32x72xf32, #tpu.memory_space<vmem>>, vector<32x72xf32>
    %c0_14 = arith.constant 0 : index
    %c0_15 = arith.constant 0 : index
    %21 = vector.load %arg7[%c0_14, %c0_15] : memref<72x838xf32, #tpu.memory_space<vmem>>, vector<72x838xf32>
    %cst = arith.constant dense<0.000000e+00> : vector<32x838xf32>
    %22 = tpu.matmul %20, %21, %cst {dimension_numbers = #tpu.dot_dimension_numbers<[1], [0], [0], [1], [0, 0, 1, 1], [], []>} : vector<32x72xf32>, vector<72x838xf32>, vector<32x838xf32> -> vector<32x838xf32>
    %c0_16 = arith.constant 0 : index
    %c0_17 = arith.constant 0 : index
    %23 = vector.load %arg4[%c0_16, %c0_17] : memref<32x1xf32, #tpu.memory_space<vmem>>, vector<32x1xf32>
    %24 = vector.broadcast %23 : vector<32x1xf32> to vector<32x838xf32>
    %25 = arith.addf %22, %24 : vector<32x838xf32>
    %cst_18 = arith.constant 0.000000e+00 : f32
    %26 = vector.broadcast %cst_18 : f32 to vector<32x838xf32>
    %27 = arith.maximumf %25, %26 : vector<32x838xf32>
    %28 = vector.extract_strided_slice %27 {offsets = [0, 0], sizes = [32, 780], strides = [1, 1]} : vector<32x838xf32> to vector<32x780xf32>
    %c0_19 = arith.constant 0 : index
    %c0_20 = arith.constant 0 : index
    %29 = vector.load %arg8[%c0_19, %c0_20] : memref<288x780xf32, #tpu.memory_space<vmem>>, vector<32x780xf32>
    tpu.vector_store %arg8[%c0_19, %c0_20], %28 {strides = array<i32>} : memref<288x780xf32, #tpu.memory_space<vmem>>, vector<32x780xf32>,
    %30 = vector.extract_strided_slice %27 {offsets = [0, 1], sizes = [32, 780], strides = [1, 1]} : vector<32x838xf32> to vector<32x780xf32>
    %c32_21 = arith.constant 32 : index
    %c0_22 = arith.constant 0 : index
    %31 = vector.load %arg8[%c32_21, %c0_22] : memref<288x780xf32, #tpu.memory_space<vmem>>, vector<32x780xf32>
    tpu.vector_store %arg8[%c32_21, %c0_22], %30 {strides = array<i32>} : memref<288x780xf32, #tpu.memory_space<vmem>>, vector<32x780xf32>,
    %32 = vector.extract_strided_slice %27 {offsets = [0, 2], sizes = [32, 780], strides = [1, 1]} : vector<32x838xf32> to vector<32x780xf32>
    %c64_23 = arith.constant 64 : index
    %c0_24 = arith.constant 0 : index
    %33 = vector.load %arg8[%c64_23, %c0_24] : memref<288x780xf32, #tpu.memory_space<vmem>>, vector<32x780xf32>
    tpu.vector_store %arg8[%c64_23, %c0_24], %32 {strides = array<i32>} : memref<288x780xf32, #tpu.memory_space<vmem>>, vector<32x780xf32>,
    %34 = vector.extract_strided_slice %27 {offsets = [0, 28], sizes = [32, 780], strides = [1, 1]} : vector<32x838xf32> to vector<32x780xf32>
    %c96 = arith.constant 96 : index
    %c0_25 = arith.constant 0 : index
    %35 = vector.load %arg8[%c96, %c0_25] : memref<288x780xf32, #tpu.memory_space<vmem>>, vector<32x780xf32>
    tpu.vector_store %arg8[%c96, %c0_25], %34 {strides = array<i32>} : memref<288x780xf32, #tpu.memory_space<vmem>>, vector<32x780xf32>,
    %36 = vector.extract_strided_slice %27 {offsets = [0, 29], sizes = [32, 780], strides = [1, 1]} : vector<32x838xf32> to vector<32x780xf32>
    %c128 = arith.constant 128 : index
    %c0_26 = arith.constant 0 : index
    %37 = vector.load %arg8[%c128, %c0_26] : memref<288x780xf32, #tpu.memory_space<vmem>>, vector<32x780xf32>
    tpu.vector_store %arg8[%c128, %c0_26], %36 {strides = array<i32>} : memref<288x780xf32, #tpu.memory_space<vmem>>, vector<32x780xf32>,
    %38 = vector.extract_strided_slice %27 {offsets = [0, 30], sizes = [32, 780], strides = [1, 1]} : vector<32x838xf32> to vector<32x780xf32>
    %c160 = arith.constant 160 : index
    %c0_27 = arith.constant 0 : index
    %39 = vector.load %arg8[%c160, %c0_27] : memref<288x780xf32, #tpu.memory_space<vmem>>, vector<32x780xf32>
    tpu.vector_store %arg8[%c160, %c0_27], %38 {strides = array<i32>} : memref<288x780xf32, #tpu.memory_space<vmem>>, vector<32x780xf32>,
    %40 = vector.extract_strided_slice %27 {offsets = [0, 56], sizes = [32, 780], strides = [1, 1]} : vector<32x838xf32> to vector<32x780xf32>
    %c192 = arith.constant 192 : index
    %c0_28 = arith.constant 0 : index
    %41 = vector.load %arg8[%c192, %c0_28] : memref<288x780xf32, #tpu.memory_space<vmem>>, vector<32x780xf32>
    tpu.vector_store %arg8[%c192, %c0_28], %40 {strides = array<i32>} : memref<288x780xf32, #tpu.memory_space<vmem>>, vector<32x780xf32>,
    %42 = vector.extract_strided_slice %27 {offsets = [0, 57], sizes = [32, 780], strides = [1, 1]} : vector<32x838xf32> to vector<32x780xf32>
    %c224 = arith.constant 224 : index
    %c0_29 = arith.constant 0 : index
    %43 = vector.load %arg8[%c224, %c0_29] : memref<288x780xf32, #tpu.memory_space<vmem>>, vector<32x780xf32>
    tpu.vector_store %arg8[%c224, %c0_29], %42 {strides = array<i32>} : memref<288x780xf32, #tpu.memory_space<vmem>>, vector<32x780xf32>,
    %44 = vector.extract_strided_slice %27 {offsets = [0, 58], sizes = [32, 780], strides = [1, 1]} : vector<32x838xf32> to vector<32x780xf32>
    %c256 = arith.constant 256 : index
    %c0_30 = arith.constant 0 : index
    %45 = vector.load %arg8[%c256, %c0_30] : memref<288x780xf32, #tpu.memory_space<vmem>>, vector<32x780xf32>
    tpu.vector_store %arg8[%c256, %c0_30], %44 {strides = array<i32>} : memref<288x780xf32, #tpu.memory_space<vmem>>, vector<32x780xf32>,
    %c0_31 = arith.constant 0 : index
    %c0_32 = arith.constant 0 : index
    %46 = vector.load %arg3[%c0_31, %c0_32] : memref<64x288xf32, #tpu.memory_space<vmem>>, vector<64x288xf32>
    %c0_33 = arith.constant 0 : index
    %c0_34 = arith.constant 0 : index
    %47 = vector.load %arg8[%c0_33, %c0_34] : memref<288x780xf32, #tpu.memory_space<vmem>>, vector<288x780xf32>
    %cst_35 = arith.constant dense<0.000000e+00> : vector<64x780xf32>
    %48 = tpu.matmul %46, %47, %cst_35 {dimension_numbers = #tpu.dot_dimension_numbers<[1], [0], [0], [1], [0, 0, 1, 1], [], []>} : vector<64x288xf32>, vector<288x780xf32>, vector<64x780xf32> -> vector<64x780xf32>
    %c0_36 = arith.constant 0 : index
    %c0_37 = arith.constant 0 : index
    %49 = vector.load %arg5[%c0_36, %c0_37] : memref<64x1xf32, #tpu.memory_space<vmem>>, vector<64x1xf32>
    %50 = vector.broadcast %49 : vector<64x1xf32> to vector<64x780xf32>
    %51 = arith.addf %48, %50 : vector<64x780xf32>
    %cst_38 = arith.constant 0.000000e+00 : f32
    %52 = vector.broadcast %cst_38 : f32 to vector<64x780xf32>
    %53 = arith.maximumf %51, %52 : vector<64x780xf32>
    %54 = vector.extract_strided_slice %53 {offsets = [0, 0], sizes = [64, 779], strides = [1, 1]} : vector<64x780xf32> to vector<64x779xf32>
    %55 = vector.extract_strided_slice %53 {offsets = [0, 1], sizes = [64, 779], strides = [1, 1]} : vector<64x780xf32> to vector<64x779xf32>
    %56 = arith.maximumf %54, %55 : vector<64x779xf32>
    %57 = vector.extract_strided_slice %56 {offsets = [0, 0], sizes = [64, 751], strides = [1, 1]} : vector<64x779xf32> to vector<64x751xf32>
    %58 = vector.extract_strided_slice %56 {offsets = [0, 28], sizes = [64, 751], strides = [1, 1]} : vector<64x779xf32> to vector<64x751xf32>
    %59 = arith.maximumf %57, %58 : vector<64x751xf32>
    %60 = vector.extract_strided_slice %59 {offsets = [0, 0], sizes = [64, 640], strides = [1, 1]} : vector<64x751xf32> to vector<64x640xf32>
    %c0_39 = arith.constant 0 : index
    %c0_40 = arith.constant 0 : index
    %c0_41 = arith.constant 0 : index
    %61 = vector.load %arg6[%c0_39, %c0_40, %c0_41] : memref<1x64x640xf32, #tpu.memory_space<vmem>>, vector<1x64x640xf32>
    %62 = vector.shape_cast %61 : vector<1x64x640xf32> to vector<64x640xf32>
    %63 = vector.shape_cast %60 : vector<64x640xf32> to vector<1x64x640xf32>
    tpu.vector_store %arg6[%c0_39, %c0_40, %c0_41], %63 {strides = array<i32>} : memref<1x64x640xf32, #tpu.memory_space<vmem>>, vector<1x64x640xf32>,
    return
  }
  func.func @transform_0(%arg0: i32) -> (i32, i32, i32) {
    %c0_i32 = arith.constant 0 : i32
    %c0_i32_0 = arith.constant 0 : i32
    %c0_i32_1 = arith.constant 0 : i32
    return %arg0, %c0_i32, %c0_i32_0 : i32, i32, i32
  }
  func.func @transform_1(%arg0: i32) -> (i32, i32) {
    %c0_i32 = arith.constant 0 : i32
    %c0_i32_0 = arith.constant 0 : i32
    %c0_i32_1 = arith.constant 0 : i32
    return %c0_i32, %c0_i32_0 : i32, i32
  }
  func.func @transform_2(%arg0: i32) -> (i32, i32) {
    %c0_i32 = arith.constant 0 : i32
    %c0_i32_0 = arith.constant 0 : i32
    %c0_i32_1 = arith.constant 0 : i32
    return %c0_i32, %c0_i32_0 : i32, i32
  }
  func.func @transform_3(%arg0: i32) -> (i32, i32) {
    %c0_i32 = arith.constant 0 : i32
    %c0_i32_0 = arith.constant 0 : i32
    %c0_i32_1 = arith.constant 0 : i32
    return %c0_i32, %c0_i32_0 : i32, i32
  }
  func.func @transform_4(%arg0: i32) -> (i32, i32) {
    %c0_i32 = arith.constant 0 : i32
    %c0_i32_0 = arith.constant 0 : i32
    %c0_i32_1 = arith.constant 0 : i32
    return %c0_i32, %c0_i32_0 : i32, i32
  }
  func.func @transform_5(%arg0: i32) -> (i32, i32, i32) {
    %c0_i32 = arith.constant 0 : i32
    %c0_i32_0 = arith.constant 0 : i32
    %c0_i32_1 = arith.constant 0 : i32
    return %arg0, %c0_i32, %c0_i32_0 : i32, i32, i32
  }
}

module attributes {stable_mosaic.version = 11 : i64} {
  func.func @_mlp_kernel(%arg0: i32, %arg1: memref<2x9216xf32, #tpu.memory_space<vmem>>, %arg2: memref<9216x128xbf16, #tpu.memory_space<vmem>>, %arg3: memref<1x128xf32, #tpu.memory_space<vmem>>, %arg4: memref<128x10xf32, #tpu.memory_space<vmem>>, %arg5: memref<1x10xf32, #tpu.memory_space<vmem>>, %arg6: memref<2x10xf32, #tpu.memory_space<vmem>>) attributes {dimension_semantics = [#tpu.dimension_semantics<parallel>], iteration_bounds = array<i64: 1>, scalar_prefetch = 0 : i64, scratch_operands = 0 : i64, tpu.core_type = #tpu.core_type<tc>, window_params = [{transform_indices = @transform_0, window_bounds = array<i64: 2, 9216>}, {pipeline_mode = #tpu.pipeline_mode<synchronous>, transform_indices = @transform_1, window_bounds = array<i64: 9216, 128>}, {pipeline_mode = #tpu.pipeline_mode<synchronous>, transform_indices = @transform_2, window_bounds = array<i64: 1, 128>}, {pipeline_mode = #tpu.pipeline_mode<synchronous>, transform_indices = @transform_3, window_bounds = array<i64: 128, 10>}, {pipeline_mode = #tpu.pipeline_mode<synchronous>, transform_indices = @transform_4, window_bounds = array<i64: 1, 10>}, {transform_indices = @transform_5, window_bounds = array<i64: 2, 10>}]} {
    %c0 = arith.constant 0 : index
    %c0_0 = arith.constant 0 : index
    %0 = vector.load %arg1[%c0, %c0_0] : memref<2x9216xf32, #tpu.memory_space<vmem>>, vector<2x9216xf32>
    %1 = arith.truncf %0 : vector<2x9216xf32> to vector<2x9216xbf16>
    %c0_1 = arith.constant 0 : index
    %c0_2 = arith.constant 0 : index
    %2 = vector.load %arg2[%c0_1, %c0_2] : memref<9216x128xbf16, #tpu.memory_space<vmem>>, vector<9216x128xbf16>
    %cst = arith.constant dense<0.000000e+00> : vector<2x128xf32>
    %3 = tpu.matmul %1, %2, %cst {dimension_numbers = #tpu.dot_dimension_numbers<[1], [0], [0], [1], [0, 0, 1, 1], [], []>} : vector<2x9216xbf16>, vector<9216x128xbf16>, vector<2x128xf32> -> vector<2x128xf32>
    %c0_3 = arith.constant 0 : index
    %c0_4 = arith.constant 0 : index
    %4 = vector.load %arg3[%c0_3, %c0_4] : memref<1x128xf32, #tpu.memory_space<vmem>>, vector<1x128xf32>
    %5 = vector.broadcast %4 : vector<1x128xf32> to vector<2x128xf32>
    %6 = arith.addf %3, %5 : vector<2x128xf32>
    %cst_5 = arith.constant 0.000000e+00 : f32
    %7 = vector.broadcast %cst_5 : f32 to vector<2x128xf32>
    %8 = arith.maximumf %6, %7 : vector<2x128xf32>
    %c0_6 = arith.constant 0 : index
    %c0_7 = arith.constant 0 : index
    %9 = vector.load %arg4[%c0_6, %c0_7] : memref<128x10xf32, #tpu.memory_space<vmem>>, vector<128x10xf32>
    %cst_8 = arith.constant dense<0.000000e+00> : vector<2x10xf32>
    %10 = tpu.matmul %8, %9, %cst_8 {dimension_numbers = #tpu.dot_dimension_numbers<[1], [0], [0], [1], [0, 0, 1, 1], [], []>} : vector<2x128xf32>, vector<128x10xf32>, vector<2x10xf32> -> vector<2x10xf32>
    %c0_9 = arith.constant 0 : index
    %c0_10 = arith.constant 0 : index
    %11 = vector.load %arg5[%c0_9, %c0_10] : memref<1x10xf32, #tpu.memory_space<vmem>>, vector<1x10xf32>
    %12 = vector.broadcast %11 : vector<1x10xf32> to vector<2x10xf32>
    %13 = arith.addf %10, %12 : vector<2x10xf32>
    %c0_11 = arith.constant 0 : index
    %c0_12 = arith.constant 0 : index
    %14 = vector.load %arg6[%c0_11, %c0_12] : memref<2x10xf32, #tpu.memory_space<vmem>>, vector<2x10xf32>
    tpu.vector_store %arg6[%c0_11, %c0_12], %13 {strides = array<i32>} : memref<2x10xf32, #tpu.memory_space<vmem>>, vector<2x10xf32>,
    return
  }
  func.func @transform_0(%arg0: i32) -> (i32, i32) {
    %c0_i32 = arith.constant 0 : i32
    %c0_i32_0 = arith.constant 0 : i32
    return %arg0, %c0_i32 : i32, i32
  }
  func.func @transform_1(%arg0: i32) -> (i32, i32) {
    %c0_i32 = arith.constant 0 : i32
    %c0_i32_0 = arith.constant 0 : i32
    %c0_i32_1 = arith.constant 0 : i32
    return %c0_i32, %c0_i32_0 : i32, i32
  }
  func.func @transform_2(%arg0: i32) -> (i32, i32) {
    %c0_i32 = arith.constant 0 : i32
    %c0_i32_0 = arith.constant 0 : i32
    %c0_i32_1 = arith.constant 0 : i32
    return %c0_i32, %c0_i32_0 : i32, i32
  }
  func.func @transform_3(%arg0: i32) -> (i32, i32) {
    %c0_i32 = arith.constant 0 : i32
    %c0_i32_0 = arith.constant 0 : i32
    %c0_i32_1 = arith.constant 0 : i32
    return %c0_i32, %c0_i32_0 : i32, i32
  }
  func.func @transform_4(%arg0: i32) -> (i32, i32) {
    %c0_i32 = arith.constant 0 : i32
    %c0_i32_0 = arith.constant 0 : i32
    %c0_i32_1 = arith.constant 0 : i32
    return %c0_i32, %c0_i32_0 : i32, i32
  }
  func.func @transform_5(%arg0: i32) -> (i32, i32) {
    %c0_i32 = arith.constant 0 : i32
    %c0_i32_0 = arith.constant 0 : i32
    return %arg0, %c0_i32 : i32, i32
  }
}

</mosaic_0001>

<llo_original>
// kernel: net_forward.2
$region0: #{net_forward.2}
  #allocation0 [shape = 'u32[]', space=smem, size = 0x4, offset = 0x4, fixed_abs, tag = 'smem constant byte address 0x4 - core index']
  #allocation1 [shape = 'u32[72,128]{1,0:T(1,128)}', space=vmem, size = 0x9000, scoped, tag = 'internal scratch']
  #allocation2 [shape = 'f32[72,838]{1,0:T(8,128)}', space=vmem, size = 0x3f000, scoped, tag = 'scratch operand']
  #allocation3 [shape = 'f32[288,780]{1,0:T(8,128)}', space=vmem, size = 0xfc000, scoped, tag = 'scratch operand']
  %s0 = inlined_call_operand.vmem [shape: f32[2,8,896], index: 0, kind: input, shape index: {}]
  %s1 = inlined_call_operand.hbm [shape: f32[32,72], index: 1, kind: input, shape index: {}]
  %s2 = inlined_call_operand.hbm [shape: f32[64,288], index: 2, kind: input, shape index: {}]
  %s3 = inlined_call_operand.vmem [shape: f32[32,1], index: 3, kind: input, shape index: {}]
  %s4 = inlined_call_operand.vmem [shape: f32[64,1], index: 4, kind: input, shape index: {}]
  %s5 = inlined_call_operand.vmem [shape: f32[2,64,640], index: 5, kind: output, shape index: {}]
  %s6 = sld [smem:[#allocation0]]
  $region61: #{net_forward.2} parent=0
    _
  %s8 = ssub.s32 1, %s6
  %s9 = scalar_select 0, %s8, %s6
  $region1: #{net_forward.2} parent=0
    #allocation4 [shape = 'u8[16384]{0}', space=vmem, size = 0x4000, scoped, tag = 'input window, operand 1, single buffered']
    #allocation5 [shape = 's32[2]{0}', space=sflag, size = 0x8, scoped, tag = 'scoped memory for net_forward.2']
    #allocation6 [shape = 'u8[98304]{0}', space=vmem, size = 0x18000, scoped, tag = 'input window, operand 2, single buffered']
    #allocation7 [shape = 's32[1]{0}', space=sflag, size = 0x4, scoped, tag = 'scoped memory for net_forward.2']
    %10 = vsyncpa [#allocation5], 0
    %11 = vsyncpa [#allocation7], 0
    loop: start=0, step=1, limit=4
    $region2: #{net_forward.2} parent=1 // loop_pre_header
      _
    $region3: #{net_forward.2} parent=1 // loop_header
      %s13 = sphi 0, %s17
      %p14 = scmp.ge.s32.totalorder %s13, 4
      %s23 = sphi 0, %s25
      %s26 = sphi 0, %s23
      %s27 = sphi 0, %s26
      %s43 = sphi 0, %s27
      %s47 = sphi 0, %s47
      %s49 = sphi 0, %s47
      %s50 = sphi 0, %s49
      %s64 = sphi 0, %s50
      %s68 = sphi 0, %s68
      %s70 = sphi 0, %s68
      %s71 = sphi 0, %s70
      %s85 = sphi 0, %s71
      %s89 = sphi 0, %s89
      %s91 = sphi 0, %s89
      %s92 = sphi 0, %s91
      %s106 = sphi 0, %s92
      %s110 = sphi 0, %s110
      %s112 = sphi 0, %s110
      %s113 = sphi 0, %s112
      %s127 = sphi 0, %s113
      %s133 = sphi 0, %s135
      %s136 = sphi 0, %s133
      %s137 = sphi 0, %s136
      %s153 = sphi 0, %s137
    $region4: #{net_forward.2} parent=1 // loop_header_branch
      %16 = sbr.rel (%p14) target = $region8
    $region5: #{net_forward.2} parent=1 // loop_body
      %s18 = ssub.s32 %s13, 1
      %s19 = ssub.s32 %s13, 2
      %s20 = sadd.s32 %s13, 1
      %s21 = ssub.s32 %s13, %s20
      %p22 = scmp.eq.s32.totalorder %s21, 0
      %s24 = sadd.s32 %s23, 1
      %s25 = scalar_select %p22, %s23, %s24
      %p28 = pneg %p22
      %p29 = scmp.eq.s32.totalorder %s13, 1
      %p30 = por %p28, %p29
      %p31 = scmp.ne.s32.totalorder %s23, %s26
      %p32 = scmp.eq.s32.totalorder %s13, 0
      %p33 = por %p31, %p32
      %p34 = scmp.ne.s32.totalorder %s23, %s26
      %p35 = scmp.eq.s32.totalorder %s18, 1
      %p36 = por %p34, %p35
      %p37 = scmp.ne.s32.totalorder %s26, %s27
      %p38 = scmp.eq.s32.totalorder %s18, 0
      %p39 = por %p37, %p38
      %p40 = scmp.ne.s32.totalorder %s26, %s27
      %p41 = scmp.eq.s32.totalorder %s19, 1
      %p42 = por %p40, %p41
      %p44 = scmp.ne.s32.totalorder %s27, %s43
      %p45 = scmp.eq.s32.totalorder %s19, 0
      %p46 = por %p44, %p45
      %s48 = sadd.s32 %s47, 1
      %p51 = scmp.eq.s32.totalorder %s13, 1
      %p52 = scmp.ne.s32.totalorder %s47, %s49
      %p53 = scmp.eq.s32.totalorder %s13, 0
      %p54 = por %p52, %p53
      %p55 = scmp.ne.s32.totalorder %s47, %s49
      %p56 = scmp.eq.s32.totalorder %s18, 1
      %p57 = por %p55, %p56
      %p58 = scmp.ne.s32.totalorder %s49, %s50
      %p59 = scmp.eq.s32.totalorder %s18, 0
      %p60 = por %p58, %p59
      %p61 = scmp.ne.s32.totalorder %s49, %s50
      %p62 = scmp.eq.s32.totalorder %s19, 1
      %p63 = por %p61, %p62
      %p65 = scmp.ne.s32.totalorder %s50, %s64
      %p66 = scmp.eq.s32.totalorder %s19, 0
      %p67 = por %p65, %p66
      %s69 = sadd.s32 %s68, 1
      %p72 = scmp.eq.s32.totalorder %s13, 1
      %p73 = scmp.ne.s32.totalorder %s68, %s70
      %p74 = scmp.eq.s32.totalorder %s13, 0
      %p75 = por %p73, %p74
      %p76 = scmp.ne.s32.totalorder %s68, %s70
      %p77 = scmp.eq.s32.totalorder %s18, 1
      %p78 = por %p76, %p77
      %p79 = scmp.ne.s32.totalorder %s70, %s71
      %p80 = scmp.eq.s32.totalorder %s18, 0
      %p81 = por %p79, %p80
      %p82 = scmp.ne.s32.totalorder %s70, %s71
      %p83 = scmp.eq.s32.totalorder %s19, 1
      %p84 = por %p82, %p83
      %p86 = scmp.ne.s32.totalorder %s71, %s85
      %p87 = scmp.eq.s32.totalorder %s19, 0
      %p88 = por %p86, %p87
      %s90 = sadd.s32 %s89, 1
      %p93 = scmp.eq.s32.totalorder %s13, 1
      %p94 = scmp.ne.s32.totalorder %s89, %s91
      %p95 = scmp.eq.s32.totalorder %s13, 0
      %p96 = por %p94, %p95
      %p97 = scmp.ne.s32.totalorder %s89, %s91
      %p98 = scmp.eq.s32.totalorder %s18, 1
      %p99 = por %p97, %p98
      %p100 = scmp.ne.s32.totalorder %s91, %s92
      %p101 = scmp.eq.s32.totalorder %s18, 0
      %p102 = por %p100, %p101
      %p103 = scmp.ne.s32.totalorder %s91, %s92
      %p104 = scmp.eq.s32.totalorder %s19, 1
      %p105 = por %p103, %p104
      %p107 = scmp.ne.s32.totalorder %s92, %s106
      %p108 = scmp.eq.s32.totalorder %s19, 0
      %p109 = por %p107, %p108
      %s111 = sadd.s32 %s110, 1
      %p114 = scmp.eq.s32.totalorder %s13, 1
      %p115 = scmp.ne.s32.totalorder %s110, %s112
      %p116 = scmp.eq.s32.totalorder %s13, 0
      %p117 = por %p115, %p116
      %p118 = scmp.ne.s32.totalorder %s110, %s112
      %p119 = scmp.eq.s32.totalorder %s18, 1
      %p120 = por %p118, %p119
      %p121 = scmp.ne.s32.totalorder %s112, %s113
      %p122 = scmp.eq.s32.totalorder %s18, 0
      %p123 = por %p121, %p122
      %p124 = scmp.ne.s32.totalorder %s112, %s113
      %p125 = scmp.eq.s32.totalorder %s19, 1
      %p126 = por %p124, %p125
      %p128 = scmp.ne.s32.totalorder %s113, %s127
      %p129 = scmp.eq.s32.totalorder %s19, 0
      %p130 = por %p128, %p129
      %s131 = ssub.s32 %s13, %s20
      %p132 = scmp.eq.s32.totalorder %s131, 0
      %s134 = sadd.s32 %s133, 1
      %s135 = scalar_select %p132, %s133, %s134
      %p138 = pneg %p132
      %p139 = scmp.eq.s32.totalorder %s13, 1
      %p140 = por %p138, %p139
      %p141 = scmp.ne.s32.totalorder %s133, %s136
      %p142 = scmp.eq.s32.totalorder %s13, 0
      %p143 = por %p141, %p142
      %p144 = scmp.ne.s32.totalorder %s133, %s136
      %p145 = scmp.eq.s32.totalorder %s18, 1
      %p146 = por %p144, %p145
      %p147 = scmp.ne.s32.totalorder %s136, %s137
      %p148 = scmp.eq.s32.totalorder %s18, 0
      %p149 = por %p147, %p148
      %p150 = scmp.ne.s32.totalorder %s136, %s137
      %p151 = scmp.eq.s32.totalorder %s19, 1
      %p152 = por %p150, %p151
      %p154 = scmp.ne.s32.totalorder %s137, %s153
      %p155 = scmp.eq.s32.totalorder %s19, 0
      %p156 = por %p154, %p155
      %p157 = scmp.le.s32.totalorder 1, %s13
      %p158 = scmp.lt.s32.totalorder %s13, 3
      %p159 = pnand %p157, %p158
      %p160 = pneg %p159
      // Predicated region
      $region9: #{net_forward.2} parent=5 // pred_check
        _
      $region10: #{net_forward.2} parent=5 // pred_check_branch
        %162 = sbr.rel (%p159) target = $region12
      $region11: #{net_forward.2} parent=5 // pred_region
        %s163 = ssub.s32 %s13, 1
        // Predicated region
        $region13: #{net_forward.2} parent=11 // pred_check
          %p164 = pneg %p60
        $region14: #{net_forward.2} parent=11 // pred_check_branch
          %166 = sbr.rel (%p164) target = $region16
        $region15: #{net_forward.2} parent=11 // pred_region
          %168 = vsyncadd [#allocation5], 0
          %s169 = sshll.u32 %s1, 4
          %s170 = int_to_ptr.hbm [resolvable:$true] %s169
          %s171 = sshll.u32 [#allocation4], 4
          %s172 = int_to_ptr.vmem [resolvable:$true] %s171
          %177 = dma.hbm_to_vmem [thread:$0]  %s170, 512, %s172, [#allocation5], 128, 128, 8
        $region16: #{net_forward.2} parent=11 // pred_fallthru
          _
        // Predicated region
        $region17: #{net_forward.2} parent=11 // pred_check
          %p178 = pneg %p81
        $region18: #{net_forward.2} parent=11 // pred_check_branch
          %180 = sbr.rel (%p178) target = $region20
        $region19: #{net_forward.2} parent=11 // pred_region
          %182 = vsyncadd [#allocation7], 0
          %s183 = sshll.u32 %s2, 4
          %s184 = int_to_ptr.hbm [resolvable:$true] %s183
          %s185 = sshll.u32 [#allocation6], 4
          %s186 = int_to_ptr.vmem [resolvable:$true] %s185
          %191 = dma.hbm_to_vmem [thread:$0]  %s184, 3072, %s186, [#allocation7], 384, 384, 24
        $region20: #{net_forward.2} parent=11 // pred_fallthru
          _
        // Predicated region
        $region21: #{net_forward.2} parent=11 // pred_check
          %p192 = pneg %p102
        $region22: #{net_forward.2} parent=11 // pred_check_branch
          %194 = sbr.rel (%p192) target = $region24
        $region23: #{net_forward.2} parent=11 // pred_region
          _
        $region24: #{net_forward.2} parent=11 // pred_fallthru
          _
        // Predicated region
        $region25: #{net_forward.2} parent=11 // pred_check
          %p195 = pneg %p123
        $region26: #{net_forward.2} parent=11 // pred_check_branch
          %197 = sbr.rel (%p195) target = $region28
        $region27: #{net_forward.2} parent=11 // pred_region
          _
        $region28: #{net_forward.2} parent=11 // pred_fallthru
          _
      $region12: #{net_forward.2} parent=5 // pred_fallthru
        _
      %p198 = scmp.lt.s32.totalorder %s13, 2
      // Predicated region
      $region29: #{net_forward.2} parent=5 // pred_check
        %p199 = pneg %p198
      $region30: #{net_forward.2} parent=5 // pred_check_branch
        %201 = sbr.rel (%p199) target = $region32
      $region31: #{net_forward.2} parent=5 // pred_region
        // Predicated region
        $region33: #{net_forward.2} parent=31 // pred_check
          %p202 = pneg %p33
        $region34: #{net_forward.2} parent=31 // pred_check_branch
          %204 = sbr.rel (%p202) target = $region36
        $region35: #{net_forward.2} parent=31 // pred_region
          %p205 = scmp.lt.s32.totalorder %s13, 1
          %s206 = scalar_select %p205, %s13, 1
          %s207 = smul.addr %s206, 7
          %s208 = smul.addr %s207, 8
          %s209 = scalar_lea.vmem %s0, %s208
        $region36: #{net_forward.2} parent=31 // pred_fallthru
          _
      $region32: #{net_forward.2} parent=5 // pred_fallthru
        _
      %p210 = scmp.le.s32.totalorder 1, %s13
      %p211 = scmp.lt.s32.totalorder %s13, 3
      %p212 = pnand %p210, %p211
      %p213 = pneg %p212
      // Predicated region
      $region37: #{net_forward.2} parent=5 // pred_check
        _
      $region38: #{net_forward.2} parent=5 // pred_check_branch
        %215 = sbr.rel (%p212) target = $region40
      $region39: #{net_forward.2} parent=5 // pred_region
        %s216 = ssub.s32 %s13, 1
        // Predicated region
        $region41: #{net_forward.2} parent=39 // pred_check
          %p217 = pneg %p60
        $region42: #{net_forward.2} parent=39 // pred_check_branch
          %219 = sbr.rel (%p217) target = $region44
        $region43: #{net_forward.2} parent=39 // pred_region
          %221 = dma.done [#allocation5], 512
        $region44: #{net_forward.2} parent=39 // pred_fallthru
          _
        // Predicated region
        $region45: #{net_forward.2} parent=39 // pred_check
          %p222 = pneg %p81
        $region46: #{net_forward.2} parent=39 // pred_check_branch
          %224 = sbr.rel (%p222) target = $region48
        $region47: #{net_forward.2} parent=39 // pred_region
          %226 = dma.done [#allocation7], 3072
        $region48: #{net_forward.2} parent=39 // pred_fallthru
          _
        %p227 = scmp.lt.s32.totalorder %s18, 1
        %s228 = scalar_select %p227, %s18, 1
        %s229 = smul.addr %s228, 7
        %s230 = smul.addr %s229, 8
        %s231 = scalar_lea.vmem %s0, %s230
        %p232 = pneg %p39
        %p233 = pneg %p36
        %p234 = pneg %p60
        %p235 = pneg %p57
        %p236 = pneg %p81
        %p237 = pneg %p78
        %p238 = pneg %p102
        %p239 = pneg %p99
        %p240 = pneg %p123
        %p241 = pneg %p120
        %p242 = pneg %p149
        %p243 = pneg %p146
        %p244 = scmp.lt.s32.totalorder %s18, 1
        %s245 = scalar_select %p244, %s18, 1
        %s246 = smul.addr %s245, 40
        %s247 = smul.addr %s246, 8
        %s248 = scalar_lea.vmem %s5, %s247
        %p249 = scmp.lt.s32.totalorder %s18, 1
        %s250 = scalar_select %p249, %s18, 1
        %s251 = smul.addr %s250, 7
        %s252 = smul.addr %s251, 8
        %s253 = scalar_lea.vmem %s0, %s252
        %p254 = scmp.lt.s32.totalorder %s18, 1
        %s255 = scalar_select %p254, %s18, 1
        %s256 = smul.addr %s255, 40
        %s257 = smul.addr %s256, 8
        %s258 = scalar_lea.vmem %s5, %s257
        %v259 = vld [vmem:[%s253] sm:$0xff]
        %v260 = vld [vmem:[%s253 + $0x8] sm:$0xff]
        %v261 = vld [vmem:[%s253 + $0x10] sm:$0xff]
        %v262 = vld [vmem:[%s253 + $0x18] sm:$0xff]
        %v263 = vld [vmem:[%s253 + $0x20] sm:$0xff]
        %v264 = vld [vmem:[%s253 + $0x28] sm:$0xff]
        %v265 = vld [vmem:[%s253 + $0x30] sm:$0xff]
        %266 = vst [vmem:[#allocation2] sm:$0xff] %v259
        %267 = vst [vmem:[#allocation2 + $0x8] sm:$0xff] %v260
        %268 = vst [vmem:[#allocation2 + $0x10] sm:$0xff] %v261
        %269 = vst [vmem:[#allocation2 + $0x18] sm:$0xff] %v262
        %270 = vst [vmem:[#allocation2 + $0x20] sm:$0xff] %v263
        %271 = vst [vmem:[#allocation2 + $0x28] sm:$0xff] %v264
        %vm272 = vcmask 572416
        %273 = vst.msk [vmem:[#allocation2 + $0x30] sm:$0xff] %vm272, %v265
        %281 = vrot.lane.b32.xlu0 %v259, 127
        %v282 = vpop.permute.xlu0 %281
        %283 = vrot.lane.b32.xlu0 %v260, 127
        %v284 = vpop.permute.xlu0 %283
        %285 = vrot.lane.b32.xlu0 %v261, 127
        %v286 = vpop.permute.xlu0 %285
        %287 = vrot.lane.b32.xlu0 %v262, 127
        %v288 = vpop.permute.xlu0 %287
        %289 = vrot.lane.b32.xlu0 %v263, 127
        %v290 = vpop.permute.xlu0 %289
        %291 = vrot.lane.b32.xlu0 %v264, 127
        %v292 = vpop.permute.xlu0 %291
        %293 = vrot.lane.b32.xlu0 %v265, 127
        %v294 = vpop.permute.xlu0 %293
        %vm295 = vcmask 1039360
        %v296 = vsel %vm295, %v282, %v284
        %v297 = vsel %vm295, %v284, %v286
        %v298 = vsel %vm295, %v286, %v288
        %v299 = vsel %vm295, %v288, %v290
        %v300 = vsel %vm295, %v290, %v292
        %v301 = vsel %vm295, %v292, %v294
        %309 = vst [vmem:[#allocation2 + $0x38] sm:$0xff] %v296
        %310 = vst [vmem:[#allocation2 + $0x40] sm:$0xff] %v297
        %311 = vst [vmem:[#allocation2 + $0x48] sm:$0xff] %v298
        %312 = vst [vmem:[#allocation2 + $0x50] sm:$0xff] %v299
        %313 = vst [vmem:[#allocation2 + $0x58] sm:$0xff] %v300
        %314 = vst [vmem:[#allocation2 + $0x60] sm:$0xff] %v301
        %315 = vst.msk [vmem:[#allocation2 + $0x68] sm:$0xff] %vm272, %v294
        %316 = vrot.lane.b32.xlu0 %v259, 126
        %v317 = vpop.permute.xlu0 %316
        %318 = vrot.lane.b32.xlu0 %v260, 126
        %v319 = vpop.permute.xlu0 %318
        %320 = vrot.lane.b32.xlu0 %v261, 126
        %v321 = vpop.permute.xlu0 %320
        %322 = vrot.lane.b32.xlu0 %v262, 126
        %v323 = vpop.permute.xlu0 %322
        %324 = vrot.lane.b32.xlu0 %v263, 126
        %v325 = vpop.permute.xlu0 %324
        %326 = vrot.lane.b32.xlu0 %v264, 126
        %v327 = vpop.permute.xlu0 %326
        %328 = vrot.lane.b32.xlu0 %v265, 126
        %v329 = vpop.permute.xlu0 %328
        %vm330 = vcmask 1031168
        %v331 = vsel %vm330, %v317, %v319
        %v332 = vsel %vm330, %v319, %v321
        %v333 = vsel %vm330, %v321, %v323
        %v334 = vsel %vm330, %v323, %v325
        %v335 = vsel %vm330, %v325, %v327
        %v336 = vsel %vm330, %v327, %v329
        %344 = vst [vmem:[#allocation2 + $0x70] sm:$0xff] %v331
        %345 = vst [vmem:[#allocation2 + $0x78] sm:$0xff] %v332
        %346 = vst [vmem:[#allocation2 + $0x80] sm:$0xff] %v333
        %347 = vst [vmem:[#allocation2 + $0x88] sm:$0xff] %v334
        %348 = vst [vmem:[#allocation2 + $0x90] sm:$0xff] %v335
        %349 = vst [vmem:[#allocation2 + $0x98] sm:$0xff] %v336
        %350 = vst.msk [vmem:[#allocation2 + $0xa0] sm:$0xff] %vm272, %v329
        %351 = vrot.lane.b32.xlu0 %v259, 100
        %v352 = vpop.permute.xlu0 %351
        %353 = vrot.lane.b32.xlu0 %v260, 100
        %v354 = vpop.permute.xlu0 %353
        %355 = vrot.lane.b32.xlu0 %v261, 100
        %v356 = vpop.permute.xlu0 %355
        %357 = vrot.lane.b32.xlu0 %v262, 100
        %v358 = vpop.permute.xlu0 %357
        %359 = vrot.lane.b32.xlu0 %v263, 100
        %v360 = vpop.permute.xlu0 %359
        %361 = vrot.lane.b32.xlu0 %v264, 100
        %v362 = vpop.permute.xlu0 %361
        %363 = vrot.lane.b32.xlu0 %v265, 100
        %v364 = vpop.permute.xlu0 %363
        %vm365 = vcmask 818176
        %v366 = vsel %vm365, %v352, %v354
        %v367 = vsel %vm365, %v354, %v356
        %v368 = vsel %vm365, %v356, %v358
        %v369 = vsel %vm365, %v358, %v360
        %v370 = vsel %vm365, %v360, %v362
        %v371 = vsel %vm365, %v362, %v364
        %379 = vst [vmem:[#allocation2 + $0xa8] sm:$0xff] %v366
        %380 = vst [vmem:[#allocation2 + $0xb0] sm:$0xff] %v367
        %381 = vst [vmem:[#allocation2 + $0xb8] sm:$0xff] %v368
        %382 = vst [vmem:[#allocation2 + $0xc0] sm:$0xff] %v369
        %383 = vst [vmem:[#allocation2 + $0xc8] sm:$0xff] %v370
        %384 = vst [vmem:[#allocation2 + $0xd0] sm:$0xff] %v371
        %385 = vst.msk [vmem:[#allocation2 + $0xd8] sm:$0xff] %vm272, %v364
        %386 = vrot.lane.b32.xlu0 %v259, 99
        %v387 = vpop.permute.xlu0 %386
        %388 = vrot.lane.b32.xlu0 %v260, 99
        %v389 = vpop.permute.xlu0 %388
        %390 = vrot.lane.b32.xlu0 %v261, 99
        %v391 = vpop.permute.xlu0 %390
        %392 = vrot.lane.b32.xlu0 %v262, 99
        %v393 = vpop.permute.xlu0 %392
        %394 = vrot.lane.b32.xlu0 %v263, 99
        %v395 = vpop.permute.xlu0 %394
        %396 = vrot.lane.b32.xlu0 %v264, 99
        %v397 = vpop.permute.xlu0 %396
        %398 = vrot.lane.b32.xlu0 %v265, 99
        %v399 = vpop.permute.xlu0 %398
        %vm400 = vcmask 809984
        %v401 = vsel %vm400, %v387, %v389
        %v402 = vsel %vm400, %v389, %v391
        %v403 = vsel %vm400, %v391, %v393
        %v404 = vsel %vm400, %v393, %v395
        %v405 = vsel %vm400, %v395, %v397
        %v406 = vsel %vm400, %v397, %v399
        %414 = vst [vmem:[#allocation2 + $0xe0] sm:$0xff] %v401
        %415 = vst [vmem:[#allocation2 + $0xe8] sm:$0xff] %v402
        %416 = vst [vmem:[#allocation2 + $0xf0] sm:$0xff] %v403
        %417 = vst [vmem:[#allocation2 + $0xf8] sm:$0xff] %v404
        %418 = vst [vmem:[#allocation2 + $0x100] sm:$0xff] %v405
        %419 = vst [vmem:[#allocation2 + $0x108] sm:$0xff] %v406
        %420 = vst.msk [vmem:[#allocation2 + $0x110] sm:$0xff] %vm272, %v399
        %421 = vrot.lane.b32.xlu0 %v259, 98
        %v422 = vpop.permute.xlu0 %421
        %423 = vrot.lane.b32.xlu0 %v260, 98
        %v424 = vpop.permute.xlu0 %423
        %425 = vrot.lane.b32.xlu0 %v261, 98
        %v426 = vpop.permute.xlu0 %425
        %427 = vrot.lane.b32.xlu0 %v262, 98
        %v428 = vpop.permute.xlu0 %427
        %429 = vrot.lane.b32.xlu0 %v263, 98
        %v430 = vpop.permute.xlu0 %429
        %431 = vrot.lane.b32.xlu0 %v264, 98
        %v432 = vpop.permute.xlu0 %431
        %433 = vrot.lane.b32.xlu0 %v265, 98
        %v434 = vpop.permute.xlu0 %433
        %vm435 = vcmask 801792
        %v436 = vsel %vm435, %v422, %v424
        %v437 = vsel %vm435, %v424, %v426
        %v438 = vsel %vm435, %v426, %v428
        %v439 = vsel %vm435, %v428, %v430
        %v440 = vsel %vm435, %v430, %v432
        %v441 = vsel %vm435, %v432, %v434
        %449 = vst [vmem:[#allocation2 + $0x118] sm:$0xff] %v436
        %450 = vst [vmem:[#allocation2 + $0x120] sm:$0xff] %v437
        %451 = vst [vmem:[#allocation2 + $0x128] sm:$0xff] %v438
        %452 = vst [vmem:[#allocation2 + $0x130] sm:$0xff] %v439
        %453 = vst [vmem:[#allocation2 + $0x138] sm:$0xff] %v440
        %454 = vst [vmem:[#allocation2 + $0x140] sm:$0xff] %v441
        %455 = vst.msk [vmem:[#allocation2 + $0x148] sm:$0xff] %vm272, %v434
        %456 = vrot.lane.b32.xlu0 %v259, 72
        %v457 = vpop.permute.xlu0 %456
        %458 = vrot.lane.b32.xlu0 %v260, 72
        %v459 = vpop.permute.xlu0 %458
        %460 = vrot.lane.b32.xlu0 %v261, 72
        %v461 = vpop.permute.xlu0 %460
        %462 = vrot.lane.b32.xlu0 %v262, 72
        %v463 = vpop.permute.xlu0 %462
        %464 = vrot.lane.b32.xlu0 %v263, 72
        %v465 = vpop.permute.xlu0 %464
        %466 = vrot.lane.b32.xlu0 %v264, 72
        %v467 = vpop.permute.xlu0 %466
        %468 = vrot.lane.b32.xlu0 %v265, 72
        %v469 = vpop.permute.xlu0 %468
        %vm470 = vcmask 588800
        %v471 = vsel %vm470, %v457, %v459
        %v472 = vsel %vm470, %v459, %v461
        %v473 = vsel %vm470, %v461, %v463
        %v474 = vsel %vm470, %v463, %v465
        %v475 = vsel %vm470, %v465, %v467
        %v476 = vsel %vm470, %v467, %v469
        %484 = vst [vmem:[#allocation2 + $0x150] sm:$0xff] %v471
        %485 = vst [vmem:[#allocation2 + $0x158] sm:$0xff] %v472
        %486 = vst [vmem:[#allocation2 + $0x160] sm:$0xff] %v473
        %487 = vst [vmem:[#allocation2 + $0x168] sm:$0xff] %v474
        %488 = vst [vmem:[#allocation2 + $0x170] sm:$0xff] %v475
        %489 = vst [vmem:[#allocation2 + $0x178] sm:$0xff] %v476
        %490 = vst.msk [vmem:[#allocation2 + $0x180] sm:$0xff] %vm272, %v469
        %491 = vrot.lane.b32.xlu0 %v259, 71
        %v492 = vpop.permute.xlu0 %491
        %493 = vrot.lane.b32.xlu0 %v260, 71
        %v494 = vpop.permute.xlu0 %493
        %495 = vrot.lane.b32.xlu0 %v261, 71
        %v496 = vpop.permute.xlu0 %495
        %497 = vrot.lane.b32.xlu0 %v262, 71
        %v498 = vpop.permute.xlu0 %497
        %499 = vrot.lane.b32.xlu0 %v263, 71
        %v500 = vpop.permute.xlu0 %499
        %501 = vrot.lane.b32.xlu0 %v264, 71
        %v502 = vpop.permute.xlu0 %501
        %503 = vrot.lane.b32.xlu0 %v265, 71
        %v504 = vpop.permute.xlu0 %503
        %vm505 = vcmask 580608
        %v506 = vsel %vm505, %v492, %v494
        %v507 = vsel %vm505, %v494, %v496
        %v508 = vsel %vm505, %v496, %v498
        %v509 = vsel %vm505, %v498, %v500
        %v510 = vsel %vm505, %v500, %v502
        %v511 = vsel %vm505, %v502, %v504
        %519 = vst [vmem:[#allocation2 + $0x188] sm:$0xff] %v506
        %520 = vst [vmem:[#allocation2 + $0x190] sm:$0xff] %v507
        %521 = vst [vmem:[#allocation2 + $0x198] sm:$0xff] %v508
        %522 = vst [vmem:[#allocation2 + $0x1a0] sm:$0xff] %v509
        %523 = vst [vmem:[#allocation2 + $0x1a8] sm:$0xff] %v510
        %524 = vst [vmem:[#allocation2 + $0x1b0] sm:$0xff] %v511
        %525 = vst.msk [vmem:[#allocation2 + $0x1b8] sm:$0xff] %vm272, %v504
        %526 = vrot.lane.b32.xlu0 %v259, 70
        %v527 = vpop.permute.xlu0 %526
        %528 = vrot.lane.b32.xlu0 %v260, 70
        %v529 = vpop.permute.xlu0 %528
        %530 = vrot.lane.b32.xlu0 %v261, 70
        %v531 = vpop.permute.xlu0 %530
        %532 = vrot.lane.b32.xlu0 %v262, 70
        %v533 = vpop.permute.xlu0 %532
        %534 = vrot.lane.b32.xlu0 %v263, 70
        %v535 = vpop.permute.xlu0 %534
        %536 = vrot.lane.b32.xlu0 %v264, 70
        %v537 = vpop.permute.xlu0 %536
        %538 = vrot.lane.b32.xlu0 %v265, 70
        %v539 = vpop.permute.xlu0 %538
        %v540 = vsel %vm272, %v527, %v529
        %v541 = vsel %vm272, %v529, %v531
        %v542 = vsel %vm272, %v531, %v533
        %v543 = vsel %vm272, %v533, %v535
        %v544 = vsel %vm272, %v535, %v537
        %v545 = vsel %vm272, %v537, %v539
        %553 = vst [vmem:[#allocation2 + $0x1c0] sm:$0xff] %v540
        %554 = vst [vmem:[#allocation2 + $0x1c8] sm:$0xff] %v541
        %555 = vst [vmem:[#allocation2 + $0x1d0] sm:$0xff] %v542
        %556 = vst [vmem:[#allocation2 + $0x1d8] sm:$0xff] %v543
        %557 = vst [vmem:[#allocation2 + $0x1e0] sm:$0xff] %v544
        %558 = vst [vmem:[#allocation2 + $0x1e8] sm:$0xff] %v545
        %559 = vst.msk [vmem:[#allocation2 + $0x1f0] sm:$0xff] %vm272, %v539
        %v560 = vld [vmem:[#allocation4] sm:$0xff]
        %v561 = vld [vmem:[#allocation4 + $0x8] sm:$0xff]
        %v562 = vld [vmem:[#allocation4 + $0x10] sm:$0xff]
        %v563 = vld [vmem:[#allocation4 + $0x18] sm:$0xff]
        %v564 = vld [vmem:[#allocation2] sm:$0xff]
        %v565 = vld [vmem:[#allocation2 + $0x8] sm:$0xff]
        %v566 = vld [vmem:[#allocation2 + $0x10] sm:$0xff]
        %v567 = vld [vmem:[#allocation2 + $0x18] sm:$0xff]
        %v568 = vld [vmem:[#allocation2 + $0x20] sm:$0xff]
        %v569 = vld [vmem:[#allocation2 + $0x28] sm:$0xff]
        %v570 = vld [vmem:[#allocation2 + $0x30] sm:$0xff]
        %v571 = vld [vmem:[#allocation2 + $0x38] sm:$0xff]
        %v572 = vld [vmem:[#allocation2 + $0x40] sm:$0xff]
        %v573 = vld [vmem:[#allocation2 + $0x48] sm:$0xff]
        %v574 = vld [vmem:[#allocation2 + $0x50] sm:$0xff]
        %v575 = vld [vmem:[#allocation2 + $0x58] sm:$0xff]
        %v576 = vld [vmem:[#allocation2 + $0x60] sm:$0xff]
        %v577 = vld [vmem:[#allocation2 + $0x68] sm:$0xff]
        %v578 = vld [vmem:[#allocation2 + $0x70] sm:$0xff]
        %v579 = vld [vmem:[#allocation2 + $0x78] sm:$0xff]
        %v580 = vld [vmem:[#allocation2 + $0x80] sm:$0xff]
        %v581 = vld [vmem:[#allocation2 + $0x88] sm:$0xff]
        %v582 = vld [vmem:[#allocation2 + $0x90] sm:$0xff]
        %v583 = vld [vmem:[#allocation2 + $0x98] sm:$0xff]
        %v584 = vld [vmem:[#allocation2 + $0xa0] sm:$0xff]
        %v585 = vld [vmem:[#allocation2 + $0xa8] sm:$0xff]
        %v586 = vld [vmem:[#allocation2 + $0xb0] sm:$0xff]
        %v587 = vld [vmem:[#allocation2 + $0xb8] sm:$0xff]
        %v588 = vld [vmem:[#allocation2 + $0xc0] sm:$0xff]
        %v589 = vld [vmem:[#allocation2 + $0xc8] sm:$0xff]
        %v590 = vld [vmem:[#allocation2 + $0xd0] sm:$0xff]
        %v591 = vld [vmem:[#allocation2 + $0xd8] sm:$0xff]
        %v592 = vld [vmem:[#allocation2 + $0xe0] sm:$0xff]
        %v593 = vld [vmem:[#allocation2 + $0xe8] sm:$0xff]
        %v594 = vld [vmem:[#allocation2 + $0xf0] sm:$0xff]
        %v595 = vld [vmem:[#allocation2 + $0xf8] sm:$0xff]
        %v596 = vld [vmem:[#allocation2 + $0x100] sm:$0xff]
        %v597 = vld [vmem:[#allocation2 + $0x108] sm:$0xff]
        %v598 = vld [vmem:[#allocation2 + $0x110] sm:$0xff]
        %v599 = vld [vmem:[#allocation2 + $0x118] sm:$0xff]
        %v600 = vld [vmem:[#allocation2 + $0x120] sm:$0xff]
        %v601 = vld [vmem:[#allocation2 + $0x128] sm:$0xff]
        %v602 = vld [vmem:[#allocation2 + $0x130] sm:$0xff]
        %v603 = vld [vmem:[#allocation2 + $0x138] sm:$0xff]
        %v604 = vld [vmem:[#allocation2 + $0x140] sm:$0xff]
        %v605 = vld [vmem:[#allocation2 + $0x148] sm:$0xff]
        %v606 = vld [vmem:[#allocation2 + $0x150] sm:$0xff]
        %v607 = vld [vmem:[#allocation2 + $0x158] sm:$0xff]
        %v608 = vld [vmem:[#allocation2 + $0x160] sm:$0xff]
        %v609 = vld [vmem:[#allocation2 + $0x168] sm:$0xff]
        %v610 = vld [vmem:[#allocation2 + $0x170] sm:$0xff]
        %v611 = vld [vmem:[#allocation2 + $0x178] sm:$0xff]
        %v612 = vld [vmem:[#allocation2 + $0x180] sm:$0xff]
        %v613 = vld [vmem:[#allocation2 + $0x188] sm:$0xff]
        %v614 = vld [vmem:[#allocation2 + $0x190] sm:$0xff]
        %v615 = vld [vmem:[#allocation2 + $0x198] sm:$0xff]
        %v616 = vld [vmem:[#allocation2 + $0x1a0] sm:$0xff]
        %v617 = vld [vmem:[#allocation2 + $0x1a8] sm:$0xff]
        %v618 = vld [vmem:[#allocation2 + $0x1b0] sm:$0xff]
        %v619 = vld [vmem:[#allocation2 + $0x1b8] sm:$0xff]
        %v620 = vld [vmem:[#allocation2 + $0x1c0] sm:$0xff]
        %v621 = vld [vmem:[#allocation2 + $0x1c8] sm:$0xff]
        %v622 = vld [vmem:[#allocation2 + $0x1d0] sm:$0xff]
        %v623 = vld [vmem:[#allocation2 + $0x1d8] sm:$0xff]
        %v624 = vld [vmem:[#allocation2 + $0x1e0] sm:$0xff]
        %v625 = vld [vmem:[#allocation2 + $0x1e8] sm:$0xff]
        %v626 = vld [vmem:[#allocation2 + $0x1f0] sm:$0xff]
        %v627 = vld [vmem:[%s3] sm:$0xff]
        %v628 = vld [vmem:[%s3 + $0x8] sm:$0xff]
        %v629 = vld [vmem:[%s3 + $0x10] sm:$0xff]
        %v630 = vld [vmem:[%s3 + $0x18] sm:$0xff]
        %632 = vset.pattern.permute.xlu0 0
        %633 = vperm.xlu0 %632, %v627
        %v634 = vpop.permute.xlu0 %633
        %637 = vset.pattern.permute.xlu0 0
        %638 = vperm.xlu0 %637, %v628
        %v639 = vpop.permute.xlu0 %638
        %642 = vset.pattern.permute.xlu0 0
        %643 = vperm.xlu0 %642, %v629
        %v644 = vpop.permute.xlu0 %643
        %647 = vset.pattern.permute.xlu0 0
        %648 = vperm.xlu0 %647, %v630
        %v649 = vpop.permute.xlu0 %648
        %v652 = vsel %vm470, %v560, 0
        %v655 = vsel %vm470, %v561, 0
        %v658 = vsel %vm470, %v562, 0
        %v661 = vsel %vm470, %v563, 0
        %663 = vmatpush.msra.mxu0 0.0
        %664 = vmatpush.msra.mxu0 0.0
        %665 = vmatpush.msra.mxu0 0.0
        %666 = vmatpush.msra.mxu0 0.0
        %667 = vmatpush.msra.mxu0 0.0
        %668 = vmatpush.msra.mxu0 0.0
        %669 = vmatpush.msra.mxu0 0.0
        %670 = vmatpush.msra.mxu0 %v620
        %671 = vmatpush.msra.mxu0 %v613
        %672 = vmatpush.msra.mxu0 %v606
        %673 = vmatpush.msra.mxu0 %v599
        %674 = vmatpush.msra.mxu0 %v592
        %675 = vmatpush.msra.mxu0 %v585
        %676 = vmatpush.msra.mxu0 %v578
        %677 = vmatpush.msra.mxu0 %v571
        %678 = vmatpush.msra.mxu0 %v564
        %679 = vmatmul.f32.gmra.mxu0 %v652
        %v680 = vpop.f32.mrf.mxu0
        %v681 = vadd.f32 %v634, %v680
        %682 = vmatmul.f32.gmra.mxu0 %v655
        %v683 = vpop.f32.mrf.mxu0
        %v684 = vadd.f32 %v639, %v683
        %685 = vmatmul.f32.gmra.mxu0 %v658
        %v686 = vpop.f32.mrf.mxu0
        %v687 = vadd.f32 %v644, %v686
        %688 = vmatmul.f32.gmra.mxu0 %v661
        %v689 = vpop.f32.mrf.mxu0
        %v690 = vadd.f32 %v649, %v689
        %691 = vdwg.mxu0
        %692 = vmatpush.msra.mxu0 0.0
        %693 = vmatpush.msra.mxu0 0.0
        %694 = vmatpush.msra.mxu0 0.0
        %695 = vmatpush.msra.mxu0 0.0
        %696 = vmatpush.msra.mxu0 0.0
        %697 = vmatpush.msra.mxu0 0.0
        %698 = vmatpush.msra.mxu0 0.0
        %699 = vmatpush.msra.mxu0 %v621
        %700 = vmatpush.msra.mxu0 %v614
        %701 = vmatpush.msra.mxu0 %v607
        %702 = vmatpush.msra.mxu0 %v600
        %703 = vmatpush.msra.mxu0 %v593
        %704 = vmatpush.msra.mxu0 %v586
        %705 = vmatpush.msra.mxu0 %v579
        %706 = vmatpush.msra.mxu0 %v572
        %707 = vmatpush.msra.mxu0 %v565
        %708 = vmatmul.f32.gmra.mxu0 %v652
        %v709 = vpop.f32.mrf.mxu0
        %v710 = vadd.f32 %v634, %v709
        %711 = vmatmul.f32.gmra.mxu0 %v655
        %v712 = vpop.f32.mrf.mxu0
        %v713 = vadd.f32 %v639, %v712
        %714 = vmatmul.f32.gmra.mxu0 %v658
        %v715 = vpop.f32.mrf.mxu0
        %v716 = vadd.f32 %v644, %v715
        %717 = vmatmul.f32.gmra.mxu0 %v661
        %v718 = vpop.f32.mrf.mxu0
        %v719 = vadd.f32 %v649, %v718
        %720 = vdwg.mxu0
        %721 = vmatpush.msra.mxu0 0.0
        %722 = vmatpush.msra.mxu0 0.0
        %723 = vmatpush.msra.mxu0 0.0
        %724 = vmatpush.msra.mxu0 0.0
        %725 = vmatpush.msra.mxu0 0.0
        %726 = vmatpush.msra.mxu0 0.0
        %727 = vmatpush.msra.mxu0 0.0
        %728 = vmatpush.msra.mxu0 %v622
        %729 = vmatpush.msra.mxu0 %v615
        %730 = vmatpush.msra.mxu0 %v608
        %731 = vmatpush.msra.mxu0 %v601
        %732 = vmatpush.msra.mxu0 %v594
        %733 = vmatpush.msra.mxu0 %v587
        %734 = vmatpush.msra.mxu0 %v580
        %735 = vmatpush.msra.mxu0 %v573
        %736 = vmatpush.msra.mxu0 %v566
        %737 = vmatmul.f32.gmra.mxu0 %v652
        %v738 = vpop.f32.mrf.mxu0
        %v739 = vadd.f32 %v634, %v738
        %740 = vmatmul.f32.gmra.mxu0 %v655
        %v741 = vpop.f32.mrf.mxu0
        %v742 = vadd.f32 %v639, %v741
        %743 = vmatmul.f32.gmra.mxu0 %v658
        %v744 = vpop.f32.mrf.mxu0
        %v745 = vadd.f32 %v644, %v744
        %746 = vmatmul.f32.gmra.mxu0 %v661
        %v747 = vpop.f32.mrf.mxu0
        %v748 = vadd.f32 %v649, %v747
        %749 = vdwg.mxu0
        %750 = vmatpush.msra.mxu0 0.0
        %751 = vmatpush.msra.mxu0 0.0
        %752 = vmatpush.msra.mxu0 0.0
        %753 = vmatpush.msra.mxu0 0.0
        %754 = vmatpush.msra.mxu0 0.0
        %755 = vmatpush.msra.mxu0 0.0
        %756 = vmatpush.msra.mxu0 0.0
        %757 = vmatpush.msra.mxu0 %v623
        %758 = vmatpush.msra.mxu0 %v616
        %759 = vmatpush.msra.mxu0 %v609
        %760 = vmatpush.msra.mxu0 %v602
        %761 = vmatpush.msra.mxu0 %v595
        %762 = vmatpush.msra.mxu0 %v588
        %763 = vmatpush.msra.mxu0 %v581
        %764 = vmatpush.msra.mxu0 %v574
        %765 = vmatpush.msra.mxu0 %v567
        %766 = vmatmul.f32.gmra.mxu0 %v652
        %v767 = vpop.f32.mrf.mxu0
        %v768 = vadd.f32 %v634, %v767
        %769 = vmatmul.f32.gmra.mxu0 %v655
        %v770 = vpop.f32.mrf.mxu0
        %v771 = vadd.f32 %v639, %v770
        %772 = vmatmul.f32.gmra.mxu0 %v658
        %v773 = vpop.f32.mrf.mxu0
        %v774 = vadd.f32 %v644, %v773
        %775 = vmatmul.f32.gmra.mxu0 %v661
        %v776 = vpop.f32.mrf.mxu0
        %v777 = vadd.f32 %v649, %v776
        %778 = vdwg.mxu0
        %779 = vmatpush.msra.mxu0 0.0
        %780 = vmatpush.msra.mxu0 0.0
        %781 = vmatpush.msra.mxu0 0.0
        %782 = vmatpush.msra.mxu0 0.0
        %783 = vmatpush.msra.mxu0 0.0
        %784 = vmatpush.msra.mxu0 0.0
        %785 = vmatpush.msra.mxu0 0.0
        %786 = vmatpush.msra.mxu0 %v624
        %787 = vmatpush.msra.mxu0 %v617
        %788 = vmatpush.msra.mxu0 %v610
        %789 = vmatpush.msra.mxu0 %v603
        %790 = vmatpush.msra.mxu0 %v596
        %791 = vmatpush.msra.mxu0 %v589
        %792 = vmatpush.msra.mxu0 %v582
        %793 = vmatpush.msra.mxu0 %v575
        %794 = vmatpush.msra.mxu0 %v568
        %795 = vmatmul.f32.gmra.mxu0 %v652
        %v796 = vpop.f32.mrf.mxu0
        %v797 = vadd.f32 %v634, %v796
        %798 = vmatmul.f32.gmra.mxu0 %v655
        %v799 = vpop.f32.mrf.mxu0
        %v800 = vadd.f32 %v639, %v799
        %801 = vmatmul.f32.gmra.mxu0 %v658
        %v802 = vpop.f32.mrf.mxu0
        %v803 = vadd.f32 %v644, %v802
        %804 = vmatmul.f32.gmra.mxu0 %v661
        %v805 = vpop.f32.mrf.mxu0
        %v806 = vadd.f32 %v649, %v805
        %807 = vdwg.mxu0
        %808 = vmatpush.msra.mxu0 0.0
        %809 = vmatpush.msra.mxu0 0.0
        %810 = vmatpush.msra.mxu0 0.0
        %811 = vmatpush.msra.mxu0 0.0
        %812 = vmatpush.msra.mxu0 0.0
        %813 = vmatpush.msra.mxu0 0.0
        %814 = vmatpush.msra.mxu0 0.0
        %815 = vmatpush.msra.mxu0 %v625
        %816 = vmatpush.msra.mxu0 %v618
        %817 = vmatpush.msra.mxu0 %v611
        %818 = vmatpush.msra.mxu0 %v604
        %819 = vmatpush.msra.mxu0 %v597
        %820 = vmatpush.msra.mxu0 %v590
        %821 = vmatpush.msra.mxu0 %v583
        %822 = vmatpush.msra.mxu0 %v576
        %823 = vmatpush.msra.mxu0 %v569
        %824 = vmatmul.f32.gmra.mxu0 %v652
        %v825 = vpop.f32.mrf.mxu0
        %v826 = vadd.f32 %v634, %v825
        %827 = vmatmul.f32.gmra.mxu0 %v655
        %v828 = vpop.f32.mrf.mxu0
        %v829 = vadd.f32 %v639, %v828
        %830 = vmatmul.f32.gmra.mxu0 %v658
        %v831 = vpop.f32.mrf.mxu0
        %v832 = vadd.f32 %v644, %v831
        %833 = vmatmul.f32.gmra.mxu0 %v661
        %v834 = vpop.f32.mrf.mxu0
        %v835 = vadd.f32 %v649, %v834
        %836 = vdwg.mxu0
        %837 = vmatpush.msra.mxu0 0.0
        %838 = vmatpush.msra.mxu0 0.0
        %839 = vmatpush.msra.mxu0 0.0
        %840 = vmatpush.msra.mxu0 0.0
        %841 = vmatpush.msra.mxu0 0.0
        %842 = vmatpush.msra.mxu0 0.0
        %843 = vmatpush.msra.mxu0 0.0
        %844 = vmatpush.msra.mxu0 %v626
        %845 = vmatpush.msra.mxu0 %v619
        %846 = vmatpush.msra.mxu0 %v612
        %847 = vmatpush.msra.mxu0 %v605
        %848 = vmatpush.msra.mxu0 %v598
        %849 = vmatpush.msra.mxu0 %v591
        %850 = vmatpush.msra.mxu0 %v584
        %851 = vmatpush.msra.mxu0 %v577
        %852 = vmatpush.msra.mxu0 %v570
        %853 = vmatmul.f32.gmra.mxu0 %v652
        %v854 = vpop.f32.mrf.mxu0
        %v855 = vadd.f32 %v634, %v854
        %856 = vmatmul.f32.gmra.mxu0 %v655
        %v857 = vpop.f32.mrf.mxu0
        %v858 = vadd.f32 %v639, %v857
        %859 = vmatmul.f32.gmra.mxu0 %v658
        %v860 = vpop.f32.mrf.mxu0
        %v861 = vadd.f32 %v644, %v860
        %862 = vmatmul.f32.gmra.mxu0 %v661
        %v863 = vpop.f32.mrf.mxu0
        %v864 = vadd.f32 %v649, %v863
        %865 = vdwg.mxu0
        %v866 = vmax.f32 %v681, 0.0
        %v867 = vmax.f32 %v710, 0.0
        %v868 = vmax.f32 %v739, 0.0
        %v869 = vmax.f32 %v768, 0.0
        %v870 = vmax.f32 %v797, 0.0
        %v871 = vmax.f32 %v826, 0.0
        %v872 = vmax.f32 %v855, 0.0
        %v873 = vmax.f32 %v684, 0.0
        %v874 = vmax.f32 %v713, 0.0
        %v875 = vmax.f32 %v742, 0.0
        %v876 = vmax.f32 %v771, 0.0
        %v877 = vmax.f32 %v800, 0.0
        %v878 = vmax.f32 %v829, 0.0
        %v879 = vmax.f32 %v858, 0.0
        %v880 = vmax.f32 %v687, 0.0
        %v881 = vmax.f32 %v716, 0.0
        %v882 = vmax.f32 %v745, 0.0
        %v883 = vmax.f32 %v774, 0.0
        %v884 = vmax.f32 %v803, 0.0
        %v885 = vmax.f32 %v832, 0.0
        %v886 = vmax.f32 %v861, 0.0
        %v887 = vmax.f32 %v690, 0.0
        %v888 = vmax.f32 %v719, 0.0
        %v889 = vmax.f32 %v748, 0.0
        %v890 = vmax.f32 %v777, 0.0
        %v891 = vmax.f32 %v806, 0.0
        %v892 = vmax.f32 %v835, 0.0
        %v893 = vmax.f32 %v864, 0.0
        %894 = vst [vmem:[#allocation3] sm:$0xff] %v866
        %895 = vst [vmem:[#allocation3 + $0x8] sm:$0xff] %v867
        %896 = vst [vmem:[#allocation3 + $0x10] sm:$0xff] %v868
        %897 = vst [vmem:[#allocation3 + $0x18] sm:$0xff] %v869
        %898 = vst [vmem:[#allocation3 + $0x20] sm:$0xff] %v870
        %899 = vst [vmem:[#allocation3 + $0x28] sm:$0xff] %v871
        %vm900 = vcmask 97280
        %901 = vst.msk [vmem:[#allocation3 + $0x30] sm:$0xff] %vm900, %v872
        %902 = vst [vmem:[#allocation3 + $0x38] sm:$0xff] %v873
        %903 = vst [vmem:[#allocation3 + $0x40] sm:$0xff] %v874
        %904 = vst [vmem:[#allocation3 + $0x48] sm:$0xff] %v875
        %905 = vst [vmem:[#allocation3 + $0x50] sm:$0xff] %v876
        %906 = vst [vmem:[#allocation3 + $0x58] sm:$0xff] %v877
        %907 = vst [vmem:[#allocation3 + $0x60] sm:$0xff] %v878
        %908 = vst.msk [vmem:[#allocation3 + $0x68] sm:$0xff] %vm900, %v879
        %909 = vst [vmem:[#allocation3 + $0x70] sm:$0xff] %v880
        %910 = vst [vmem:[#allocation3 + $0x78] sm:$0xff] %v881
        %911 = vst [vmem:[#allocation3 + $0x80] sm:$0xff] %v882
        %912 = vst [vmem:[#allocation3 + $0x88] sm:$0xff] %v883
        %913 = vst [vmem:[#allocation3 + $0x90] sm:$0xff] %v884
        %914 = vst [vmem:[#allocation3 + $0x98] sm:$0xff] %v885
        %915 = vst.msk [vmem:[#allocation3 + $0xa0] sm:$0xff] %vm900, %v886
        %916 = vst [vmem:[#allocation3 + $0xa8] sm:$0xff] %v887
        %917 = vst [vmem:[#allocation3 + $0xb0] sm:$0xff] %v888
        %918 = vst [vmem:[#allocation3 + $0xb8] sm:$0xff] %v889
        %919 = vst [vmem:[#allocation3 + $0xc0] sm:$0xff] %v890
        %920 = vst [vmem:[#allocation3 + $0xc8] sm:$0xff] %v891
        %921 = vst [vmem:[#allocation3 + $0xd0] sm:$0xff] %v892
        %922 = vst.msk [vmem:[#allocation3 + $0xd8] sm:$0xff] %vm900, %v893
        %951 = vrot.lane.b32.xlu0 %v866, 127
        %v952 = vpop.permute.xlu0 %951
        %953 = vrot.lane.b32.xlu0 %v867, 127
        %v954 = vpop.permute.xlu0 %953
        %955 = vrot.lane.b32.xlu0 %v868, 127
        %v956 = vpop.permute.xlu0 %955
        %957 = vrot.lane.b32.xlu0 %v869, 127
        %v958 = vpop.permute.xlu0 %957
        %959 = vrot.lane.b32.xlu0 %v870, 127
        %v960 = vpop.permute.xlu0 %959
        %961 = vrot.lane.b32.xlu0 %v871, 127
        %v962 = vpop.permute.xlu0 %961
        %963 = vrot.lane.b32.xlu0 %v872, 127
        %v964 = vpop.permute.xlu0 %963
        %965 = vrot.lane.b32.xlu0 %v873, 127
        %v966 = vpop.permute.xlu0 %965
        %967 = vrot.lane.b32.xlu0 %v874, 127
        %v968 = vpop.permute.xlu0 %967
        %969 = vrot.lane.b32.xlu0 %v875, 127
        %v970 = vpop.permute.xlu0 %969
        %971 = vrot.lane.b32.xlu0 %v876, 127
        %v972 = vpop.permute.xlu0 %971
        %973 = vrot.lane.b32.xlu0 %v877, 127
        %v974 = vpop.permute.xlu0 %973
        %975 = vrot.lane.b32.xlu0 %v878, 127
        %v976 = vpop.permute.xlu0 %975
        %977 = vrot.lane.b32.xlu0 %v879, 127
        %v978 = vpop.permute.xlu0 %977
        %979 = vrot.lane.b32.xlu0 %v880, 127
        %v980 = vpop.permute.xlu0 %979
        %981 = vrot.lane.b32.xlu0 %v881, 127
        %v982 = vpop.permute.xlu0 %981
        %983 = vrot.lane.b32.xlu0 %v882, 127
        %v984 = vpop.permute.xlu0 %983
        %985 = vrot.lane.b32.xlu0 %v883, 127
        %v986 = vpop.permute.xlu0 %985
        %987 = vrot.lane.b32.xlu0 %v884, 127
        %v988 = vpop.permute.xlu0 %987
        %989 = vrot.lane.b32.xlu0 %v885, 127
        %v990 = vpop.permute.xlu0 %989
        %991 = vrot.lane.b32.xlu0 %v886, 127
        %v992 = vpop.permute.xlu0 %991
        %993 = vrot.lane.b32.xlu0 %v887, 127
        %v994 = vpop.permute.xlu0 %993
        %995 = vrot.lane.b32.xlu0 %v888, 127
        %v996 = vpop.permute.xlu0 %995
        %997 = vrot.lane.b32.xlu0 %v889, 127
        %v998 = vpop.permute.xlu0 %997
        %999 = vrot.lane.b32.xlu0 %v890, 127
        %v1000 = vpop.permute.xlu0 %999
        %1001 = vrot.lane.b32.xlu0 %v891, 127
        %v1002 = vpop.permute.xlu0 %1001
        %1003 = vrot.lane.b32.xlu0 %v892, 127
        %v1004 = vpop.permute.xlu0 %1003
        %1005 = vrot.lane.b32.xlu0 %v893, 127
        %v1006 = vpop.permute.xlu0 %1005
        %v1007 = vsel %vm295, %v952, %v954
        %v1008 = vsel %vm295, %v954, %v956
        %v1009 = vsel %vm295, %v956, %v958
        %v1010 = vsel %vm295, %v958, %v960
        %v1011 = vsel %vm295, %v960, %v962
        %v1012 = vsel %vm295, %v962, %v964
        %v1013 = vsel %vm295, %v966, %v968
        %v1014 = vsel %vm295, %v968, %v970
        %v1015 = vsel %vm295, %v970, %v972
        %v1016 = vsel %vm295, %v972, %v974
        %v1017 = vsel %vm295, %v974, %v976
        %v1018 = vsel %vm295, %v976, %v978
        %v1019 = vsel %vm295, %v980, %v982
        %v1020 = vsel %vm295, %v982, %v984
        %v1021 = vsel %vm295, %v984, %v986
        %v1022 = vsel %vm295, %v986, %v988
        %v1023 = vsel %vm295, %v988, %v990
        %v1024 = vsel %vm295, %v990, %v992
        %v1025 = vsel %vm295, %v994, %v996
        %v1026 = vsel %vm295, %v996, %v998
        %v1027 = vsel %vm295, %v998, %v1000
        %v1028 = vsel %vm295, %v1000, %v1002
        %v1029 = vsel %vm295, %v1002, %v1004
        %v1030 = vsel %vm295, %v1004, %v1006
        %1059 = vst [vmem:[#allocation3 + $0xe0] sm:$0xff] %v1007
        %1060 = vst [vmem:[#allocation3 + $0xe8] sm:$0xff] %v1008
        %1061 = vst [vmem:[#allocation3 + $0xf0] sm:$0xff] %v1009
        %1062 = vst [vmem:[#allocation3 + $0xf8] sm:$0xff] %v1010
        %1063 = vst [vmem:[#allocation3 + $0x100] sm:$0xff] %v1011
        %1064 = vst [vmem:[#allocation3 + $0x108] sm:$0xff] %v1012
        %1065 = vst.msk [vmem:[#allocation3 + $0x110] sm:$0xff] %vm900, %v964
        %1066 = vst [vmem:[#allocation3 + $0x118] sm:$0xff] %v1013
        %1067 = vst [vmem:[#allocation3 + $0x120] sm:$0xff] %v1014
        %1068 = vst [vmem:[#allocation3 + $0x128] sm:$0xff] %v1015
        %1069 = vst [vmem:[#allocation3 + $0x130] sm:$0xff] %v1016
        %1070 = vst [vmem:[#allocation3 + $0x138] sm:$0xff] %v1017
        %1071 = vst [vmem:[#allocation3 + $0x140] sm:$0xff] %v1018
        %1072 = vst.msk [vmem:[#allocation3 + $0x148] sm:$0xff] %vm900, %v978
        %1073 = vst [vmem:[#allocation3 + $0x150] sm:$0xff] %v1019
        %1074 = vst [vmem:[#allocation3 + $0x158] sm:$0xff] %v1020
        %1075 = vst [vmem:[#allocation3 + $0x160] sm:$0xff] %v1021
        %1076 = vst [vmem:[#allocation3 + $0x168] sm:$0xff] %v1022
        %1077 = vst [vmem:[#allocation3 + $0x170] sm:$0xff] %v1023
        %1078 = vst [vmem:[#allocation3 + $0x178] sm:$0xff] %v1024
        %1079 = vst.msk [vmem:[#allocation3 + $0x180] sm:$0xff] %vm900, %v992
        %1080 = vst [vmem:[#allocation3 + $0x188] sm:$0xff] %v1025
        %1081 = vst [vmem:[#allocation3 + $0x190] sm:$0xff] %v1026
        %1082 = vst [vmem:[#allocation3 + $0x198] sm:$0xff] %v1027
        %1083 = vst [vmem:[#allocation3 + $0x1a0] sm:$0xff] %v1028
        %1084 = vst [vmem:[#allocation3 + $0x1a8] sm:$0xff] %v1029
        %1085 = vst [vmem:[#allocation3 + $0x1b0] sm:$0xff] %v1030
        %1086 = vst.msk [vmem:[#allocation3 + $0x1b8] sm:$0xff] %vm900, %v1006
        %1087 = vrot.lane.b32.xlu0 %v866, 126
        %v1088 = vpop.permute.xlu0 %1087
        %1089 = vrot.lane.b32.xlu0 %v867, 126
        %v1090 = vpop.permute.xlu0 %1089
        %1091 = vrot.lane.b32.xlu0 %v868, 126
        %v1092 = vpop.permute.xlu0 %1091
        %1093 = vrot.lane.b32.xlu0 %v869, 126
        %v1094 = vpop.permute.xlu0 %1093
        %1095 = vrot.lane.b32.xlu0 %v870, 126
        %v1096 = vpop.permute.xlu0 %1095
        %1097 = vrot.lane.b32.xlu0 %v871, 126
        %v1098 = vpop.permute.xlu0 %1097
        %1099 = vrot.lane.b32.xlu0 %v872, 126
        %v1100 = vpop.permute.xlu0 %1099
        %1101 = vrot.lane.b32.xlu0 %v873, 126
        %v1102 = vpop.permute.xlu0 %1101
        %1103 = vrot.lane.b32.xlu0 %v874, 126
        %v1104 = vpop.permute.xlu0 %1103
        %1105 = vrot.lane.b32.xlu0 %v875, 126
        %v1106 = vpop.permute.xlu0 %1105
        %1107 = vrot.lane.b32.xlu0 %v876, 126
        %v1108 = vpop.permute.xlu0 %1107
        %1109 = vrot.lane.b32.xlu0 %v877, 126
        %v1110 = vpop.permute.xlu0 %1109
        %1111 = vrot.lane.b32.xlu0 %v878, 126
        %v1112 = vpop.permute.xlu0 %1111
        %1113 = vrot.lane.b32.xlu0 %v879, 126
        %v1114 = vpop.permute.xlu0 %1113
        %1115 = vrot.lane.b32.xlu0 %v880, 126
        %v1116 = vpop.permute.xlu0 %1115
        %1117 = vrot.lane.b32.xlu0 %v881, 126
        %v1118 = vpop.permute.xlu0 %1117
        %1119 = vrot.lane.b32.xlu0 %v882, 126
        %v1120 = vpop.permute.xlu0 %1119
        %1121 = vrot.lane.b32.xlu0 %v883, 126
        %v1122 = vpop.permute.xlu0 %1121
        %1123 = vrot.lane.b32.xlu0 %v884, 126
        %v1124 = vpop.permute.xlu0 %1123
        %1125 = vrot.lane.b32.xlu0 %v885, 126
        %v1126 = vpop.permute.xlu0 %1125
        %1127 = vrot.lane.b32.xlu0 %v886, 126
        %v1128 = vpop.permute.xlu0 %1127
        %1129 = vrot.lane.b32.xlu0 %v887, 126
        %v1130 = vpop.permute.xlu0 %1129
        %1131 = vrot.lane.b32.xlu0 %v888, 126
        %v1132 = vpop.permute.xlu0 %1131
        %1133 = vrot.lane.b32.xlu0 %v889, 126
        %v1134 = vpop.permute.xlu0 %1133
        %1135 = vrot.lane.b32.xlu0 %v890, 126
        %v1136 = vpop.permute.xlu0 %1135
        %1137 = vrot.lane.b32.xlu0 %v891, 126
        %v1138 = vpop.permute.xlu0 %1137
        %1139 = vrot.lane.b32.xlu0 %v892, 126
        %v1140 = vpop.permute.xlu0 %1139
        %1141 = vrot.lane.b32.xlu0 %v893, 126
        %v1142 = vpop.permute.xlu0 %1141
        %v1143 = vsel %vm330, %v1088, %v1090
        %v1144 = vsel %vm330, %v1090, %v1092
        %v1145 = vsel %vm330, %v1092, %v1094
        %v1146 = vsel %vm330, %v1094, %v1096
        %v1147 = vsel %vm330, %v1096, %v1098
        %v1148 = vsel %vm330, %v1098, %v1100
        %v1149 = vsel %vm330, %v1102, %v1104
        %v1150 = vsel %vm330, %v1104, %v1106
        %v1151 = vsel %vm330, %v1106, %v1108
        %v1152 = vsel %vm330, %v1108, %v1110
        %v1153 = vsel %vm330, %v1110, %v1112
        %v1154 = vsel %vm330, %v1112, %v1114
        %v1155 = vsel %vm330, %v1116, %v1118
        %v1156 = vsel %vm330, %v1118, %v1120
        %v1157 = vsel %vm330, %v1120, %v1122
        %v1158 = vsel %vm330, %v1122, %v1124
        %v1159 = vsel %vm330, %v1124, %v1126
        %v1160 = vsel %vm330, %v1126, %v1128
        %v1161 = vsel %vm330, %v1130, %v1132
        %v1162 = vsel %vm330, %v1132, %v1134
        %v1163 = vsel %vm330, %v1134, %v1136
        %v1164 = vsel %vm330, %v1136, %v1138
        %v1165 = vsel %vm330, %v1138, %v1140
        %v1166 = vsel %vm330, %v1140, %v1142
        %1195 = vst [vmem:[#allocation3 + $0x1c0] sm:$0xff] %v1143
        %1196 = vst [vmem:[#allocation3 + $0x1c8] sm:$0xff] %v1144
        %1197 = vst [vmem:[#allocation3 + $0x1d0] sm:$0xff] %v1145
        %1198 = vst [vmem:[#allocation3 + $0x1d8] sm:$0xff] %v1146
        %1199 = vst [vmem:[#allocation3 + $0x1e0] sm:$0xff] %v1147
        %1200 = vst [vmem:[#allocation3 + $0x1e8] sm:$0xff] %v1148
        %1201 = vst.msk [vmem:[#allocation3 + $0x1f0] sm:$0xff] %vm900, %v1100
        %1202 = vst [vmem:[#allocation3 + $0x1f8] sm:$0xff] %v1149
        %1203 = vst [vmem:[#allocation3 + $0x200] sm:$0xff] %v1150
        %1204 = vst [vmem:[#allocation3 + $0x208] sm:$0xff] %v1151
        %1205 = vst [vmem:[#allocation3 + $0x210] sm:$0xff] %v1152
        %1206 = vst [vmem:[#allocation3 + $0x218] sm:$0xff] %v1153
        %1207 = vst [vmem:[#allocation3 + $0x220] sm:$0xff] %v1154
        %1208 = vst.msk [vmem:[#allocation3 + $0x228] sm:$0xff] %vm900, %v1114
        %1209 = vst [vmem:[#allocation3 + $0x230] sm:$0xff] %v1155
        %1210 = vst [vmem:[#allocation3 + $0x238] sm:$0xff] %v1156
        %1211 = vst [vmem:[#allocation3 + $0x240] sm:$0xff] %v1157
        %1212 = vst [vmem:[#allocation3 + $0x248] sm:$0xff] %v1158
        %1213 = vst [vmem:[#allocation3 + $0x250] sm:$0xff] %v1159
        %1214 = vst [vmem:[#allocation3 + $0x258] sm:$0xff] %v1160
        %1215 = vst.msk [vmem:[#allocation3 + $0x260] sm:$0xff] %vm900, %v1128
        %1216 = vst [vmem:[#allocation3 + $0x268] sm:$0xff] %v1161
        %1217 = vst [vmem:[#allocation3 + $0x270] sm:$0xff] %v1162
        %1218 = vst [vmem:[#allocation3 + $0x278] sm:$0xff] %v1163
        %1219 = vst [vmem:[#allocation3 + $0x280] sm:$0xff] %v1164
        %1220 = vst [vmem:[#allocation3 + $0x288] sm:$0xff] %v1165
        %1221 = vst [vmem:[#allocation3 + $0x290] sm:$0xff] %v1166
        %1222 = vst.msk [vmem:[#allocation3 + $0x298] sm:$0xff] %vm900, %v1142
        %1223 = vrot.lane.b32.xlu0 %v866, 100
        %v1224 = vpop.permute.xlu0 %1223
        %1225 = vrot.lane.b32.xlu0 %v867, 100
        %v1226 = vpop.permute.xlu0 %1225
        %1227 = vrot.lane.b32.xlu0 %v868, 100
        %v1228 = vpop.permute.xlu0 %1227
        %1229 = vrot.lane.b32.xlu0 %v869, 100
        %v1230 = vpop.permute.xlu0 %1229
        %1231 = vrot.lane.b32.xlu0 %v870, 100
        %v1232 = vpop.permute.xlu0 %1231
        %1233 = vrot.lane.b32.xlu0 %v871, 100
        %v1234 = vpop.permute.xlu0 %1233
        %1235 = vrot.lane.b32.xlu0 %v872, 100
        %v1236 = vpop.permute.xlu0 %1235
        %1237 = vrot.lane.b32.xlu0 %v873, 100
        %v1238 = vpop.permute.xlu0 %1237
        %1239 = vrot.lane.b32.xlu0 %v874, 100
        %v1240 = vpop.permute.xlu0 %1239
        %1241 = vrot.lane.b32.xlu0 %v875, 100
        %v1242 = vpop.permute.xlu0 %1241
        %1243 = vrot.lane.b32.xlu0 %v876, 100
        %v1244 = vpop.permute.xlu0 %1243
        %1245 = vrot.lane.b32.xlu0 %v877, 100
        %v1246 = vpop.permute.xlu0 %1245
        %1247 = vrot.lane.b32.xlu0 %v878, 100
        %v1248 = vpop.permute.xlu0 %1247
        %1249 = vrot.lane.b32.xlu0 %v879, 100
        %v1250 = vpop.permute.xlu0 %1249
        %1251 = vrot.lane.b32.xlu0 %v880, 100
        %v1252 = vpop.permute.xlu0 %1251
        %1253 = vrot.lane.b32.xlu0 %v881, 100
        %v1254 = vpop.permute.xlu0 %1253
        %1255 = vrot.lane.b32.xlu0 %v882, 100
        %v1256 = vpop.permute.xlu0 %1255
        %1257 = vrot.lane.b32.xlu0 %v883, 100
        %v1258 = vpop.permute.xlu0 %1257
        %1259 = vrot.lane.b32.xlu0 %v884, 100
        %v1260 = vpop.permute.xlu0 %1259
        %1261 = vrot.lane.b32.xlu0 %v885, 100
        %v1262 = vpop.permute.xlu0 %1261
        %1263 = vrot.lane.b32.xlu0 %v886, 100
        %v1264 = vpop.permute.xlu0 %1263
        %1265 = vrot.lane.b32.xlu0 %v887, 100
        %v1266 = vpop.permute.xlu0 %1265
        %1267 = vrot.lane.b32.xlu0 %v888, 100
        %v1268 = vpop.permute.xlu0 %1267
        %1269 = vrot.lane.b32.xlu0 %v889, 100
        %v1270 = vpop.permute.xlu0 %1269
        %1271 = vrot.lane.b32.xlu0 %v890, 100
        %v1272 = vpop.permute.xlu0 %1271
        %1273 = vrot.lane.b32.xlu0 %v891, 100
        %v1274 = vpop.permute.xlu0 %1273
        %1275 = vrot.lane.b32.xlu0 %v892, 100
        %v1276 = vpop.permute.xlu0 %1275
        %1277 = vrot.lane.b32.xlu0 %v893, 100
        %v1278 = vpop.permute.xlu0 %1277
        %v1279 = vsel %vm365, %v1224, %v1226
        %v1280 = vsel %vm365, %v1226, %v1228
        %v1281 = vsel %vm365, %v1228, %v1230
        %v1282 = vsel %vm365, %v1230, %v1232
        %v1283 = vsel %vm365, %v1232, %v1234
        %v1284 = vsel %vm365, %v1234, %v1236
        %v1285 = vsel %vm365, %v1238, %v1240
        %v1286 = vsel %vm365, %v1240, %v1242
        %v1287 = vsel %vm365, %v1242, %v1244
        %v1288 = vsel %vm365, %v1244, %v1246
        %v1289 = vsel %vm365, %v1246, %v1248
        %v1290 = vsel %vm365, %v1248, %v1250
        %v1291 = vsel %vm365, %v1252, %v1254
        %v1292 = vsel %vm365, %v1254, %v1256
        %v1293 = vsel %vm365, %v1256, %v1258
        %v1294 = vsel %vm365, %v1258, %v1260
        %v1295 = vsel %vm365, %v1260, %v1262
        %v1296 = vsel %vm365, %v1262, %v1264
        %v1297 = vsel %vm365, %v1266, %v1268
        %v1298 = vsel %vm365, %v1268, %v1270
        %v1299 = vsel %vm365, %v1270, %v1272
        %v1300 = vsel %vm365, %v1272, %v1274
        %v1301 = vsel %vm365, %v1274, %v1276
        %v1302 = vsel %vm365, %v1276, %v1278
        %1331 = vst [vmem:[#allocation3 + $0x2a0] sm:$0xff] %v1279
        %1332 = vst [vmem:[#allocation3 + $0x2a8] sm:$0xff] %v1280
        %1333 = vst [vmem:[#allocation3 + $0x2b0] sm:$0xff] %v1281
        %1334 = vst [vmem:[#allocation3 + $0x2b8] sm:$0xff] %v1282
        %1335 = vst [vmem:[#allocation3 + $0x2c0] sm:$0xff] %v1283
        %1336 = vst [vmem:[#allocation3 + $0x2c8] sm:$0xff] %v1284
        %1337 = vst.msk [vmem:[#allocation3 + $0x2d0] sm:$0xff] %vm900, %v1236
        %1338 = vst [vmem:[#allocation3 + $0x2d8] sm:$0xff] %v1285
        %1339 = vst [vmem:[#allocation3 + $0x2e0] sm:$0xff] %v1286
        %1340 = vst [vmem:[#allocation3 + $0x2e8] sm:$0xff] %v1287
        %1341 = vst [vmem:[#allocation3 + $0x2f0] sm:$0xff] %v1288
        %1342 = vst [vmem:[#allocation3 + $0x2f8] sm:$0xff] %v1289
        %1343 = vst [vmem:[#allocation3 + $0x300] sm:$0xff] %v1290
        %1344 = vst.msk [vmem:[#allocation3 + $0x308] sm:$0xff] %vm900, %v1250
        %1345 = vst [vmem:[#allocation3 + $0x310] sm:$0xff] %v1291
        %1346 = vst [vmem:[#allocation3 + $0x318] sm:$0xff] %v1292
        %1347 = vst [vmem:[#allocation3 + $0x320] sm:$0xff] %v1293
        %1348 = vst [vmem:[#allocation3 + $0x328] sm:$0xff] %v1294
        %1349 = vst [vmem:[#allocation3 + $0x330] sm:$0xff] %v1295
        %1350 = vst [vmem:[#allocation3 + $0x338] sm:$0xff] %v1296
        %1351 = vst.msk [vmem:[#allocation3 + $0x340] sm:$0xff] %vm900, %v1264
        %1352 = vst [vmem:[#allocation3 + $0x348] sm:$0xff] %v1297
        %1353 = vst [vmem:[#allocation3 + $0x350] sm:$0xff] %v1298
        %1354 = vst [vmem:[#allocation3 + $0x358] sm:$0xff] %v1299
        %1355 = vst [vmem:[#allocation3 + $0x360] sm:$0xff] %v1300
        %1356 = vst [vmem:[#allocation3 + $0x368] sm:$0xff] %v1301
        %1357 = vst [vmem:[#allocation3 + $0x370] sm:$0xff] %v1302
        %1358 = vst.msk [vmem:[#allocation3 + $0x378] sm:$0xff] %vm900, %v1278
        %1359 = vrot.lane.b32.xlu0 %v866, 99
        %v1360 = vpop.permute.xlu0 %1359
        %1361 = vrot.lane.b32.xlu0 %v867, 99
        %v1362 = vpop.permute.xlu0 %1361
        %1363 = vrot.lane.b32.xlu0 %v868, 99
        %v1364 = vpop.permute.xlu0 %1363
        %1365 = vrot.lane.b32.xlu0 %v869, 99
        %v1366 = vpop.permute.xlu0 %1365
        %1367 = vrot.lane.b32.xlu0 %v870, 99
        %v1368 = vpop.permute.xlu0 %1367
        %1369 = vrot.lane.b32.xlu0 %v871, 99
        %v1370 = vpop.permute.xlu0 %1369
        %1371 = vrot.lane.b32.xlu0 %v872, 99
        %v1372 = vpop.permute.xlu0 %1371
        %1373 = vrot.lane.b32.xlu0 %v873, 99
        %v1374 = vpop.permute.xlu0 %1373
        %1375 = vrot.lane.b32.xlu0 %v874, 99
        %v1376 = vpop.permute.xlu0 %1375
        %1377 = vrot.lane.b32.xlu0 %v875, 99
        %v1378 = vpop.permute.xlu0 %1377
        %1379 = vrot.lane.b32.xlu0 %v876, 99
        %v1380 = vpop.permute.xlu0 %1379
        %1381 = vrot.lane.b32.xlu0 %v877, 99
        %v1382 = vpop.permute.xlu0 %1381
        %1383 = vrot.lane.b32.xlu0 %v878, 99
        %v1384 = vpop.permute.xlu0 %1383
        %1385 = vrot.lane.b32.xlu0 %v879, 99
        %v1386 = vpop.permute.xlu0 %1385
        %1387 = vrot.lane.b32.xlu0 %v880, 99
        %v1388 = vpop.permute.xlu0 %1387
        %1389 = vrot.lane.b32.xlu0 %v881, 99
        %v1390 = vpop.permute.xlu0 %1389
        %1391 = vrot.lane.b32.xlu0 %v882, 99
        %v1392 = vpop.permute.xlu0 %1391
        %1393 = vrot.lane.b32.xlu0 %v883, 99
        %v1394 = vpop.permute.xlu0 %1393
        %1395 = vrot.lane.b32.xlu0 %v884, 99
        %v1396 = vpop.permute.xlu0 %1395
        %1397 = vrot.lane.b32.xlu0 %v885, 99
        %v1398 = vpop.permute.xlu0 %1397
        %1399 = vrot.lane.b32.xlu0 %v886, 99
        %v1400 = vpop.permute.xlu0 %1399
        %1401 = vrot.lane.b32.xlu0 %v887, 99
        %v1402 = vpop.permute.xlu0 %1401
        %1403 = vrot.lane.b32.xlu0 %v888, 99
        %v1404 = vpop.permute.xlu0 %1403
        %1405 = vrot.lane.b32.xlu0 %v889, 99
        %v1406 = vpop.permute.xlu0 %1405
        %1407 = vrot.lane.b32.xlu0 %v890, 99
        %v1408 = vpop.permute.xlu0 %1407
        %1409 = vrot.lane.b32.xlu0 %v891, 99
        %v1410 = vpop.permute.xlu0 %1409
        %1411 = vrot.lane.b32.xlu0 %v892, 99
        %v1412 = vpop.permute.xlu0 %1411
        %1413 = vrot.lane.b32.xlu0 %v893, 99
        %v1414 = vpop.permute.xlu0 %1413
        %v1415 = vsel %vm400, %v1360, %v1362
        %v1416 = vsel %vm400, %v1362, %v1364
        %v1417 = vsel %vm400, %v1364, %v1366
        %v1418 = vsel %vm400, %v1366, %v1368
        %v1419 = vsel %vm400, %v1368, %v1370
        %v1420 = vsel %vm400, %v1370, %v1372
        %v1421 = vsel %vm400, %v1374, %v1376
        %v1422 = vsel %vm400, %v1376, %v1378
        %v1423 = vsel %vm400, %v1378, %v1380
        %v1424 = vsel %vm400, %v1380, %v1382
        %v1425 = vsel %vm400, %v1382, %v1384
        %v1426 = vsel %vm400, %v1384, %v1386
        %v1427 = vsel %vm400, %v1388, %v1390
        %v1428 = vsel %vm400, %v1390, %v1392
        %v1429 = vsel %vm400, %v1392, %v1394
        %v1430 = vsel %vm400, %v1394, %v1396
        %v1431 = vsel %vm400, %v1396, %v1398
        %v1432 = vsel %vm400, %v1398, %v1400
        %v1433 = vsel %vm400, %v1402, %v1404
        %v1434 = vsel %vm400, %v1404, %v1406
        %v1435 = vsel %vm400, %v1406, %v1408
        %v1436 = vsel %vm400, %v1408, %v1410
        %v1437 = vsel %vm400, %v1410, %v1412
        %v1438 = vsel %vm400, %v1412, %v1414
        %1467 = vst [vmem:[#allocation3 + $0x380] sm:$0xff] %v1415
        %1468 = vst [vmem:[#allocation3 + $0x388] sm:$0xff] %v1416
        %1469 = vst [vmem:[#allocation3 + $0x390] sm:$0xff] %v1417
        %1470 = vst [vmem:[#allocation3 + $0x398] sm:$0xff] %v1418
        %1471 = vst [vmem:[#allocation3 + $0x3a0] sm:$0xff] %v1419
        %1472 = vst [vmem:[#allocation3 + $0x3a8] sm:$0xff] %v1420
        %1473 = vst.msk [vmem:[#allocation3 + $0x3b0] sm:$0xff] %vm900, %v1372
        %1474 = vst [vmem:[#allocation3 + $0x3b8] sm:$0xff] %v1421
        %1475 = vst [vmem:[#allocation3 + $0x3c0] sm:$0xff] %v1422
        %1476 = vst [vmem:[#allocation3 + $0x3c8] sm:$0xff] %v1423
        %1477 = vst [vmem:[#allocation3 + $0x3d0] sm:$0xff] %v1424
        %1478 = vst [vmem:[#allocation3 + $0x3d8] sm:$0xff] %v1425
        %1479 = vst [vmem:[#allocation3 + $0x3e0] sm:$0xff] %v1426
        %1480 = vst.msk [vmem:[#allocation3 + $0x3e8] sm:$0xff] %vm900, %v1386
        %1481 = vst [vmem:[#allocation3 + $0x3f0] sm:$0xff] %v1427
        %1482 = vst [vmem:[#allocation3 + $0x3f8] sm:$0xff] %v1428
        %1483 = vst [vmem:[#allocation3 + $0x400] sm:$0xff] %v1429
        %1484 = vst [vmem:[#allocation3 + $0x408] sm:$0xff] %v1430
        %1485 = vst [vmem:[#allocation3 + $0x410] sm:$0xff] %v1431
        %1486 = vst [vmem:[#allocation3 + $0x418] sm:$0xff] %v1432
        %1487 = vst.msk [vmem:[#allocation3 + $0x420] sm:$0xff] %vm900, %v1400
        %1488 = vst [vmem:[#allocation3 + $0x428] sm:$0xff] %v1433
        %1489 = vst [vmem:[#allocation3 + $0x430] sm:$0xff] %v1434
        %1490 = vst [vmem:[#allocation3 + $0x438] sm:$0xff] %v1435
        %1491 = vst [vmem:[#allocation3 + $0x440] sm:$0xff] %v1436
        %1492 = vst [vmem:[#allocation3 + $0x448] sm:$0xff] %v1437
        %1493 = vst [vmem:[#allocation3 + $0x450] sm:$0xff] %v1438
        %1494 = vst.msk [vmem:[#allocation3 + $0x458] sm:$0xff] %vm900, %v1414
        %1495 = vrot.lane.b32.xlu0 %v866, 98
        %v1496 = vpop.permute.xlu0 %1495
        %1497 = vrot.lane.b32.xlu0 %v867, 98
        %v1498 = vpop.permute.xlu0 %1497
        %1499 = vrot.lane.b32.xlu0 %v868, 98
        %v1500 = vpop.permute.xlu0 %1499
        %1501 = vrot.lane.b32.xlu0 %v869, 98
        %v1502 = vpop.permute.xlu0 %1501
        %1503 = vrot.lane.b32.xlu0 %v870, 98
        %v1504 = vpop.permute.xlu0 %1503
        %1505 = vrot.lane.b32.xlu0 %v871, 98
        %v1506 = vpop.permute.xlu0 %1505
        %1507 = vrot.lane.b32.xlu0 %v872, 98
        %v1508 = vpop.permute.xlu0 %1507
        %1509 = vrot.lane.b32.xlu0 %v873, 98
        %v1510 = vpop.permute.xlu0 %1509
        %1511 = vrot.lane.b32.xlu0 %v874, 98
        %v1512 = vpop.permute.xlu0 %1511
        %1513 = vrot.lane.b32.xlu0 %v875, 98
        %v1514 = vpop.permute.xlu0 %1513
        %1515 = vrot.lane.b32.xlu0 %v876, 98
        %v1516 = vpop.permute.xlu0 %1515
        %1517 = vrot.lane.b32.xlu0 %v877, 98
        %v1518 = vpop.permute.xlu0 %1517
        %1519 = vrot.lane.b32.xlu0 %v878, 98
        %v1520 = vpop.permute.xlu0 %1519
        %1521 = vrot.lane.b32.xlu0 %v879, 98
        %v1522 = vpop.permute.xlu0 %1521
        %1523 = vrot.lane.b32.xlu0 %v880, 98
        %v1524 = vpop.permute.xlu0 %1523
        %1525 = vrot.lane.b32.xlu0 %v881, 98
        %v1526 = vpop.permute.xlu0 %1525
        %1527 = vrot.lane.b32.xlu0 %v882, 98
        %v1528 = vpop.permute.xlu0 %1527
        %1529 = vrot.lane.b32.xlu0 %v883, 98
        %v1530 = vpop.permute.xlu0 %1529
        %1531 = vrot.lane.b32.xlu0 %v884, 98
        %v1532 = vpop.permute.xlu0 %1531
        %1533 = vrot.lane.b32.xlu0 %v885, 98
        %v1534 = vpop.permute.xlu0 %1533
        %1535 = vrot.lane.b32.xlu0 %v886, 98
        %v1536 = vpop.permute.xlu0 %1535
        %1537 = vrot.lane.b32.xlu0 %v887, 98
        %v1538 = vpop.permute.xlu0 %1537
        %1539 = vrot.lane.b32.xlu0 %v888, 98
        %v1540 = vpop.permute.xlu0 %1539
        %1541 = vrot.lane.b32.xlu0 %v889, 98
        %v1542 = vpop.permute.xlu0 %1541
        %1543 = vrot.lane.b32.xlu0 %v890, 98
        %v1544 = vpop.permute.xlu0 %1543
        %1545 = vrot.lane.b32.xlu0 %v891, 98
        %v1546 = vpop.permute.xlu0 %1545
        %1547 = vrot.lane.b32.xlu0 %v892, 98
        %v1548 = vpop.permute.xlu0 %1547
        %1549 = vrot.lane.b32.xlu0 %v893, 98
        %v1550 = vpop.permute.xlu0 %1549
        %v1551 = vsel %vm435, %v1496, %v1498
        %v1552 = vsel %vm435, %v1498, %v1500
        %v1553 = vsel %vm435, %v1500, %v1502
        %v1554 = vsel %vm435, %v1502, %v1504
        %v1555 = vsel %vm435, %v1504, %v1506
        %v1556 = vsel %vm435, %v1506, %v1508
        %v1557 = vsel %vm435, %v1510, %v1512
        %v1558 = vsel %vm435, %v1512, %v1514
        %v1559 = vsel %vm435, %v1514, %v1516
        %v1560 = vsel %vm435, %v1516, %v1518
        %v1561 = vsel %vm435, %v1518, %v1520
        %v1562 = vsel %vm435, %v1520, %v1522
        %v1563 = vsel %vm435, %v1524, %v1526
        %v1564 = vsel %vm435, %v1526, %v1528
        %v1565 = vsel %vm435, %v1528, %v1530
        %v1566 = vsel %vm435, %v1530, %v1532
        %v1567 = vsel %vm435, %v1532, %v1534
        %v1568 = vsel %vm435, %v1534, %v1536
        %v1569 = vsel %vm435, %v1538, %v1540
        %v1570 = vsel %vm435, %v1540, %v1542
        %v1571 = vsel %vm435, %v1542, %v1544
        %v1572 = vsel %vm435, %v1544, %v1546
        %v1573 = vsel %vm435, %v1546, %v1548
        %v1574 = vsel %vm435, %v1548, %v1550
        %1603 = vst [vmem:[#allocation3 + $0x460] sm:$0xff] %v1551
        %1604 = vst [vmem:[#allocation3 + $0x468] sm:$0xff] %v1552
        %1605 = vst [vmem:[#allocation3 + $0x470] sm:$0xff] %v1553
        %1606 = vst [vmem:[#allocation3 + $0x478] sm:$0xff] %v1554
        %1607 = vst [vmem:[#allocation3 + $0x480] sm:$0xff] %v1555
        %1608 = vst [vmem:[#allocation3 + $0x488] sm:$0xff] %v1556
        %1609 = vst.msk [vmem:[#allocation3 + $0x490] sm:$0xff] %vm900, %v1508
        %1610 = vst [vmem:[#allocation3 + $0x498] sm:$0xff] %v1557
        %1611 = vst [vmem:[#allocation3 + $0x4a0] sm:$0xff] %v1558
        %1612 = vst [vmem:[#allocation3 + $0x4a8] sm:$0xff] %v1559
        %1613 = vst [vmem:[#allocation3 + $0x4b0] sm:$0xff] %v1560
        %1614 = vst [vmem:[#allocation3 + $0x4b8] sm:$0xff] %v1561
        %1615 = vst [vmem:[#allocation3 + $0x4c0] sm:$0xff] %v1562
        %1616 = vst.msk [vmem:[#allocation3 + $0x4c8] sm:$0xff] %vm900, %v1522
        %1617 = vst [vmem:[#allocation3 + $0x4d0] sm:$0xff] %v1563
        %1618 = vst [vmem:[#allocation3 + $0x4d8] sm:$0xff] %v1564
        %1619 = vst [vmem:[#allocation3 + $0x4e0] sm:$0xff] %v1565
        %1620 = vst [vmem:[#allocation3 + $0x4e8] sm:$0xff] %v1566
        %1621 = vst [vmem:[#allocation3 + $0x4f0] sm:$0xff] %v1567
        %1622 = vst [vmem:[#allocation3 + $0x4f8] sm:$0xff] %v1568
        %1623 = vst.msk [vmem:[#allocation3 + $0x500] sm:$0xff] %vm900, %v1536
        %1624 = vst [vmem:[#allocation3 + $0x508] sm:$0xff] %v1569
        %1625 = vst [vmem:[#allocation3 + $0x510] sm:$0xff] %v1570
        %1626 = vst [vmem:[#allocation3 + $0x518] sm:$0xff] %v1571
        %1627 = vst [vmem:[#allocation3 + $0x520] sm:$0xff] %v1572
        %1628 = vst [vmem:[#allocation3 + $0x528] sm:$0xff] %v1573
        %1629 = vst [vmem:[#allocation3 + $0x530] sm:$0xff] %v1574
        %1630 = vst.msk [vmem:[#allocation3 + $0x538] sm:$0xff] %vm900, %v1550
        %1631 = vrot.lane.b32.xlu0 %v866, 72
        %v1632 = vpop.permute.xlu0 %1631
        %1633 = vrot.lane.b32.xlu0 %v867, 72
        %v1634 = vpop.permute.xlu0 %1633
        %1635 = vrot.lane.b32.xlu0 %v868, 72
        %v1636 = vpop.permute.xlu0 %1635
        %1637 = vrot.lane.b32.xlu0 %v869, 72
        %v1638 = vpop.permute.xlu0 %1637
        %1639 = vrot.lane.b32.xlu0 %v870, 72
        %v1640 = vpop.permute.xlu0 %1639
        %1641 = vrot.lane.b32.xlu0 %v871, 72
        %v1642 = vpop.permute.xlu0 %1641
        %1643 = vrot.lane.b32.xlu0 %v872, 72
        %v1644 = vpop.permute.xlu0 %1643
        %1645 = vrot.lane.b32.xlu0 %v873, 72
        %v1646 = vpop.permute.xlu0 %1645
        %1647 = vrot.lane.b32.xlu0 %v874, 72
        %v1648 = vpop.permute.xlu0 %1647
        %1649 = vrot.lane.b32.xlu0 %v875, 72
        %v1650 = vpop.permute.xlu0 %1649
        %1651 = vrot.lane.b32.xlu0 %v876, 72
        %v1652 = vpop.permute.xlu0 %1651
        %1653 = vrot.lane.b32.xlu0 %v877, 72
        %v1654 = vpop.permute.xlu0 %1653
        %1655 = vrot.lane.b32.xlu0 %v878, 72
        %v1656 = vpop.permute.xlu0 %1655
        %1657 = vrot.lane.b32.xlu0 %v879, 72
        %v1658 = vpop.permute.xlu0 %1657
        %1659 = vrot.lane.b32.xlu0 %v880, 72
        %v1660 = vpop.permute.xlu0 %1659
        %1661 = vrot.lane.b32.xlu0 %v881, 72
        %v1662 = vpop.permute.xlu0 %1661
        %1663 = vrot.lane.b32.xlu0 %v882, 72
        %v1664 = vpop.permute.xlu0 %1663
        %1665 = vrot.lane.b32.xlu0 %v883, 72
        %v1666 = vpop.permute.xlu0 %1665
        %1667 = vrot.lane.b32.xlu0 %v884, 72
        %v1668 = vpop.permute.xlu0 %1667
        %1669 = vrot.lane.b32.xlu0 %v885, 72
        %v1670 = vpop.permute.xlu0 %1669
        %1671 = vrot.lane.b32.xlu0 %v886, 72
        %v1672 = vpop.permute.xlu0 %1671
        %1673 = vrot.lane.b32.xlu0 %v887, 72
        %v1674 = vpop.permute.xlu0 %1673
        %1675 = vrot.lane.b32.xlu0 %v888, 72
        %v1676 = vpop.permute.xlu0 %1675
        %1677 = vrot.lane.b32.xlu0 %v889, 72
        %v1678 = vpop.permute.xlu0 %1677
        %1679 = vrot.lane.b32.xlu0 %v890, 72
        %v1680 = vpop.permute.xlu0 %1679
        %1681 = vrot.lane.b32.xlu0 %v891, 72
        %v1682 = vpop.permute.xlu0 %1681
        %1683 = vrot.lane.b32.xlu0 %v892, 72
        %v1684 = vpop.permute.xlu0 %1683
        %1685 = vrot.lane.b32.xlu0 %v893, 72
        %v1686 = vpop.permute.xlu0 %1685
        %v1687 = vsel %vm470, %v1632, %v1634
        %v1688 = vsel %vm470, %v1634, %v1636
        %v1689 = vsel %vm470, %v1636, %v1638
        %v1690 = vsel %vm470, %v1638, %v1640
        %v1691 = vsel %vm470, %v1640, %v1642
        %v1692 = vsel %vm470, %v1642, %v1644
        %v1693 = vsel %vm470, %v1646, %v1648
        %v1694 = vsel %vm470, %v1648, %v1650
        %v1695 = vsel %vm470, %v1650, %v1652
        %v1696 = vsel %vm470, %v1652, %v1654
        %v1697 = vsel %vm470, %v1654, %v1656
        %v1698 = vsel %vm470, %v1656, %v1658
        %v1699 = vsel %vm470, %v1660, %v1662
        %v1700 = vsel %vm470, %v1662, %v1664
        %v1701 = vsel %vm470, %v1664, %v1666
        %v1702 = vsel %vm470, %v1666, %v1668
        %v1703 = vsel %vm470, %v1668, %v1670
        %v1704 = vsel %vm470, %v1670, %v1672
        %v1705 = vsel %vm470, %v1674, %v1676
        %v1706 = vsel %vm470, %v1676, %v1678
        %v1707 = vsel %vm470, %v1678, %v1680
        %v1708 = vsel %vm470, %v1680, %v1682
        %v1709 = vsel %vm470, %v1682, %v1684
        %v1710 = vsel %vm470, %v1684, %v1686
        %1739 = vst [vmem:[#allocation3 + $0x540] sm:$0xff] %v1687
        %1740 = vst [vmem:[#allocation3 + $0x548] sm:$0xff] %v1688
        %1741 = vst [vmem:[#allocation3 + $0x550] sm:$0xff] %v1689
        %1742 = vst [vmem:[#allocation3 + $0x558] sm:$0xff] %v1690
        %1743 = vst [vmem:[#allocation3 + $0x560] sm:$0xff] %v1691
        %1744 = vst [vmem:[#allocation3 + $0x568] sm:$0xff] %v1692
        %1745 = vst.msk [vmem:[#allocation3 + $0x570] sm:$0xff] %vm900, %v1644
        %1746 = vst [vmem:[#allocation3 + $0x578] sm:$0xff] %v1693
        %1747 = vst [vmem:[#allocation3 + $0x580] sm:$0xff] %v1694
        %1748 = vst [vmem:[#allocation3 + $0x588] sm:$0xff] %v1695
        %1749 = vst [vmem:[#allocation3 + $0x590] sm:$0xff] %v1696
        %1750 = vst [vmem:[#allocation3 + $0x598] sm:$0xff] %v1697
        %1751 = vst [vmem:[#allocation3 + $0x5a0] sm:$0xff] %v1698
        %1752 = vst.msk [vmem:[#allocation3 + $0x5a8] sm:$0xff] %vm900, %v1658
        %1753 = vst [vmem:[#allocation3 + $0x5b0] sm:$0xff] %v1699
        %1754 = vst [vmem:[#allocation3 + $0x5b8] sm:$0xff] %v1700
        %1755 = vst [vmem:[#allocation3 + $0x5c0] sm:$0xff] %v1701
        %1756 = vst [vmem:[#allocation3 + $0x5c8] sm:$0xff] %v1702
        %1757 = vst [vmem:[#allocation3 + $0x5d0] sm:$0xff] %v1703
        %1758 = vst [vmem:[#allocation3 + $0x5d8] sm:$0xff] %v1704
        %1759 = vst.msk [vmem:[#allocation3 + $0x5e0] sm:$0xff] %vm900, %v1672
        %1760 = vst [vmem:[#allocation3 + $0x5e8] sm:$0xff] %v1705
        %1761 = vst [vmem:[#allocation3 + $0x5f0] sm:$0xff] %v1706
        %1762 = vst [vmem:[#allocation3 + $0x5f8] sm:$0xff] %v1707
        %1763 = vst [vmem:[#allocation3 + $0x600] sm:$0xff] %v1708
        %1764 = vst [vmem:[#allocation3 + $0x608] sm:$0xff] %v1709
        %1765 = vst [vmem:[#allocation3 + $0x610] sm:$0xff] %v1710
        %1766 = vst.msk [vmem:[#allocation3 + $0x618] sm:$0xff] %vm900, %v1686
        %1767 = vrot.lane.b32.xlu0 %v866, 71
        %v1768 = vpop.permute.xlu0 %1767
        %1769 = vrot.lane.b32.xlu0 %v867, 71
        %v1770 = vpop.permute.xlu0 %1769
        %1771 = vrot.lane.b32.xlu0 %v868, 71
        %v1772 = vpop.permute.xlu0 %1771
        %1773 = vrot.lane.b32.xlu0 %v869, 71
        %v1774 = vpop.permute.xlu0 %1773
        %1775 = vrot.lane.b32.xlu0 %v870, 71
        %v1776 = vpop.permute.xlu0 %1775
        %1777 = vrot.lane.b32.xlu0 %v871, 71
        %v1778 = vpop.permute.xlu0 %1777
        %1779 = vrot.lane.b32.xlu0 %v872, 71
        %v1780 = vpop.permute.xlu0 %1779
        %1781 = vrot.lane.b32.xlu0 %v873, 71
        %v1782 = vpop.permute.xlu0 %1781
        %1783 = vrot.lane.b32.xlu0 %v874, 71
        %v1784 = vpop.permute.xlu0 %1783
        %1785 = vrot.lane.b32.xlu0 %v875, 71
        %v1786 = vpop.permute.xlu0 %1785
        %1787 = vrot.lane.b32.xlu0 %v876, 71
        %v1788 = vpop.permute.xlu0 %1787
        %1789 = vrot.lane.b32.xlu0 %v877, 71
        %v1790 = vpop.permute.xlu0 %1789
        %1791 = vrot.lane.b32.xlu0 %v878, 71
        %v1792 = vpop.permute.xlu0 %1791
        %1793 = vrot.lane.b32.xlu0 %v879, 71
        %v1794 = vpop.permute.xlu0 %1793
        %1795 = vrot.lane.b32.xlu0 %v880, 71
        %v1796 = vpop.permute.xlu0 %1795
        %1797 = vrot.lane.b32.xlu0 %v881, 71
        %v1798 = vpop.permute.xlu0 %1797
        %1799 = vrot.lane.b32.xlu0 %v882, 71
        %v1800 = vpop.permute.xlu0 %1799
        %1801 = vrot.lane.b32.xlu0 %v883, 71
        %v1802 = vpop.permute.xlu0 %1801
        %1803 = vrot.lane.b32.xlu0 %v884, 71
        %v1804 = vpop.permute.xlu0 %1803
        %1805 = vrot.lane.b32.xlu0 %v885, 71
        %v1806 = vpop.permute.xlu0 %1805
        %1807 = vrot.lane.b32.xlu0 %v886, 71
        %v1808 = vpop.permute.xlu0 %1807
        %1809 = vrot.lane.b32.xlu0 %v887, 71
        %v1810 = vpop.permute.xlu0 %1809
        %1811 = vrot.lane.b32.xlu0 %v888, 71
        %v1812 = vpop.permute.xlu0 %1811
        %1813 = vrot.lane.b32.xlu0 %v889, 71
        %v1814 = vpop.permute.xlu0 %1813
        %1815 = vrot.lane.b32.xlu0 %v890, 71
        %v1816 = vpop.permute.xlu0 %1815
        %1817 = vrot.lane.b32.xlu0 %v891, 71
        %v1818 = vpop.permute.xlu0 %1817
        %1819 = vrot.lane.b32.xlu0 %v892, 71
        %v1820 = vpop.permute.xlu0 %1819
        %1821 = vrot.lane.b32.xlu0 %v893, 71
        %v1822 = vpop.permute.xlu0 %1821
        %v1823 = vsel %vm505, %v1768, %v1770
        %v1824 = vsel %vm505, %v1770, %v1772
        %v1825 = vsel %vm505, %v1772, %v1774
        %v1826 = vsel %vm505, %v1774, %v1776
        %v1827 = vsel %vm505, %v1776, %v1778
        %v1828 = vsel %vm505, %v1778, %v1780
        %v1829 = vsel %vm505, %v1782, %v1784
        %v1830 = vsel %vm505, %v1784, %v1786
        %v1831 = vsel %vm505, %v1786, %v1788
        %v1832 = vsel %vm505, %v1788, %v1790
        %v1833 = vsel %vm505, %v1790, %v1792
        %v1834 = vsel %vm505, %v1792, %v1794
        %v1835 = vsel %vm505, %v1796, %v1798
        %v1836 = vsel %vm505, %v1798, %v1800
        %v1837 = vsel %vm505, %v1800, %v1802
        %v1838 = vsel %vm505, %v1802, %v1804
        %v1839 = vsel %vm505, %v1804, %v1806
        %v1840 = vsel %vm505, %v1806, %v1808
        %v1841 = vsel %vm505, %v1810, %v1812
        %v1842 = vsel %vm505, %v1812, %v1814
        %v1843 = vsel %vm505, %v1814, %v1816
        %v1844 = vsel %vm505, %v1816, %v1818
        %v1845 = vsel %vm505, %v1818, %v1820
        %v1846 = vsel %vm505, %v1820, %v1822
        %1875 = vst [vmem:[#allocation3 + $0x620] sm:$0xff] %v1823
        %1876 = vst [vmem:[#allocation3 + $0x628] sm:$0xff] %v1824
        %1877 = vst [vmem:[#allocation3 + $0x630] sm:$0xff] %v1825
        %1878 = vst [vmem:[#allocation3 + $0x638] sm:$0xff] %v1826
        %1879 = vst [vmem:[#allocation3 + $0x640] sm:$0xff] %v1827
        %1880 = vst [vmem:[#allocation3 + $0x648] sm:$0xff] %v1828
        %1881 = vst.msk [vmem:[#allocation3 + $0x650] sm:$0xff] %vm900, %v1780
        %1882 = vst [vmem:[#allocation3 + $0x658] sm:$0xff] %v1829
        %1883 = vst [vmem:[#allocation3 + $0x660] sm:$0xff] %v1830
        %1884 = vst [vmem:[#allocation3 + $0x668] sm:$0xff] %v1831
        %1885 = vst [vmem:[#allocation3 + $0x670] sm:$0xff] %v1832
        %1886 = vst [vmem:[#allocation3 + $0x678] sm:$0xff] %v1833
        %1887 = vst [vmem:[#allocation3 + $0x680] sm:$0xff] %v1834
        %1888 = vst.msk [vmem:[#allocation3 + $0x688] sm:$0xff] %vm900, %v1794
        %1889 = vst [vmem:[#allocation3 + $0x690] sm:$0xff] %v1835
        %1890 = vst [vmem:[#allocation3 + $0x698] sm:$0xff] %v1836
        %1891 = vst [vmem:[#allocation3 + $0x6a0] sm:$0xff] %v1837
        %1892 = vst [vmem:[#allocation3 + $0x6a8] sm:$0xff] %v1838
        %1893 = vst [vmem:[#allocation3 + $0x6b0] sm:$0xff] %v1839
        %1894 = vst [vmem:[#allocation3 + $0x6b8] sm:$0xff] %v1840
        %1895 = vst.msk [vmem:[#allocation3 + $0x6c0] sm:$0xff] %vm900, %v1808
        %1896 = vst [vmem:[#allocation3 + $0x6c8] sm:$0xff] %v1841
        %1897 = vst [vmem:[#allocation3 + $0x6d0] sm:$0xff] %v1842
        %1898 = vst [vmem:[#allocation3 + $0x6d8] sm:$0xff] %v1843
        %1899 = vst [vmem:[#allocation3 + $0x6e0] sm:$0xff] %v1844
        %1900 = vst [vmem:[#allocation3 + $0x6e8] sm:$0xff] %v1845
        %1901 = vst [vmem:[#allocation3 + $0x6f0] sm:$0xff] %v1846
        %1902 = vst.msk [vmem:[#allocation3 + $0x6f8] sm:$0xff] %vm900, %v1822
        %1903 = vrot.lane.b32.xlu0 %v866, 70
        %v1904 = vpop.permute.xlu0 %1903
        %1905 = vrot.lane.b32.xlu0 %v867, 70
        %v1906 = vpop.permute.xlu0 %1905
        %1907 = vrot.lane.b32.xlu0 %v868, 70
        %v1908 = vpop.permute.xlu0 %1907
        %1909 = vrot.lane.b32.xlu0 %v869, 70
        %v1910 = vpop.permute.xlu0 %1909
        %1911 = vrot.lane.b32.xlu0 %v870, 70
        %v1912 = vpop.permute.xlu0 %1911
        %1913 = vrot.lane.b32.xlu0 %v871, 70
        %v1914 = vpop.permute.xlu0 %1913
        %1915 = vrot.lane.b32.xlu0 %v872, 70
        %v1916 = vpop.permute.xlu0 %1915
        %1917 = vrot.lane.b32.xlu0 %v873, 70
        %v1918 = vpop.permute.xlu0 %1917
        %1919 = vrot.lane.b32.xlu0 %v874, 70
        %v1920 = vpop.permute.xlu0 %1919
        %1921 = vrot.lane.b32.xlu0 %v875, 70
        %v1922 = vpop.permute.xlu0 %1921
        %1923 = vrot.lane.b32.xlu0 %v876, 70
        %v1924 = vpop.permute.xlu0 %1923
        %1925 = vrot.lane.b32.xlu0 %v877, 70
        %v1926 = vpop.permute.xlu0 %1925
        %1927 = vrot.lane.b32.xlu0 %v878, 70
        %v1928 = vpop.permute.xlu0 %1927
        %1929 = vrot.lane.b32.xlu0 %v879, 70
        %v1930 = vpop.permute.xlu0 %1929
        %1931 = vrot.lane.b32.xlu0 %v880, 70
        %v1932 = vpop.permute.xlu0 %1931
        %1933 = vrot.lane.b32.xlu0 %v881, 70
        %v1934 = vpop.permute.xlu0 %1933
        %1935 = vrot.lane.b32.xlu0 %v882, 70
        %v1936 = vpop.permute.xlu0 %1935
        %1937 = vrot.lane.b32.xlu0 %v883, 70
        %v1938 = vpop.permute.xlu0 %1937
        %1939 = vrot.lane.b32.xlu0 %v884, 70
        %v1940 = vpop.permute.xlu0 %1939
        %1941 = vrot.lane.b32.xlu0 %v885, 70
        %v1942 = vpop.permute.xlu0 %1941
        %1943 = vrot.lane.b32.xlu0 %v886, 70
        %v1944 = vpop.permute.xlu0 %1943
        %1945 = vrot.lane.b32.xlu0 %v887, 70
        %v1946 = vpop.permute.xlu0 %1945
        %1947 = vrot.lane.b32.xlu0 %v888, 70
        %v1948 = vpop.permute.xlu0 %1947
        %1949 = vrot.lane.b32.xlu0 %v889, 70
        %v1950 = vpop.permute.xlu0 %1949
        %1951 = vrot.lane.b32.xlu0 %v890, 70
        %v1952 = vpop.permute.xlu0 %1951
        %1953 = vrot.lane.b32.xlu0 %v891, 70
        %v1954 = vpop.permute.xlu0 %1953
        %1955 = vrot.lane.b32.xlu0 %v892, 70
        %v1956 = vpop.permute.xlu0 %1955
        %1957 = vrot.lane.b32.xlu0 %v893, 70
        %v1958 = vpop.permute.xlu0 %1957
        %v1959 = vsel %vm272, %v1904, %v1906
        %v1960 = vsel %vm272, %v1906, %v1908
        %v1961 = vsel %vm272, %v1908, %v1910
        %v1962 = vsel %vm272, %v1910, %v1912
        %v1963 = vsel %vm272, %v1912, %v1914
        %v1964 = vsel %vm272, %v1914, %v1916
        %v1965 = vsel %vm272, %v1918, %v1920
        %v1966 = vsel %vm272, %v1920, %v1922
        %v1967 = vsel %vm272, %v1922, %v1924
        %v1968 = vsel %vm272, %v1924, %v1926
        %v1969 = vsel %vm272, %v1926, %v1928
        %v1970 = vsel %vm272, %v1928, %v1930
        %v1971 = vsel %vm272, %v1932, %v1934
        %v1972 = vsel %vm272, %v1934, %v1936
        %v1973 = vsel %vm272, %v1936, %v1938
        %v1974 = vsel %vm272, %v1938, %v1940
        %v1975 = vsel %vm272, %v1940, %v1942
        %v1976 = vsel %vm272, %v1942, %v1944
        %v1977 = vsel %vm272, %v1946, %v1948
        %v1978 = vsel %vm272, %v1948, %v1950
        %v1979 = vsel %vm272, %v1950, %v1952
        %v1980 = vsel %vm272, %v1952, %v1954
        %v1981 = vsel %vm272, %v1954, %v1956
        %v1982 = vsel %vm272, %v1956, %v1958
        %2011 = vst [vmem:[#allocation3 + $0x700] sm:$0xff] %v1959
        %2012 = vst [vmem:[#allocation3 + $0x708] sm:$0xff] %v1960
        %2013 = vst [vmem:[#allocation3 + $0x710] sm:$0xff] %v1961
        %2014 = vst [vmem:[#allocation3 + $0x718] sm:$0xff] %v1962
        %2015 = vst [vmem:[#allocation3 + $0x720] sm:$0xff] %v1963
        %2016 = vst [vmem:[#allocation3 + $0x728] sm:$0xff] %v1964
        %2017 = vst.msk [vmem:[#allocation3 + $0x730] sm:$0xff] %vm900, %v1916
        %2018 = vst [vmem:[#allocation3 + $0x738] sm:$0xff] %v1965
        %2019 = vst [vmem:[#allocation3 + $0x740] sm:$0xff] %v1966
        %2020 = vst [vmem:[#allocation3 + $0x748] sm:$0xff] %v1967
        %2021 = vst [vmem:[#allocation3 + $0x750] sm:$0xff] %v1968
        %2022 = vst [vmem:[#allocation3 + $0x758] sm:$0xff] %v1969
        %2023 = vst [vmem:[#allocation3 + $0x760] sm:$0xff] %v1970
        %2024 = vst.msk [vmem:[#allocation3 + $0x768] sm:$0xff] %vm900, %v1930
        %2025 = vst [vmem:[#allocation3 + $0x770] sm:$0xff] %v1971
        %2026 = vst [vmem:[#allocation3 + $0x778] sm:$0xff] %v1972
        %2027 = vst [vmem:[#allocation3 + $0x780] sm:$0xff] %v1973
        %2028 = vst [vmem:[#allocation3 + $0x788] sm:$0xff] %v1974
        %2029 = vst [vmem:[#allocation3 + $0x790] sm:$0xff] %v1975
        %2030 = vst [vmem:[#allocation3 + $0x798] sm:$0xff] %v1976
        %2031 = vst.msk [vmem:[#allocation3 + $0x7a0] sm:$0xff] %vm900, %v1944
        %2032 = vst [vmem:[#allocation3 + $0x7a8] sm:$0xff] %v1977
        %2033 = vst [vmem:[#allocation3 + $0x7b0] sm:$0xff] %v1978
        %2034 = vst [vmem:[#allocation3 + $0x7b8] sm:$0xff] %v1979
        %2035 = vst [vmem:[#allocation3 + $0x7c0] sm:$0xff] %v1980
        %2036 = vst [vmem:[#allocation3 + $0x7c8] sm:$0xff] %v1981
        %2037 = vst [vmem:[#allocation3 + $0x7d0] sm:$0xff] %v1982
        %2038 = vst.msk [vmem:[#allocation3 + $0x7d8] sm:$0xff] %vm900, %v1958
        %v2039 = vld [vmem:[#allocation6] sm:$0xff]
        %v2040 = vld [vmem:[#allocation6 + $0x8] sm:$0xff]
        %v2041 = vld [vmem:[#allocation6 + $0x10] sm:$0xff]
        %v2042 = vld [vmem:[#allocation6 + $0x18] sm:$0xff]
        %v2043 = vld [vmem:[#allocation6 + $0x20] sm:$0xff]
        %v2044 = vld [vmem:[#allocation6 + $0x28] sm:$0xff]
        %v2045 = vld [vmem:[#allocation6 + $0x30] sm:$0xff]
        %v2046 = vld [vmem:[#allocation6 + $0x38] sm:$0xff]
        %v2047 = vld [vmem:[#allocation6 + $0x40] sm:$0xff]
        %v2048 = vld [vmem:[#allocation6 + $0x48] sm:$0xff]
        %v2049 = vld [vmem:[#allocation6 + $0x50] sm:$0xff]
        %v2050 = vld [vmem:[#allocation6 + $0x58] sm:$0xff]
        %v2051 = vld [vmem:[#allocation6 + $0x60] sm:$0xff]
        %v2052 = vld [vmem:[#allocation6 + $0x68] sm:$0xff]
        %v2053 = vld [vmem:[#allocation6 + $0x70] sm:$0xff]
        %v2054 = vld [vmem:[#allocation6 + $0x78] sm:$0xff]
        %v2055 = vld [vmem:[#allocation6 + $0x80] sm:$0xff]
        %v2056 = vld [vmem:[#allocation6 + $0x88] sm:$0xff]
        %v2057 = vld [vmem:[#allocation6 + $0x90] sm:$0xff]
        %v2058 = vld [vmem:[#allocation6 + $0x98] sm:$0xff]
        %v2059 = vld [vmem:[#allocation6 + $0xa0] sm:$0xff]
        %v2060 = vld [vmem:[#allocation6 + $0xa8] sm:$0xff]
        %v2061 = vld [vmem:[#allocation6 + $0xb0] sm:$0xff]
        %v2062 = vld [vmem:[#allocation6 + $0xb8] sm:$0xff]
        %v2063 = vld [vmem:[#allocation3] sm:$0xff]
        %v2064 = vld [vmem:[#allocation3 + $0x8] sm:$0xff]
        %v2065 = vld [vmem:[#allocation3 + $0x10] sm:$0xff]
        %v2066 = vld [vmem:[#allocation3 + $0x18] sm:$0xff]
        %v2067 = vld [vmem:[#allocation3 + $0x20] sm:$0xff]
        %v2068 = vld [vmem:[#allocation3 + $0x28] sm:$0xff]
        %v2069 = vld [vmem:[#allocation3 + $0x30] sm:$0xff]
        %v2070 = vld [vmem:[#allocation3 + $0x38] sm:$0xff]
        %v2071 = vld [vmem:[#allocation3 + $0x40] sm:$0xff]
        %v2072 = vld [vmem:[#allocation3 + $0x48] sm:$0xff]
        %v2073 = vld [vmem:[#allocation3 + $0x50] sm:$0xff]
        %v2074 = vld [vmem:[#allocation3 + $0x58] sm:$0xff]
        %v2075 = vld [vmem:[#allocation3 + $0x60] sm:$0xff]
        %v2076 = vld [vmem:[#allocation3 + $0x68] sm:$0xff]
        %v2077 = vld [vmem:[#allocation3 + $0x70] sm:$0xff]
        %v2078 = vld [vmem:[#allocation3 + $0x78] sm:$0xff]
        %v2079 = vld [vmem:[#allocation3 + $0x80] sm:$0xff]
        %v2080 = vld [vmem:[#allocation3 + $0x88] sm:$0xff]
        %v2081 = vld [vmem:[#allocation3 + $0x90] sm:$0xff]
        %v2082 = vld [vmem:[#allocation3 + $0x98] sm:$0xff]
        %v2083 = vld [vmem:[#allocation3 + $0xa0] sm:$0xff]
        %v2084 = vld [vmem:[#allocation3 + $0xa8] sm:$0xff]
        %v2085 = vld [vmem:[#allocation3 + $0xb0] sm:$0xff]
        %v2086 = vld [vmem:[#allocation3 + $0xb8] sm:$0xff]
        %v2087 = vld [vmem:[#allocation3 + $0xc0] sm:$0xff]
        %v2088 = vld [vmem:[#allocation3 + $0xc8] sm:$0xff]
        %v2089 = vld [vmem:[#allocation3 + $0xd0] sm:$0xff]
        %v2090 = vld [vmem:[#allocation3 + $0xd8] sm:$0xff]
        %v2091 = vld [vmem:[#allocation3 + $0xe0] sm:$0xff]
        %v2092 = vld [vmem:[#allocation3 + $0xe8] sm:$0xff]
        %v2093 = vld [vmem:[#allocation3 + $0xf0] sm:$0xff]
        %v2094 = vld [vmem:[#allocation3 + $0xf8] sm:$0xff]
        %v2095 = vld [vmem:[#allocation3 + $0x100] sm:$0xff]
        %v2096 = vld [vmem:[#allocation3 + $0x108] sm:$0xff]
        %v2097 = vld [vmem:[#allocation3 + $0x110] sm:$0xff]
        %v2098 = vld [vmem:[#allocation3 + $0x118] sm:$0xff]
        %v2099 = vld [vmem:[#allocation3 + $0x120] sm:$0xff]
        %v2100 = vld [vmem:[#allocation3 + $0x128] sm:$0xff]
        %v2101 = vld [vmem:[#allocation3 + $0x130] sm:$0xff]
        %v2102 = vld [vmem:[#allocation3 + $0x138] sm:$0xff]
        %v2103 = vld [vmem:[#allocation3 + $0x140] sm:$0xff]
        %v2104 = vld [vmem:[#allocation3 + $0x148] sm:$0xff]
        %v2105 = vld [vmem:[#allocation3 + $0x150] sm:$0xff]
        %v2106 = vld [vmem:[#allocation3 + $0x158] sm:$0xff]
        %v2107 = vld [vmem:[#allocation3 + $0x160] sm:$0xff]
        %v2108 = vld [vmem:[#allocation3 + $0x168] sm:$0xff]
        %v2109 = vld [vmem:[#allocation3 + $0x170] sm:$0xff]
        %v2110 = vld [vmem:[#allocation3 + $0x178] sm:$0xff]
        %v2111 = vld [vmem:[#allocation3 + $0x180] sm:$0xff]
        %v2112 = vld [vmem:[#allocation3 + $0x188] sm:$0xff]
        %v2113 = vld [vmem:[#allocation3 + $0x190] sm:$0xff]
        %v2114 = vld [vmem:[#allocation3 + $0x198] sm:$0xff]
        %v2115 = vld [vmem:[#allocation3 + $0x1a0] sm:$0xff]
        %v2116 = vld [vmem:[#allocation3 + $0x1a8] sm:$0xff]
        %v2117 = vld [vmem:[#allocation3 + $0x1b0] sm:$0xff]
        %v2118 = vld [vmem:[#allocation3 + $0x1b8] sm:$0xff]
        %v2119 = vld [vmem:[#allocation3 + $0x1c0] sm:$0xff]
        %v2120 = vld [vmem:[#allocation3 + $0x1c8] sm:$0xff]
        %v2121 = vld [vmem:[#allocation3 + $0x1d0] sm:$0xff]
        %v2122 = vld [vmem:[#allocation3 + $0x1d8] sm:$0xff]
        %v2123 = vld [vmem:[#allocation3 + $0x1e0] sm:$0xff]
        %v2124 = vld [vmem:[#allocation3 + $0x1e8] sm:$0xff]
        %v2125 = vld [vmem:[#allocation3 + $0x1f0] sm:$0xff]
        %v2126 = vld [vmem:[#allocation3 + $0x1f8] sm:$0xff]
        %v2127 = vld [vmem:[#allocation3 + $0x200] sm:$0xff]
        %v2128 = vld [vmem:[#allocation3 + $0x208] sm:$0xff]
        %v2129 = vld [vmem:[#allocation3 + $0x210] sm:$0xff]
        %v2130 = vld [vmem:[#allocation3 + $0x218] sm:$0xff]
        %v2131 = vld [vmem:[#allocation3 + $0x220] sm:$0xff]
        %v2132 = vld [vmem:[#allocation3 + $0x228] sm:$0xff]
        %v2133 = vld [vmem:[#allocation3 + $0x230] sm:$0xff]
        %v2134 = vld [vmem:[#allocation3 + $0x238] sm:$0xff]
        %v2135 = vld [vmem:[#allocation3 + $0x240] sm:$0xff]
        %v2136 = vld [vmem:[#allocation3 + $0x248] sm:$0xff]
        %v2137 = vld [vmem:[#allocation3 + $0x250] sm:$0xff]
        %v2138 = vld [vmem:[#allocation3 + $0x258] sm:$0xff]
        %v2139 = vld [vmem:[#allocation3 + $0x260] sm:$0xff]
        %v2140 = vld [vmem:[#allocation3 + $0x268] sm:$0xff]
        %v2141 = vld [vmem:[#allocation3 + $0x270] sm:$0xff]
        %v2142 = vld [vmem:[#allocation3 + $0x278] sm:$0xff]
        %v2143 = vld [vmem:[#allocation3 + $0x280] sm:$0xff]
        %v2144 = vld [vmem:[#allocation3 + $0x288] sm:$0xff]
        %v2145 = vld [vmem:[#allocation3 + $0x290] sm:$0xff]
        %v2146 = vld [vmem:[#allocation3 + $0x298] sm:$0xff]
        %v2147 = vld [vmem:[#allocation3 + $0x2a0] sm:$0xff]
        %v2148 = vld [vmem:[#allocation3 + $0x2a8] sm:$0xff]
        %v2149 = vld [vmem:[#allocation3 + $0x2b0] sm:$0xff]
        %v2150 = vld [vmem:[#allocation3 + $0x2b8] sm:$0xff]
        %v2151 = vld [vmem:[#allocation3 + $0x2c0] sm:$0xff]
        %v2152 = vld [vmem:[#allocation3 + $0x2c8] sm:$0xff]
        %v2153 = vld [vmem:[#allocation3 + $0x2d0] sm:$0xff]
        %v2154 = vld [vmem:[#allocation3 + $0x2d8] sm:$0xff]
        %v2155 = vld [vmem:[#allocation3 + $0x2e0] sm:$0xff]
        %v2156 = vld [vmem:[#allocation3 + $0x2e8] sm:$0xff]
        %v2157 = vld [vmem:[#allocation3 + $0x2f0] sm:$0xff]
        %v2158 = vld [vmem:[#allocation3 + $0x2f8] sm:$0xff]
        %v2159 = vld [vmem:[#allocation3 + $0x300] sm:$0xff]
        %v2160 = vld [vmem:[#allocation3 + $0x308] sm:$0xff]
        %v2161 = vld [vmem:[#allocation3 + $0x310] sm:$0xff]
        %v2162 = vld [vmem:[#allocation3 + $0x318] sm:$0xff]
        %v2163 = vld [vmem:[#allocation3 + $0x320] sm:$0xff]
        %v2164 = vld [vmem:[#allocation3 + $0x328] sm:$0xff]
        %v2165 = vld [vmem:[#allocation3 + $0x330] sm:$0xff]
        %v2166 = vld [vmem:[#allocation3 + $0x338] sm:$0xff]
        %v2167 = vld [vmem:[#allocation3 + $0x340] sm:$0xff]
        %v2168 = vld [vmem:[#allocation3 + $0x348] sm:$0xff]
        %v2169 = vld [vmem:[#allocation3 + $0x350] sm:$0xff]
        %v2170 = vld [vmem:[#allocation3 + $0x358] sm:$0xff]
        %v2171 = vld [vmem:[#allocation3 + $0x360] sm:$0xff]
        %v2172 = vld [vmem:[#allocation3 + $0x368] sm:$0xff]
        %v2173 = vld [vmem:[#allocation3 + $0x370] sm:$0xff]
        %v2174 = vld [vmem:[#allocation3 + $0x378] sm:$0xff]
        %v2175 = vld [vmem:[#allocation3 + $0x380] sm:$0xff]
        %v2176 = vld [vmem:[#allocation3 + $0x388] sm:$0xff]
        %v2177 = vld [vmem:[#allocation3 + $0x390] sm:$0xff]
        %v2178 = vld [vmem:[#allocation3 + $0x398] sm:$0xff]
        %v2179 = vld [vmem:[#allocation3 + $0x3a0] sm:$0xff]
        %v2180 = vld [vmem:[#allocation3 + $0x3a8] sm:$0xff]
        %v2181 = vld [vmem:[#allocation3 + $0x3b0] sm:$0xff]
        %v2182 = vld [vmem:[#allocation3 + $0x3b8] sm:$0xff]
        %v2183 = vld [vmem:[#allocation3 + $0x3c0] sm:$0xff]
        %v2184 = vld [vmem:[#allocation3 + $0x3c8] sm:$0xff]
        %v2185 = vld [vmem:[#allocation3 + $0x3d0] sm:$0xff]
        %v2186 = vld [vmem:[#allocation3 + $0x3d8] sm:$0xff]
        %v2187 = vld [vmem:[#allocation3 + $0x3e0] sm:$0xff]
        %v2188 = vld [vmem:[#allocation3 + $0x3e8] sm:$0xff]
        %v2189 = vld [vmem:[#allocation3 + $0x3f0] sm:$0xff]
        %v2190 = vld [vmem:[#allocation3 + $0x3f8] sm:$0xff]
        %v2191 = vld [vmem:[#allocation3 + $0x400] sm:$0xff]
        %v2192 = vld [vmem:[#allocation3 + $0x408] sm:$0xff]
        %v2193 = vld [vmem:[#allocation3 + $0x410] sm:$0xff]
        %v2194 = vld [vmem:[#allocation3 + $0x418] sm:$0xff]
        %v2195 = vld [vmem:[#allocation3 + $0x420] sm:$0xff]
        %v2196 = vld [vmem:[#allocation3 + $0x428] sm:$0xff]
        %v2197 = vld [vmem:[#allocation3 + $0x430] sm:$0xff]
        %v2198 = vld [vmem:[#allocation3 + $0x438] sm:$0xff]
        %v2199 = vld [vmem:[#allocation3 + $0x440] sm:$0xff]
        %v2200 = vld [vmem:[#allocation3 + $0x448] sm:$0xff]
        %v2201 = vld [vmem:[#allocation3 + $0x450] sm:$0xff]
        %v2202 = vld [vmem:[#allocation3 + $0x458] sm:$0xff]
        %v2203 = vld [vmem:[#allocation3 + $0x460] sm:$0xff]
        %v2204 = vld [vmem:[#allocation3 + $0x468] sm:$0xff]
        %v2205 = vld [vmem:[#allocation3 + $0x470] sm:$0xff]
        %v2206 = vld [vmem:[#allocation3 + $0x478] sm:$0xff]
        %v2207 = vld [vmem:[#allocation3 + $0x480] sm:$0xff]
        %v2208 = vld [vmem:[#allocation3 + $0x488] sm:$0xff]
        %v2209 = vld [vmem:[#allocation3 + $0x490] sm:$0xff]
        %v2210 = vld [vmem:[#allocation3 + $0x498] sm:$0xff]
        %v2211 = vld [vmem:[#allocation3 + $0x4a0] sm:$0xff]
        %v2212 = vld [vmem:[#allocation3 + $0x4a8] sm:$0xff]
        %v2213 = vld [vmem:[#allocation3 + $0x4b0] sm:$0xff]
        %v2214 = vld [vmem:[#allocation3 + $0x4b8] sm:$0xff]
        %v2215 = vld [vmem:[#allocation3 + $0x4c0] sm:$0xff]
        %v2216 = vld [vmem:[#allocation3 + $0x4c8] sm:$0xff]
        %v2217 = vld [vmem:[#allocation3 + $0x4d0] sm:$0xff]
        %v2218 = vld [vmem:[#allocation3 + $0x4d8] sm:$0xff]
        %v2219 = vld [vmem:[#allocation3 + $0x4e0] sm:$0xff]
        %v2220 = vld [vmem:[#allocation3 + $0x4e8] sm:$0xff]
        %v2221 = vld [vmem:[#allocation3 + $0x4f0] sm:$0xff]
        %v2222 = vld [vmem:[#allocation3 + $0x4f8] sm:$0xff]
        %v2223 = vld [vmem:[#allocation3 + $0x500] sm:$0xff]
        %v2224 = vld [vmem:[#allocation3 + $0x508] sm:$0xff]
        %v2225 = vld [vmem:[#allocation3 + $0x510] sm:$0xff]
        %v2226 = vld [vmem:[#allocation3 + $0x518] sm:$0xff]
        %v2227 = vld [vmem:[#allocation3 + $0x520] sm:$0xff]
        %v2228 = vld [vmem:[#allocation3 + $0x528] sm:$0xff]
        %v2229 = vld [vmem:[#allocation3 + $0x530] sm:$0xff]
        %v2230 = vld [vmem:[#allocation3 + $0x538] sm:$0xff]
        %v2231 = vld [vmem:[#allocation3 + $0x540] sm:$0xff]
        %v2232 = vld [vmem:[#allocation3 + $0x548] sm:$0xff]
        %v2233 = vld [vmem:[#allocation3 + $0x550] sm:$0xff]
        %v2234 = vld [vmem:[#allocation3 + $0x558] sm:$0xff]
        %v2235 = vld [vmem:[#allocation3 + $0x560] sm:$0xff]
        %v2236 = vld [vmem:[#allocation3 + $0x568] sm:$0xff]
        %v2237 = vld [vmem:[#allocation3 + $0x570] sm:$0xff]
        %v2238 = vld [vmem:[#allocation3 + $0x578] sm:$0xff]
        %v2239 = vld [vmem:[#allocation3 + $0x580] sm:$0xff]
        %v2240 = vld [vmem:[#allocation3 + $0x588] sm:$0xff]
        %v2241 = vld [vmem:[#allocation3 + $0x590] sm:$0xff]
        %v2242 = vld [vmem:[#allocation3 + $0x598] sm:$0xff]
        %v2243 = vld [vmem:[#allocation3 + $0x5a0] sm:$0xff]
        %v2244 = vld [vmem:[#allocation3 + $0x5a8] sm:$0xff]
        %v2245 = vld [vmem:[#allocation3 + $0x5b0] sm:$0xff]
        %v2246 = vld [vmem:[#allocation3 + $0x5b8] sm:$0xff]
        %v2247 = vld [vmem:[#allocation3 + $0x5c0] sm:$0xff]
        %v2248 = vld [vmem:[#allocation3 + $0x5c8] sm:$0xff]
        %v2249 = vld [vmem:[#allocation3 + $0x5d0] sm:$0xff]
        %v2250 = vld [vmem:[#allocation3 + $0x5d8] sm:$0xff]
        %v2251 = vld [vmem:[#allocation3 + $0x5e0] sm:$0xff]
        %v2252 = vld [vmem:[#allocation3 + $0x5e8] sm:$0xff]
        %v2253 = vld [vmem:[#allocation3 + $0x5f0] sm:$0xff]
        %v2254 = vld [vmem:[#allocation3 + $0x5f8] sm:$0xff]
        %v2255 = vld [vmem:[#allocation3 + $0x600] sm:$0xff]
        %v2256 = vld [vmem:[#allocation3 + $0x608] sm:$0xff]
        %v2257 = vld [vmem:[#allocation3 + $0x610] sm:$0xff]
        %v2258 = vld [vmem:[#allocation3 + $0x618] sm:$0xff]
        %v2259 = vld [vmem:[#allocation3 + $0x620] sm:$0xff]
        %v2260 = vld [vmem:[#allocation3 + $0x628] sm:$0xff]
        %v2261 = vld [vmem:[#allocation3 + $0x630] sm:$0xff]
        %v2262 = vld [vmem:[#allocation3 + $0x638] sm:$0xff]
        %v2263 = vld [vmem:[#allocation3 + $0x640] sm:$0xff]
        %v2264 = vld [vmem:[#allocation3 + $0x648] sm:$0xff]
        %v2265 = vld [vmem:[#allocation3 + $0x650] sm:$0xff]
        %v2266 = vld [vmem:[#allocation3 + $0x658] sm:$0xff]
        %v2267 = vld [vmem:[#allocation3 + $0x660] sm:$0xff]
        %v2268 = vld [vmem:[#allocation3 + $0x668] sm:$0xff]
        %v2269 = vld [vmem:[#allocation3 + $0x670] sm:$0xff]
        %v2270 = vld [vmem:[#allocation3 + $0x678] sm:$0xff]
        %v2271 = vld [vmem:[#allocation3 + $0x680] sm:$0xff]
        %v2272 = vld [vmem:[#allocation3 + $0x688] sm:$0xff]
        %v2273 = vld [vmem:[#allocation3 + $0x690] sm:$0xff]
        %v2274 = vld [vmem:[#allocation3 + $0x698] sm:$0xff]
        %v2275 = vld [vmem:[#allocation3 + $0x6a0] sm:$0xff]
        %v2276 = vld [vmem:[#allocation3 + $0x6a8] sm:$0xff]
        %v2277 = vld [vmem:[#allocation3 + $0x6b0] sm:$0xff]
        %v2278 = vld [vmem:[#allocation3 + $0x6b8] sm:$0xff]
        %v2279 = vld [vmem:[#allocation3 + $0x6c0] sm:$0xff]
        %v2280 = vld [vmem:[#allocation3 + $0x6c8] sm:$0xff]
        %v2281 = vld [vmem:[#allocation3 + $0x6d0] sm:$0xff]
        %v2282 = vld [vmem:[#allocation3 + $0x6d8] sm:$0xff]
        %v2283 = vld [vmem:[#allocation3 + $0x6e0] sm:$0xff]
        %v2284 = vld [vmem:[#allocation3 + $0x6e8] sm:$0xff]
        %v2285 = vld [vmem:[#allocation3 + $0x6f0] sm:$0xff]
        %v2286 = vld [vmem:[#allocation3 + $0x6f8] sm:$0xff]
        %v2287 = vld [vmem:[#allocation3 + $0x700] sm:$0xff]
        %v2288 = vld [vmem:[#allocation3 + $0x708] sm:$0xff]
        %v2289 = vld [vmem:[#allocation3 + $0x710] sm:$0xff]
        %v2290 = vld [vmem:[#allocation3 + $0x718] sm:$0xff]
        %v2291 = vld [vmem:[#allocation3 + $0x720] sm:$0xff]
        %v2292 = vld [vmem:[#allocation3 + $0x728] sm:$0xff]
        %v2293 = vld [vmem:[#allocation3 + $0x730] sm:$0xff]
        %v2294 = vld [vmem:[#allocation3 + $0x738] sm:$0xff]
        %v2295 = vld [vmem:[#allocation3 + $0x740] sm:$0xff]
        %v2296 = vld [vmem:[#allocation3 + $0x748] sm:$0xff]
        %v2297 = vld [vmem:[#allocation3 + $0x750] sm:$0xff]
        %v2298 = vld [vmem:[#allocation3 + $0x758] sm:$0xff]
        %v2299 = vld [vmem:[#allocation3 + $0x760] sm:$0xff]
        %v2300 = vld [vmem:[#allocation3 + $0x768] sm:$0xff]
        %v2301 = vld [vmem:[#allocation3 + $0x770] sm:$0xff]
        %v2302 = vld [vmem:[#allocation3 + $0x778] sm:$0xff]
        %v2303 = vld [vmem:[#allocation3 + $0x780] sm:$0xff]
        %v2304 = vld [vmem:[#allocation3 + $0x788] sm:$0xff]
        %v2305 = vld [vmem:[#allocation3 + $0x790] sm:$0xff]
        %v2306 = vld [vmem:[#allocation3 + $0x798] sm:$0xff]
        %v2307 = vld [vmem:[#allocation3 + $0x7a0] sm:$0xff]
        %v2308 = vld [vmem:[#allocation3 + $0x7a8] sm:$0xff]
        %v2309 = vld [vmem:[#allocation3 + $0x7b0] sm:$0xff]
        %v2310 = vld [vmem:[#allocation3 + $0x7b8] sm:$0xff]
        %v2311 = vld [vmem:[#allocation3 + $0x7c0] sm:$0xff]
        %v2312 = vld [vmem:[#allocation3 + $0x7c8] sm:$0xff]
        %v2313 = vld [vmem:[#allocation3 + $0x7d0] sm:$0xff]
        %v2314 = vld [vmem:[#allocation3 + $0x7d8] sm:$0xff]
        %v2315 = vld [vmem:[%s4] sm:$0xff]
        %v2316 = vld [vmem:[%s4 + $0x8] sm:$0xff]
        %v2317 = vld [vmem:[%s4 + $0x10] sm:$0xff]
        %v2318 = vld [vmem:[%s4 + $0x18] sm:$0xff]
        %v2319 = vld [vmem:[%s4 + $0x20] sm:$0xff]
        %v2320 = vld [vmem:[%s4 + $0x28] sm:$0xff]
        %v2321 = vld [vmem:[%s4 + $0x30] sm:$0xff]
        %v2322 = vld [vmem:[%s4 + $0x38] sm:$0xff]
        %2324 = vset.pattern.permute.xlu0 0
        %2325 = vperm.xlu0 %2324, %v2315
        %v2326 = vpop.permute.xlu0 %2325
        %2329 = vset.pattern.permute.xlu0 0
        %2330 = vperm.xlu0 %2329, %v2316
        %v2331 = vpop.permute.xlu0 %2330
        %2334 = vset.pattern.permute.xlu0 0
        %2335 = vperm.xlu0 %2334, %v2317
        %v2336 = vpop.permute.xlu0 %2335
        %2339 = vset.pattern.permute.xlu0 0
        %2340 = vperm.xlu0 %2339, %v2318
        %v2341 = vpop.permute.xlu0 %2340
        %2344 = vset.pattern.permute.xlu0 0
        %2345 = vperm.xlu0 %2344, %v2319
        %v2346 = vpop.permute.xlu0 %2345
        %2349 = vset.pattern.permute.xlu0 0
        %2350 = vperm.xlu0 %2349, %v2320
        %v2351 = vpop.permute.xlu0 %2350
        %2354 = vset.pattern.permute.xlu0 0
        %2355 = vperm.xlu0 %2354, %v2321
        %v2356 = vpop.permute.xlu0 %2355
        %2359 = vset.pattern.permute.xlu0 0
        %2360 = vperm.xlu0 %2359, %v2322
        %v2361 = vpop.permute.xlu0 %2360
        %vm2363 = vcmask 261120
        %v2365 = vsel %vm2363, %v2041, 0
        %v2368 = vsel %vm2363, %v2044, 0
        %v2371 = vsel %vm2363, %v2047, 0
        %v2374 = vsel %vm2363, %v2050, 0
        %v2377 = vsel %vm2363, %v2053, 0
        %v2380 = vsel %vm2363, %v2056, 0
        %v2383 = vsel %vm2363, %v2059, 0
        %v2386 = vsel %vm2363, %v2062, 0
        %2388 = vmatpush.msra.mxu0 %v2168
        %2389 = vmatpush.msra.mxu0 %v2161
        %2390 = vmatpush.msra.mxu0 %v2154
        %2391 = vmatpush.msra.mxu0 %v2147
        %2392 = vmatpush.msra.mxu0 %v2140
        %2393 = vmatpush.msra.mxu0 %v2133
        %2394 = vmatpush.msra.mxu0 %v2126
        %2395 = vmatpush.msra.mxu0 %v2119
        %2396 = vmatpush.msra.mxu0 %v2112
        %2397 = vmatpush.msra.mxu0 %v2105
        %2398 = vmatpush.msra.mxu0 %v2098
        %2399 = vmatpush.msra.mxu0 %v2091
        %2400 = vmatpush.msra.mxu0 %v2084
        %2401 = vmatpush.msra.mxu0 %v2077
        %2402 = vmatpush.msra.mxu0 %v2070
        %2403 = vmatpush.msra.mxu0 %v2063
        %2404 = vmatmul.f32.gmra.mxu0 %v2039
        %v2405 = vpop.f32.mrf.mxu0
        %v2406 = vadd.f32 %v2326, %v2405
        %2407 = vmatmul.f32.gmra.mxu0 %v2042
        %v2408 = vpop.f32.mrf.mxu0
        %v2409 = vadd.f32 %v2331, %v2408
        %2410 = vmatmul.f32.gmra.mxu0 %v2045
        %v2411 = vpop.f32.mrf.mxu0
        %v2412 = vadd.f32 %v2336, %v2411
        %2413 = vmatmul.f32.gmra.mxu0 %v2048
        %v2414 = vpop.f32.mrf.mxu0
        %v2415 = vadd.f32 %v2341, %v2414
        %2416 = vmatmul.f32.gmra.mxu0 %v2051
        %v2417 = vpop.f32.mrf.mxu0
        %v2418 = vadd.f32 %v2346, %v2417
        %2419 = vmatmul.f32.gmra.mxu0 %v2054
        %v2420 = vpop.f32.mrf.mxu0
        %v2421 = vadd.f32 %v2351, %v2420
        %2422 = vmatmul.f32.gmra.mxu0 %v2057
        %v2423 = vpop.f32.mrf.mxu0
        %v2424 = vadd.f32 %v2356, %v2423
        %2425 = vmatmul.f32.gmra.mxu0 %v2060
        %v2426 = vpop.f32.mrf.mxu0
        %v2427 = vadd.f32 %v2361, %v2426
        %2428 = vdwg.mxu0
        %2429 = vmatpush.msra.mxu0 %v2280
        %2430 = vmatpush.msra.mxu0 %v2273
        %2431 = vmatpush.msra.mxu0 %v2266
        %2432 = vmatpush.msra.mxu0 %v2259
        %2433 = vmatpush.msra.mxu0 %v2252
        %2434 = vmatpush.msra.mxu0 %v2245
        %2435 = vmatpush.msra.mxu0 %v2238
        %2436 = vmatpush.msra.mxu0 %v2231
        %2437 = vmatpush.msra.mxu0 %v2224
        %2438 = vmatpush.msra.mxu0 %v2217
        %2439 = vmatpush.msra.mxu0 %v2210
        %2440 = vmatpush.msra.mxu0 %v2203
        %2441 = vmatpush.msra.mxu0 %v2196
        %2442 = vmatpush.msra.mxu0 %v2189
        %2443 = vmatpush.msra.mxu0 %v2182
        %2444 = vmatpush.msra.mxu0 %v2175
        %2445 = vmatmul.f32.gmra.mxu0 %v2040
        %v2446 = vpop.f32.mrf.mxu0
        %v2447 = vadd.f32 %v2406, %v2446
        %2448 = vmatmul.f32.gmra.mxu0 %v2043
        %v2449 = vpop.f32.mrf.mxu0
        %v2450 = vadd.f32 %v2409, %v2449
        %2451 = vmatmul.f32.gmra.mxu0 %v2046
        %v2452 = vpop.f32.mrf.mxu0
        %v2453 = vadd.f32 %v2412, %v2452
        %2454 = vmatmul.f32.gmra.mxu0 %v2049
        %v2455 = vpop.f32.mrf.mxu0
        %v2456 = vadd.f32 %v2415, %v2455
        %2457 = vmatmul.f32.gmra.mxu0 %v2052
        %v2458 = vpop.f32.mrf.mxu0
        %v2459 = vadd.f32 %v2418, %v2458
        %2460 = vmatmul.f32.gmra.mxu0 %v2055
        %v2461 = vpop.f32.mrf.mxu0
        %v2462 = vadd.f32 %v2421, %v2461
        %2463 = vmatmul.f32.gmra.mxu0 %v2058
        %v2464 = vpop.f32.mrf.mxu0
        %v2465 = vadd.f32 %v2424, %v2464
        %2466 = vmatmul.f32.gmra.mxu0 %v2061
        %v2467 = vpop.f32.mrf.mxu0
        %v2468 = vadd.f32 %v2427, %v2467
        %2469 = vdwg.mxu0
        %2470 = vmatpush.msra.mxu0 0.0
        %2471 = vmatpush.msra.mxu0 0.0
        %2472 = vmatpush.msra.mxu0 0.0
        %2473 = vmatpush.msra.mxu0 0.0
        %2474 = vmatpush.msra.mxu0 0.0
        %2475 = vmatpush.msra.mxu0 0.0
        %2476 = vmatpush.msra.mxu0 0.0
        %2477 = vmatpush.msra.mxu0 0.0
        %2478 = vmatpush.msra.mxu0 0.0
        %2479 = vmatpush.msra.mxu0 0.0
        %2480 = vmatpush.msra.mxu0 0.0
        %2481 = vmatpush.msra.mxu0 0.0
        %2482 = vmatpush.msra.mxu0 %v2308
        %2483 = vmatpush.msra.mxu0 %v2301
        %2484 = vmatpush.msra.mxu0 %v2294
        %2485 = vmatpush.msra.mxu0 %v2287
        %2486 = vmatmul.f32.gmra.mxu0 %v2365
        %v2487 = vpop.f32.mrf.mxu0
        %v2488 = vadd.f32 %v2447, %v2487
        %2489 = vmatmul.f32.gmra.mxu0 %v2368
        %v2490 = vpop.f32.mrf.mxu0
        %v2491 = vadd.f32 %v2450, %v2490
        %2492 = vmatmul.f32.gmra.mxu0 %v2371
        %v2493 = vpop.f32.mrf.mxu0
        %v2494 = vadd.f32 %v2453, %v2493
        %2495 = vmatmul.f32.gmra.mxu0 %v2374
        %v2496 = vpop.f32.mrf.mxu0
        %v2497 = vadd.f32 %v2456, %v2496
        %2498 = vmatmul.f32.gmra.mxu0 %v2377
        %v2499 = vpop.f32.mrf.mxu0
        %v2500 = vadd.f32 %v2459, %v2499
        %2501 = vmatmul.f32.gmra.mxu0 %v2380
        %v2502 = vpop.f32.mrf.mxu0
        %v2503 = vadd.f32 %v2462, %v2502
        %2504 = vmatmul.f32.gmra.mxu0 %v2383
        %v2505 = vpop.f32.mrf.mxu0
        %v2506 = vadd.f32 %v2465, %v2505
        %2507 = vmatmul.f32.gmra.mxu0 %v2386
        %v2508 = vpop.f32.mrf.mxu0
        %v2509 = vadd.f32 %v2468, %v2508
        %2510 = vdwg.mxu0
        %2511 = vmatpush.msra.mxu0 %v2169
        %2512 = vmatpush.msra.mxu0 %v2162
        %2513 = vmatpush.msra.mxu0 %v2155
        %2514 = vmatpush.msra.mxu0 %v2148
        %2515 = vmatpush.msra.mxu0 %v2141
        %2516 = vmatpush.msra.mxu0 %v2134
        %2517 = vmatpush.msra.mxu0 %v2127
        %2518 = vmatpush.msra.mxu0 %v2120
        %2519 = vmatpush.msra.mxu0 %v2113
        %2520 = vmatpush.msra.mxu0 %v2106
        %2521 = vmatpush.msra.mxu0 %v2099
        %2522 = vmatpush.msra.mxu0 %v2092
        %2523 = vmatpush.msra.mxu0 %v2085
        %2524 = vmatpush.msra.mxu0 %v2078
        %2525 = vmatpush.msra.mxu0 %v2071
        %2526 = vmatpush.msra.mxu0 %v2064
        %2527 = vmatmul.f32.gmra.mxu0 %v2039
        %v2528 = vpop.f32.mrf.mxu0
        %v2529 = vadd.f32 %v2326, %v2528
        %2530 = vmatmul.f32.gmra.mxu0 %v2042
        %v2531 = vpop.f32.mrf.mxu0
        %v2532 = vadd.f32 %v2331, %v2531
        %2533 = vmatmul.f32.gmra.mxu0 %v2045
        %v2534 = vpop.f32.mrf.mxu0
        %v2535 = vadd.f32 %v2336, %v2534
        %2536 = vmatmul.f32.gmra.mxu0 %v2048
        %v2537 = vpop.f32.mrf.mxu0
        %v2538 = vadd.f32 %v2341, %v2537
        %2539 = vmatmul.f32.gmra.mxu0 %v2051
        %v2540 = vpop.f32.mrf.mxu0
        %v2541 = vadd.f32 %v2346, %v2540
        %2542 = vmatmul.f32.gmra.mxu0 %v2054
        %v2543 = vpop.f32.mrf.mxu0
        %v2544 = vadd.f32 %v2351, %v2543
        %2545 = vmatmul.f32.gmra.mxu0 %v2057
        %v2546 = vpop.f32.mrf.mxu0
        %v2547 = vadd.f32 %v2356, %v2546
        %2548 = vmatmul.f32.gmra.mxu0 %v2060
        %v2549 = vpop.f32.mrf.mxu0
        %v2550 = vadd.f32 %v2361, %v2549
        %2551 = vdwg.mxu0
        %2552 = vmatpush.msra.mxu0 %v2281
        %2553 = vmatpush.msra.mxu0 %v2274
        %2554 = vmatpush.msra.mxu0 %v2267
        %2555 = vmatpush.msra.mxu0 %v2260
        %2556 = vmatpush.msra.mxu0 %v2253
        %2557 = vmatpush.msra.mxu0 %v2246
        %2558 = vmatpush.msra.mxu0 %v2239
        %2559 = vmatpush.msra.mxu0 %v2232
        %2560 = vmatpush.msra.mxu0 %v2225
        %2561 = vmatpush.msra.mxu0 %v2218
        %2562 = vmatpush.msra.mxu0 %v2211
        %2563 = vmatpush.msra.mxu0 %v2204
        %2564 = vmatpush.msra.mxu0 %v2197
        %2565 = vmatpush.msra.mxu0 %v2190
        %2566 = vmatpush.msra.mxu0 %v2183
        %2567 = vmatpush.msra.mxu0 %v2176
        %2568 = vmatmul.f32.gmra.mxu0 %v2040
        %v2569 = vpop.f32.mrf.mxu0
        %v2570 = vadd.f32 %v2529, %v2569
        %2571 = vmatmul.f32.gmra.mxu0 %v2043
        %v2572 = vpop.f32.mrf.mxu0
        %v2573 = vadd.f32 %v2532, %v2572
        %2574 = vmatmul.f32.gmra.mxu0 %v2046
        %v2575 = vpop.f32.mrf.mxu0
        %v2576 = vadd.f32 %v2535, %v2575
        %2577 = vmatmul.f32.gmra.mxu0 %v2049
        %v2578 = vpop.f32.mrf.mxu0
        %v2579 = vadd.f32 %v2538, %v2578
        %2580 = vmatmul.f32.gmra.mxu0 %v2052
        %v2581 = vpop.f32.mrf.mxu0
        %v2582 = vadd.f32 %v2541, %v2581
        %2583 = vmatmul.f32.gmra.mxu0 %v2055
        %v2584 = vpop.f32.mrf.mxu0
        %v2585 = vadd.f32 %v2544, %v2584
        %2586 = vmatmul.f32.gmra.mxu0 %v2058
        %v2587 = vpop.f32.mrf.mxu0
        %v2588 = vadd.f32 %v2547, %v2587
        %2589 = vmatmul.f32.gmra.mxu0 %v2061
        %v2590 = vpop.f32.mrf.mxu0
        %v2591 = vadd.f32 %v2550, %v2590
        %2592 = vdwg.mxu0
        %2593 = vmatpush.msra.mxu0 0.0
        %2594 = vmatpush.msra.mxu0 0.0
        %2595 = vmatpush.msra.mxu0 0.0
        %2596 = vmatpush.msra.mxu0 0.0
        %2597 = vmatpush.msra.mxu0 0.0
        %2598 = vmatpush.msra.mxu0 0.0
        %2599 = vmatpush.msra.mxu0 0.0
        %2600 = vmatpush.msra.mxu0 0.0
        %2601 = vmatpush.msra.mxu0 0.0
        %2602 = vmatpush.msra.mxu0 0.0
        %2603 = vmatpush.msra.mxu0 0.0
        %2604 = vmatpush.msra.mxu0 0.0
        %2605 = vmatpush.msra.mxu0 %v2309
        %2606 = vmatpush.msra.mxu0 %v2302
        %2607 = vmatpush.msra.mxu0 %v2295
        %2608 = vmatpush.msra.mxu0 %v2288
        %2609 = vmatmul.f32.gmra.mxu0 %v2365
        %v2610 = vpop.f32.mrf.mxu0
        %v2611 = vadd.f32 %v2570, %v2610
        %2612 = vmatmul.f32.gmra.mxu0 %v2368
        %v2613 = vpop.f32.mrf.mxu0
        %v2614 = vadd.f32 %v2573, %v2613
        %2615 = vmatmul.f32.gmra.mxu0 %v2371
        %v2616 = vpop.f32.mrf.mxu0
        %v2617 = vadd.f32 %v2576, %v2616
        %2618 = vmatmul.f32.gmra.mxu0 %v2374
        %v2619 = vpop.f32.mrf.mxu0
        %v2620 = vadd.f32 %v2579, %v2619
        %2621 = vmatmul.f32.gmra.mxu0 %v2377
        %v2622 = vpop.f32.mrf.mxu0
        %v2623 = vadd.f32 %v2582, %v2622
        %2624 = vmatmul.f32.gmra.mxu0 %v2380
        %v2625 = vpop.f32.mrf.mxu0
        %v2626 = vadd.f32 %v2585, %v2625
        %2627 = vmatmul.f32.gmra.mxu0 %v2383
        %v2628 = vpop.f32.mrf.mxu0
        %v2629 = vadd.f32 %v2588, %v2628
        %2630 = vmatmul.f32.gmra.mxu0 %v2386
        %v2631 = vpop.f32.mrf.mxu0
        %v2632 = vadd.f32 %v2591, %v2631
        %2633 = vdwg.mxu0
        %2634 = vmatpush.msra.mxu0 %v2170
        %2635 = vmatpush.msra.mxu0 %v2163
        %2636 = vmatpush.msra.mxu0 %v2156
        %2637 = vmatpush.msra.mxu0 %v2149
        %2638 = vmatpush.msra.mxu0 %v2142
        %2639 = vmatpush.msra.mxu0 %v2135
        %2640 = vmatpush.msra.mxu0 %v2128
        %2641 = vmatpush.msra.mxu0 %v2121
        %2642 = vmatpush.msra.mxu0 %v2114
        %2643 = vmatpush.msra.mxu0 %v2107
        %2644 = vmatpush.msra.mxu0 %v2100
        %2645 = vmatpush.msra.mxu0 %v2093
        %2646 = vmatpush.msra.mxu0 %v2086
        %2647 = vmatpush.msra.mxu0 %v2079
        %2648 = vmatpush.msra.mxu0 %v2072
        %2649 = vmatpush.msra.mxu0 %v2065
        %2650 = vmatmul.f32.gmra.mxu0 %v2039
        %v2651 = vpop.f32.mrf.mxu0
        %v2652 = vadd.f32 %v2326, %v2651
        %2653 = vmatmul.f32.gmra.mxu0 %v2042
        %v2654 = vpop.f32.mrf.mxu0
        %v2655 = vadd.f32 %v2331, %v2654
        %2656 = vmatmul.f32.gmra.mxu0 %v2045
        %v2657 = vpop.f32.mrf.mxu0
        %v2658 = vadd.f32 %v2336, %v2657
        %2659 = vmatmul.f32.gmra.mxu0 %v2048
        %v2660 = vpop.f32.mrf.mxu0
        %v2661 = vadd.f32 %v2341, %v2660
        %2662 = vmatmul.f32.gmra.mxu0 %v2051
        %v2663 = vpop.f32.mrf.mxu0
        %v2664 = vadd.f32 %v2346, %v2663
        %2665 = vmatmul.f32.gmra.mxu0 %v2054
        %v2666 = vpop.f32.mrf.mxu0
        %v2667 = vadd.f32 %v2351, %v2666
        %2668 = vmatmul.f32.gmra.mxu0 %v2057
        %v2669 = vpop.f32.mrf.mxu0
        %v2670 = vadd.f32 %v2356, %v2669
        %2671 = vmatmul.f32.gmra.mxu0 %v2060
        %v2672 = vpop.f32.mrf.mxu0
        %v2673 = vadd.f32 %v2361, %v2672
        %2674 = vdwg.mxu0
        %2675 = vmatpush.msra.mxu0 %v2282
        %2676 = vmatpush.msra.mxu0 %v2275
        %2677 = vmatpush.msra.mxu0 %v2268
        %2678 = vmatpush.msra.mxu0 %v2261
        %2679 = vmatpush.msra.mxu0 %v2254
        %2680 = vmatpush.msra.mxu0 %v2247
        %2681 = vmatpush.msra.mxu0 %v2240
        %2682 = vmatpush.msra.mxu0 %v2233
        %2683 = vmatpush.msra.mxu0 %v2226
        %2684 = vmatpush.msra.mxu0 %v2219
        %2685 = vmatpush.msra.mxu0 %v2212
        %2686 = vmatpush.msra.mxu0 %v2205
        %2687 = vmatpush.msra.mxu0 %v2198
        %2688 = vmatpush.msra.mxu0 %v2191
        %2689 = vmatpush.msra.mxu0 %v2184
        %2690 = vmatpush.msra.mxu0 %v2177
        %2691 = vmatmul.f32.gmra.mxu0 %v2040
        %v2692 = vpop.f32.mrf.mxu0
        %v2693 = vadd.f32 %v2652, %v2692
        %2694 = vmatmul.f32.gmra.mxu0 %v2043
        %v2695 = vpop.f32.mrf.mxu0
        %v2696 = vadd.f32 %v2655, %v2695
        %2697 = vmatmul.f32.gmra.mxu0 %v2046
        %v2698 = vpop.f32.mrf.mxu0
        %v2699 = vadd.f32 %v2658, %v2698
        %2700 = vmatmul.f32.gmra.mxu0 %v2049
        %v2701 = vpop.f32.mrf.mxu0
        %v2702 = vadd.f32 %v2661, %v2701
        %2703 = vmatmul.f32.gmra.mxu0 %v2052
        %v2704 = vpop.f32.mrf.mxu0
        %v2705 = vadd.f32 %v2664, %v2704
        %2706 = vmatmul.f32.gmra.mxu0 %v2055
        %v2707 = vpop.f32.mrf.mxu0
        %v2708 = vadd.f32 %v2667, %v2707
        %2709 = vmatmul.f32.gmra.mxu0 %v2058
        %v2710 = vpop.f32.mrf.mxu0
        %v2711 = vadd.f32 %v2670, %v2710
        %2712 = vmatmul.f32.gmra.mxu0 %v2061
        %v2713 = vpop.f32.mrf.mxu0
        %v2714 = vadd.f32 %v2673, %v2713
        %2715 = vdwg.mxu0
        %2716 = vmatpush.msra.mxu0 0.0
        %2717 = vmatpush.msra.mxu0 0.0
        %2718 = vmatpush.msra.mxu0 0.0
        %2719 = vmatpush.msra.mxu0 0.0
        %2720 = vmatpush.msra.mxu0 0.0
        %2721 = vmatpush.msra.mxu0 0.0
        %2722 = vmatpush.msra.mxu0 0.0
        %2723 = vmatpush.msra.mxu0 0.0
        %2724 = vmatpush.msra.mxu0 0.0
        %2725 = vmatpush.msra.mxu0 0.0
        %2726 = vmatpush.msra.mxu0 0.0
        %2727 = vmatpush.msra.mxu0 0.0
        %2728 = vmatpush.msra.mxu0 %v2310
        %2729 = vmatpush.msra.mxu0 %v2303
        %2730 = vmatpush.msra.mxu0 %v2296
        %2731 = vmatpush.msra.mxu0 %v2289
        %2732 = vmatmul.f32.gmra.mxu0 %v2365
        %v2733 = vpop.f32.mrf.mxu0
        %v2734 = vadd.f32 %v2693, %v2733
        %2735 = vmatmul.f32.gmra.mxu0 %v2368
        %v2736 = vpop.f32.mrf.mxu0
        %v2737 = vadd.f32 %v2696, %v2736
        %2738 = vmatmul.f32.gmra.mxu0 %v2371
        %v2739 = vpop.f32.mrf.mxu0
        %v2740 = vadd.f32 %v2699, %v2739
        %2741 = vmatmul.f32.gmra.mxu0 %v2374
        %v2742 = vpop.f32.mrf.mxu0
        %v2743 = vadd.f32 %v2702, %v2742
        %2744 = vmatmul.f32.gmra.mxu0 %v2377
        %v2745 = vpop.f32.mrf.mxu0
        %v2746 = vadd.f32 %v2705, %v2745
        %2747 = vmatmul.f32.gmra.mxu0 %v2380
        %v2748 = vpop.f32.mrf.mxu0
        %v2749 = vadd.f32 %v2708, %v2748
        %2750 = vmatmul.f32.gmra.mxu0 %v2383
        %v2751 = vpop.f32.mrf.mxu0
        %v2752 = vadd.f32 %v2711, %v2751
        %2753 = vmatmul.f32.gmra.mxu0 %v2386
        %v2754 = vpop.f32.mrf.mxu0
        %v2755 = vadd.f32 %v2714, %v2754
        %2756 = vdwg.mxu0
        %2757 = vmatpush.msra.mxu0 %v2171
        %2758 = vmatpush.msra.mxu0 %v2164
        %2759 = vmatpush.msra.mxu0 %v2157
        %2760 = vmatpush.msra.mxu0 %v2150
        %2761 = vmatpush.msra.mxu0 %v2143
        %2762 = vmatpush.msra.mxu0 %v2136
        %2763 = vmatpush.msra.mxu0 %v2129
        %2764 = vmatpush.msra.mxu0 %v2122
        %2765 = vmatpush.msra.mxu0 %v2115
        %2766 = vmatpush.msra.mxu0 %v2108
        %2767 = vmatpush.msra.mxu0 %v2101
        %2768 = vmatpush.msra.mxu0 %v2094
        %2769 = vmatpush.msra.mxu0 %v2087
        %2770 = vmatpush.msra.mxu0 %v2080
        %2771 = vmatpush.msra.mxu0 %v2073
        %2772 = vmatpush.msra.mxu0 %v2066
        %2773 = vmatmul.f32.gmra.mxu0 %v2039
        %v2774 = vpop.f32.mrf.mxu0
        %v2775 = vadd.f32 %v2326, %v2774
        %2776 = vmatmul.f32.gmra.mxu0 %v2042
        %v2777 = vpop.f32.mrf.mxu0
        %v2778 = vadd.f32 %v2331, %v2777
        %2779 = vmatmul.f32.gmra.mxu0 %v2045
        %v2780 = vpop.f32.mrf.mxu0
        %v2781 = vadd.f32 %v2336, %v2780
        %2782 = vmatmul.f32.gmra.mxu0 %v2048
        %v2783 = vpop.f32.mrf.mxu0
        %v2784 = vadd.f32 %v2341, %v2783
        %2785 = vmatmul.f32.gmra.mxu0 %v2051
        %v2786 = vpop.f32.mrf.mxu0
        %v2787 = vadd.f32 %v2346, %v2786
        %2788 = vmatmul.f32.gmra.mxu0 %v2054
        %v2789 = vpop.f32.mrf.mxu0
        %v2790 = vadd.f32 %v2351, %v2789
        %2791 = vmatmul.f32.gmra.mxu0 %v2057
        %v2792 = vpop.f32.mrf.mxu0
        %v2793 = vadd.f32 %v2356, %v2792
        %2794 = vmatmul.f32.gmra.mxu0 %v2060
        %v2795 = vpop.f32.mrf.mxu0
        %v2796 = vadd.f32 %v2361, %v2795
        %2797 = vdwg.mxu0
        %2798 = vmatpush.msra.mxu0 %v2283
        %2799 = vmatpush.msra.mxu0 %v2276
        %2800 = vmatpush.msra.mxu0 %v2269
        %2801 = vmatpush.msra.mxu0 %v2262
        %2802 = vmatpush.msra.mxu0 %v2255
        %2803 = vmatpush.msra.mxu0 %v2248
        %2804 = vmatpush.msra.mxu0 %v2241
        %2805 = vmatpush.msra.mxu0 %v2234
        %2806 = vmatpush.msra.mxu0 %v2227
        %2807 = vmatpush.msra.mxu0 %v2220
        %2808 = vmatpush.msra.mxu0 %v2213
        %2809 = vmatpush.msra.mxu0 %v2206
        %2810 = vmatpush.msra.mxu0 %v2199
        %2811 = vmatpush.msra.mxu0 %v2192
        %2812 = vmatpush.msra.mxu0 %v2185
        %2813 = vmatpush.msra.mxu0 %v2178
        %2814 = vmatmul.f32.gmra.mxu0 %v2040
        %v2815 = vpop.f32.mrf.mxu0
        %v2816 = vadd.f32 %v2775, %v2815
        %2817 = vmatmul.f32.gmra.mxu0 %v2043
        %v2818 = vpop.f32.mrf.mxu0
        %v2819 = vadd.f32 %v2778, %v2818
        %2820 = vmatmul.f32.gmra.mxu0 %v2046
        %v2821 = vpop.f32.mrf.mxu0
        %v2822 = vadd.f32 %v2781, %v2821
        %2823 = vmatmul.f32.gmra.mxu0 %v2049
        %v2824 = vpop.f32.mrf.mxu0
        %v2825 = vadd.f32 %v2784, %v2824
        %2826 = vmatmul.f32.gmra.mxu0 %v2052
        %v2827 = vpop.f32.mrf.mxu0
        %v2828 = vadd.f32 %v2787, %v2827
        %2829 = vmatmul.f32.gmra.mxu0 %v2055
        %v2830 = vpop.f32.mrf.mxu0
        %v2831 = vadd.f32 %v2790, %v2830
        %2832 = vmatmul.f32.gmra.mxu0 %v2058
        %v2833 = vpop.f32.mrf.mxu0
        %v2834 = vadd.f32 %v2793, %v2833
        %2835 = vmatmul.f32.gmra.mxu0 %v2061
        %v2836 = vpop.f32.mrf.mxu0
        %v2837 = vadd.f32 %v2796, %v2836
        %2838 = vdwg.mxu0
        %2839 = vmatpush.msra.mxu0 0.0
        %2840 = vmatpush.msra.mxu0 0.0
        %2841 = vmatpush.msra.mxu0 0.0
        %2842 = vmatpush.msra.mxu0 0.0
        %2843 = vmatpush.msra.mxu0 0.0
        %2844 = vmatpush.msra.mxu0 0.0
        %2845 = vmatpush.msra.mxu0 0.0
        %2846 = vmatpush.msra.mxu0 0.0
        %2847 = vmatpush.msra.mxu0 0.0
        %2848 = vmatpush.msra.mxu0 0.0
        %2849 = vmatpush.msra.mxu0 0.0
        %2850 = vmatpush.msra.mxu0 0.0
        %2851 = vmatpush.msra.mxu0 %v2311
        %2852 = vmatpush.msra.mxu0 %v2304
        %2853 = vmatpush.msra.mxu0 %v2297
        %2854 = vmatpush.msra.mxu0 %v2290
        %2855 = vmatmul.f32.gmra.mxu0 %v2365
        %v2856 = vpop.f32.mrf.mxu0
        %v2857 = vadd.f32 %v2816, %v2856
        %2858 = vmatmul.f32.gmra.mxu0 %v2368
        %v2859 = vpop.f32.mrf.mxu0
        %v2860 = vadd.f32 %v2819, %v2859
        %2861 = vmatmul.f32.gmra.mxu0 %v2371
        %v2862 = vpop.f32.mrf.mxu0
        %v2863 = vadd.f32 %v2822, %v2862
        %2864 = vmatmul.f32.gmra.mxu0 %v2374
        %v2865 = vpop.f32.mrf.mxu0
        %v2866 = vadd.f32 %v2825, %v2865
        %2867 = vmatmul.f32.gmra.mxu0 %v2377
        %v2868 = vpop.f32.mrf.mxu0
        %v2869 = vadd.f32 %v2828, %v2868
        %2870 = vmatmul.f32.gmra.mxu0 %v2380
        %v2871 = vpop.f32.mrf.mxu0
        %v2872 = vadd.f32 %v2831, %v2871
        %2873 = vmatmul.f32.gmra.mxu0 %v2383
        %v2874 = vpop.f32.mrf.mxu0
        %v2875 = vadd.f32 %v2834, %v2874
        %2876 = vmatmul.f32.gmra.mxu0 %v2386
        %v2877 = vpop.f32.mrf.mxu0
        %v2878 = vadd.f32 %v2837, %v2877
        %2879 = vdwg.mxu0
        %2880 = vmatpush.msra.mxu0 %v2172
        %2881 = vmatpush.msra.mxu0 %v2165
        %2882 = vmatpush.msra.mxu0 %v2158
        %2883 = vmatpush.msra.mxu0 %v2151
        %2884 = vmatpush.msra.mxu0 %v2144
        %2885 = vmatpush.msra.mxu0 %v2137
        %2886 = vmatpush.msra.mxu0 %v2130
        %2887 = vmatpush.msra.mxu0 %v2123
        %2888 = vmatpush.msra.mxu0 %v2116
        %2889 = vmatpush.msra.mxu0 %v2109
        %2890 = vmatpush.msra.mxu0 %v2102
        %2891 = vmatpush.msra.mxu0 %v2095
        %2892 = vmatpush.msra.mxu0 %v2088
        %2893 = vmatpush.msra.mxu0 %v2081
        %2894 = vmatpush.msra.mxu0 %v2074
        %2895 = vmatpush.msra.mxu0 %v2067
        %2896 = vmatmul.f32.gmra.mxu0 %v2039
        %v2897 = vpop.f32.mrf.mxu0
        %v2898 = vadd.f32 %v2326, %v2897
        %2899 = vmatmul.f32.gmra.mxu0 %v2042
        %v2900 = vpop.f32.mrf.mxu0
        %v2901 = vadd.f32 %v2331, %v2900
        %2902 = vmatmul.f32.gmra.mxu0 %v2045
        %v2903 = vpop.f32.mrf.mxu0
        %v2904 = vadd.f32 %v2336, %v2903
        %2905 = vmatmul.f32.gmra.mxu0 %v2048
        %v2906 = vpop.f32.mrf.mxu0
        %v2907 = vadd.f32 %v2341, %v2906
        %2908 = vmatmul.f32.gmra.mxu0 %v2051
        %v2909 = vpop.f32.mrf.mxu0
        %v2910 = vadd.f32 %v2346, %v2909
        %2911 = vmatmul.f32.gmra.mxu0 %v2054
        %v2912 = vpop.f32.mrf.mxu0
        %v2913 = vadd.f32 %v2351, %v2912
        %2914 = vmatmul.f32.gmra.mxu0 %v2057
        %v2915 = vpop.f32.mrf.mxu0
        %v2916 = vadd.f32 %v2356, %v2915
        %2917 = vmatmul.f32.gmra.mxu0 %v2060
        %v2918 = vpop.f32.mrf.mxu0
        %v2919 = vadd.f32 %v2361, %v2918
        %2920 = vdwg.mxu0
        %2921 = vmatpush.msra.mxu0 %v2284
        %2922 = vmatpush.msra.mxu0 %v2277
        %2923 = vmatpush.msra.mxu0 %v2270
        %2924 = vmatpush.msra.mxu0 %v2263
        %2925 = vmatpush.msra.mxu0 %v2256
        %2926 = vmatpush.msra.mxu0 %v2249
        %2927 = vmatpush.msra.mxu0 %v2242
        %2928 = vmatpush.msra.mxu0 %v2235
        %2929 = vmatpush.msra.mxu0 %v2228
        %2930 = vmatpush.msra.mxu0 %v2221
        %2931 = vmatpush.msra.mxu0 %v2214
        %2932 = vmatpush.msra.mxu0 %v2207
        %2933 = vmatpush.msra.mxu0 %v2200
        %2934 = vmatpush.msra.mxu0 %v2193
        %2935 = vmatpush.msra.mxu0 %v2186
        %2936 = vmatpush.msra.mxu0 %v2179
        %2937 = vmatmul.f32.gmra.mxu0 %v2040
        %v2938 = vpop.f32.mrf.mxu0
        %v2939 = vadd.f32 %v2898, %v2938
        %2940 = vmatmul.f32.gmra.mxu0 %v2043
        %v2941 = vpop.f32.mrf.mxu0
        %v2942 = vadd.f32 %v2901, %v2941
        %2943 = vmatmul.f32.gmra.mxu0 %v2046
        %v2944 = vpop.f32.mrf.mxu0
        %v2945 = vadd.f32 %v2904, %v2944
        %2946 = vmatmul.f32.gmra.mxu0 %v2049
        %v2947 = vpop.f32.mrf.mxu0
        %v2948 = vadd.f32 %v2907, %v2947
        %2949 = vmatmul.f32.gmra.mxu0 %v2052
        %v2950 = vpop.f32.mrf.mxu0
        %v2951 = vadd.f32 %v2910, %v2950
        %2952 = vmatmul.f32.gmra.mxu0 %v2055
        %v2953 = vpop.f32.mrf.mxu0
        %v2954 = vadd.f32 %v2913, %v2953
        %2955 = vmatmul.f32.gmra.mxu0 %v2058
        %v2956 = vpop.f32.mrf.mxu0
        %v2957 = vadd.f32 %v2916, %v2956
        %2958 = vmatmul.f32.gmra.mxu0 %v2061
        %v2959 = vpop.f32.mrf.mxu0
        %v2960 = vadd.f32 %v2919, %v2959
        %2961 = vdwg.mxu0
        %2962 = vmatpush.msra.mxu0 0.0
        %2963 = vmatpush.msra.mxu0 0.0
        %2964 = vmatpush.msra.mxu0 0.0
        %2965 = vmatpush.msra.mxu0 0.0
        %2966 = vmatpush.msra.mxu0 0.0
        %2967 = vmatpush.msra.mxu0 0.0
        %2968 = vmatpush.msra.mxu0 0.0
        %2969 = vmatpush.msra.mxu0 0.0
        %2970 = vmatpush.msra.mxu0 0.0
        %2971 = vmatpush.msra.mxu0 0.0
        %2972 = vmatpush.msra.mxu0 0.0
        %2973 = vmatpush.msra.mxu0 0.0
        %2974 = vmatpush.msra.mxu0 %v2312
        %2975 = vmatpush.msra.mxu0 %v2305
        %2976 = vmatpush.msra.mxu0 %v2298
        %2977 = vmatpush.msra.mxu0 %v2291
        %2978 = vmatmul.f32.gmra.mxu0 %v2365
        %v2979 = vpop.f32.mrf.mxu0
        %v2980 = vadd.f32 %v2939, %v2979
        %2981 = vmatmul.f32.gmra.mxu0 %v2368
        %v2982 = vpop.f32.mrf.mxu0
        %v2983 = vadd.f32 %v2942, %v2982
        %2984 = vmatmul.f32.gmra.mxu0 %v2371
        %v2985 = vpop.f32.mrf.mxu0
        %v2986 = vadd.f32 %v2945, %v2985
        %2987 = vmatmul.f32.gmra.mxu0 %v2374
        %v2988 = vpop.f32.mrf.mxu0
        %v2989 = vadd.f32 %v2948, %v2988
        %2990 = vmatmul.f32.gmra.mxu0 %v2377
        %v2991 = vpop.f32.mrf.mxu0
        %v2992 = vadd.f32 %v2951, %v2991
        %2993 = vmatmul.f32.gmra.mxu0 %v2380
        %v2994 = vpop.f32.mrf.mxu0
        %v2995 = vadd.f32 %v2954, %v2994
        %2996 = vmatmul.f32.gmra.mxu0 %v2383
        %v2997 = vpop.f32.mrf.mxu0
        %v2998 = vadd.f32 %v2957, %v2997
        %2999 = vmatmul.f32.gmra.mxu0 %v2386
        %v3000 = vpop.f32.mrf.mxu0
        %v3001 = vadd.f32 %v2960, %v3000
        %3002 = vdwg.mxu0
        %3003 = vmatpush.msra.mxu0 %v2173
        %3004 = vmatpush.msra.mxu0 %v2166
        %3005 = vmatpush.msra.mxu0 %v2159
        %3006 = vmatpush.msra.mxu0 %v2152
        %3007 = vmatpush.msra.mxu0 %v2145
        %3008 = vmatpush.msra.mxu0 %v2138
        %3009 = vmatpush.msra.mxu0 %v2131
        %3010 = vmatpush.msra.mxu0 %v2124
        %3011 = vmatpush.msra.mxu0 %v2117
        %3012 = vmatpush.msra.mxu0 %v2110
        %3013 = vmatpush.msra.mxu0 %v2103
        %3014 = vmatpush.msra.mxu0 %v2096
        %3015 = vmatpush.msra.mxu0 %v2089
        %3016 = vmatpush.msra.mxu0 %v2082
        %3017 = vmatpush.msra.mxu0 %v2075
        %3018 = vmatpush.msra.mxu0 %v2068
        %3019 = vmatmul.f32.gmra.mxu0 %v2039
        %v3020 = vpop.f32.mrf.mxu0
        %v3021 = vadd.f32 %v2326, %v3020
        %3022 = vmatmul.f32.gmra.mxu0 %v2042
        %v3023 = vpop.f32.mrf.mxu0
        %v3024 = vadd.f32 %v2331, %v3023
        %3025 = vmatmul.f32.gmra.mxu0 %v2045
        %v3026 = vpop.f32.mrf.mxu0
        %v3027 = vadd.f32 %v2336, %v3026
        %3028 = vmatmul.f32.gmra.mxu0 %v2048
        %v3029 = vpop.f32.mrf.mxu0
        %v3030 = vadd.f32 %v2341, %v3029
        %3031 = vmatmul.f32.gmra.mxu0 %v2051
        %v3032 = vpop.f32.mrf.mxu0
        %v3033 = vadd.f32 %v2346, %v3032
        %3034 = vmatmul.f32.gmra.mxu0 %v2054
        %v3035 = vpop.f32.mrf.mxu0
        %v3036 = vadd.f32 %v2351, %v3035
        %3037 = vmatmul.f32.gmra.mxu0 %v2057
        %v3038 = vpop.f32.mrf.mxu0
        %v3039 = vadd.f32 %v2356, %v3038
        %3040 = vmatmul.f32.gmra.mxu0 %v2060
        %v3041 = vpop.f32.mrf.mxu0
        %v3042 = vadd.f32 %v2361, %v3041
        %3043 = vdwg.mxu0
        %3044 = vmatpush.msra.mxu0 %v2285
        %3045 = vmatpush.msra.mxu0 %v2278
        %3046 = vmatpush.msra.mxu0 %v2271
        %3047 = vmatpush.msra.mxu0 %v2264
        %3048 = vmatpush.msra.mxu0 %v2257
        %3049 = vmatpush.msra.mxu0 %v2250
        %3050 = vmatpush.msra.mxu0 %v2243
        %3051 = vmatpush.msra.mxu0 %v2236
        %3052 = vmatpush.msra.mxu0 %v2229
        %3053 = vmatpush.msra.mxu0 %v2222
        %3054 = vmatpush.msra.mxu0 %v2215
        %3055 = vmatpush.msra.mxu0 %v2208
        %3056 = vmatpush.msra.mxu0 %v2201
        %3057 = vmatpush.msra.mxu0 %v2194
        %3058 = vmatpush.msra.mxu0 %v2187
        %3059 = vmatpush.msra.mxu0 %v2180
        %3060 = vmatmul.f32.gmra.mxu0 %v2040
        %v3061 = vpop.f32.mrf.mxu0
        %v3062 = vadd.f32 %v3021, %v3061
        %3063 = vmatmul.f32.gmra.mxu0 %v2043
        %v3064 = vpop.f32.mrf.mxu0
        %v3065 = vadd.f32 %v3024, %v3064
        %3066 = vmatmul.f32.gmra.mxu0 %v2046
        %v3067 = vpop.f32.mrf.mxu0
        %v3068 = vadd.f32 %v3027, %v3067
        %3069 = vmatmul.f32.gmra.mxu0 %v2049
        %v3070 = vpop.f32.mrf.mxu0
        %v3071 = vadd.f32 %v3030, %v3070
        %3072 = vmatmul.f32.gmra.mxu0 %v2052
        %v3073 = vpop.f32.mrf.mxu0
        %v3074 = vadd.f32 %v3033, %v3073
        %3075 = vmatmul.f32.gmra.mxu0 %v2055
        %v3076 = vpop.f32.mrf.mxu0
        %v3077 = vadd.f32 %v3036, %v3076
        %3078 = vmatmul.f32.gmra.mxu0 %v2058
        %v3079 = vpop.f32.mrf.mxu0
        %v3080 = vadd.f32 %v3039, %v3079
        %3081 = vmatmul.f32.gmra.mxu0 %v2061
        %v3082 = vpop.f32.mrf.mxu0
        %v3083 = vadd.f32 %v3042, %v3082
        %3084 = vdwg.mxu0
        %3085 = vmatpush.msra.mxu0 0.0
        %3086 = vmatpush.msra.mxu0 0.0
        %3087 = vmatpush.msra.mxu0 0.0
        %3088 = vmatpush.msra.mxu0 0.0
        %3089 = vmatpush.msra.mxu0 0.0
        %3090 = vmatpush.msra.mxu0 0.0
        %3091 = vmatpush.msra.mxu0 0.0
        %3092 = vmatpush.msra.mxu0 0.0
        %3093 = vmatpush.msra.mxu0 0.0
        %3094 = vmatpush.msra.mxu0 0.0
        %3095 = vmatpush.msra.mxu0 0.0
        %3096 = vmatpush.msra.mxu0 0.0
        %3097 = vmatpush.msra.mxu0 %v2313
        %3098 = vmatpush.msra.mxu0 %v2306
        %3099 = vmatpush.msra.mxu0 %v2299
        %3100 = vmatpush.msra.mxu0 %v2292
        %3101 = vmatmul.f32.gmra.mxu0 %v2365
        %v3102 = vpop.f32.mrf.mxu0
        %v3103 = vadd.f32 %v3062, %v3102
        %3104 = vmatmul.f32.gmra.mxu0 %v2368
        %v3105 = vpop.f32.mrf.mxu0
        %v3106 = vadd.f32 %v3065, %v3105
        %3107 = vmatmul.f32.gmra.mxu0 %v2371
        %v3108 = vpop.f32.mrf.mxu0
        %v3109 = vadd.f32 %v3068, %v3108
        %3110 = vmatmul.f32.gmra.mxu0 %v2374
        %v3111 = vpop.f32.mrf.mxu0
        %v3112 = vadd.f32 %v3071, %v3111
        %3113 = vmatmul.f32.gmra.mxu0 %v2377
        %v3114 = vpop.f32.mrf.mxu0
        %v3115 = vadd.f32 %v3074, %v3114
        %3116 = vmatmul.f32.gmra.mxu0 %v2380
        %v3117 = vpop.f32.mrf.mxu0
        %v3118 = vadd.f32 %v3077, %v3117
        %3119 = vmatmul.f32.gmra.mxu0 %v2383
        %v3120 = vpop.f32.mrf.mxu0
        %v3121 = vadd.f32 %v3080, %v3120
        %3122 = vmatmul.f32.gmra.mxu0 %v2386
        %v3123 = vpop.f32.mrf.mxu0
        %v3124 = vadd.f32 %v3083, %v3123
        %3125 = vdwg.mxu0
        %3126 = vmatpush.msra.mxu0 %v2174
        %3127 = vmatpush.msra.mxu0 %v2167
        %3128 = vmatpush.msra.mxu0 %v2160
        %3129 = vmatpush.msra.mxu0 %v2153
        %3130 = vmatpush.msra.mxu0 %v2146
        %3131 = vmatpush.msra.mxu0 %v2139
        %3132 = vmatpush.msra.mxu0 %v2132
        %3133 = vmatpush.msra.mxu0 %v2125
        %3134 = vmatpush.msra.mxu0 %v2118
        %3135 = vmatpush.msra.mxu0 %v2111
        %3136 = vmatpush.msra.mxu0 %v2104
        %3137 = vmatpush.msra.mxu0 %v2097
        %3138 = vmatpush.msra.mxu0 %v2090
        %3139 = vmatpush.msra.mxu0 %v2083
        %3140 = vmatpush.msra.mxu0 %v2076
        %3141 = vmatpush.msra.mxu0 %v2069
        %3142 = vmatmul.f32.gmra.mxu0 %v2039
        %v3143 = vpop.f32.mrf.mxu0
        %v3144 = vadd.f32 %v2326, %v3143
        %3145 = vmatmul.f32.gmra.mxu0 %v2042
        %v3146 = vpop.f32.mrf.mxu0
        %v3147 = vadd.f32 %v2331, %v3146
        %3148 = vmatmul.f32.gmra.mxu0 %v2045
        %v3149 = vpop.f32.mrf.mxu0
        %v3150 = vadd.f32 %v2336, %v3149
        %3151 = vmatmul.f32.gmra.mxu0 %v2048
        %v3152 = vpop.f32.mrf.mxu0
        %v3153 = vadd.f32 %v2341, %v3152
        %3154 = vmatmul.f32.gmra.mxu0 %v2051
        %v3155 = vpop.f32.mrf.mxu0
        %v3156 = vadd.f32 %v2346, %v3155
        %3157 = vmatmul.f32.gmra.mxu0 %v2054
        %v3158 = vpop.f32.mrf.mxu0
        %v3159 = vadd.f32 %v2351, %v3158
        %3160 = vmatmul.f32.gmra.mxu0 %v2057
        %v3161 = vpop.f32.mrf.mxu0
        %v3162 = vadd.f32 %v2356, %v3161
        %3163 = vmatmul.f32.gmra.mxu0 %v2060
        %v3164 = vpop.f32.mrf.mxu0
        %v3165 = vadd.f32 %v2361, %v3164
        %3166 = vdwg.mxu0
        %3167 = vmatpush.msra.mxu0 %v2286
        %3168 = vmatpush.msra.mxu0 %v2279
        %3169 = vmatpush.msra.mxu0 %v2272
        %3170 = vmatpush.msra.mxu0 %v2265
        %3171 = vmatpush.msra.mxu0 %v2258
        %3172 = vmatpush.msra.mxu0 %v2251
        %3173 = vmatpush.msra.mxu0 %v2244
        %3174 = vmatpush.msra.mxu0 %v2237
        %3175 = vmatpush.msra.mxu0 %v2230
        %3176 = vmatpush.msra.mxu0 %v2223
        %3177 = vmatpush.msra.mxu0 %v2216
        %3178 = vmatpush.msra.mxu0 %v2209
        %3179 = vmatpush.msra.mxu0 %v2202
        %3180 = vmatpush.msra.mxu0 %v2195
        %3181 = vmatpush.msra.mxu0 %v2188
        %3182 = vmatpush.msra.mxu0 %v2181
        %3183 = vmatmul.f32.gmra.mxu0 %v2040
        %v3184 = vpop.f32.mrf.mxu0
        %v3185 = vadd.f32 %v3144, %v3184
        %3186 = vmatmul.f32.gmra.mxu0 %v2043
        %v3187 = vpop.f32.mrf.mxu0
        %v3188 = vadd.f32 %v3147, %v3187
        %3189 = vmatmul.f32.gmra.mxu0 %v2046
        %v3190 = vpop.f32.mrf.mxu0
        %v3191 = vadd.f32 %v3150, %v3190
        %3192 = vmatmul.f32.gmra.mxu0 %v2049
        %v3193 = vpop.f32.mrf.mxu0
        %v3194 = vadd.f32 %v3153, %v3193
        %3195 = vmatmul.f32.gmra.mxu0 %v2052
        %v3196 = vpop.f32.mrf.mxu0
        %v3197 = vadd.f32 %v3156, %v3196
        %3198 = vmatmul.f32.gmra.mxu0 %v2055
        %v3199 = vpop.f32.mrf.mxu0
        %v3200 = vadd.f32 %v3159, %v3199
        %3201 = vmatmul.f32.gmra.mxu0 %v2058
        %v3202 = vpop.f32.mrf.mxu0
        %v3203 = vadd.f32 %v3162, %v3202
        %3204 = vmatmul.f32.gmra.mxu0 %v2061
        %v3205 = vpop.f32.mrf.mxu0
        %v3206 = vadd.f32 %v3165, %v3205
        %3207 = vdwg.mxu0
        %3208 = vmatpush.msra.mxu0 0.0
        %3209 = vmatpush.msra.mxu0 0.0
        %3210 = vmatpush.msra.mxu0 0.0
        %3211 = vmatpush.msra.mxu0 0.0
        %3212 = vmatpush.msra.mxu0 0.0
        %3213 = vmatpush.msra.mxu0 0.0
        %3214 = vmatpush.msra.mxu0 0.0
        %3215 = vmatpush.msra.mxu0 0.0
        %3216 = vmatpush.msra.mxu0 0.0
        %3217 = vmatpush.msra.mxu0 0.0
        %3218 = vmatpush.msra.mxu0 0.0
        %3219 = vmatpush.msra.mxu0 0.0
        %3220 = vmatpush.msra.mxu0 %v2314
        %3221 = vmatpush.msra.mxu0 %v2307
        %3222 = vmatpush.msra.mxu0 %v2300
        %3223 = vmatpush.msra.mxu0 %v2293
        %3224 = vmatmul.f32.gmra.mxu0 %v2365
        %v3225 = vpop.f32.mrf.mxu0
        %v3226 = vadd.f32 %v3185, %v3225
        %3227 = vmatmul.f32.gmra.mxu0 %v2368
        %v3228 = vpop.f32.mrf.mxu0
        %v3229 = vadd.f32 %v3188, %v3228
        %3230 = vmatmul.f32.gmra.mxu0 %v2371
        %v3231 = vpop.f32.mrf.mxu0
        %v3232 = vadd.f32 %v3191, %v3231
        %3233 = vmatmul.f32.gmra.mxu0 %v2374
        %v3234 = vpop.f32.mrf.mxu0
        %v3235 = vadd.f32 %v3194, %v3234
        %3236 = vmatmul.f32.gmra.mxu0 %v2377
        %v3237 = vpop.f32.mrf.mxu0
        %v3238 = vadd.f32 %v3197, %v3237
        %3239 = vmatmul.f32.gmra.mxu0 %v2380
        %v3240 = vpop.f32.mrf.mxu0
        %v3241 = vadd.f32 %v3200, %v3240
        %3242 = vmatmul.f32.gmra.mxu0 %v2383
        %v3243 = vpop.f32.mrf.mxu0
        %v3244 = vadd.f32 %v3203, %v3243
        %3245 = vmatmul.f32.gmra.mxu0 %v2386
        %v3246 = vpop.f32.mrf.mxu0
        %v3247 = vadd.f32 %v3206, %v3246
        %3248 = vdwg.mxu0
        %v3249 = vmax.f32 %v2488, 0.0
        %v3250 = vmax.f32 %v2611, 0.0
        %v3251 = vmax.f32 %v2734, 0.0
        %v3252 = vmax.f32 %v2857, 0.0
        %v3253 = vmax.f32 %v2980, 0.0
        %v3254 = vmax.f32 %v3103, 0.0
        %v3255 = vmax.f32 %v3226, 0.0
        %v3256 = vmax.f32 %v2491, 0.0
        %v3257 = vmax.f32 %v2614, 0.0
        %v3258 = vmax.f32 %v2737, 0.0
        %v3259 = vmax.f32 %v2860, 0.0
        %v3260 = vmax.f32 %v2983, 0.0
        %v3261 = vmax.f32 %v3106, 0.0
        %v3262 = vmax.f32 %v3229, 0.0
        %v3263 = vmax.f32 %v2494, 0.0
        %v3264 = vmax.f32 %v2617, 0.0
        %v3265 = vmax.f32 %v2740, 0.0
        %v3266 = vmax.f32 %v2863, 0.0
        %v3267 = vmax.f32 %v2986, 0.0
        %v3268 = vmax.f32 %v3109, 0.0
        %v3269 = vmax.f32 %v3232, 0.0
        %v3270 = vmax.f32 %v2497, 0.0
        %v3271 = vmax.f32 %v2620, 0.0
        %v3272 = vmax.f32 %v2743, 0.0
        %v3273 = vmax.f32 %v2866, 0.0
        %v3274 = vmax.f32 %v2989, 0.0
        %v3275 = vmax.f32 %v3112, 0.0
        %v3276 = vmax.f32 %v3235, 0.0
        %v3277 = vmax.f32 %v2500, 0.0
        %v3278 = vmax.f32 %v2623, 0.0
        %v3279 = vmax.f32 %v2746, 0.0
        %v3280 = vmax.f32 %v2869, 0.0
        %v3281 = vmax.f32 %v2992, 0.0
        %v3282 = vmax.f32 %v3115, 0.0
        %v3283 = vmax.f32 %v3238, 0.0
        %v3284 = vmax.f32 %v2503, 0.0
        %v3285 = vmax.f32 %v2626, 0.0
        %v3286 = vmax.f32 %v2749, 0.0
        %v3287 = vmax.f32 %v2872, 0.0
        %v3288 = vmax.f32 %v2995, 0.0
        %v3289 = vmax.f32 %v3118, 0.0
        %v3290 = vmax.f32 %v3241, 0.0
        %v3291 = vmax.f32 %v2506, 0.0
        %v3292 = vmax.f32 %v2629, 0.0
        %v3293 = vmax.f32 %v2752, 0.0
        %v3294 = vmax.f32 %v2875, 0.0
        %v3295 = vmax.f32 %v2998, 0.0
        %v3296 = vmax.f32 %v3121, 0.0
        %v3297 = vmax.f32 %v3244, 0.0
        %v3298 = vmax.f32 %v2509, 0.0
        %v3299 = vmax.f32 %v2632, 0.0
        %v3300 = vmax.f32 %v2755, 0.0
        %v3301 = vmax.f32 %v2878, 0.0
        %v3302 = vmax.f32 %v3001, 0.0
        %v3303 = vmax.f32 %v3124, 0.0
        %v3304 = vmax.f32 %v3247, 0.0
        %3361 = vrot.lane.b32.xlu0 %v3249, 127
        %v3362 = vpop.permute.xlu0 %3361
        %3363 = vrot.lane.b32.xlu0 %v3250, 127
        %v3364 = vpop.permute.xlu0 %3363
        %3365 = vrot.lane.b32.xlu0 %v3251, 127
        %v3366 = vpop.permute.xlu0 %3365
        %3367 = vrot.lane.b32.xlu0 %v3252, 127
        %v3368 = vpop.permute.xlu0 %3367
        %3369 = vrot.lane.b32.xlu0 %v3253, 127
        %v3370 = vpop.permute.xlu0 %3369
        %3371 = vrot.lane.b32.xlu0 %v3254, 127
        %v3372 = vpop.permute.xlu0 %3371
        %3373 = vrot.lane.b32.xlu0 %v3255, 127
        %v3374 = vpop.permute.xlu0 %3373
        %3375 = vrot.lane.b32.xlu0 %v3256, 127
        %v3376 = vpop.permute.xlu0 %3375
        %3377 = vrot.lane.b32.xlu0 %v3257, 127
        %v3378 = vpop.permute.xlu0 %3377
        %3379 = vrot.lane.b32.xlu0 %v3258, 127
        %v3380 = vpop.permute.xlu0 %3379
        %3381 = vrot.lane.b32.xlu0 %v3259, 127
        %v3382 = vpop.permute.xlu0 %3381
        %3383 = vrot.lane.b32.xlu0 %v3260, 127
        %v3384 = vpop.permute.xlu0 %3383
        %3385 = vrot.lane.b32.xlu0 %v3261, 127
        %v3386 = vpop.permute.xlu0 %3385
        %3387 = vrot.lane.b32.xlu0 %v3262, 127
        %v3388 = vpop.permute.xlu0 %3387
        %3389 = vrot.lane.b32.xlu0 %v3263, 127
        %v3390 = vpop.permute.xlu0 %3389
        %3391 = vrot.lane.b32.xlu0 %v3264, 127
        %v3392 = vpop.permute.xlu0 %3391
        %3393 = vrot.lane.b32.xlu0 %v3265, 127
        %v3394 = vpop.permute.xlu0 %3393
        %3395 = vrot.lane.b32.xlu0 %v3266, 127
        %v3396 = vpop.permute.xlu0 %3395
        %3397 = vrot.lane.b32.xlu0 %v3267, 127
        %v3398 = vpop.permute.xlu0 %3397
        %3399 = vrot.lane.b32.xlu0 %v3268, 127
        %v3400 = vpop.permute.xlu0 %3399
        %3401 = vrot.lane.b32.xlu0 %v3269, 127
        %v3402 = vpop.permute.xlu0 %3401
        %3403 = vrot.lane.b32.xlu0 %v3270, 127
        %v3404 = vpop.permute.xlu0 %3403
        %3405 = vrot.lane.b32.xlu0 %v3271, 127
        %v3406 = vpop.permute.xlu0 %3405
        %3407 = vrot.lane.b32.xlu0 %v3272, 127
        %v3408 = vpop.permute.xlu0 %3407
        %3409 = vrot.lane.b32.xlu0 %v3273, 127
        %v3410 = vpop.permute.xlu0 %3409
        %3411 = vrot.lane.b32.xlu0 %v3274, 127
        %v3412 = vpop.permute.xlu0 %3411
        %3413 = vrot.lane.b32.xlu0 %v3275, 127
        %v3414 = vpop.permute.xlu0 %3413
        %3415 = vrot.lane.b32.xlu0 %v3276, 127
        %v3416 = vpop.permute.xlu0 %3415
        %3417 = vrot.lane.b32.xlu0 %v3277, 127
        %v3418 = vpop.permute.xlu0 %3417
        %3419 = vrot.lane.b32.xlu0 %v3278, 127
        %v3420 = vpop.permute.xlu0 %3419
        %3421 = vrot.lane.b32.xlu0 %v3279, 127
        %v3422 = vpop.permute.xlu0 %3421
        %3423 = vrot.lane.b32.xlu0 %v3280, 127
        %v3424 = vpop.permute.xlu0 %3423
        %3425 = vrot.lane.b32.xlu0 %v3281, 127
        %v3426 = vpop.permute.xlu0 %3425
        %3427 = vrot.lane.b32.xlu0 %v3282, 127
        %v3428 = vpop.permute.xlu0 %3427
        %3429 = vrot.lane.b32.xlu0 %v3283, 127
        %v3430 = vpop.permute.xlu0 %3429
        %3431 = vrot.lane.b32.xlu0 %v3284, 127
        %v3432 = vpop.permute.xlu0 %3431
        %3433 = vrot.lane.b32.xlu0 %v3285, 127
        %v3434 = vpop.permute.xlu0 %3433
        %3435 = vrot.lane.b32.xlu0 %v3286, 127
        %v3436 = vpop.permute.xlu0 %3435
        %3437 = vrot.lane.b32.xlu0 %v3287, 127
        %v3438 = vpop.permute.xlu0 %3437
        %3439 = vrot.lane.b32.xlu0 %v3288, 127
        %v3440 = vpop.permute.xlu0 %3439
        %3441 = vrot.lane.b32.xlu0 %v3289, 127
        %v3442 = vpop.permute.xlu0 %3441
        %3443 = vrot.lane.b32.xlu0 %v3290, 127
        %v3444 = vpop.permute.xlu0 %3443
        %3445 = vrot.lane.b32.xlu0 %v3291, 127
        %v3446 = vpop.permute.xlu0 %3445
        %3447 = vrot.lane.b32.xlu0 %v3292, 127
        %v3448 = vpop.permute.xlu0 %3447
        %3449 = vrot.lane.b32.xlu0 %v3293, 127
        %v3450 = vpop.permute.xlu0 %3449
        %3451 = vrot.lane.b32.xlu0 %v3294, 127
        %v3452 = vpop.permute.xlu0 %3451
        %3453 = vrot.lane.b32.xlu0 %v3295, 127
        %v3454 = vpop.permute.xlu0 %3453
        %3455 = vrot.lane.b32.xlu0 %v3296, 127
        %v3456 = vpop.permute.xlu0 %3455
        %3457 = vrot.lane.b32.xlu0 %v3297, 127
        %v3458 = vpop.permute.xlu0 %3457
        %3459 = vrot.lane.b32.xlu0 %v3298, 127
        %v3460 = vpop.permute.xlu0 %3459
        %3461 = vrot.lane.b32.xlu0 %v3299, 127
        %v3462 = vpop.permute.xlu0 %3461
        %3463 = vrot.lane.b32.xlu0 %v3300, 127
        %v3464 = vpop.permute.xlu0 %3463
        %3465 = vrot.lane.b32.xlu0 %v3301, 127
        %v3466 = vpop.permute.xlu0 %3465
        %3467 = vrot.lane.b32.xlu0 %v3302, 127
        %v3468 = vpop.permute.xlu0 %3467
        %3469 = vrot.lane.b32.xlu0 %v3303, 127
        %v3470 = vpop.permute.xlu0 %3469
        %3471 = vrot.lane.b32.xlu0 %v3304, 127
        %v3472 = vpop.permute.xlu0 %3471
        %v3473 = vsel %vm295, %v3362, %v3364
        %v3474 = vsel %vm295, %v3364, %v3366
        %v3475 = vsel %vm295, %v3366, %v3368
        %v3476 = vsel %vm295, %v3368, %v3370
        %v3477 = vsel %vm295, %v3370, %v3372
        %v3478 = vsel %vm295, %v3372, %v3374
        %v3479 = vsel %vm295, %v3376, %v3378
        %v3480 = vsel %vm295, %v3378, %v3380
        %v3481 = vsel %vm295, %v3380, %v3382
        %v3482 = vsel %vm295, %v3382, %v3384
        %v3483 = vsel %vm295, %v3384, %v3386
        %v3484 = vsel %vm295, %v3386, %v3388
        %v3485 = vsel %vm295, %v3390, %v3392
        %v3486 = vsel %vm295, %v3392, %v3394
        %v3487 = vsel %vm295, %v3394, %v3396
        %v3488 = vsel %vm295, %v3396, %v3398
        %v3489 = vsel %vm295, %v3398, %v3400
        %v3490 = vsel %vm295, %v3400, %v3402
        %v3491 = vsel %vm295, %v3404, %v3406
        %v3492 = vsel %vm295, %v3406, %v3408
        %v3493 = vsel %vm295, %v3408, %v3410
        %v3494 = vsel %vm295, %v3410, %v3412
        %v3495 = vsel %vm295, %v3412, %v3414
        %v3496 = vsel %vm295, %v3414, %v3416
        %v3497 = vsel %vm295, %v3418, %v3420
        %v3498 = vsel %vm295, %v3420, %v3422
        %v3499 = vsel %vm295, %v3422, %v3424
        %v3500 = vsel %vm295, %v3424, %v3426
        %v3501 = vsel %vm295, %v3426, %v3428
        %v3502 = vsel %vm295, %v3428, %v3430
        %v3503 = vsel %vm295, %v3432, %v3434
        %v3504 = vsel %vm295, %v3434, %v3436
        %v3505 = vsel %vm295, %v3436, %v3438
        %v3506 = vsel %vm295, %v3438, %v3440
        %v3507 = vsel %vm295, %v3440, %v3442
        %v3508 = vsel %vm295, %v3442, %v3444
        %v3509 = vsel %vm295, %v3446, %v3448
        %v3510 = vsel %vm295, %v3448, %v3450
        %v3511 = vsel %vm295, %v3450, %v3452
        %v3512 = vsel %vm295, %v3452, %v3454
        %v3513 = vsel %vm295, %v3454, %v3456
        %v3514 = vsel %vm295, %v3456, %v3458
        %v3515 = vsel %vm295, %v3460, %v3462
        %v3516 = vsel %vm295, %v3462, %v3464
        %v3517 = vsel %vm295, %v3464, %v3466
        %v3518 = vsel %vm295, %v3466, %v3468
        %v3519 = vsel %vm295, %v3468, %v3470
        %v3520 = vsel %vm295, %v3470, %v3472
        %v3569 = vmax.f32 %v3249, %v3473
        %v3570 = vmax.f32 %v3250, %v3474
        %v3571 = vmax.f32 %v3251, %v3475
        %v3572 = vmax.f32 %v3252, %v3476
        %v3573 = vmax.f32 %v3253, %v3477
        %v3574 = vmax.f32 %v3254, %v3478
        %v3575 = vmax.f32 %v3256, %v3479
        %v3576 = vmax.f32 %v3257, %v3480
        %v3577 = vmax.f32 %v3258, %v3481
        %v3578 = vmax.f32 %v3259, %v3482
        %v3579 = vmax.f32 %v3260, %v3483
        %v3580 = vmax.f32 %v3261, %v3484
        %v3581 = vmax.f32 %v3263, %v3485
        %v3582 = vmax.f32 %v3264, %v3486
        %v3583 = vmax.f32 %v3265, %v3487
        %v3584 = vmax.f32 %v3266, %v3488
        %v3585 = vmax.f32 %v3267, %v3489
        %v3586 = vmax.f32 %v3268, %v3490
        %v3587 = vmax.f32 %v3270, %v3491
        %v3588 = vmax.f32 %v3271, %v3492
        %v3589 = vmax.f32 %v3272, %v3493
        %v3590 = vmax.f32 %v3273, %v3494
        %v3591 = vmax.f32 %v3274, %v3495
        %v3592 = vmax.f32 %v3275, %v3496
        %v3593 = vmax.f32 %v3277, %v3497
        %v3594 = vmax.f32 %v3278, %v3498
        %v3595 = vmax.f32 %v3279, %v3499
        %v3596 = vmax.f32 %v3280, %v3500
        %v3597 = vmax.f32 %v3281, %v3501
        %v3598 = vmax.f32 %v3282, %v3502
        %v3599 = vmax.f32 %v3284, %v3503
        %v3600 = vmax.f32 %v3285, %v3504
        %v3601 = vmax.f32 %v3286, %v3505
        %v3602 = vmax.f32 %v3287, %v3506
        %v3603 = vmax.f32 %v3288, %v3507
        %v3604 = vmax.f32 %v3289, %v3508
        %v3605 = vmax.f32 %v3291, %v3509
        %v3606 = vmax.f32 %v3292, %v3510
        %v3607 = vmax.f32 %v3293, %v3511
        %v3608 = vmax.f32 %v3294, %v3512
        %v3609 = vmax.f32 %v3295, %v3513
        %v3610 = vmax.f32 %v3296, %v3514
        %v3611 = vmax.f32 %v3298, %v3515
        %v3612 = vmax.f32 %v3299, %v3516
        %v3613 = vmax.f32 %v3300, %v3517
        %v3614 = vmax.f32 %v3301, %v3518
        %v3615 = vmax.f32 %v3302, %v3519
        %v3616 = vmax.f32 %v3303, %v3520
        %3665 = vrot.lane.b32.xlu0 %v3569, 100
        %v3666 = vpop.permute.xlu0 %3665
        %3667 = vrot.lane.b32.xlu0 %v3570, 100
        %v3668 = vpop.permute.xlu0 %3667
        %3669 = vrot.lane.b32.xlu0 %v3571, 100
        %v3670 = vpop.permute.xlu0 %3669
        %3671 = vrot.lane.b32.xlu0 %v3572, 100
        %v3672 = vpop.permute.xlu0 %3671
        %3673 = vrot.lane.b32.xlu0 %v3573, 100
        %v3674 = vpop.permute.xlu0 %3673
        %3675 = vrot.lane.b32.xlu0 %v3574, 100
        %v3676 = vpop.permute.xlu0 %3675
        %3677 = vrot.lane.b32.xlu0 %v3575, 100
        %v3678 = vpop.permute.xlu0 %3677
        %3679 = vrot.lane.b32.xlu0 %v3576, 100
        %v3680 = vpop.permute.xlu0 %3679
        %3681 = vrot.lane.b32.xlu0 %v3577, 100
        %v3682 = vpop.permute.xlu0 %3681
        %3683 = vrot.lane.b32.xlu0 %v3578, 100
        %v3684 = vpop.permute.xlu0 %3683
        %3685 = vrot.lane.b32.xlu0 %v3579, 100
        %v3686 = vpop.permute.xlu0 %3685
        %3687 = vrot.lane.b32.xlu0 %v3580, 100
        %v3688 = vpop.permute.xlu0 %3687
        %3689 = vrot.lane.b32.xlu0 %v3581, 100
        %v3690 = vpop.permute.xlu0 %3689
        %3691 = vrot.lane.b32.xlu0 %v3582, 100
        %v3692 = vpop.permute.xlu0 %3691
        %3693 = vrot.lane.b32.xlu0 %v3583, 100
        %v3694 = vpop.permute.xlu0 %3693
        %3695 = vrot.lane.b32.xlu0 %v3584, 100
        %v3696 = vpop.permute.xlu0 %3695
        %3697 = vrot.lane.b32.xlu0 %v3585, 100
        %v3698 = vpop.permute.xlu0 %3697
        %3699 = vrot.lane.b32.xlu0 %v3586, 100
        %v3700 = vpop.permute.xlu0 %3699
        %3701 = vrot.lane.b32.xlu0 %v3587, 100
        %v3702 = vpop.permute.xlu0 %3701
        %3703 = vrot.lane.b32.xlu0 %v3588, 100
        %v3704 = vpop.permute.xlu0 %3703
        %3705 = vrot.lane.b32.xlu0 %v3589, 100
        %v3706 = vpop.permute.xlu0 %3705
        %3707 = vrot.lane.b32.xlu0 %v3590, 100
        %v3708 = vpop.permute.xlu0 %3707
        %3709 = vrot.lane.b32.xlu0 %v3591, 100
        %v3710 = vpop.permute.xlu0 %3709
        %3711 = vrot.lane.b32.xlu0 %v3592, 100
        %v3712 = vpop.permute.xlu0 %3711
        %3713 = vrot.lane.b32.xlu0 %v3593, 100
        %v3714 = vpop.permute.xlu0 %3713
        %3715 = vrot.lane.b32.xlu0 %v3594, 100
        %v3716 = vpop.permute.xlu0 %3715
        %3717 = vrot.lane.b32.xlu0 %v3595, 100
        %v3718 = vpop.permute.xlu0 %3717
        %3719 = vrot.lane.b32.xlu0 %v3596, 100
        %v3720 = vpop.permute.xlu0 %3719
        %3721 = vrot.lane.b32.xlu0 %v3597, 100
        %v3722 = vpop.permute.xlu0 %3721
        %3723 = vrot.lane.b32.xlu0 %v3598, 100
        %v3724 = vpop.permute.xlu0 %3723
        %3725 = vrot.lane.b32.xlu0 %v3599, 100
        %v3726 = vpop.permute.xlu0 %3725
        %3727 = vrot.lane.b32.xlu0 %v3600, 100
        %v3728 = vpop.permute.xlu0 %3727
        %3729 = vrot.lane.b32.xlu0 %v3601, 100
        %v3730 = vpop.permute.xlu0 %3729
        %3731 = vrot.lane.b32.xlu0 %v3602, 100
        %v3732 = vpop.permute.xlu0 %3731
        %3733 = vrot.lane.b32.xlu0 %v3603, 100
        %v3734 = vpop.permute.xlu0 %3733
        %3735 = vrot.lane.b32.xlu0 %v3604, 100
        %v3736 = vpop.permute.xlu0 %3735
        %3737 = vrot.lane.b32.xlu0 %v3605, 100
        %v3738 = vpop.permute.xlu0 %3737
        %3739 = vrot.lane.b32.xlu0 %v3606, 100
        %v3740 = vpop.permute.xlu0 %3739
        %3741 = vrot.lane.b32.xlu0 %v3607, 100
        %v3742 = vpop.permute.xlu0 %3741
        %3743 = vrot.lane.b32.xlu0 %v3608, 100
        %v3744 = vpop.permute.xlu0 %3743
        %3745 = vrot.lane.b32.xlu0 %v3609, 100
        %v3746 = vpop.permute.xlu0 %3745
        %3747 = vrot.lane.b32.xlu0 %v3610, 100
        %v3748 = vpop.permute.xlu0 %3747
        %3749 = vrot.lane.b32.xlu0 %v3611, 100
        %v3750 = vpop.permute.xlu0 %3749
        %3751 = vrot.lane.b32.xlu0 %v3612, 100
        %v3752 = vpop.permute.xlu0 %3751
        %3753 = vrot.lane.b32.xlu0 %v3613, 100
        %v3754 = vpop.permute.xlu0 %3753
        %3755 = vrot.lane.b32.xlu0 %v3614, 100
        %v3756 = vpop.permute.xlu0 %3755
        %3757 = vrot.lane.b32.xlu0 %v3615, 100
        %v3758 = vpop.permute.xlu0 %3757
        %3759 = vrot.lane.b32.xlu0 %v3616, 100
        %v3760 = vpop.permute.xlu0 %3759
        %v3761 = vsel %vm365, %v3666, %v3668
        %v3762 = vsel %vm365, %v3668, %v3670
        %v3763 = vsel %vm365, %v3670, %v3672
        %v3764 = vsel %vm365, %v3672, %v3674
        %v3765 = vsel %vm365, %v3674, %v3676
        %v3766 = vsel %vm365, %v3678, %v3680
        %v3767 = vsel %vm365, %v3680, %v3682
        %v3768 = vsel %vm365, %v3682, %v3684
        %v3769 = vsel %vm365, %v3684, %v3686
        %v3770 = vsel %vm365, %v3686, %v3688
        %v3771 = vsel %vm365, %v3690, %v3692
        %v3772 = vsel %vm365, %v3692, %v3694
        %v3773 = vsel %vm365, %v3694, %v3696
        %v3774 = vsel %vm365, %v3696, %v3698
        %v3775 = vsel %vm365, %v3698, %v3700
        %v3776 = vsel %vm365, %v3702, %v3704
        %v3777 = vsel %vm365, %v3704, %v3706
        %v3778 = vsel %vm365, %v3706, %v3708
        %v3779 = vsel %vm365, %v3708, %v3710
        %v3780 = vsel %vm365, %v3710, %v3712
        %v3781 = vsel %vm365, %v3714, %v3716
        %v3782 = vsel %vm365, %v3716, %v3718
        %v3783 = vsel %vm365, %v3718, %v3720
        %v3784 = vsel %vm365, %v3720, %v3722
        %v3785 = vsel %vm365, %v3722, %v3724
        %v3786 = vsel %vm365, %v3726, %v3728
        %v3787 = vsel %vm365, %v3728, %v3730
        %v3788 = vsel %vm365, %v3730, %v3732
        %v3789 = vsel %vm365, %v3732, %v3734
        %v3790 = vsel %vm365, %v3734, %v3736
        %v3791 = vsel %vm365, %v3738, %v3740
        %v3792 = vsel %vm365, %v3740, %v3742
        %v3793 = vsel %vm365, %v3742, %v3744
        %v3794 = vsel %vm365, %v3744, %v3746
        %v3795 = vsel %vm365, %v3746, %v3748
        %v3796 = vsel %vm365, %v3750, %v3752
        %v3797 = vsel %vm365, %v3752, %v3754
        %v3798 = vsel %vm365, %v3754, %v3756
        %v3799 = vsel %vm365, %v3756, %v3758
        %v3800 = vsel %vm365, %v3758, %v3760
        %v3841 = vmax.f32 %v3569, %v3761
        %v3842 = vmax.f32 %v3570, %v3762
        %v3843 = vmax.f32 %v3571, %v3763
        %v3844 = vmax.f32 %v3572, %v3764
        %v3845 = vmax.f32 %v3573, %v3765
        %v3846 = vmax.f32 %v3575, %v3766
        %v3847 = vmax.f32 %v3576, %v3767
        %v3848 = vmax.f32 %v3577, %v3768
        %v3849 = vmax.f32 %v3578, %v3769
        %v3850 = vmax.f32 %v3579, %v3770
        %v3851 = vmax.f32 %v3581, %v3771
        %v3852 = vmax.f32 %v3582, %v3772
        %v3853 = vmax.f32 %v3583, %v3773
        %v3854 = vmax.f32 %v3584, %v3774
        %v3855 = vmax.f32 %v3585, %v3775
        %v3856 = vmax.f32 %v3587, %v3776
        %v3857 = vmax.f32 %v3588, %v3777
        %v3858 = vmax.f32 %v3589, %v3778
        %v3859 = vmax.f32 %v3590, %v3779
        %v3860 = vmax.f32 %v3591, %v3780
        %v3861 = vmax.f32 %v3593, %v3781
        %v3862 = vmax.f32 %v3594, %v3782
        %v3863 = vmax.f32 %v3595, %v3783
        %v3864 = vmax.f32 %v3596, %v3784
        %v3865 = vmax.f32 %v3597, %v3785
        %v3866 = vmax.f32 %v3599, %v3786
        %v3867 = vmax.f32 %v3600, %v3787
        %v3868 = vmax.f32 %v3601, %v3788
        %v3869 = vmax.f32 %v3602, %v3789
        %v3870 = vmax.f32 %v3603, %v3790
        %v3871 = vmax.f32 %v3605, %v3791
        %v3872 = vmax.f32 %v3606, %v3792
        %v3873 = vmax.f32 %v3607, %v3793
        %v3874 = vmax.f32 %v3608, %v3794
        %v3875 = vmax.f32 %v3609, %v3795
        %v3876 = vmax.f32 %v3611, %v3796
        %v3877 = vmax.f32 %v3612, %v3797
        %v3878 = vmax.f32 %v3613, %v3798
        %v3879 = vmax.f32 %v3614, %v3799
        %v3880 = vmax.f32 %v3615, %v3800
        %3881 = vst [vmem:[%s258] sm:$0xff] %v3841
        %3882 = vst [vmem:[%s258 + $0x8] sm:$0xff] %v3842
        %3883 = vst [vmem:[%s258 + $0x10] sm:$0xff] %v3843
        %3884 = vst [vmem:[%s258 + $0x18] sm:$0xff] %v3844
        %3885 = vst [vmem:[%s258 + $0x20] sm:$0xff] %v3845
        %3886 = vst [vmem:[%s258 + $0x28] sm:$0xff] %v3846
        %3887 = vst [vmem:[%s258 + $0x30] sm:$0xff] %v3847
        %3888 = vst [vmem:[%s258 + $0x38] sm:$0xff] %v3848
        %3889 = vst [vmem:[%s258 + $0x40] sm:$0xff] %v3849
        %3890 = vst [vmem:[%s258 + $0x48] sm:$0xff] %v3850
        %3891 = vst [vmem:[%s258 + $0x50] sm:$0xff] %v3851
        %3892 = vst [vmem:[%s258 + $0x58] sm:$0xff] %v3852
        %3893 = vst [vmem:[%s258 + $0x60] sm:$0xff] %v3853
        %3894 = vst [vmem:[%s258 + $0x68] sm:$0xff] %v3854
        %3895 = vst [vmem:[%s258 + $0x70] sm:$0xff] %v3855
        %3896 = vst [vmem:[%s258 + $0x78] sm:$0xff] %v3856
        %3897 = vst [vmem:[%s258 + $0x80] sm:$0xff] %v3857
        %3898 = vst [vmem:[%s258 + $0x88] sm:$0xff] %v3858
        %3899 = vst [vmem:[%s258 + $0x90] sm:$0xff] %v3859
        %3900 = vst [vmem:[%s258 + $0x98] sm:$0xff] %v3860
        %3901 = vst [vmem:[%s258 + $0xa0] sm:$0xff] %v3861
        %3902 = vst [vmem:[%s258 + $0xa8] sm:$0xff] %v3862
        %3903 = vst [vmem:[%s258 + $0xb0] sm:$0xff] %v3863
        %3904 = vst [vmem:[%s258 + $0xb8] sm:$0xff] %v3864
        %3905 = vst [vmem:[%s258 + $0xc0] sm:$0xff] %v3865
        %3906 = vst [vmem:[%s258 + $0xc8] sm:$0xff] %v3866
        %3907 = vst [vmem:[%s258 + $0xd0] sm:$0xff] %v3867
        %3908 = vst [vmem:[%s258 + $0xd8] sm:$0xff] %v3868
        %3909 = vst [vmem:[%s258 + $0xe0] sm:$0xff] %v3869
        %3910 = vst [vmem:[%s258 + $0xe8] sm:$0xff] %v3870
        %3911 = vst [vmem:[%s258 + $0xf0] sm:$0xff] %v3871
        %3912 = vst [vmem:[%s258 + $0xf8] sm:$0xff] %v3872
        %3913 = vst [vmem:[%s258 + $0x100] sm:$0xff] %v3873
        %3914 = vst [vmem:[%s258 + $0x108] sm:$0xff] %v3874
        %3915 = vst [vmem:[%s258 + $0x110] sm:$0xff] %v3875
        %3916 = vst [vmem:[%s258 + $0x118] sm:$0xff] %v3876
        %3917 = vst [vmem:[%s258 + $0x120] sm:$0xff] %v3877
        %3918 = vst [vmem:[%s258 + $0x128] sm:$0xff] %v3878
        %3919 = vst [vmem:[%s258 + $0x130] sm:$0xff] %v3879
        %3920 = vst [vmem:[%s258 + $0x138] sm:$0xff] %v3880
        %p3921 = scmp.lt.s32.totalorder %s18, 1
        %s3922 = scalar_select %p3921, %s18, 1
        %s3923 = smul.addr %s3922, 40
        %s3924 = smul.addr %s3923, 8
        %s3925 = scalar_lea.vmem %s5, %s3924
        // Predicated region
        $region49: #{net_forward.2} parent=39 // pred_check
          %p3926 = pneg %p146
        $region50: #{net_forward.2} parent=39 // pred_check_branch
          %3928 = sbr.rel (%p3926) target = $region52
        $region51: #{net_forward.2} parent=39 // pred_region
          _
        $region52: #{net_forward.2} parent=39 // pred_fallthru
          _
      $region40: #{net_forward.2} parent=5 // pred_fallthru
        _
      %p3929 = scmp.le.s32.totalorder 2, %s13
      // Predicated region
      $region53: #{net_forward.2} parent=5 // pred_check
        %p3930 = pneg %p3929
      $region54: #{net_forward.2} parent=5 // pred_check_branch
        %3932 = sbr.rel (%p3930) target = $region56
      $region55: #{net_forward.2} parent=5 // pred_region
        %s3933 = ssub.s32 %s13, 2
        // Predicated region
        $region57: #{net_forward.2} parent=55 // pred_check
          %p3934 = pneg %p152
        $region58: #{net_forward.2} parent=55 // pred_check_branch
          %3936 = sbr.rel (%p3934) target = $region60
        $region59: #{net_forward.2} parent=55 // pred_region
          %p3937 = scmp.lt.s32.totalorder %s19, 1
          %s3938 = scalar_select %p3937, %s19, 1
          %s3939 = smul.addr %s3938, 40
          %s3940 = smul.addr %s3939, 8
          %s3941 = scalar_lea.vmem %s5, %s3940
        $region60: #{net_forward.2} parent=55 // pred_fallthru
          _
      $region56: #{net_forward.2} parent=5 // pred_fallthru
        _
    $region6: #{net_forward.2} parent=1 // loop_footer
      %s17 = sadd.s32 1, %s13
    $region7: #{net_forward.2} parent=1 // loop_footer_branch
      %12 = sbr.rel target = $region3
    $region8: #{net_forward.2} parent=1 // loop_exit
      _
    %3942 = vsyncpa [#allocation5], 1
    %s3943 = scalar_lea.sflag [#allocation5], 1
    %3944 = vsyncpa %s3943, 1
    %3945 = vsyncpa [#allocation7], 1

// kernel: net_forward.3
$region0: #{net_forward.3}
  #allocation0 [shape = 'u32[]', space=smem, size = 0x4, offset = 0x4, fixed_abs, tag = 'smem constant byte address 0x4 - core index']
  #allocation1 [shape = 'u32[72,128]{1,0:T(1,128)}', space=vmem, size = 0x9000, scoped, tag = 'internal scratch']
  %s0 = inlined_call_operand.vmem [shape: f32[2,9216], index: 0, kind: input, shape index: {}]
  %s1 = inlined_call_operand.vmem [shape: bf16[9216,128], index: 1, kind: input, shape index: {}]
  %s2 = inlined_call_operand.vmem [shape: f32[1,128], index: 2, kind: input, shape index: {}]
  %s3 = inlined_call_operand.vmem [shape: f32[128,10], index: 3, kind: input, shape index: {}]
  %s4 = inlined_call_operand.vmem [shape: f32[1,10], index: 4, kind: input, shape index: {}]
  %s5 = inlined_call_operand.hbm [shape: f32[2,10], index: 5, kind: output, shape index: {}]
  %s6 = sld [smem:[#allocation0]]
  $region30: #{net_forward.3} parent=0
    _
  %s8 = ssub.s32 1, %s6
  %s9 = scalar_select 0, %s8, %s6
  $region1: #{net_forward.3} parent=0
    #allocation2 [shape = 'u8[1024]{0}', space=vmem, size = 0x400, scoped, tag = 'output window, operand 0, single buffered']
    #allocation3 [shape = 's32[1]{0}', space=sflag, size = 0x4, scoped, tag = 'scoped memory for net_forward.3']
    %10 = vsyncpa [#allocation3], 0
    // Predicated region
    $region2: #{net_forward.3} parent=1 // pred_check
      _
    $region3: #{net_forward.3} parent=1 // pred_check_branch
      %12 = sbr.rel (0) target = $region5
    $region4: #{net_forward.3} parent=1 // pred_region
      _
    $region5: #{net_forward.3} parent=1 // pred_fallthru
      _
    // Predicated region
    $region6: #{net_forward.3} parent=1 // pred_check
      _
    $region7: #{net_forward.3} parent=1 // pred_check_branch
      %14 = sbr.rel (0) target = $region9
    $region8: #{net_forward.3} parent=1 // pred_region
      _
    $region9: #{net_forward.3} parent=1 // pred_fallthru
      _
    // Predicated region
    $region10: #{net_forward.3} parent=1 // pred_check
      _
    $region11: #{net_forward.3} parent=1 // pred_check_branch
      %16 = sbr.rel (0) target = $region13
    $region12: #{net_forward.3} parent=1 // pred_region
      _
    $region13: #{net_forward.3} parent=1 // pred_fallthru
      _
    // Predicated region
    $region14: #{net_forward.3} parent=1 // pred_check
      _
    $region15: #{net_forward.3} parent=1 // pred_check_branch
      %18 = sbr.rel (0) target = $region17
    $region16: #{net_forward.3} parent=1 // pred_region
      _
    $region17: #{net_forward.3} parent=1 // pred_fallthru
      _
    // Predicated region
    $region18: #{net_forward.3} parent=1 // pred_check
      _
    $region19: #{net_forward.3} parent=1 // pred_check_branch
      %20 = sbr.rel (0) target = $region21
    $region20: #{net_forward.3} parent=1 // pred_region
      _
    $region21: #{net_forward.3} parent=1 // pred_fallthru
      _
    %v21 = vld [vmem:[%s0] sm:$0xff]
    %v22 = vld [vmem:[%s0 + $0x8] sm:$0xff]
    %v23 = vld [vmem:[%s0 + $0x10] sm:$0xff]
    %v24 = vld [vmem:[%s0 + $0x18] sm:$0xff]
    %v25 = vld [vmem:[%s0 + $0x20] sm:$0xff]
    %v26 = vld [vmem:[%s0 + $0x28] sm:$0xff]
    %v27 = vld [vmem:[%s0 + $0x30] sm:$0xff]
    %v28 = vld [vmem:[%s0 + $0x38] sm:$0xff]
    %v29 = vld [vmem:[%s0 + $0x40] sm:$0xff]
    %v30 = vld [vmem:[%s0 + $0x48] sm:$0xff]
    %v31 = vld [vmem:[%s0 + $0x50] sm:$0xff]
    %v32 = vld [vmem:[%s0 + $0x58] sm:$0xff]
    %v33 = vld [vmem:[%s0 + $0x60] sm:$0xff]
    %v34 = vld [vmem:[%s0 + $0x68] sm:$0xff]
    %v35 = vld [vmem:[%s0 + $0x70] sm:$0xff]
    %v36 = vld [vmem:[%s0 + $0x78] sm:$0xff]
    %v37 = vld [vmem:[%s0 + $0x80] sm:$0xff]
    %v38 = vld [vmem:[%s0 + $0x88] sm:$0xff]
    %57 = vst [vmem:[#allocation1] ss:$4 sm:$0xff] %v21
    %s58 = scalar_lea.vmem [#allocation1], 32
    %59 = vst [vmem:[%s58] ss:$4 sm:$0xff] %v22
    %v60 = vld.sshfl [vmem:[#allocation1] sm:$0xff pattern:$0x73625140]
    %v61 = vld.sshfl [vmem:[#allocation1 + $0x8] sm:$0xff pattern:$0x73625140]
    %v62 = vld.sshfl [vmem:[#allocation1 + $0x10] sm:$0xff pattern:$0x73625140]
    %v63 = vld.sshfl [vmem:[#allocation1 + $0x18] sm:$0xff pattern:$0x73625140]
    %v64 = vld.sshfl [vmem:[#allocation1 + $0x20] sm:$0xff pattern:$0x73625140]
    %v65 = vld.sshfl [vmem:[#allocation1 + $0x28] sm:$0xff pattern:$0x73625140]
    %v66 = vld.sshfl [vmem:[#allocation1 + $0x30] sm:$0xff pattern:$0x73625140]
    %v67 = vld.sshfl [vmem:[#allocation1 + $0x38] sm:$0xff pattern:$0x73625140]
    %68 = vst [vmem:[#allocation1] ss:$4 sm:$0xff] %v23
    %69 = vst [vmem:[%s58] ss:$4 sm:$0xff] %v24
    %v70 = vld.sshfl [vmem:[#allocation1] sm:$0xff pattern:$0x73625140]
    %v71 = vld.sshfl [vmem:[#allocation1 + $0x8] sm:$0xff pattern:$0x73625140]
    %v72 = vld.sshfl [vmem:[#allocation1 + $0x10] sm:$0xff pattern:$0x73625140]
    %v73 = vld.sshfl [vmem:[#allocation1 + $0x18] sm:$0xff pattern:$0x73625140]
    %v74 = vld.sshfl [vmem:[#allocation1 + $0x20] sm:$0xff pattern:$0x73625140]
    %v75 = vld.sshfl [vmem:[#allocation1 + $0x28] sm:$0xff pattern:$0x73625140]
    %v76 = vld.sshfl [vmem:[#allocation1 + $0x30] sm:$0xff pattern:$0x73625140]
    %v77 = vld.sshfl [vmem:[#allocation1 + $0x38] sm:$0xff pattern:$0x73625140]
    %78 = vst [vmem:[#allocation1] ss:$4 sm:$0xff] %v25
    %79 = vst [vmem:[%s58] ss:$4 sm:$0xff] %v26
    %v80 = vld.sshfl [vmem:[#allocation1] sm:$0xff pattern:$0x73625140]
    %v81 = vld.sshfl [vmem:[#allocation1 + $0x8] sm:$0xff pattern:$0x73625140]
    %v82 = vld.sshfl [vmem:[#allocation1 + $0x10] sm:$0xff pattern:$0x73625140]
    %v83 = vld.sshfl [vmem:[#allocation1 + $0x18] sm:$0xff pattern:$0x73625140]
    %v84 = vld.sshfl [vmem:[#allocation1 + $0x20] sm:$0xff pattern:$0x73625140]
    %v85 = vld.sshfl [vmem:[#allocation1 + $0x28] sm:$0xff pattern:$0x73625140]
    %v86 = vld.sshfl [vmem:[#allocation1 + $0x30] sm:$0xff pattern:$0x73625140]
    %v87 = vld.sshfl [vmem:[#allocation1 + $0x38] sm:$0xff pattern:$0x73625140]
    %88 = vst [vmem:[#allocation1] ss:$4 sm:$0xff] %v27
    %89 = vst [vmem:[%s58] ss:$4 sm:$0xff] %v28
    %v90 = vld.sshfl [vmem:[#allocation1] sm:$0xff pattern:$0x73625140]
    %v91 = vld.sshfl [vmem:[#allocation1 + $0x8] sm:$0xff pattern:$0x73625140]
    %v92 = vld.sshfl [vmem:[#allocation1 + $0x10] sm:$0xff pattern:$0x73625140]
    %v93 = vld.sshfl [vmem:[#allocation1 + $0x18] sm:$0xff pattern:$0x73625140]
    %v94 = vld.sshfl [vmem:[#allocation1 + $0x20] sm:$0xff pattern:$0x73625140]
    %v95 = vld.sshfl [vmem:[#allocation1 + $0x28] sm:$0xff pattern:$0x73625140]
    %v96 = vld.sshfl [vmem:[#allocation1 + $0x30] sm:$0xff pattern:$0x73625140]
    %v97 = vld.sshfl [vmem:[#allocation1 + $0x38] sm:$0xff pattern:$0x73625140]
    %98 = vst [vmem:[#allocation1] ss:$4 sm:$0xff] %v29
    %99 = vst [vmem:[%s58] ss:$4 sm:$0xff] %v30
    %v100 = vld.sshfl [vmem:[#allocation1] sm:$0xff pattern:$0x73625140]
    %v101 = vld.sshfl [vmem:[#allocation1 + $0x8] sm:$0xff pattern:$0x73625140]
    %v102 = vld.sshfl [vmem:[#allocation1 + $0x10] sm:$0xff pattern:$0x73625140]
    %v103 = vld.sshfl [vmem:[#allocation1 + $0x18] sm:$0xff pattern:$0x73625140]
    %v104 = vld.sshfl [vmem:[#allocation1 + $0x20] sm:$0xff pattern:$0x73625140]
    %v105 = vld.sshfl [vmem:[#allocation1 + $0x28] sm:$0xff pattern:$0x73625140]
    %v106 = vld.sshfl [vmem:[#allocation1 + $0x30] sm:$0xff pattern:$0x73625140]
    %v107 = vld.sshfl [vmem:[#allocation1 + $0x38] sm:$0xff pattern:$0x73625140]
    %108 = vst [vmem:[#allocation1] ss:$4 sm:$0xff] %v31
    %109 = vst [vmem:[%s58] ss:$4 sm:$0xff] %v32
    %v110 = vld.sshfl [vmem:[#allocation1] sm:$0xff pattern:$0x73625140]
    %v111 = vld.sshfl [vmem:[#allocation1 + $0x8] sm:$0xff pattern:$0x73625140]
    %v112 = vld.sshfl [vmem:[#allocation1 + $0x10] sm:$0xff pattern:$0x73625140]
    %v113 = vld.sshfl [vmem:[#allocation1 + $0x18] sm:$0xff pattern:$0x73625140]
    %v114 = vld.sshfl [vmem:[#allocation1 + $0x20] sm:$0xff pattern:$0x73625140]
    %v115 = vld.sshfl [vmem:[#allocation1 + $0x28] sm:$0xff pattern:$0x73625140]
    %v116 = vld.sshfl [vmem:[#allocation1 + $0x30] sm:$0xff pattern:$0x73625140]
    %v117 = vld.sshfl [vmem:[#allocation1 + $0x38] sm:$0xff pattern:$0x73625140]
    %118 = vst [vmem:[#allocation1] ss:$4 sm:$0xff] %v33
    %119 = vst [vmem:[%s58] ss:$4 sm:$0xff] %v34
    %v120 = vld.sshfl [vmem:[#allocation1] sm:$0xff pattern:$0x73625140]
    %v121 = vld.sshfl [vmem:[#allocation1 + $0x8] sm:$0xff pattern:$0x73625140]
    %v122 = vld.sshfl [vmem:[#allocation1 + $0x10] sm:$0xff pattern:$0x73625140]
    %v123 = vld.sshfl [vmem:[#allocation1 + $0x18] sm:$0xff pattern:$0x73625140]
    %v124 = vld.sshfl [vmem:[#allocation1 + $0x20] sm:$0xff pattern:$0x73625140]
    %v125 = vld.sshfl [vmem:[#allocation1 + $0x28] sm:$0xff pattern:$0x73625140]
    %v126 = vld.sshfl [vmem:[#allocation1 + $0x30] sm:$0xff pattern:$0x73625140]
    %v127 = vld.sshfl [vmem:[#allocation1 + $0x38] sm:$0xff pattern:$0x73625140]
    %128 = vst [vmem:[#allocation1] ss:$4 sm:$0xff] %v35
    %129 = vst [vmem:[%s58] ss:$4 sm:$0xff] %v36
    %v130 = vld.sshfl [vmem:[#allocation1] sm:$0xff pattern:$0x73625140]
    %v131 = vld.sshfl [vmem:[#allocation1 + $0x8] sm:$0xff pattern:$0x73625140]
    %v132 = vld.sshfl [vmem:[#allocation1 + $0x10] sm:$0xff pattern:$0x73625140]
    %v133 = vld.sshfl [vmem:[#allocation1 + $0x18] sm:$0xff pattern:$0x73625140]
    %v134 = vld.sshfl [vmem:[#allocation1 + $0x20] sm:$0xff pattern:$0x73625140]
    %v135 = vld.sshfl [vmem:[#allocation1 + $0x28] sm:$0xff pattern:$0x73625140]
    %v136 = vld.sshfl [vmem:[#allocation1 + $0x30] sm:$0xff pattern:$0x73625140]
    %v137 = vld.sshfl [vmem:[#allocation1 + $0x38] sm:$0xff pattern:$0x73625140]
    %138 = vst [vmem:[#allocation1] ss:$4 sm:$0xff] %v37
    %139 = vst [vmem:[%s58] ss:$4 sm:$0xff] %v38
    %v140 = vld.sshfl [vmem:[#allocation1] sm:$0xff pattern:$0x73625140]
    %v141 = vld.sshfl [vmem:[#allocation1 + $0x8] sm:$0xff pattern:$0x73625140]
    %v142 = vld.sshfl [vmem:[#allocation1 + $0x10] sm:$0xff pattern:$0x73625140]
    %v143 = vld.sshfl [vmem:[#allocation1 + $0x18] sm:$0xff pattern:$0x73625140]
    %v144 = vld.sshfl [vmem:[#allocation1 + $0x20] sm:$0xff pattern:$0x73625140]
    %v145 = vld.sshfl [vmem:[#allocation1 + $0x28] sm:$0xff pattern:$0x73625140]
    %v146 = vld.sshfl [vmem:[#allocation1 + $0x30] sm:$0xff pattern:$0x73625140]
    %v147 = vld.sshfl [vmem:[#allocation1 + $0x38] sm:$0xff pattern:$0x73625140]
    %v220 = vpack.c.bf16 %v60, %v60
    %v221 = vpack.c.bf16 %v61, %v61
    %v222 = vpack.c.bf16 %v62, %v62
    %v223 = vpack.c.bf16 %v63, %v63
    %v224 = vpack.c.bf16 %v64, %v64
    %v225 = vpack.c.bf16 %v65, %v65
    %v226 = vpack.c.bf16 %v66, %v66
    %v227 = vpack.c.bf16 %v67, %v67
    %v228 = vpack.c.bf16 %v70, %v70
    %v229 = vpack.c.bf16 %v71, %v71
    %v230 = vpack.c.bf16 %v72, %v72
    %v231 = vpack.c.bf16 %v73, %v73
    %v232 = vpack.c.bf16 %v74, %v74
    %v233 = vpack.c.bf16 %v75, %v75
    %v234 = vpack.c.bf16 %v76, %v76
    %v235 = vpack.c.bf16 %v77, %v77
    %v236 = vpack.c.bf16 %v80, %v80
    %v237 = vpack.c.bf16 %v81, %v81
    %v238 = vpack.c.bf16 %v82, %v82
    %v239 = vpack.c.bf16 %v83, %v83
    %v240 = vpack.c.bf16 %v84, %v84
    %v241 = vpack.c.bf16 %v85, %v85
    %v242 = vpack.c.bf16 %v86, %v86
    %v243 = vpack.c.bf16 %v87, %v87
    %v244 = vpack.c.bf16 %v90, %v90
    %v245 = vpack.c.bf16 %v91, %v91
    %v246 = vpack.c.bf16 %v92, %v92
    %v247 = vpack.c.bf16 %v93, %v93
    %v248 = vpack.c.bf16 %v94, %v94
    %v249 = vpack.c.bf16 %v95, %v95
    %v250 = vpack.c.bf16 %v96, %v96
    %v251 = vpack.c.bf16 %v97, %v97
    %v252 = vpack.c.bf16 %v100, %v100
    %v253 = vpack.c.bf16 %v101, %v101
    %v254 = vpack.c.bf16 %v102, %v102
    %v255 = vpack.c.bf16 %v103, %v103
    %v256 = vpack.c.bf16 %v104, %v104
    %v257 = vpack.c.bf16 %v105, %v105
    %v258 = vpack.c.bf16 %v106, %v106
    %v259 = vpack.c.bf16 %v107, %v107
    %v260 = vpack.c.bf16 %v110, %v110
    %v261 = vpack.c.bf16 %v111, %v111
    %v262 = vpack.c.bf16 %v112, %v112
    %v263 = vpack.c.bf16 %v113, %v113
    %v264 = vpack.c.bf16 %v114, %v114
    %v265 = vpack.c.bf16 %v115, %v115
    %v266 = vpack.c.bf16 %v116, %v116
    %v267 = vpack.c.bf16 %v117, %v117
    %v268 = vpack.c.bf16 %v120, %v120
    %v269 = vpack.c.bf16 %v121, %v121
    %v270 = vpack.c.bf16 %v122, %v122
    %v271 = vpack.c.bf16 %v123, %v123
    %v272 = vpack.c.bf16 %v124, %v124
    %v273 = vpack.c.bf16 %v125, %v125
    %v274 = vpack.c.bf16 %v126, %v126
    %v275 = vpack.c.bf16 %v127, %v127
    %v276 = vpack.c.bf16 %v130, %v130
    %v277 = vpack.c.bf16 %v131, %v131
    %v278 = vpack.c.bf16 %v132, %v132
    %v279 = vpack.c.bf16 %v133, %v133
    %v280 = vpack.c.bf16 %v134, %v134
    %v281 = vpack.c.bf16 %v135, %v135
    %v282 = vpack.c.bf16 %v136, %v136
    %v283 = vpack.c.bf16 %v137, %v137
    %v284 = vpack.c.bf16 %v140, %v140
    %v285 = vpack.c.bf16 %v141, %v141
    %v286 = vpack.c.bf16 %v142, %v142
    %v287 = vpack.c.bf16 %v143, %v143
    %v288 = vpack.c.bf16 %v144, %v144
    %v289 = vpack.c.bf16 %v145, %v145
    %v290 = vpack.c.bf16 %v146, %v146
    %v291 = vpack.c.bf16 %v147, %v147
    %v292 = vld [vmem:[%s1] sm:$0xf]
    %v293 = vld [vmem:[%s1 + $0x4] sm:$0xf]
    %v294 = vld [vmem:[%s1 + $0x8] sm:$0xf]
    %v295 = vld [vmem:[%s1 + $0xc] sm:$0xf]
    %v296 = vld [vmem:[%s1 + $0x10] sm:$0xf]
    %v297 = vld [vmem:[%s1 + $0x14] sm:$0xf]
    %v298 = vld [vmem:[%s1 + $0x18] sm:$0xf]
    %v299 = vld [vmem:[%s1 + $0x1c] sm:$0xf]
    %v300 = vld [vmem:[%s1 + $0x20] sm:$0xf]
    %v301 = vld [vmem:[%s1 + $0x24] sm:$0xf]
    %v302 = vld [vmem:[%s1 + $0x28] sm:$0xf]
    %v303 = vld [vmem:[%s1 + $0x2c] sm:$0xf]
    %v304 = vld [vmem:[%s1 + $0x30] sm:$0xf]
    %v305 = vld [vmem:[%s1 + $0x34] sm:$0xf]
    %v306 = vld [vmem:[%s1 + $0x38] sm:$0xf]
    %v307 = vld [vmem:[%s1 + $0x3c] sm:$0xf]
    %v308 = vld [vmem:[%s1 + $0x40] sm:$0xf]
    %v309 = vld [vmem:[%s1 + $0x44] sm:$0xf]
    %v310 = vld [vmem:[%s1 + $0x48] sm:$0xf]
    %v311 = vld [vmem:[%s1 + $0x4c] sm:$0xf]
    %v312 = vld [vmem:[%s1 + $0x50] sm:$0xf]
    %v313 = vld [vmem:[%s1 + $0x54] sm:$0xf]
    %v314 = vld [vmem:[%s1 + $0x58] sm:$0xf]
    %v315 = vld [vmem:[%s1 + $0x5c] sm:$0xf]
    %v316 = vld [vmem:[%s1 + $0x60] sm:$0xf]
    %v317 = vld [vmem:[%s1 + $0x64] sm:$0xf]
    %v318 = vld [vmem:[%s1 + $0x68] sm:$0xf]
    %v319 = vld [vmem:[%s1 + $0x6c] sm:$0xf]
    %v320 = vld [vmem:[%s1 + $0x70] sm:$0xf]
    %v321 = vld [vmem:[%s1 + $0x74] sm:$0xf]
    %v322 = vld [vmem:[%s1 + $0x78] sm:$0xf]
    %v323 = vld [vmem:[%s1 + $0x7c] sm:$0xf]
    %v324 = vld [vmem:[%s1 + $0x80] sm:$0xf]
    %v325 = vld [vmem:[%s1 + $0x84] sm:$0xf]
    %v326 = vld [vmem:[%s1 + $0x88] sm:$0xf]
    %v327 = vld [vmem:[%s1 + $0x8c] sm:$0xf]
    %v328 = vld [vmem:[%s1 + $0x90] sm:$0xf]
    %v329 = vld [vmem:[%s1 + $0x94] sm:$0xf]
    %v330 = vld [vmem:[%s1 + $0x98] sm:$0xf]
    %v331 = vld [vmem:[%s1 + $0x9c] sm:$0xf]
    %v332 = vld [vmem:[%s1 + $0xa0] sm:$0xf]
    %v333 = vld [vmem:[%s1 + $0xa4] sm:$0xf]
    %v334 = vld [vmem:[%s1 + $0xa8] sm:$0xf]
    %v335 = vld [vmem:[%s1 + $0xac] sm:$0xf]
    %v336 = vld [vmem:[%s1 + $0xb0] sm:$0xf]
    %v337 = vld [vmem:[%s1 + $0xb4] sm:$0xf]
    %v338 = vld [vmem:[%s1 + $0xb8] sm:$0xf]
    %v339 = vld [vmem:[%s1 + $0xbc] sm:$0xf]
    %v340 = vld [vmem:[%s1 + $0xc0] sm:$0xf]
    %v341 = vld [vmem:[%s1 + $0xc4] sm:$0xf]
    %v342 = vld [vmem:[%s1 + $0xc8] sm:$0xf]
    %v343 = vld [vmem:[%s1 + $0xcc] sm:$0xf]
    %v344 = vld [vmem:[%s1 + $0xd0] sm:$0xf]
    %v345 = vld [vmem:[%s1 + $0xd4] sm:$0xf]
    %v346 = vld [vmem:[%s1 + $0xd8] sm:$0xf]
    %v347 = vld [vmem:[%s1 + $0xdc] sm:$0xf]
    %v348 = vld [vmem:[%s1 + $0xe0] sm:$0xf]
    %v349 = vld [vmem:[%s1 + $0xe4] sm:$0xf]
    %v350 = vld [vmem:[%s1 + $0xe8] sm:$0xf]
    %v351 = vld [vmem:[%s1 + $0xec] sm:$0xf]
    %v352 = vld [vmem:[%s1 + $0xf0] sm:$0xf]
    %v353 = vld [vmem:[%s1 + $0xf4] sm:$0xf]
    %v354 = vld [vmem:[%s1 + $0xf8] sm:$0xf]
    %v355 = vld [vmem:[%s1 + $0xfc] sm:$0xf]
    %v356 = vld [vmem:[%s1 + $0x100] sm:$0xf]
    %v357 = vld [vmem:[%s1 + $0x104] sm:$0xf]
    %v358 = vld [vmem:[%s1 + $0x108] sm:$0xf]
    %v359 = vld [vmem:[%s1 + $0x10c] sm:$0xf]
    %v360 = vld [vmem:[%s1 + $0x110] sm:$0xf]
    %v361 = vld [vmem:[%s1 + $0x114] sm:$0xf]
    %v362 = vld [vmem:[%s1 + $0x118] sm:$0xf]
    %v363 = vld [vmem:[%s1 + $0x11c] sm:$0xf]
    %v364 = vld [vmem:[%s1 + $0x120] sm:$0xf]
    %v365 = vld [vmem:[%s1 + $0x124] sm:$0xf]
    %v366 = vld [vmem:[%s1 + $0x128] sm:$0xf]
    %v367 = vld [vmem:[%s1 + $0x12c] sm:$0xf]
    %v368 = vld [vmem:[%s1 + $0x130] sm:$0xf]
    %v369 = vld [vmem:[%s1 + $0x134] sm:$0xf]
    %v370 = vld [vmem:[%s1 + $0x138] sm:$0xf]
    %v371 = vld [vmem:[%s1 + $0x13c] sm:$0xf]
    %v372 = vld [vmem:[%s1 + $0x140] sm:$0xf]
    %v373 = vld [vmem:[%s1 + $0x144] sm:$0xf]
    %v374 = vld [vmem:[%s1 + $0x148] sm:$0xf]
    %v375 = vld [vmem:[%s1 + $0x14c] sm:$0xf]
    %v376 = vld [vmem:[%s1 + $0x150] sm:$0xf]
    %v377 = vld [vmem:[%s1 + $0x154] sm:$0xf]
    %v378 = vld [vmem:[%s1 + $0x158] sm:$0xf]
    %v379 = vld [vmem:[%s1 + $0x15c] sm:$0xf]
    %v380 = vld [vmem:[%s1 + $0x160] sm:$0xf]
    %v381 = vld [vmem:[%s1 + $0x164] sm:$0xf]
    %v382 = vld [vmem:[%s1 + $0x168] sm:$0xf]
    %v383 = vld [vmem:[%s1 + $0x16c] sm:$0xf]
    %v384 = vld [vmem:[%s1 + $0x170] sm:$0xf]
    %v385 = vld [vmem:[%s1 + $0x174] sm:$0xf]
    %v386 = vld [vmem:[%s1 + $0x178] sm:$0xf]
    %v387 = vld [vmem:[%s1 + $0x17c] sm:$0xf]
    %v388 = vld [vmem:[%s1 + $0x180] sm:$0xf]
    %v389 = vld [vmem:[%s1 + $0x184] sm:$0xf]
    %v390 = vld [vmem:[%s1 + $0x188] sm:$0xf]
    %v391 = vld [vmem:[%s1 + $0x18c] sm:$0xf]
    %v392 = vld [vmem:[%s1 + $0x190] sm:$0xf]
    %v393 = vld [vmem:[%s1 + $0x194] sm:$0xf]
    %v394 = vld [vmem:[%s1 + $0x198] sm:$0xf]
    %v395 = vld [vmem:[%s1 + $0x19c] sm:$0xf]
    %v396 = vld [vmem:[%s1 + $0x1a0] sm:$0xf]
    %v397 = vld [vmem:[%s1 + $0x1a4] sm:$0xf]
    %v398 = vld [vmem:[%s1 + $0x1a8] sm:$0xf]
    %v399 = vld [vmem:[%s1 + $0x1ac] sm:$0xf]
    %v400 = vld [vmem:[%s1 + $0x1b0] sm:$0xf]
    %v401 = vld [vmem:[%s1 + $0x1b4] sm:$0xf]
    %v402 = vld [vmem:[%s1 + $0x1b8] sm:$0xf]
    %v403 = vld [vmem:[%s1 + $0x1bc] sm:$0xf]
    %v404 = vld [vmem:[%s1 + $0x1c0] sm:$0xf]
    %v405 = vld [vmem:[%s1 + $0x1c4] sm:$0xf]
    %v406 = vld [vmem:[%s1 + $0x1c8] sm:$0xf]
    %v407 = vld [vmem:[%s1 + $0x1cc] sm:$0xf]
    %v408 = vld [vmem:[%s1 + $0x1d0] sm:$0xf]
    %v409 = vld [vmem:[%s1 + $0x1d4] sm:$0xf]
    %v410 = vld [vmem:[%s1 + $0x1d8] sm:$0xf]
    %v411 = vld [vmem:[%s1 + $0x1dc] sm:$0xf]
    %v412 = vld [vmem:[%s1 + $0x1e0] sm:$0xf]
    %v413 = vld [vmem:[%s1 + $0x1e4] sm:$0xf]
    %v414 = vld [vmem:[%s1 + $0x1e8] sm:$0xf]
    %v415 = vld [vmem:[%s1 + $0x1ec] sm:$0xf]
    %v416 = vld [vmem:[%s1 + $0x1f0] sm:$0xf]
    %v417 = vld [vmem:[%s1 + $0x1f4] sm:$0xf]
    %v418 = vld [vmem:[%s1 + $0x1f8] sm:$0xf]
    %v419 = vld [vmem:[%s1 + $0x1fc] sm:$0xf]
    %v420 = vld [vmem:[%s1 + $0x200] sm:$0xf]
    %v421 = vld [vmem:[%s1 + $0x204] sm:$0xf]
    %v422 = vld [vmem:[%s1 + $0x208] sm:$0xf]
    %v423 = vld [vmem:[%s1 + $0x20c] sm:$0xf]
    %v424 = vld [vmem:[%s1 + $0x210] sm:$0xf]
    %v425 = vld [vmem:[%s1 + $0x214] sm:$0xf]
    %v426 = vld [vmem:[%s1 + $0x218] sm:$0xf]
    %v427 = vld [vmem:[%s1 + $0x21c] sm:$0xf]
    %v428 = vld [vmem:[%s1 + $0x220] sm:$0xf]
    %v429 = vld [vmem:[%s1 + $0x224] sm:$0xf]
    %v430 = vld [vmem:[%s1 + $0x228] sm:$0xf]
    %v431 = vld [vmem:[%s1 + $0x22c] sm:$0xf]
    %v432 = vld [vmem:[%s1 + $0x230] sm:$0xf]
    %v433 = vld [vmem:[%s1 + $0x234] sm:$0xf]
    %v434 = vld [vmem:[%s1 + $0x238] sm:$0xf]
    %v435 = vld [vmem:[%s1 + $0x23c] sm:$0xf]
    %v436 = vld [vmem:[%s1 + $0x240] sm:$0xf]
    %v437 = vld [vmem:[%s1 + $0x244] sm:$0xf]
    %v438 = vld [vmem:[%s1 + $0x248] sm:$0xf]
    %v439 = vld [vmem:[%s1 + $0x24c] sm:$0xf]
    %v440 = vld [vmem:[%s1 + $0x250] sm:$0xf]
    %v441 = vld [vmem:[%s1 + $0x254] sm:$0xf]
    %v442 = vld [vmem:[%s1 + $0x258] sm:$0xf]
    %v443 = vld [vmem:[%s1 + $0x25c] sm:$0xf]
    %v444 = vld [vmem:[%s1 + $0x260] sm:$0xf]
    %v445 = vld [vmem:[%s1 + $0x264] sm:$0xf]
    %v446 = vld [vmem:[%s1 + $0x268] sm:$0xf]
    %v447 = vld [vmem:[%s1 + $0x26c] sm:$0xf]
    %v448 = vld [vmem:[%s1 + $0x270] sm:$0xf]
    %v449 = vld [vmem:[%s1 + $0x274] sm:$0xf]
    %v450 = vld [vmem:[%s1 + $0x278] sm:$0xf]
    %v451 = vld [vmem:[%s1 + $0x27c] sm:$0xf]
    %v452 = vld [vmem:[%s1 + $0x280] sm:$0xf]
    %v453 = vld [vmem:[%s1 + $0x284] sm:$0xf]
    %v454 = vld [vmem:[%s1 + $0x288] sm:$0xf]
    %v455 = vld [vmem:[%s1 + $0x28c] sm:$0xf]
    %v456 = vld [vmem:[%s1 + $0x290] sm:$0xf]
    %v457 = vld [vmem:[%s1 + $0x294] sm:$0xf]
    %v458 = vld [vmem:[%s1 + $0x298] sm:$0xf]
    %v459 = vld [vmem:[%s1 + $0x29c] sm:$0xf]
    %v460 = vld [vmem:[%s1 + $0x2a0] sm:$0xf]
    %v461 = vld [vmem:[%s1 + $0x2a4] sm:$0xf]
    %v462 = vld [vmem:[%s1 + $0x2a8] sm:$0xf]
    %v463 = vld [vmem:[%s1 + $0x2ac] sm:$0xf]
    %v464 = vld [vmem:[%s1 + $0x2b0] sm:$0xf]
    %v465 = vld [vmem:[%s1 + $0x2b4] sm:$0xf]
    %v466 = vld [vmem:[%s1 + $0x2b8] sm:$0xf]
    %v467 = vld [vmem:[%s1 + $0x2bc] sm:$0xf]
    %v468 = vld [vmem:[%s1 + $0x2c0] sm:$0xf]
    %v469 = vld [vmem:[%s1 + $0x2c4] sm:$0xf]
    %v470 = vld [vmem:[%s1 + $0x2c8] sm:$0xf]
    %v471 = vld [vmem:[%s1 + $0x2cc] sm:$0xf]
    %v472 = vld [vmem:[%s1 + $0x2d0] sm:$0xf]
    %v473 = vld [vmem:[%s1 + $0x2d4] sm:$0xf]
    %v474 = vld [vmem:[%s1 + $0x2d8] sm:$0xf]
    %v475 = vld [vmem:[%s1 + $0x2dc] sm:$0xf]
    %v476 = vld [vmem:[%s1 + $0x2e0] sm:$0xf]
    %v477 = vld [vmem:[%s1 + $0x2e4] sm:$0xf]
    %v478 = vld [vmem:[%s1 + $0x2e8] sm:$0xf]
    %v479 = vld [vmem:[%s1 + $0x2ec] sm:$0xf]
    %v480 = vld [vmem:[%s1 + $0x2f0] sm:$0xf]
    %v481 = vld [vmem:[%s1 + $0x2f4] sm:$0xf]
    %v482 = vld [vmem:[%s1 + $0x2f8] sm:$0xf]
    %v483 = vld [vmem:[%s1 + $0x2fc] sm:$0xf]
    %v484 = vld [vmem:[%s1 + $0x300] sm:$0xf]
    %v485 = vld [vmem:[%s1 + $0x304] sm:$0xf]
    %v486 = vld [vmem:[%s1 + $0x308] sm:$0xf]
    %v487 = vld [vmem:[%s1 + $0x30c] sm:$0xf]
    %v488 = vld [vmem:[%s1 + $0x310] sm:$0xf]
    %v489 = vld [vmem:[%s1 + $0x314] sm:$0xf]
    %v490 = vld [vmem:[%s1 + $0x318] sm:$0xf]
    %v491 = vld [vmem:[%s1 + $0x31c] sm:$0xf]
    %v492 = vld [vmem:[%s1 + $0x320] sm:$0xf]
    %v493 = vld [vmem:[%s1 + $0x324] sm:$0xf]
    %v494 = vld [vmem:[%s1 + $0x328] sm:$0xf]
    %v495 = vld [vmem:[%s1 + $0x32c] sm:$0xf]
    %v496 = vld [vmem:[%s1 + $0x330] sm:$0xf]
    %v497 = vld [vmem:[%s1 + $0x334] sm:$0xf]
    %v498 = vld [vmem:[%s1 + $0x338] sm:$0xf]
    %v499 = vld [vmem:[%s1 + $0x33c] sm:$0xf]
    %v500 = vld [vmem:[%s1 + $0x340] sm:$0xf]
    %v501 = vld [vmem:[%s1 + $0x344] sm:$0xf]
    %v502 = vld [vmem:[%s1 + $0x348] sm:$0xf]
    %v503 = vld [vmem:[%s1 + $0x34c] sm:$0xf]
    %v504 = vld [vmem:[%s1 + $0x350] sm:$0xf]
    %v505 = vld [vmem:[%s1 + $0x354] sm:$0xf]
    %v506 = vld [vmem:[%s1 + $0x358] sm:$0xf]
    %v507 = vld [vmem:[%s1 + $0x35c] sm:$0xf]
    %v508 = vld [vmem:[%s1 + $0x360] sm:$0xf]
    %v509 = vld [vmem:[%s1 + $0x364] sm:$0xf]
    %v510 = vld [vmem:[%s1 + $0x368] sm:$0xf]
    %v511 = vld [vmem:[%s1 + $0x36c] sm:$0xf]
    %v512 = vld [vmem:[%s1 + $0x370] sm:$0xf]
    %v513 = vld [vmem:[%s1 + $0x374] sm:$0xf]
    %v514 = vld [vmem:[%s1 + $0x378] sm:$0xf]
    %v515 = vld [vmem:[%s1 + $0x37c] sm:$0xf]
    %v516 = vld [vmem:[%s1 + $0x380] sm:$0xf]
    %v517 = vld [vmem:[%s1 + $0x384] sm:$0xf]
    %v518 = vld [vmem:[%s1 + $0x388] sm:$0xf]
    %v519 = vld [vmem:[%s1 + $0x38c] sm:$0xf]
    %v520 = vld [vmem:[%s1 + $0x390] sm:$0xf]
    %v521 = vld [vmem:[%s1 + $0x394] sm:$0xf]
    %v522 = vld [vmem:[%s1 + $0x398] sm:$0xf]
    %v523 = vld [vmem:[%s1 + $0x39c] sm:$0xf]
    %v524 = vld [vmem:[%s1 + $0x3a0] sm:$0xf]
    %v525 = vld [vmem:[%s1 + $0x3a4] sm:$0xf]
    %v526 = vld [vmem:[%s1 + $0x3a8] sm:$0xf]
    %v527 = vld [vmem:[%s1 + $0x3ac] sm:$0xf]
    %v528 = vld [vmem:[%s1 + $0x3b0] sm:$0xf]
    %v529 = vld [vmem:[%s1 + $0x3b4] sm:$0xf]
    %v530 = vld [vmem:[%s1 + $0x3b8] sm:$0xf]
    %v531 = vld [vmem:[%s1 + $0x3bc] sm:$0xf]
    %v532 = vld [vmem:[%s1 + $0x3c0] sm:$0xf]
    %v533 = vld [vmem:[%s1 + $0x3c4] sm:$0xf]
    %v534 = vld [vmem:[%s1 + $0x3c8] sm:$0xf]
    %v535 = vld [vmem:[%s1 + $0x3cc] sm:$0xf]
    %v536 = vld [vmem:[%s1 + $0x3d0] sm:$0xf]
    %v537 = vld [vmem:[%s1 + $0x3d4] sm:$0xf]
    %v538 = vld [vmem:[%s1 + $0x3d8] sm:$0xf]
    %v539 = vld [vmem:[%s1 + $0x3dc] sm:$0xf]
    %v540 = vld [vmem:[%s1 + $0x3e0] sm:$0xf]
    %v541 = vld [vmem:[%s1 + $0x3e4] sm:$0xf]
    %v542 = vld [vmem:[%s1 + $0x3e8] sm:$0xf]
    %v543 = vld [vmem:[%s1 + $0x3ec] sm:$0xf]
    %v544 = vld [vmem:[%s1 + $0x3f0] sm:$0xf]
    %v545 = vld [vmem:[%s1 + $0x3f4] sm:$0xf]
    %v546 = vld [vmem:[%s1 + $0x3f8] sm:$0xf]
    %v547 = vld [vmem:[%s1 + $0x3fc] sm:$0xf]
    %v548 = vld [vmem:[%s1 + $0x400] sm:$0xf]
    %v549 = vld [vmem:[%s1 + $0x404] sm:$0xf]
    %v550 = vld [vmem:[%s1 + $0x408] sm:$0xf]
    %v551 = vld [vmem:[%s1 + $0x40c] sm:$0xf]
    %v552 = vld [vmem:[%s1 + $0x410] sm:$0xf]
    %v553 = vld [vmem:[%s1 + $0x414] sm:$0xf]
    %v554 = vld [vmem:[%s1 + $0x418] sm:$0xf]
    %v555 = vld [vmem:[%s1 + $0x41c] sm:$0xf]
    %v556 = vld [vmem:[%s1 + $0x420] sm:$0xf]
    %v557 = vld [vmem:[%s1 + $0x424] sm:$0xf]
    %v558 = vld [vmem:[%s1 + $0x428] sm:$0xf]
    %v559 = vld [vmem:[%s1 + $0x42c] sm:$0xf]
    %v560 = vld [vmem:[%s1 + $0x430] sm:$0xf]
    %v561 = vld [vmem:[%s1 + $0x434] sm:$0xf]
    %v562 = vld [vmem:[%s1 + $0x438] sm:$0xf]
    %v563 = vld [vmem:[%s1 + $0x43c] sm:$0xf]
    %v564 = vld [vmem:[%s1 + $0x440] sm:$0xf]
    %v565 = vld [vmem:[%s1 + $0x444] sm:$0xf]
    %v566 = vld [vmem:[%s1 + $0x448] sm:$0xf]
    %v567 = vld [vmem:[%s1 + $0x44c] sm:$0xf]
    %v568 = vld [vmem:[%s1 + $0x450] sm:$0xf]
    %v569 = vld [vmem:[%s1 + $0x454] sm:$0xf]
    %v570 = vld [vmem:[%s1 + $0x458] sm:$0xf]
    %v571 = vld [vmem:[%s1 + $0x45c] sm:$0xf]
    %v572 = vld [vmem:[%s1 + $0x460] sm:$0xf]
    %v573 = vld [vmem:[%s1 + $0x464] sm:$0xf]
    %v574 = vld [vmem:[%s1 + $0x468] sm:$0xf]
    %v575 = vld [vmem:[%s1 + $0x46c] sm:$0xf]
    %v576 = vld [vmem:[%s1 + $0x470] sm:$0xf]
    %v577 = vld [vmem:[%s1 + $0x474] sm:$0xf]
    %v578 = vld [vmem:[%s1 + $0x478] sm:$0xf]
    %v579 = vld [vmem:[%s1 + $0x47c] sm:$0xf]
    %v580 = vld [vmem:[%s1 + $0x480] sm:$0xf]
    %v581 = vld [vmem:[%s1 + $0x484] sm:$0xf]
    %v582 = vld [vmem:[%s1 + $0x488] sm:$0xf]
    %v583 = vld [vmem:[%s1 + $0x48c] sm:$0xf]
    %v584 = vld [vmem:[%s1 + $0x490] sm:$0xf]
    %v585 = vld [vmem:[%s1 + $0x494] sm:$0xf]
    %v586 = vld [vmem:[%s1 + $0x498] sm:$0xf]
    %v587 = vld [vmem:[%s1 + $0x49c] sm:$0xf]
    %v588 = vld [vmem:[%s1 + $0x4a0] sm:$0xf]
    %v589 = vld [vmem:[%s1 + $0x4a4] sm:$0xf]
    %v590 = vld [vmem:[%s1 + $0x4a8] sm:$0xf]
    %v591 = vld [vmem:[%s1 + $0x4ac] sm:$0xf]
    %v592 = vld [vmem:[%s1 + $0x4b0] sm:$0xf]
    %v593 = vld [vmem:[%s1 + $0x4b4] sm:$0xf]
    %v594 = vld [vmem:[%s1 + $0x4b8] sm:$0xf]
    %v595 = vld [vmem:[%s1 + $0x4bc] sm:$0xf]
    %v596 = vld [vmem:[%s1 + $0x4c0] sm:$0xf]
    %v597 = vld [vmem:[%s1 + $0x4c4] sm:$0xf]
    %v598 = vld [vmem:[%s1 + $0x4c8] sm:$0xf]
    %v599 = vld [vmem:[%s1 + $0x4cc] sm:$0xf]
    %v600 = vld [vmem:[%s1 + $0x4d0] sm:$0xf]
    %v601 = vld [vmem:[%s1 + $0x4d4] sm:$0xf]
    %v602 = vld [vmem:[%s1 + $0x4d8] sm:$0xf]
    %v603 = vld [vmem:[%s1 + $0x4dc] sm:$0xf]
    %v604 = vld [vmem:[%s1 + $0x4e0] sm:$0xf]
    %v605 = vld [vmem:[%s1 + $0x4e4] sm:$0xf]
    %v606 = vld [vmem:[%s1 + $0x4e8] sm:$0xf]
    %v607 = vld [vmem:[%s1 + $0x4ec] sm:$0xf]
    %v608 = vld [vmem:[%s1 + $0x4f0] sm:$0xf]
    %v609 = vld [vmem:[%s1 + $0x4f4] sm:$0xf]
    %v610 = vld [vmem:[%s1 + $0x4f8] sm:$0xf]
    %v611 = vld [vmem:[%s1 + $0x4fc] sm:$0xf]
    %v612 = vld [vmem:[%s1 + $0x500] sm:$0xf]
    %v613 = vld [vmem:[%s1 + $0x504] sm:$0xf]
    %v614 = vld [vmem:[%s1 + $0x508] sm:$0xf]
    %v615 = vld [vmem:[%s1 + $0x50c] sm:$0xf]
    %v616 = vld [vmem:[%s1 + $0x510] sm:$0xf]
    %v617 = vld [vmem:[%s1 + $0x514] sm:$0xf]
    %v618 = vld [vmem:[%s1 + $0x518] sm:$0xf]
    %v619 = vld [vmem:[%s1 + $0x51c] sm:$0xf]
    %v620 = vld [vmem:[%s1 + $0x520] sm:$0xf]
    %v621 = vld [vmem:[%s1 + $0x524] sm:$0xf]
    %v622 = vld [vmem:[%s1 + $0x528] sm:$0xf]
    %v623 = vld [vmem:[%s1 + $0x52c] sm:$0xf]
    %v624 = vld [vmem:[%s1 + $0x530] sm:$0xf]
    %v625 = vld [vmem:[%s1 + $0x534] sm:$0xf]
    %v626 = vld [vmem:[%s1 + $0x538] sm:$0xf]
    %v627 = vld [vmem:[%s1 + $0x53c] sm:$0xf]
    %v628 = vld [vmem:[%s1 + $0x540] sm:$0xf]
    %v629 = vld [vmem:[%s1 + $0x544] sm:$0xf]
    %v630 = vld [vmem:[%s1 + $0x548] sm:$0xf]
    %v631 = vld [vmem:[%s1 + $0x54c] sm:$0xf]
    %v632 = vld [vmem:[%s1 + $0x550] sm:$0xf]
    %v633 = vld [vmem:[%s1 + $0x554] sm:$0xf]
    %v634 = vld [vmem:[%s1 + $0x558] sm:$0xf]
    %v635 = vld [vmem:[%s1 + $0x55c] sm:$0xf]
    %v636 = vld [vmem:[%s1 + $0x560] sm:$0xf]
    %v637 = vld [vmem:[%s1 + $0x564] sm:$0xf]
    %v638 = vld [vmem:[%s1 + $0x568] sm:$0xf]
    %v639 = vld [vmem:[%s1 + $0x56c] sm:$0xf]
    %v640 = vld [vmem:[%s1 + $0x570] sm:$0xf]
    %v641 = vld [vmem:[%s1 + $0x574] sm:$0xf]
    %v642 = vld [vmem:[%s1 + $0x578] sm:$0xf]
    %v643 = vld [vmem:[%s1 + $0x57c] sm:$0xf]
    %v644 = vld [vmem:[%s1 + $0x580] sm:$0xf]
    %v645 = vld [vmem:[%s1 + $0x584] sm:$0xf]
    %v646 = vld [vmem:[%s1 + $0x588] sm:$0xf]
    %v647 = vld [vmem:[%s1 + $0x58c] sm:$0xf]
    %v648 = vld [vmem:[%s1 + $0x590] sm:$0xf]
    %v649 = vld [vmem:[%s1 + $0x594] sm:$0xf]
    %v650 = vld [vmem:[%s1 + $0x598] sm:$0xf]
    %v651 = vld [vmem:[%s1 + $0x59c] sm:$0xf]
    %v652 = vld [vmem:[%s1 + $0x5a0] sm:$0xf]
    %v653 = vld [vmem:[%s1 + $0x5a4] sm:$0xf]
    %v654 = vld [vmem:[%s1 + $0x5a8] sm:$0xf]
    %v655 = vld [vmem:[%s1 + $0x5ac] sm:$0xf]
    %v656 = vld [vmem:[%s1 + $0x5b0] sm:$0xf]
    %v657 = vld [vmem:[%s1 + $0x5b4] sm:$0xf]
    %v658 = vld [vmem:[%s1 + $0x5b8] sm:$0xf]
    %v659 = vld [vmem:[%s1 + $0x5bc] sm:$0xf]
    %v660 = vld [vmem:[%s1 + $0x5c0] sm:$0xf]
    %v661 = vld [vmem:[%s1 + $0x5c4] sm:$0xf]
    %v662 = vld [vmem:[%s1 + $0x5c8] sm:$0xf]
    %v663 = vld [vmem:[%s1 + $0x5cc] sm:$0xf]
    %v664 = vld [vmem:[%s1 + $0x5d0] sm:$0xf]
    %v665 = vld [vmem:[%s1 + $0x5d4] sm:$0xf]
    %v666 = vld [vmem:[%s1 + $0x5d8] sm:$0xf]
    %v667 = vld [vmem:[%s1 + $0x5dc] sm:$0xf]
    %v668 = vld [vmem:[%s1 + $0x5e0] sm:$0xf]
    %v669 = vld [vmem:[%s1 + $0x5e4] sm:$0xf]
    %v670 = vld [vmem:[%s1 + $0x5e8] sm:$0xf]
    %v671 = vld [vmem:[%s1 + $0x5ec] sm:$0xf]
    %v672 = vld [vmem:[%s1 + $0x5f0] sm:$0xf]
    %v673 = vld [vmem:[%s1 + $0x5f4] sm:$0xf]
    %v674 = vld [vmem:[%s1 + $0x5f8] sm:$0xf]
    %v675 = vld [vmem:[%s1 + $0x5fc] sm:$0xf]
    %v676 = vld [vmem:[%s1 + $0x600] sm:$0xf]
    %v677 = vld [vmem:[%s1 + $0x604] sm:$0xf]
    %v678 = vld [vmem:[%s1 + $0x608] sm:$0xf]
    %v679 = vld [vmem:[%s1 + $0x60c] sm:$0xf]
    %v680 = vld [vmem:[%s1 + $0x610] sm:$0xf]
    %v681 = vld [vmem:[%s1 + $0x614] sm:$0xf]
    %v682 = vld [vmem:[%s1 + $0x618] sm:$0xf]
    %v683 = vld [vmem:[%s1 + $0x61c] sm:$0xf]
    %v684 = vld [vmem:[%s1 + $0x620] sm:$0xf]
    %v685 = vld [vmem:[%s1 + $0x624] sm:$0xf]
    %v686 = vld [vmem:[%s1 + $0x628] sm:$0xf]
    %v687 = vld [vmem:[%s1 + $0x62c] sm:$0xf]
    %v688 = vld [vmem:[%s1 + $0x630] sm:$0xf]
    %v689 = vld [vmem:[%s1 + $0x634] sm:$0xf]
    %v690 = vld [vmem:[%s1 + $0x638] sm:$0xf]
    %v691 = vld [vmem:[%s1 + $0x63c] sm:$0xf]
    %v692 = vld [vmem:[%s1 + $0x640] sm:$0xf]
    %v693 = vld [vmem:[%s1 + $0x644] sm:$0xf]
    %v694 = vld [vmem:[%s1 + $0x648] sm:$0xf]
    %v695 = vld [vmem:[%s1 + $0x64c] sm:$0xf]
    %v696 = vld [vmem:[%s1 + $0x650] sm:$0xf]
    %v697 = vld [vmem:[%s1 + $0x654] sm:$0xf]
    %v698 = vld [vmem:[%s1 + $0x658] sm:$0xf]
    %v699 = vld [vmem:[%s1 + $0x65c] sm:$0xf]
    %v700 = vld [vmem:[%s1 + $0x660] sm:$0xf]
    %v701 = vld [vmem:[%s1 + $0x664] sm:$0xf]
    %v702 = vld [vmem:[%s1 + $0x668] sm:$0xf]
    %v703 = vld [vmem:[%s1 + $0x66c] sm:$0xf]
    %v704 = vld [vmem:[%s1 + $0x670] sm:$0xf]
    %v705 = vld [vmem:[%s1 + $0x674] sm:$0xf]
    %v706 = vld [vmem:[%s1 + $0x678] sm:$0xf]
    %v707 = vld [vmem:[%s1 + $0x67c] sm:$0xf]
    %v708 = vld [vmem:[%s1 + $0x680] sm:$0xf]
    %v709 = vld [vmem:[%s1 + $0x684] sm:$0xf]
    %v710 = vld [vmem:[%s1 + $0x688] sm:$0xf]
    %v711 = vld [vmem:[%s1 + $0x68c] sm:$0xf]
    %v712 = vld [vmem:[%s1 + $0x690] sm:$0xf]
    %v713 = vld [vmem:[%s1 + $0x694] sm:$0xf]
    %v714 = vld [vmem:[%s1 + $0x698] sm:$0xf]
    %v715 = vld [vmem:[%s1 + $0x69c] sm:$0xf]
    %v716 = vld [vmem:[%s1 + $0x6a0] sm:$0xf]
    %v717 = vld [vmem:[%s1 + $0x6a4] sm:$0xf]
    %v718 = vld [vmem:[%s1 + $0x6a8] sm:$0xf]
    %v719 = vld [vmem:[%s1 + $0x6ac] sm:$0xf]
    %v720 = vld [vmem:[%s1 + $0x6b0] sm:$0xf]
    %v721 = vld [vmem:[%s1 + $0x6b4] sm:$0xf]
    %v722 = vld [vmem:[%s1 + $0x6b8] sm:$0xf]
    %v723 = vld [vmem:[%s1 + $0x6bc] sm:$0xf]
    %v724 = vld [vmem:[%s1 + $0x6c0] sm:$0xf]
    %v725 = vld [vmem:[%s1 + $0x6c4] sm:$0xf]
    %v726 = vld [vmem:[%s1 + $0x6c8] sm:$0xf]
    %v727 = vld [vmem:[%s1 + $0x6cc] sm:$0xf]
    %v728 = vld [vmem:[%s1 + $0x6d0] sm:$0xf]
    %v729 = vld [vmem:[%s1 + $0x6d4] sm:$0xf]
    %v730 = vld [vmem:[%s1 + $0x6d8] sm:$0xf]
    %v731 = vld [vmem:[%s1 + $0x6dc] sm:$0xf]
    %v732 = vld [vmem:[%s1 + $0x6e0] sm:$0xf]
    %v733 = vld [vmem:[%s1 + $0x6e4] sm:$0xf]
    %v734 = vld [vmem:[%s1 + $0x6e8] sm:$0xf]
    %v735 = vld [vmem:[%s1 + $0x6ec] sm:$0xf]
    %v736 = vld [vmem:[%s1 + $0x6f0] sm:$0xf]
    %v737 = vld [vmem:[%s1 + $0x6f4] sm:$0xf]
    %v738 = vld [vmem:[%s1 + $0x6f8] sm:$0xf]
    %v739 = vld [vmem:[%s1 + $0x6fc] sm:$0xf]
    %v740 = vld [vmem:[%s1 + $0x700] sm:$0xf]
    %v741 = vld [vmem:[%s1 + $0x704] sm:$0xf]
    %v742 = vld [vmem:[%s1 + $0x708] sm:$0xf]
    %v743 = vld [vmem:[%s1 + $0x70c] sm:$0xf]
    %v744 = vld [vmem:[%s1 + $0x710] sm:$0xf]
    %v745 = vld [vmem:[%s1 + $0x714] sm:$0xf]
    %v746 = vld [vmem:[%s1 + $0x718] sm:$0xf]
    %v747 = vld [vmem:[%s1 + $0x71c] sm:$0xf]
    %v748 = vld [vmem:[%s1 + $0x720] sm:$0xf]
    %v749 = vld [vmem:[%s1 + $0x724] sm:$0xf]
    %v750 = vld [vmem:[%s1 + $0x728] sm:$0xf]
    %v751 = vld [vmem:[%s1 + $0x72c] sm:$0xf]
    %v752 = vld [vmem:[%s1 + $0x730] sm:$0xf]
    %v753 = vld [vmem:[%s1 + $0x734] sm:$0xf]
    %v754 = vld [vmem:[%s1 + $0x738] sm:$0xf]
    %v755 = vld [vmem:[%s1 + $0x73c] sm:$0xf]
    %v756 = vld [vmem:[%s1 + $0x740] sm:$0xf]
    %v757 = vld [vmem:[%s1 + $0x744] sm:$0xf]
    %v758 = vld [vmem:[%s1 + $0x748] sm:$0xf]
    %v759 = vld [vmem:[%s1 + $0x74c] sm:$0xf]
    %v760 = vld [vmem:[%s1 + $0x750] sm:$0xf]
    %v761 = vld [vmem:[%s1 + $0x754] sm:$0xf]
    %v762 = vld [vmem:[%s1 + $0x758] sm:$0xf]
    %v763 = vld [vmem:[%s1 + $0x75c] sm:$0xf]
    %v764 = vld [vmem:[%s1 + $0x760] sm:$0xf]
    %v765 = vld [vmem:[%s1 + $0x764] sm:$0xf]
    %v766 = vld [vmem:[%s1 + $0x768] sm:$0xf]
    %v767 = vld [vmem:[%s1 + $0x76c] sm:$0xf]
    %v768 = vld [vmem:[%s1 + $0x770] sm:$0xf]
    %v769 = vld [vmem:[%s1 + $0x774] sm:$0xf]
    %v770 = vld [vmem:[%s1 + $0x778] sm:$0xf]
    %v771 = vld [vmem:[%s1 + $0x77c] sm:$0xf]
    %v772 = vld [vmem:[%s1 + $0x780] sm:$0xf]
    %v773 = vld [vmem:[%s1 + $0x784] sm:$0xf]
    %v774 = vld [vmem:[%s1 + $0x788] sm:$0xf]
    %v775 = vld [vmem:[%s1 + $0x78c] sm:$0xf]
    %v776 = vld [vmem:[%s1 + $0x790] sm:$0xf]
    %v777 = vld [vmem:[%s1 + $0x794] sm:$0xf]
    %v778 = vld [vmem:[%s1 + $0x798] sm:$0xf]
    %v779 = vld [vmem:[%s1 + $0x79c] sm:$0xf]
    %v780 = vld [vmem:[%s1 + $0x7a0] sm:$0xf]
    %v781 = vld [vmem:[%s1 + $0x7a4] sm:$0xf]
    %v782 = vld [vmem:[%s1 + $0x7a8] sm:$0xf]
    %v783 = vld [vmem:[%s1 + $0x7ac] sm:$0xf]
    %v784 = vld [vmem:[%s1 + $0x7b0] sm:$0xf]
    %v785 = vld [vmem:[%s1 + $0x7b4] sm:$0xf]
    %v786 = vld [vmem:[%s1 + $0x7b8] sm:$0xf]
    %v787 = vld [vmem:[%s1 + $0x7bc] sm:$0xf]
    %v788 = vld [vmem:[%s1 + $0x7c0] sm:$0xf]
    %v789 = vld [vmem:[%s1 + $0x7c4] sm:$0xf]
    %v790 = vld [vmem:[%s1 + $0x7c8] sm:$0xf]
    %v791 = vld [vmem:[%s1 + $0x7cc] sm:$0xf]
    %v792 = vld [vmem:[%s1 + $0x7d0] sm:$0xf]
    %v793 = vld [vmem:[%s1 + $0x7d4] sm:$0xf]
    %v794 = vld [vmem:[%s1 + $0x7d8] sm:$0xf]
    %v795 = vld [vmem:[%s1 + $0x7dc] sm:$0xf]
    %v796 = vld [vmem:[%s1 + $0x7e0] sm:$0xf]
    %v797 = vld [vmem:[%s1 + $0x7e4] sm:$0xf]
    %v798 = vld [vmem:[%s1 + $0x7e8] sm:$0xf]
    %v799 = vld [vmem:[%s1 + $0x7ec] sm:$0xf]
    %v800 = vld [vmem:[%s1 + $0x7f0] sm:$0xf]
    %v801 = vld [vmem:[%s1 + $0x7f4] sm:$0xf]
    %v802 = vld [vmem:[%s1 + $0x7f8] sm:$0xf]
    %v803 = vld [vmem:[%s1 + $0x7fc] sm:$0xf]
    %v804 = vld [vmem:[%s1 + $0x800] sm:$0xf]
    %v805 = vld [vmem:[%s1 + $0x804] sm:$0xf]
    %v806 = vld [vmem:[%s1 + $0x808] sm:$0xf]
    %v807 = vld [vmem:[%s1 + $0x80c] sm:$0xf]
    %v808 = vld [vmem:[%s1 + $0x810] sm:$0xf]
    %v809 = vld [vmem:[%s1 + $0x814] sm:$0xf]
    %v810 = vld [vmem:[%s1 + $0x818] sm:$0xf]
    %v811 = vld [vmem:[%s1 + $0x81c] sm:$0xf]
    %v812 = vld [vmem:[%s1 + $0x820] sm:$0xf]
    %v813 = vld [vmem:[%s1 + $0x824] sm:$0xf]
    %v814 = vld [vmem:[%s1 + $0x828] sm:$0xf]
    %v815 = vld [vmem:[%s1 + $0x82c] sm:$0xf]
    %v816 = vld [vmem:[%s1 + $0x830] sm:$0xf]
    %v817 = vld [vmem:[%s1 + $0x834] sm:$0xf]
    %v818 = vld [vmem:[%s1 + $0x838] sm:$0xf]
    %v819 = vld [vmem:[%s1 + $0x83c] sm:$0xf]
    %v820 = vld [vmem:[%s1 + $0x840] sm:$0xf]
    %v821 = vld [vmem:[%s1 + $0x844] sm:$0xf]
    %v822 = vld [vmem:[%s1 + $0x848] sm:$0xf]
    %v823 = vld [vmem:[%s1 + $0x84c] sm:$0xf]
    %v824 = vld [vmem:[%s1 + $0x850] sm:$0xf]
    %v825 = vld [vmem:[%s1 + $0x854] sm:$0xf]
    %v826 = vld [vmem:[%s1 + $0x858] sm:$0xf]
    %v827 = vld [vmem:[%s1 + $0x85c] sm:$0xf]
    %v828 = vld [vmem:[%s1 + $0x860] sm:$0xf]
    %v829 = vld [vmem:[%s1 + $0x864] sm:$0xf]
    %v830 = vld [vmem:[%s1 + $0x868] sm:$0xf]
    %v831 = vld [vmem:[%s1 + $0x86c] sm:$0xf]
    %v832 = vld [vmem:[%s1 + $0x870] sm:$0xf]
    %v833 = vld [vmem:[%s1 + $0x874] sm:$0xf]
    %v834 = vld [vmem:[%s1 + $0x878] sm:$0xf]
    %v835 = vld [vmem:[%s1 + $0x87c] sm:$0xf]
    %v836 = vld [vmem:[%s1 + $0x880] sm:$0xf]
    %v837 = vld [vmem:[%s1 + $0x884] sm:$0xf]
    %v838 = vld [vmem:[%s1 + $0x888] sm:$0xf]
    %v839 = vld [vmem:[%s1 + $0x88c] sm:$0xf]
    %v840 = vld [vmem:[%s1 + $0x890] sm:$0xf]
    %v841 = vld [vmem:[%s1 + $0x894] sm:$0xf]
    %v842 = vld [vmem:[%s1 + $0x898] sm:$0xf]
    %v843 = vld [vmem:[%s1 + $0x89c] sm:$0xf]
    %v844 = vld [vmem:[%s1 + $0x8a0] sm:$0xf]
    %v845 = vld [vmem:[%s1 + $0x8a4] sm:$0xf]
    %v846 = vld [vmem:[%s1 + $0x8a8] sm:$0xf]
    %v847 = vld [vmem:[%s1 + $0x8ac] sm:$0xf]
    %v848 = vld [vmem:[%s1 + $0x8b0] sm:$0xf]
    %v849 = vld [vmem:[%s1 + $0x8b4] sm:$0xf]
    %v850 = vld [vmem:[%s1 + $0x8b8] sm:$0xf]
    %v851 = vld [vmem:[%s1 + $0x8bc] sm:$0xf]
    %v852 = vld [vmem:[%s1 + $0x8c0] sm:$0xf]
    %v853 = vld [vmem:[%s1 + $0x8c4] sm:$0xf]
    %v854 = vld [vmem:[%s1 + $0x8c8] sm:$0xf]
    %v855 = vld [vmem:[%s1 + $0x8cc] sm:$0xf]
    %v856 = vld [vmem:[%s1 + $0x8d0] sm:$0xf]
    %v857 = vld [vmem:[%s1 + $0x8d4] sm:$0xf]
    %v858 = vld [vmem:[%s1 + $0x8d8] sm:$0xf]
    %v859 = vld [vmem:[%s1 + $0x8dc] sm:$0xf]
    %v860 = vld [vmem:[%s1 + $0x8e0] sm:$0xf]
    %v861 = vld [vmem:[%s1 + $0x8e4] sm:$0xf]
    %v862 = vld [vmem:[%s1 + $0x8e8] sm:$0xf]
    %v863 = vld [vmem:[%s1 + $0x8ec] sm:$0xf]
    %v864 = vld [vmem:[%s1 + $0x8f0] sm:$0xf]
    %v865 = vld [vmem:[%s1 + $0x8f4] sm:$0xf]
    %v866 = vld [vmem:[%s1 + $0x8f8] sm:$0xf]
    %v867 = vld [vmem:[%s1 + $0x8fc] sm:$0xf]
    %v868 = vld [vmem:[%s1 + $0x900] sm:$0xf]
    %v869 = vld [vmem:[%s1 + $0x904] sm:$0xf]
    %v870 = vld [vmem:[%s1 + $0x908] sm:$0xf]
    %v871 = vld [vmem:[%s1 + $0x90c] sm:$0xf]
    %v872 = vld [vmem:[%s1 + $0x910] sm:$0xf]
    %v873 = vld [vmem:[%s1 + $0x914] sm:$0xf]
    %v874 = vld [vmem:[%s1 + $0x918] sm:$0xf]
    %v875 = vld [vmem:[%s1 + $0x91c] sm:$0xf]
    %v876 = vld [vmem:[%s1 + $0x920] sm:$0xf]
    %v877 = vld [vmem:[%s1 + $0x924] sm:$0xf]
    %v878 = vld [vmem:[%s1 + $0x928] sm:$0xf]
    %v879 = vld [vmem:[%s1 + $0x92c] sm:$0xf]
    %v880 = vld [vmem:[%s1 + $0x930] sm:$0xf]
    %v881 = vld [vmem:[%s1 + $0x934] sm:$0xf]
    %v882 = vld [vmem:[%s1 + $0x938] sm:$0xf]
    %v883 = vld [vmem:[%s1 + $0x93c] sm:$0xf]
    %v884 = vld [vmem:[%s1 + $0x940] sm:$0xf]
    %v885 = vld [vmem:[%s1 + $0x944] sm:$0xf]
    %v886 = vld [vmem:[%s1 + $0x948] sm:$0xf]
    %v887 = vld [vmem:[%s1 + $0x94c] sm:$0xf]
    %v888 = vld [vmem:[%s1 + $0x950] sm:$0xf]
    %v889 = vld [vmem:[%s1 + $0x954] sm:$0xf]
    %v890 = vld [vmem:[%s1 + $0x958] sm:$0xf]
    %v891 = vld [vmem:[%s1 + $0x95c] sm:$0xf]
    %v892 = vld [vmem:[%s1 + $0x960] sm:$0xf]
    %v893 = vld [vmem:[%s1 + $0x964] sm:$0xf]
    %v894 = vld [vmem:[%s1 + $0x968] sm:$0xf]
    %v895 = vld [vmem:[%s1 + $0x96c] sm:$0xf]
    %v896 = vld [vmem:[%s1 + $0x970] sm:$0xf]
    %v897 = vld [vmem:[%s1 + $0x974] sm:$0xf]
    %v898 = vld [vmem:[%s1 + $0x978] sm:$0xf]
    %v899 = vld [vmem:[%s1 + $0x97c] sm:$0xf]
    %v900 = vld [vmem:[%s1 + $0x980] sm:$0xf]
    %v901 = vld [vmem:[%s1 + $0x984] sm:$0xf]
    %v902 = vld [vmem:[%s1 + $0x988] sm:$0xf]
    %v903 = vld [vmem:[%s1 + $0x98c] sm:$0xf]
    %v904 = vld [vmem:[%s1 + $0x990] sm:$0xf]
    %v905 = vld [vmem:[%s1 + $0x994] sm:$0xf]
    %v906 = vld [vmem:[%s1 + $0x998] sm:$0xf]
    %v907 = vld [vmem:[%s1 + $0x99c] sm:$0xf]
    %v908 = vld [vmem:[%s1 + $0x9a0] sm:$0xf]
    %v909 = vld [vmem:[%s1 + $0x9a4] sm:$0xf]
    %v910 = vld [vmem:[%s1 + $0x9a8] sm:$0xf]
    %v911 = vld [vmem:[%s1 + $0x9ac] sm:$0xf]
    %v912 = vld [vmem:[%s1 + $0x9b0] sm:$0xf]
    %v913 = vld [vmem:[%s1 + $0x9b4] sm:$0xf]
    %v914 = vld [vmem:[%s1 + $0x9b8] sm:$0xf]
    %v915 = vld [vmem:[%s1 + $0x9bc] sm:$0xf]
    %v916 = vld [vmem:[%s1 + $0x9c0] sm:$0xf]
    %v917 = vld [vmem:[%s1 + $0x9c4] sm:$0xf]
    %v918 = vld [vmem:[%s1 + $0x9c8] sm:$0xf]
    %v919 = vld [vmem:[%s1 + $0x9cc] sm:$0xf]
    %v920 = vld [vmem:[%s1 + $0x9d0] sm:$0xf]
    %v921 = vld [vmem:[%s1 + $0x9d4] sm:$0xf]
    %v922 = vld [vmem:[%s1 + $0x9d8] sm:$0xf]
    %v923 = vld [vmem:[%s1 + $0x9dc] sm:$0xf]
    %v924 = vld [vmem:[%s1 + $0x9e0] sm:$0xf]
    %v925 = vld [vmem:[%s1 + $0x9e4] sm:$0xf]
    %v926 = vld [vmem:[%s1 + $0x9e8] sm:$0xf]
    %v927 = vld [vmem:[%s1 + $0x9ec] sm:$0xf]
    %v928 = vld [vmem:[%s1 + $0x9f0] sm:$0xf]
    %v929 = vld [vmem:[%s1 + $0x9f4] sm:$0xf]
    %v930 = vld [vmem:[%s1 + $0x9f8] sm:$0xf]
    %v931 = vld [vmem:[%s1 + $0x9fc] sm:$0xf]
    %v932 = vld [vmem:[%s1 + $0xa00] sm:$0xf]
    %v933 = vld [vmem:[%s1 + $0xa04] sm:$0xf]
    %v934 = vld [vmem:[%s1 + $0xa08] sm:$0xf]
    %v935 = vld [vmem:[%s1 + $0xa0c] sm:$0xf]
    %v936 = vld [vmem:[%s1 + $0xa10] sm:$0xf]
    %v937 = vld [vmem:[%s1 + $0xa14] sm:$0xf]
    %v938 = vld [vmem:[%s1 + $0xa18] sm:$0xf]
    %v939 = vld [vmem:[%s1 + $0xa1c] sm:$0xf]
    %v940 = vld [vmem:[%s1 + $0xa20] sm:$0xf]
    %v941 = vld [vmem:[%s1 + $0xa24] sm:$0xf]
    %v942 = vld [vmem:[%s1 + $0xa28] sm:$0xf]
    %v943 = vld [vmem:[%s1 + $0xa2c] sm:$0xf]
    %v944 = vld [vmem:[%s1 + $0xa30] sm:$0xf]
    %v945 = vld [vmem:[%s1 + $0xa34] sm:$0xf]
    %v946 = vld [vmem:[%s1 + $0xa38] sm:$0xf]
    %v947 = vld [vmem:[%s1 + $0xa3c] sm:$0xf]
    %v948 = vld [vmem:[%s1 + $0xa40] sm:$0xf]
    %v949 = vld [vmem:[%s1 + $0xa44] sm:$0xf]
    %v950 = vld [vmem:[%s1 + $0xa48] sm:$0xf]
    %v951 = vld [vmem:[%s1 + $0xa4c] sm:$0xf]
    %v952 = vld [vmem:[%s1 + $0xa50] sm:$0xf]
    %v953 = vld [vmem:[%s1 + $0xa54] sm:$0xf]
    %v954 = vld [vmem:[%s1 + $0xa58] sm:$0xf]
    %v955 = vld [vmem:[%s1 + $0xa5c] sm:$0xf]
    %v956 = vld [vmem:[%s1 + $0xa60] sm:$0xf]
    %v957 = vld [vmem:[%s1 + $0xa64] sm:$0xf]
    %v958 = vld [vmem:[%s1 + $0xa68] sm:$0xf]
    %v959 = vld [vmem:[%s1 + $0xa6c] sm:$0xf]
    %v960 = vld [vmem:[%s1 + $0xa70] sm:$0xf]
    %v961 = vld [vmem:[%s1 + $0xa74] sm:$0xf]
    %v962 = vld [vmem:[%s1 + $0xa78] sm:$0xf]
    %v963 = vld [vmem:[%s1 + $0xa7c] sm:$0xf]
    %v964 = vld [vmem:[%s1 + $0xa80] sm:$0xf]
    %v965 = vld [vmem:[%s1 + $0xa84] sm:$0xf]
    %v966 = vld [vmem:[%s1 + $0xa88] sm:$0xf]
    %v967 = vld [vmem:[%s1 + $0xa8c] sm:$0xf]
    %v968 = vld [vmem:[%s1 + $0xa90] sm:$0xf]
    %v969 = vld [vmem:[%s1 + $0xa94] sm:$0xf]
    %v970 = vld [vmem:[%s1 + $0xa98] sm:$0xf]
    %v971 = vld [vmem:[%s1 + $0xa9c] sm:$0xf]
    %v972 = vld [vmem:[%s1 + $0xaa0] sm:$0xf]
    %v973 = vld [vmem:[%s1 + $0xaa4] sm:$0xf]
    %v974 = vld [vmem:[%s1 + $0xaa8] sm:$0xf]
    %v975 = vld [vmem:[%s1 + $0xaac] sm:$0xf]
    %v976 = vld [vmem:[%s1 + $0xab0] sm:$0xf]
    %v977 = vld [vmem:[%s1 + $0xab4] sm:$0xf]
    %v978 = vld [vmem:[%s1 + $0xab8] sm:$0xf]
    %v979 = vld [vmem:[%s1 + $0xabc] sm:$0xf]
    %v980 = vld [vmem:[%s1 + $0xac0] sm:$0xf]
    %v981 = vld [vmem:[%s1 + $0xac4] sm:$0xf]
    %v982 = vld [vmem:[%s1 + $0xac8] sm:$0xf]
    %v983 = vld [vmem:[%s1 + $0xacc] sm:$0xf]
    %v984 = vld [vmem:[%s1 + $0xad0] sm:$0xf]
    %v985 = vld [vmem:[%s1 + $0xad4] sm:$0xf]
    %v986 = vld [vmem:[%s1 + $0xad8] sm:$0xf]
    %v987 = vld [vmem:[%s1 + $0xadc] sm:$0xf]
    %v988 = vld [vmem:[%s1 + $0xae0] sm:$0xf]
    %v989 = vld [vmem:[%s1 + $0xae4] sm:$0xf]
    %v990 = vld [vmem:[%s1 + $0xae8] sm:$0xf]
    %v991 = vld [vmem:[%s1 + $0xaec] sm:$0xf]
    %v992 = vld [vmem:[%s1 + $0xaf0] sm:$0xf]
    %v993 = vld [vmem:[%s1 + $0xaf4] sm:$0xf]
    %v994 = vld [vmem:[%s1 + $0xaf8] sm:$0xf]
    %v995 = vld [vmem:[%s1 + $0xafc] sm:$0xf]
    %v996 = vld [vmem:[%s1 + $0xb00] sm:$0xf]
    %v997 = vld [vmem:[%s1 + $0xb04] sm:$0xf]
    %v998 = vld [vmem:[%s1 + $0xb08] sm:$0xf]
    %v999 = vld [vmem:[%s1 + $0xb0c] sm:$0xf]
    %v1000 = vld [vmem:[%s1 + $0xb10] sm:$0xf]
    %v1001 = vld [vmem:[%s1 + $0xb14] sm:$0xf]
    %v1002 = vld [vmem:[%s1 + $0xb18] sm:$0xf]
    %v1003 = vld [vmem:[%s1 + $0xb1c] sm:$0xf]
    %v1004 = vld [vmem:[%s1 + $0xb20] sm:$0xf]
    %v1005 = vld [vmem:[%s1 + $0xb24] sm:$0xf]
    %v1006 = vld [vmem:[%s1 + $0xb28] sm:$0xf]
    %v1007 = vld [vmem:[%s1 + $0xb2c] sm:$0xf]
    %v1008 = vld [vmem:[%s1 + $0xb30] sm:$0xf]
    %v1009 = vld [vmem:[%s1 + $0xb34] sm:$0xf]
    %v1010 = vld [vmem:[%s1 + $0xb38] sm:$0xf]
    %v1011 = vld [vmem:[%s1 + $0xb3c] sm:$0xf]
    %v1012 = vld [vmem:[%s1 + $0xb40] sm:$0xf]
    %v1013 = vld [vmem:[%s1 + $0xb44] sm:$0xf]
    %v1014 = vld [vmem:[%s1 + $0xb48] sm:$0xf]
    %v1015 = vld [vmem:[%s1 + $0xb4c] sm:$0xf]
    %v1016 = vld [vmem:[%s1 + $0xb50] sm:$0xf]
    %v1017 = vld [vmem:[%s1 + $0xb54] sm:$0xf]
    %v1018 = vld [vmem:[%s1 + $0xb58] sm:$0xf]
    %v1019 = vld [vmem:[%s1 + $0xb5c] sm:$0xf]
    %v1020 = vld [vmem:[%s1 + $0xb60] sm:$0xf]
    %v1021 = vld [vmem:[%s1 + $0xb64] sm:$0xf]
    %v1022 = vld [vmem:[%s1 + $0xb68] sm:$0xf]
    %v1023 = vld [vmem:[%s1 + $0xb6c] sm:$0xf]
    %v1024 = vld [vmem:[%s1 + $0xb70] sm:$0xf]
    %v1025 = vld [vmem:[%s1 + $0xb74] sm:$0xf]
    %v1026 = vld [vmem:[%s1 + $0xb78] sm:$0xf]
    %v1027 = vld [vmem:[%s1 + $0xb7c] sm:$0xf]
    %v1028 = vld [vmem:[%s1 + $0xb80] sm:$0xf]
    %v1029 = vld [vmem:[%s1 + $0xb84] sm:$0xf]
    %v1030 = vld [vmem:[%s1 + $0xb88] sm:$0xf]
    %v1031 = vld [vmem:[%s1 + $0xb8c] sm:$0xf]
    %v1032 = vld [vmem:[%s1 + $0xb90] sm:$0xf]
    %v1033 = vld [vmem:[%s1 + $0xb94] sm:$0xf]
    %v1034 = vld [vmem:[%s1 + $0xb98] sm:$0xf]
    %v1035 = vld [vmem:[%s1 + $0xb9c] sm:$0xf]
    %v1036 = vld [vmem:[%s1 + $0xba0] sm:$0xf]
    %v1037 = vld [vmem:[%s1 + $0xba4] sm:$0xf]
    %v1038 = vld [vmem:[%s1 + $0xba8] sm:$0xf]
    %v1039 = vld [vmem:[%s1 + $0xbac] sm:$0xf]
    %v1040 = vld [vmem:[%s1 + $0xbb0] sm:$0xf]
    %v1041 = vld [vmem:[%s1 + $0xbb4] sm:$0xf]
    %v1042 = vld [vmem:[%s1 + $0xbb8] sm:$0xf]
    %v1043 = vld [vmem:[%s1 + $0xbbc] sm:$0xf]
    %v1044 = vld [vmem:[%s1 + $0xbc0] sm:$0xf]
    %v1045 = vld [vmem:[%s1 + $0xbc4] sm:$0xf]
    %v1046 = vld [vmem:[%s1 + $0xbc8] sm:$0xf]
    %v1047 = vld [vmem:[%s1 + $0xbcc] sm:$0xf]
    %v1048 = vld [vmem:[%s1 + $0xbd0] sm:$0xf]
    %v1049 = vld [vmem:[%s1 + $0xbd4] sm:$0xf]
    %v1050 = vld [vmem:[%s1 + $0xbd8] sm:$0xf]
    %v1051 = vld [vmem:[%s1 + $0xbdc] sm:$0xf]
    %v1052 = vld [vmem:[%s1 + $0xbe0] sm:$0xf]
    %v1053 = vld [vmem:[%s1 + $0xbe4] sm:$0xf]
    %v1054 = vld [vmem:[%s1 + $0xbe8] sm:$0xf]
    %v1055 = vld [vmem:[%s1 + $0xbec] sm:$0xf]
    %v1056 = vld [vmem:[%s1 + $0xbf0] sm:$0xf]
    %v1057 = vld [vmem:[%s1 + $0xbf4] sm:$0xf]
    %v1058 = vld [vmem:[%s1 + $0xbf8] sm:$0xf]
    %v1059 = vld [vmem:[%s1 + $0xbfc] sm:$0xf]
    %v1060 = vld [vmem:[%s1 + $0xc00] sm:$0xf]
    %v1061 = vld [vmem:[%s1 + $0xc04] sm:$0xf]
    %v1062 = vld [vmem:[%s1 + $0xc08] sm:$0xf]
    %v1063 = vld [vmem:[%s1 + $0xc0c] sm:$0xf]
    %v1064 = vld [vmem:[%s1 + $0xc10] sm:$0xf]
    %v1065 = vld [vmem:[%s1 + $0xc14] sm:$0xf]
    %v1066 = vld [vmem:[%s1 + $0xc18] sm:$0xf]
    %v1067 = vld [vmem:[%s1 + $0xc1c] sm:$0xf]
    %v1068 = vld [vmem:[%s1 + $0xc20] sm:$0xf]
    %v1069 = vld [vmem:[%s1 + $0xc24] sm:$0xf]
    %v1070 = vld [vmem:[%s1 + $0xc28] sm:$0xf]
    %v1071 = vld [vmem:[%s1 + $0xc2c] sm:$0xf]
    %v1072 = vld [vmem:[%s1 + $0xc30] sm:$0xf]
    %v1073 = vld [vmem:[%s1 + $0xc34] sm:$0xf]
    %v1074 = vld [vmem:[%s1 + $0xc38] sm:$0xf]
    %v1075 = vld [vmem:[%s1 + $0xc3c] sm:$0xf]
    %v1076 = vld [vmem:[%s1 + $0xc40] sm:$0xf]
    %v1077 = vld [vmem:[%s1 + $0xc44] sm:$0xf]
    %v1078 = vld [vmem:[%s1 + $0xc48] sm:$0xf]
    %v1079 = vld [vmem:[%s1 + $0xc4c] sm:$0xf]
    %v1080 = vld [vmem:[%s1 + $0xc50] sm:$0xf]
    %v1081 = vld [vmem:[%s1 + $0xc54] sm:$0xf]
    %v1082 = vld [vmem:[%s1 + $0xc58] sm:$0xf]
    %v1083 = vld [vmem:[%s1 + $0xc5c] sm:$0xf]
    %v1084 = vld [vmem:[%s1 + $0xc60] sm:$0xf]
    %v1085 = vld [vmem:[%s1 + $0xc64] sm:$0xf]
    %v1086 = vld [vmem:[%s1 + $0xc68] sm:$0xf]
    %v1087 = vld [vmem:[%s1 + $0xc6c] sm:$0xf]
    %v1088 = vld [vmem:[%s1 + $0xc70] sm:$0xf]
    %v1089 = vld [vmem:[%s1 + $0xc74] sm:$0xf]
    %v1090 = vld [vmem:[%s1 + $0xc78] sm:$0xf]
    %v1091 = vld [vmem:[%s1 + $0xc7c] sm:$0xf]
    %v1092 = vld [vmem:[%s1 + $0xc80] sm:$0xf]
    %v1093 = vld [vmem:[%s1 + $0xc84] sm:$0xf]
    %v1094 = vld [vmem:[%s1 + $0xc88] sm:$0xf]
    %v1095 = vld [vmem:[%s1 + $0xc8c] sm:$0xf]
    %v1096 = vld [vmem:[%s1 + $0xc90] sm:$0xf]
    %v1097 = vld [vmem:[%s1 + $0xc94] sm:$0xf]
    %v1098 = vld [vmem:[%s1 + $0xc98] sm:$0xf]
    %v1099 = vld [vmem:[%s1 + $0xc9c] sm:$0xf]
    %v1100 = vld [vmem:[%s1 + $0xca0] sm:$0xf]
    %v1101 = vld [vmem:[%s1 + $0xca4] sm:$0xf]
    %v1102 = vld [vmem:[%s1 + $0xca8] sm:$0xf]
    %v1103 = vld [vmem:[%s1 + $0xcac] sm:$0xf]
    %v1104 = vld [vmem:[%s1 + $0xcb0] sm:$0xf]
    %v1105 = vld [vmem:[%s1 + $0xcb4] sm:$0xf]
    %v1106 = vld [vmem:[%s1 + $0xcb8] sm:$0xf]
    %v1107 = vld [vmem:[%s1 + $0xcbc] sm:$0xf]
    %v1108 = vld [vmem:[%s1 + $0xcc0] sm:$0xf]
    %v1109 = vld [vmem:[%s1 + $0xcc4] sm:$0xf]
    %v1110 = vld [vmem:[%s1 + $0xcc8] sm:$0xf]
    %v1111 = vld [vmem:[%s1 + $0xccc] sm:$0xf]
    %v1112 = vld [vmem:[%s1 + $0xcd0] sm:$0xf]
    %v1113 = vld [vmem:[%s1 + $0xcd4] sm:$0xf]
    %v1114 = vld [vmem:[%s1 + $0xcd8] sm:$0xf]
    %v1115 = vld [vmem:[%s1 + $0xcdc] sm:$0xf]
    %v1116 = vld [vmem:[%s1 + $0xce0] sm:$0xf]
    %v1117 = vld [vmem:[%s1 + $0xce4] sm:$0xf]
    %v1118 = vld [vmem:[%s1 + $0xce8] sm:$0xf]
    %v1119 = vld [vmem:[%s1 + $0xcec] sm:$0xf]
    %v1120 = vld [vmem:[%s1 + $0xcf0] sm:$0xf]
    %v1121 = vld [vmem:[%s1 + $0xcf4] sm:$0xf]
    %v1122 = vld [vmem:[%s1 + $0xcf8] sm:$0xf]
    %v1123 = vld [vmem:[%s1 + $0xcfc] sm:$0xf]
    %v1124 = vld [vmem:[%s1 + $0xd00] sm:$0xf]
    %v1125 = vld [vmem:[%s1 + $0xd04] sm:$0xf]
    %v1126 = vld [vmem:[%s1 + $0xd08] sm:$0xf]
    %v1127 = vld [vmem:[%s1 + $0xd0c] sm:$0xf]
    %v1128 = vld [vmem:[%s1 + $0xd10] sm:$0xf]
    %v1129 = vld [vmem:[%s1 + $0xd14] sm:$0xf]
    %v1130 = vld [vmem:[%s1 + $0xd18] sm:$0xf]
    %v1131 = vld [vmem:[%s1 + $0xd1c] sm:$0xf]
    %v1132 = vld [vmem:[%s1 + $0xd20] sm:$0xf]
    %v1133 = vld [vmem:[%s1 + $0xd24] sm:$0xf]
    %v1134 = vld [vmem:[%s1 + $0xd28] sm:$0xf]
    %v1135 = vld [vmem:[%s1 + $0xd2c] sm:$0xf]
    %v1136 = vld [vmem:[%s1 + $0xd30] sm:$0xf]
    %v1137 = vld [vmem:[%s1 + $0xd34] sm:$0xf]
    %v1138 = vld [vmem:[%s1 + $0xd38] sm:$0xf]
    %v1139 = vld [vmem:[%s1 + $0xd3c] sm:$0xf]
    %v1140 = vld [vmem:[%s1 + $0xd40] sm:$0xf]
    %v1141 = vld [vmem:[%s1 + $0xd44] sm:$0xf]
    %v1142 = vld [vmem:[%s1 + $0xd48] sm:$0xf]
    %v1143 = vld [vmem:[%s1 + $0xd4c] sm:$0xf]
    %v1144 = vld [vmem:[%s1 + $0xd50] sm:$0xf]
    %v1145 = vld [vmem:[%s1 + $0xd54] sm:$0xf]
    %v1146 = vld [vmem:[%s1 + $0xd58] sm:$0xf]
    %v1147 = vld [vmem:[%s1 + $0xd5c] sm:$0xf]
    %v1148 = vld [vmem:[%s1 + $0xd60] sm:$0xf]
    %v1149 = vld [vmem:[%s1 + $0xd64] sm:$0xf]
    %v1150 = vld [vmem:[%s1 + $0xd68] sm:$0xf]
    %v1151 = vld [vmem:[%s1 + $0xd6c] sm:$0xf]
    %v1152 = vld [vmem:[%s1 + $0xd70] sm:$0xf]
    %v1153 = vld [vmem:[%s1 + $0xd74] sm:$0xf]
    %v1154 = vld [vmem:[%s1 + $0xd78] sm:$0xf]
    %v1155 = vld [vmem:[%s1 + $0xd7c] sm:$0xf]
    %v1156 = vld [vmem:[%s1 + $0xd80] sm:$0xf]
    %v1157 = vld [vmem:[%s1 + $0xd84] sm:$0xf]
    %v1158 = vld [vmem:[%s1 + $0xd88] sm:$0xf]
    %v1159 = vld [vmem:[%s1 + $0xd8c] sm:$0xf]
    %v1160 = vld [vmem:[%s1 + $0xd90] sm:$0xf]
    %v1161 = vld [vmem:[%s1 + $0xd94] sm:$0xf]
    %v1162 = vld [vmem:[%s1 + $0xd98] sm:$0xf]
    %v1163 = vld [vmem:[%s1 + $0xd9c] sm:$0xf]
    %v1164 = vld [vmem:[%s1 + $0xda0] sm:$0xf]
    %v1165 = vld [vmem:[%s1 + $0xda4] sm:$0xf]
    %v1166 = vld [vmem:[%s1 + $0xda8] sm:$0xf]
    %v1167 = vld [vmem:[%s1 + $0xdac] sm:$0xf]
    %v1168 = vld [vmem:[%s1 + $0xdb0] sm:$0xf]
    %v1169 = vld [vmem:[%s1 + $0xdb4] sm:$0xf]
    %v1170 = vld [vmem:[%s1 + $0xdb8] sm:$0xf]
    %v1171 = vld [vmem:[%s1 + $0xdbc] sm:$0xf]
    %v1172 = vld [vmem:[%s1 + $0xdc0] sm:$0xf]
    %v1173 = vld [vmem:[%s1 + $0xdc4] sm:$0xf]
    %v1174 = vld [vmem:[%s1 + $0xdc8] sm:$0xf]
    %v1175 = vld [vmem:[%s1 + $0xdcc] sm:$0xf]
    %v1176 = vld [vmem:[%s1 + $0xdd0] sm:$0xf]
    %v1177 = vld [vmem:[%s1 + $0xdd4] sm:$0xf]
    %v1178 = vld [vmem:[%s1 + $0xdd8] sm:$0xf]
    %v1179 = vld [vmem:[%s1 + $0xddc] sm:$0xf]
    %v1180 = vld [vmem:[%s1 + $0xde0] sm:$0xf]
    %v1181 = vld [vmem:[%s1 + $0xde4] sm:$0xf]
    %v1182 = vld [vmem:[%s1 + $0xde8] sm:$0xf]
    %v1183 = vld [vmem:[%s1 + $0xdec] sm:$0xf]
    %v1184 = vld [vmem:[%s1 + $0xdf0] sm:$0xf]
    %v1185 = vld [vmem:[%s1 + $0xdf4] sm:$0xf]
    %v1186 = vld [vmem:[%s1 + $0xdf8] sm:$0xf]
    %v1187 = vld [vmem:[%s1 + $0xdfc] sm:$0xf]
    %v1188 = vld [vmem:[%s1 + $0xe00] sm:$0xf]
    %v1189 = vld [vmem:[%s1 + $0xe04] sm:$0xf]
    %v1190 = vld [vmem:[%s1 + $0xe08] sm:$0xf]
    %v1191 = vld [vmem:[%s1 + $0xe0c] sm:$0xf]
    %v1192 = vld [vmem:[%s1 + $0xe10] sm:$0xf]
    %v1193 = vld [vmem:[%s1 + $0xe14] sm:$0xf]
    %v1194 = vld [vmem:[%s1 + $0xe18] sm:$0xf]
    %v1195 = vld [vmem:[%s1 + $0xe1c] sm:$0xf]
    %v1196 = vld [vmem:[%s1 + $0xe20] sm:$0xf]
    %v1197 = vld [vmem:[%s1 + $0xe24] sm:$0xf]
    %v1198 = vld [vmem:[%s1 + $0xe28] sm:$0xf]
    %v1199 = vld [vmem:[%s1 + $0xe2c] sm:$0xf]
    %v1200 = vld [vmem:[%s1 + $0xe30] sm:$0xf]
    %v1201 = vld [vmem:[%s1 + $0xe34] sm:$0xf]
    %v1202 = vld [vmem:[%s1 + $0xe38] sm:$0xf]
    %v1203 = vld [vmem:[%s1 + $0xe3c] sm:$0xf]
    %v1204 = vld [vmem:[%s1 + $0xe40] sm:$0xf]
    %v1205 = vld [vmem:[%s1 + $0xe44] sm:$0xf]
    %v1206 = vld [vmem:[%s1 + $0xe48] sm:$0xf]
    %v1207 = vld [vmem:[%s1 + $0xe4c] sm:$0xf]
    %v1208 = vld [vmem:[%s1 + $0xe50] sm:$0xf]
    %v1209 = vld [vmem:[%s1 + $0xe54] sm:$0xf]
    %v1210 = vld [vmem:[%s1 + $0xe58] sm:$0xf]
    %v1211 = vld [vmem:[%s1 + $0xe5c] sm:$0xf]
    %v1212 = vld [vmem:[%s1 + $0xe60] sm:$0xf]
    %v1213 = vld [vmem:[%s1 + $0xe64] sm:$0xf]
    %v1214 = vld [vmem:[%s1 + $0xe68] sm:$0xf]
    %v1215 = vld [vmem:[%s1 + $0xe6c] sm:$0xf]
    %v1216 = vld [vmem:[%s1 + $0xe70] sm:$0xf]
    %v1217 = vld [vmem:[%s1 + $0xe74] sm:$0xf]
    %v1218 = vld [vmem:[%s1 + $0xe78] sm:$0xf]
    %v1219 = vld [vmem:[%s1 + $0xe7c] sm:$0xf]
    %v1220 = vld [vmem:[%s1 + $0xe80] sm:$0xf]
    %v1221 = vld [vmem:[%s1 + $0xe84] sm:$0xf]
    %v1222 = vld [vmem:[%s1 + $0xe88] sm:$0xf]
    %v1223 = vld [vmem:[%s1 + $0xe8c] sm:$0xf]
    %v1224 = vld [vmem:[%s1 + $0xe90] sm:$0xf]
    %v1225 = vld [vmem:[%s1 + $0xe94] sm:$0xf]
    %v1226 = vld [vmem:[%s1 + $0xe98] sm:$0xf]
    %v1227 = vld [vmem:[%s1 + $0xe9c] sm:$0xf]
    %v1228 = vld [vmem:[%s1 + $0xea0] sm:$0xf]
    %v1229 = vld [vmem:[%s1 + $0xea4] sm:$0xf]
    %v1230 = vld [vmem:[%s1 + $0xea8] sm:$0xf]
    %v1231 = vld [vmem:[%s1 + $0xeac] sm:$0xf]
    %v1232 = vld [vmem:[%s1 + $0xeb0] sm:$0xf]
    %v1233 = vld [vmem:[%s1 + $0xeb4] sm:$0xf]
    %v1234 = vld [vmem:[%s1 + $0xeb8] sm:$0xf]
    %v1235 = vld [vmem:[%s1 + $0xebc] sm:$0xf]
    %v1236 = vld [vmem:[%s1 + $0xec0] sm:$0xf]
    %v1237 = vld [vmem:[%s1 + $0xec4] sm:$0xf]
    %v1238 = vld [vmem:[%s1 + $0xec8] sm:$0xf]
    %v1239 = vld [vmem:[%s1 + $0xecc] sm:$0xf]
    %v1240 = vld [vmem:[%s1 + $0xed0] sm:$0xf]
    %v1241 = vld [vmem:[%s1 + $0xed4] sm:$0xf]
    %v1242 = vld [vmem:[%s1 + $0xed8] sm:$0xf]
    %v1243 = vld [vmem:[%s1 + $0xedc] sm:$0xf]
    %v1244 = vld [vmem:[%s1 + $0xee0] sm:$0xf]
    %v1245 = vld [vmem:[%s1 + $0xee4] sm:$0xf]
    %v1246 = vld [vmem:[%s1 + $0xee8] sm:$0xf]
    %v1247 = vld [vmem:[%s1 + $0xeec] sm:$0xf]
    %v1248 = vld [vmem:[%s1 + $0xef0] sm:$0xf]
    %v1249 = vld [vmem:[%s1 + $0xef4] sm:$0xf]
    %v1250 = vld [vmem:[%s1 + $0xef8] sm:$0xf]
    %v1251 = vld [vmem:[%s1 + $0xefc] sm:$0xf]
    %v1252 = vld [vmem:[%s1 + $0xf00] sm:$0xf]
    %v1253 = vld [vmem:[%s1 + $0xf04] sm:$0xf]
    %v1254 = vld [vmem:[%s1 + $0xf08] sm:$0xf]
    %v1255 = vld [vmem:[%s1 + $0xf0c] sm:$0xf]
    %v1256 = vld [vmem:[%s1 + $0xf10] sm:$0xf]
    %v1257 = vld [vmem:[%s1 + $0xf14] sm:$0xf]
    %v1258 = vld [vmem:[%s1 + $0xf18] sm:$0xf]
    %v1259 = vld [vmem:[%s1 + $0xf1c] sm:$0xf]
    %v1260 = vld [vmem:[%s1 + $0xf20] sm:$0xf]
    %v1261 = vld [vmem:[%s1 + $0xf24] sm:$0xf]
    %v1262 = vld [vmem:[%s1 + $0xf28] sm:$0xf]
    %v1263 = vld [vmem:[%s1 + $0xf2c] sm:$0xf]
    %v1264 = vld [vmem:[%s1 + $0xf30] sm:$0xf]
    %v1265 = vld [vmem:[%s1 + $0xf34] sm:$0xf]
    %v1266 = vld [vmem:[%s1 + $0xf38] sm:$0xf]
    %v1267 = vld [vmem:[%s1 + $0xf3c] sm:$0xf]
    %v1268 = vld [vmem:[%s1 + $0xf40] sm:$0xf]
    %v1269 = vld [vmem:[%s1 + $0xf44] sm:$0xf]
    %v1270 = vld [vmem:[%s1 + $0xf48] sm:$0xf]
    %v1271 = vld [vmem:[%s1 + $0xf4c] sm:$0xf]
    %v1272 = vld [vmem:[%s1 + $0xf50] sm:$0xf]
    %v1273 = vld [vmem:[%s1 + $0xf54] sm:$0xf]
    %v1274 = vld [vmem:[%s1 + $0xf58] sm:$0xf]
    %v1275 = vld [vmem:[%s1 + $0xf5c] sm:$0xf]
    %v1276 = vld [vmem:[%s1 + $0xf60] sm:$0xf]
    %v1277 = vld [vmem:[%s1 + $0xf64] sm:$0xf]
    %v1278 = vld [vmem:[%s1 + $0xf68] sm:$0xf]
    %v1279 = vld [vmem:[%s1 + $0xf6c] sm:$0xf]
    %v1280 = vld [vmem:[%s1 + $0xf70] sm:$0xf]
    %v1281 = vld [vmem:[%s1 + $0xf74] sm:$0xf]
    %v1282 = vld [vmem:[%s1 + $0xf78] sm:$0xf]
    %v1283 = vld [vmem:[%s1 + $0xf7c] sm:$0xf]
    %v1284 = vld [vmem:[%s1 + $0xf80] sm:$0xf]
    %v1285 = vld [vmem:[%s1 + $0xf84] sm:$0xf]
    %v1286 = vld [vmem:[%s1 + $0xf88] sm:$0xf]
    %v1287 = vld [vmem:[%s1 + $0xf8c] sm:$0xf]
    %v1288 = vld [vmem:[%s1 + $0xf90] sm:$0xf]
    %v1289 = vld [vmem:[%s1 + $0xf94] sm:$0xf]
    %v1290 = vld [vmem:[%s1 + $0xf98] sm:$0xf]
    %v1291 = vld [vmem:[%s1 + $0xf9c] sm:$0xf]
    %v1292 = vld [vmem:[%s1 + $0xfa0] sm:$0xf]
    %v1293 = vld [vmem:[%s1 + $0xfa4] sm:$0xf]
    %v1294 = vld [vmem:[%s1 + $0xfa8] sm:$0xf]
    %v1295 = vld [vmem:[%s1 + $0xfac] sm:$0xf]
    %v1296 = vld [vmem:[%s1 + $0xfb0] sm:$0xf]
    %v1297 = vld [vmem:[%s1 + $0xfb4] sm:$0xf]
    %v1298 = vld [vmem:[%s1 + $0xfb8] sm:$0xf]
    %v1299 = vld [vmem:[%s1 + $0xfbc] sm:$0xf]
    %v1300 = vld [vmem:[%s1 + $0xfc0] sm:$0xf]
    %v1301 = vld [vmem:[%s1 + $0xfc4] sm:$0xf]
    %v1302 = vld [vmem:[%s1 + $0xfc8] sm:$0xf]
    %v1303 = vld [vmem:[%s1 + $0xfcc] sm:$0xf]
    %v1304 = vld [vmem:[%s1 + $0xfd0] sm:$0xf]
    %v1305 = vld [vmem:[%s1 + $0xfd4] sm:$0xf]
    %v1306 = vld [vmem:[%s1 + $0xfd8] sm:$0xf]
    %v1307 = vld [vmem:[%s1 + $0xfdc] sm:$0xf]
    %v1308 = vld [vmem:[%s1 + $0xfe0] sm:$0xf]
    %v1309 = vld [vmem:[%s1 + $0xfe4] sm:$0xf]
    %v1310 = vld [vmem:[%s1 + $0xfe8] sm:$0xf]
    %v1311 = vld [vmem:[%s1 + $0xfec] sm:$0xf]
    %v1312 = vld [vmem:[%s1 + $0xff0] sm:$0xf]
    %v1313 = vld [vmem:[%s1 + $0xff4] sm:$0xf]
    %v1314 = vld [vmem:[%s1 + $0xff8] sm:$0xf]
    %v1315 = vld [vmem:[%s1 + $0xffc] sm:$0xf]
    %v1316 = vld [vmem:[%s1 + $0x1000] sm:$0xf]
    %v1317 = vld [vmem:[%s1 + $0x1004] sm:$0xf]
    %v1318 = vld [vmem:[%s1 + $0x1008] sm:$0xf]
    %v1319 = vld [vmem:[%s1 + $0x100c] sm:$0xf]
    %v1320 = vld [vmem:[%s1 + $0x1010] sm:$0xf]
    %v1321 = vld [vmem:[%s1 + $0x1014] sm:$0xf]
    %v1322 = vld [vmem:[%s1 + $0x1018] sm:$0xf]
    %v1323 = vld [vmem:[%s1 + $0x101c] sm:$0xf]
    %v1324 = vld [vmem:[%s1 + $0x1020] sm:$0xf]
    %v1325 = vld [vmem:[%s1 + $0x1024] sm:$0xf]
    %v1326 = vld [vmem:[%s1 + $0x1028] sm:$0xf]
    %v1327 = vld [vmem:[%s1 + $0x102c] sm:$0xf]
    %v1328 = vld [vmem:[%s1 + $0x1030] sm:$0xf]
    %v1329 = vld [vmem:[%s1 + $0x1034] sm:$0xf]
    %v1330 = vld [vmem:[%s1 + $0x1038] sm:$0xf]
    %v1331 = vld [vmem:[%s1 + $0x103c] sm:$0xf]
    %v1332 = vld [vmem:[%s1 + $0x1040] sm:$0xf]
    %v1333 = vld [vmem:[%s1 + $0x1044] sm:$0xf]
    %v1334 = vld [vmem:[%s1 + $0x1048] sm:$0xf]
    %v1335 = vld [vmem:[%s1 + $0x104c] sm:$0xf]
    %v1336 = vld [vmem:[%s1 + $0x1050] sm:$0xf]
    %v1337 = vld [vmem:[%s1 + $0x1054] sm:$0xf]
    %v1338 = vld [vmem:[%s1 + $0x1058] sm:$0xf]
    %v1339 = vld [vmem:[%s1 + $0x105c] sm:$0xf]
    %v1340 = vld [vmem:[%s1 + $0x1060] sm:$0xf]
    %v1341 = vld [vmem:[%s1 + $0x1064] sm:$0xf]
    %v1342 = vld [vmem:[%s1 + $0x1068] sm:$0xf]
    %v1343 = vld [vmem:[%s1 + $0x106c] sm:$0xf]
    %v1344 = vld [vmem:[%s1 + $0x1070] sm:$0xf]
    %v1345 = vld [vmem:[%s1 + $0x1074] sm:$0xf]
    %v1346 = vld [vmem:[%s1 + $0x1078] sm:$0xf]
    %v1347 = vld [vmem:[%s1 + $0x107c] sm:$0xf]
    %v1348 = vld [vmem:[%s1 + $0x1080] sm:$0xf]
    %v1349 = vld [vmem:[%s1 + $0x1084] sm:$0xf]
    %v1350 = vld [vmem:[%s1 + $0x1088] sm:$0xf]
    %v1351 = vld [vmem:[%s1 + $0x108c] sm:$0xf]
    %v1352 = vld [vmem:[%s1 + $0x1090] sm:$0xf]
    %v1353 = vld [vmem:[%s1 + $0x1094] sm:$0xf]
    %v1354 = vld [vmem:[%s1 + $0x1098] sm:$0xf]
    %v1355 = vld [vmem:[%s1 + $0x109c] sm:$0xf]
    %v1356 = vld [vmem:[%s1 + $0x10a0] sm:$0xf]
    %v1357 = vld [vmem:[%s1 + $0x10a4] sm:$0xf]
    %v1358 = vld [vmem:[%s1 + $0x10a8] sm:$0xf]
    %v1359 = vld [vmem:[%s1 + $0x10ac] sm:$0xf]
    %v1360 = vld [vmem:[%s1 + $0x10b0] sm:$0xf]
    %v1361 = vld [vmem:[%s1 + $0x10b4] sm:$0xf]
    %v1362 = vld [vmem:[%s1 + $0x10b8] sm:$0xf]
    %v1363 = vld [vmem:[%s1 + $0x10bc] sm:$0xf]
    %v1364 = vld [vmem:[%s1 + $0x10c0] sm:$0xf]
    %v1365 = vld [vmem:[%s1 + $0x10c4] sm:$0xf]
    %v1366 = vld [vmem:[%s1 + $0x10c8] sm:$0xf]
    %v1367 = vld [vmem:[%s1 + $0x10cc] sm:$0xf]
    %v1368 = vld [vmem:[%s1 + $0x10d0] sm:$0xf]
    %v1369 = vld [vmem:[%s1 + $0x10d4] sm:$0xf]
    %v1370 = vld [vmem:[%s1 + $0x10d8] sm:$0xf]
    %v1371 = vld [vmem:[%s1 + $0x10dc] sm:$0xf]
    %v1372 = vld [vmem:[%s1 + $0x10e0] sm:$0xf]
    %v1373 = vld [vmem:[%s1 + $0x10e4] sm:$0xf]
    %v1374 = vld [vmem:[%s1 + $0x10e8] sm:$0xf]
    %v1375 = vld [vmem:[%s1 + $0x10ec] sm:$0xf]
    %v1376 = vld [vmem:[%s1 + $0x10f0] sm:$0xf]
    %v1377 = vld [vmem:[%s1 + $0x10f4] sm:$0xf]
    %v1378 = vld [vmem:[%s1 + $0x10f8] sm:$0xf]
    %v1379 = vld [vmem:[%s1 + $0x10fc] sm:$0xf]
    %v1380 = vld [vmem:[%s1 + $0x1100] sm:$0xf]
    %v1381 = vld [vmem:[%s1 + $0x1104] sm:$0xf]
    %v1382 = vld [vmem:[%s1 + $0x1108] sm:$0xf]
    %v1383 = vld [vmem:[%s1 + $0x110c] sm:$0xf]
    %v1384 = vld [vmem:[%s1 + $0x1110] sm:$0xf]
    %v1385 = vld [vmem:[%s1 + $0x1114] sm:$0xf]
    %v1386 = vld [vmem:[%s1 + $0x1118] sm:$0xf]
    %v1387 = vld [vmem:[%s1 + $0x111c] sm:$0xf]
    %v1388 = vld [vmem:[%s1 + $0x1120] sm:$0xf]
    %v1389 = vld [vmem:[%s1 + $0x1124] sm:$0xf]
    %v1390 = vld [vmem:[%s1 + $0x1128] sm:$0xf]
    %v1391 = vld [vmem:[%s1 + $0x112c] sm:$0xf]
    %v1392 = vld [vmem:[%s1 + $0x1130] sm:$0xf]
    %v1393 = vld [vmem:[%s1 + $0x1134] sm:$0xf]
    %v1394 = vld [vmem:[%s1 + $0x1138] sm:$0xf]
    %v1395 = vld [vmem:[%s1 + $0x113c] sm:$0xf]
    %v1396 = vld [vmem:[%s1 + $0x1140] sm:$0xf]
    %v1397 = vld [vmem:[%s1 + $0x1144] sm:$0xf]
    %v1398 = vld [vmem:[%s1 + $0x1148] sm:$0xf]
    %v1399 = vld [vmem:[%s1 + $0x114c] sm:$0xf]
    %v1400 = vld [vmem:[%s1 + $0x1150] sm:$0xf]
    %v1401 = vld [vmem:[%s1 + $0x1154] sm:$0xf]
    %v1402 = vld [vmem:[%s1 + $0x1158] sm:$0xf]
    %v1403 = vld [vmem:[%s1 + $0x115c] sm:$0xf]
    %v1404 = vld [vmem:[%s1 + $0x1160] sm:$0xf]
    %v1405 = vld [vmem:[%s1 + $0x1164] sm:$0xf]
    %v1406 = vld [vmem:[%s1 + $0x1168] sm:$0xf]
    %v1407 = vld [vmem:[%s1 + $0x116c] sm:$0xf]
    %v1408 = vld [vmem:[%s1 + $0x1170] sm:$0xf]
    %v1409 = vld [vmem:[%s1 + $0x1174] sm:$0xf]
    %v1410 = vld [vmem:[%s1 + $0x1178] sm:$0xf]
    %v1411 = vld [vmem:[%s1 + $0x117c] sm:$0xf]
    %v1412 = vld [vmem:[%s1 + $0x1180] sm:$0xf]
    %v1413 = vld [vmem:[%s1 + $0x1184] sm:$0xf]
    %v1414 = vld [vmem:[%s1 + $0x1188] sm:$0xf]
    %v1415 = vld [vmem:[%s1 + $0x118c] sm:$0xf]
    %v1416 = vld [vmem:[%s1 + $0x1190] sm:$0xf]
    %v1417 = vld [vmem:[%s1 + $0x1194] sm:$0xf]
    %v1418 = vld [vmem:[%s1 + $0x1198] sm:$0xf]
    %v1419 = vld [vmem:[%s1 + $0x119c] sm:$0xf]
    %v1420 = vld [vmem:[%s1 + $0x11a0] sm:$0xf]
    %v1421 = vld [vmem:[%s1 + $0x11a4] sm:$0xf]
    %v1422 = vld [vmem:[%s1 + $0x11a8] sm:$0xf]
    %v1423 = vld [vmem:[%s1 + $0x11ac] sm:$0xf]
    %v1424 = vld [vmem:[%s1 + $0x11b0] sm:$0xf]
    %v1425 = vld [vmem:[%s1 + $0x11b4] sm:$0xf]
    %v1426 = vld [vmem:[%s1 + $0x11b8] sm:$0xf]
    %v1427 = vld [vmem:[%s1 + $0x11bc] sm:$0xf]
    %v1428 = vld [vmem:[%s1 + $0x11c0] sm:$0xf]
    %v1429 = vld [vmem:[%s1 + $0x11c4] sm:$0xf]
    %v1430 = vld [vmem:[%s1 + $0x11c8] sm:$0xf]
    %v1431 = vld [vmem:[%s1 + $0x11cc] sm:$0xf]
    %v1432 = vld [vmem:[%s1 + $0x11d0] sm:$0xf]
    %v1433 = vld [vmem:[%s1 + $0x11d4] sm:$0xf]
    %v1434 = vld [vmem:[%s1 + $0x11d8] sm:$0xf]
    %v1435 = vld [vmem:[%s1 + $0x11dc] sm:$0xf]
    %v1436 = vld [vmem:[%s1 + $0x11e0] sm:$0xf]
    %v1437 = vld [vmem:[%s1 + $0x11e4] sm:$0xf]
    %v1438 = vld [vmem:[%s1 + $0x11e8] sm:$0xf]
    %v1439 = vld [vmem:[%s1 + $0x11ec] sm:$0xf]
    %v1440 = vld [vmem:[%s1 + $0x11f0] sm:$0xf]
    %v1441 = vld [vmem:[%s1 + $0x11f4] sm:$0xf]
    %v1442 = vld [vmem:[%s1 + $0x11f8] sm:$0xf]
    %v1443 = vld [vmem:[%s1 + $0x11fc] sm:$0xf]
    %v1444 = vld [vmem:[%s2] sm:$0x1]
    %v1446 = vperm.slane %v1444, 0
    %v2600 = vunpack.c.l.b16 %v292
    %v2601 = vunpack.c.l.b16 %v293
    %v2602 = vunpack.c.l.b16 %v294
    %v2603 = vunpack.c.l.b16 %v295
    %v2604 = vunpack.c.l.b16 %v296
    %v2605 = vunpack.c.l.b16 %v297
    %v2606 = vunpack.c.l.b16 %v298
    %v2607 = vunpack.c.l.b16 %v299
    %v2608 = vunpack.c.l.b16 %v300
    %v2609 = vunpack.c.l.b16 %v301
    %v2610 = vunpack.c.l.b16 %v302
    %v2611 = vunpack.c.l.b16 %v303
    %v2612 = vunpack.c.l.b16 %v304
    %v2613 = vunpack.c.l.b16 %v305
    %v2614 = vunpack.c.l.b16 %v306
    %v2615 = vunpack.c.l.b16 %v307
    %v2616 = vunpack.c.l.b16 %v308
    %v2617 = vunpack.c.l.b16 %v309
    %v2618 = vunpack.c.l.b16 %v310
    %v2619 = vunpack.c.l.b16 %v311
    %v2620 = vunpack.c.l.b16 %v312
    %v2621 = vunpack.c.l.b16 %v313
    %v2622 = vunpack.c.l.b16 %v314
    %v2623 = vunpack.c.l.b16 %v315
    %v2624 = vunpack.c.l.b16 %v316
    %v2625 = vunpack.c.l.b16 %v317
    %v2626 = vunpack.c.l.b16 %v318
    %v2627 = vunpack.c.l.b16 %v319
    %v2628 = vunpack.c.l.b16 %v320
    %v2629 = vunpack.c.l.b16 %v321
    %v2630 = vunpack.c.l.b16 %v322
    %v2631 = vunpack.c.l.b16 %v323
    %v2632 = vunpack.c.l.b16 %v324
    %v2633 = vunpack.c.l.b16 %v325
    %v2634 = vunpack.c.l.b16 %v326
    %v2635 = vunpack.c.l.b16 %v327
    %v2636 = vunpack.c.l.b16 %v328
    %v2637 = vunpack.c.l.b16 %v329
    %v2638 = vunpack.c.l.b16 %v330
    %v2639 = vunpack.c.l.b16 %v331
    %v2640 = vunpack.c.l.b16 %v332
    %v2641 = vunpack.c.l.b16 %v333
    %v2642 = vunpack.c.l.b16 %v334
    %v2643 = vunpack.c.l.b16 %v335
    %v2644 = vunpack.c.l.b16 %v336
    %v2645 = vunpack.c.l.b16 %v337
    %v2646 = vunpack.c.l.b16 %v338
    %v2647 = vunpack.c.l.b16 %v339
    %v2648 = vunpack.c.l.b16 %v340
    %v2649 = vunpack.c.l.b16 %v341
    %v2650 = vunpack.c.l.b16 %v342
    %v2651 = vunpack.c.l.b16 %v343
    %v2652 = vunpack.c.l.b16 %v344
    %v2653 = vunpack.c.l.b16 %v345
    %v2654 = vunpack.c.l.b16 %v346
    %v2655 = vunpack.c.l.b16 %v347
    %v2656 = vunpack.c.l.b16 %v348
    %v2657 = vunpack.c.l.b16 %v349
    %v2658 = vunpack.c.l.b16 %v350
    %v2659 = vunpack.c.l.b16 %v351
    %v2660 = vunpack.c.l.b16 %v352
    %v2661 = vunpack.c.l.b16 %v353
    %v2662 = vunpack.c.l.b16 %v354
    %v2663 = vunpack.c.l.b16 %v355
    %v2664 = vunpack.c.l.b16 %v356
    %v2665 = vunpack.c.l.b16 %v357
    %v2666 = vunpack.c.l.b16 %v358
    %v2667 = vunpack.c.l.b16 %v359
    %v2668 = vunpack.c.l.b16 %v360
    %v2669 = vunpack.c.l.b16 %v361
    %v2670 = vunpack.c.l.b16 %v362
    %v2671 = vunpack.c.l.b16 %v363
    %v2672 = vunpack.c.l.b16 %v364
    %v2673 = vunpack.c.l.b16 %v365
    %v2674 = vunpack.c.l.b16 %v366
    %v2675 = vunpack.c.l.b16 %v367
    %v2676 = vunpack.c.l.b16 %v368
    %v2677 = vunpack.c.l.b16 %v369
    %v2678 = vunpack.c.l.b16 %v370
    %v2679 = vunpack.c.l.b16 %v371
    %v2680 = vunpack.c.l.b16 %v372
    %v2681 = vunpack.c.l.b16 %v373
    %v2682 = vunpack.c.l.b16 %v374
    %v2683 = vunpack.c.l.b16 %v375
    %v2684 = vunpack.c.l.b16 %v376
    %v2685 = vunpack.c.l.b16 %v377
    %v2686 = vunpack.c.l.b16 %v378
    %v2687 = vunpack.c.l.b16 %v379
    %v2688 = vunpack.c.l.b16 %v380
    %v2689 = vunpack.c.l.b16 %v381
    %v2690 = vunpack.c.l.b16 %v382
    %v2691 = vunpack.c.l.b16 %v383
    %v2692 = vunpack.c.l.b16 %v384
    %v2693 = vunpack.c.l.b16 %v385
    %v2694 = vunpack.c.l.b16 %v386
    %v2695 = vunpack.c.l.b16 %v387
    %v2696 = vunpack.c.l.b16 %v388
    %v2697 = vunpack.c.l.b16 %v389
    %v2698 = vunpack.c.l.b16 %v390
    %v2699 = vunpack.c.l.b16 %v391
    %v2700 = vunpack.c.l.b16 %v392
    %v2701 = vunpack.c.l.b16 %v393
    %v2702 = vunpack.c.l.b16 %v394
    %v2703 = vunpack.c.l.b16 %v395
    %v2704 = vunpack.c.l.b16 %v396
    %v2705 = vunpack.c.l.b16 %v397
    %v2706 = vunpack.c.l.b16 %v398
    %v2707 = vunpack.c.l.b16 %v399
    %v2708 = vunpack.c.l.b16 %v400
    %v2709 = vunpack.c.l.b16 %v401
    %v2710 = vunpack.c.l.b16 %v402
    %v2711 = vunpack.c.l.b16 %v403
    %v2712 = vunpack.c.l.b16 %v404
    %v2713 = vunpack.c.l.b16 %v405
    %v2714 = vunpack.c.l.b16 %v406
    %v2715 = vunpack.c.l.b16 %v407
    %v2716 = vunpack.c.l.b16 %v408
    %v2717 = vunpack.c.l.b16 %v409
    %v2718 = vunpack.c.l.b16 %v410
    %v2719 = vunpack.c.l.b16 %v411
    %v2720 = vunpack.c.l.b16 %v412
    %v2721 = vunpack.c.l.b16 %v413
    %v2722 = vunpack.c.l.b16 %v414
    %v2723 = vunpack.c.l.b16 %v415
    %v2724 = vunpack.c.l.b16 %v416
    %v2725 = vunpack.c.l.b16 %v417
    %v2726 = vunpack.c.l.b16 %v418
    %v2727 = vunpack.c.l.b16 %v419
    %v2728 = vunpack.c.l.b16 %v420
    %v2729 = vunpack.c.l.b16 %v421
    %v2730 = vunpack.c.l.b16 %v422
    %v2731 = vunpack.c.l.b16 %v423
    %v2732 = vunpack.c.l.b16 %v424
    %v2733 = vunpack.c.l.b16 %v425
    %v2734 = vunpack.c.l.b16 %v426
    %v2735 = vunpack.c.l.b16 %v427
    %v2736 = vunpack.c.l.b16 %v428
    %v2737 = vunpack.c.l.b16 %v429
    %v2738 = vunpack.c.l.b16 %v430
    %v2739 = vunpack.c.l.b16 %v431
    %v2740 = vunpack.c.l.b16 %v432
    %v2741 = vunpack.c.l.b16 %v433
    %v2742 = vunpack.c.l.b16 %v434
    %v2743 = vunpack.c.l.b16 %v435
    %v2744 = vunpack.c.l.b16 %v436
    %v2745 = vunpack.c.l.b16 %v437
    %v2746 = vunpack.c.l.b16 %v438
    %v2747 = vunpack.c.l.b16 %v439
    %v2748 = vunpack.c.l.b16 %v440
    %v2749 = vunpack.c.l.b16 %v441
    %v2750 = vunpack.c.l.b16 %v442
    %v2751 = vunpack.c.l.b16 %v443
    %v2752 = vunpack.c.l.b16 %v444
    %v2753 = vunpack.c.l.b16 %v445
    %v2754 = vunpack.c.l.b16 %v446
    %v2755 = vunpack.c.l.b16 %v447
    %v2756 = vunpack.c.l.b16 %v448
    %v2757 = vunpack.c.l.b16 %v449
    %v2758 = vunpack.c.l.b16 %v450
    %v2759 = vunpack.c.l.b16 %v451
    %v2760 = vunpack.c.l.b16 %v452
    %v2761 = vunpack.c.l.b16 %v453
    %v2762 = vunpack.c.l.b16 %v454
    %v2763 = vunpack.c.l.b16 %v455
    %v2764 = vunpack.c.l.b16 %v456
    %v2765 = vunpack.c.l.b16 %v457
    %v2766 = vunpack.c.l.b16 %v458
    %v2767 = vunpack.c.l.b16 %v459
    %v2768 = vunpack.c.l.b16 %v460
    %v2769 = vunpack.c.l.b16 %v461
    %v2770 = vunpack.c.l.b16 %v462
    %v2771 = vunpack.c.l.b16 %v463
    %v2772 = vunpack.c.l.b16 %v464
    %v2773 = vunpack.c.l.b16 %v465
    %v2774 = vunpack.c.l.b16 %v466
    %v2775 = vunpack.c.l.b16 %v467
    %v2776 = vunpack.c.l.b16 %v468
    %v2777 = vunpack.c.l.b16 %v469
    %v2778 = vunpack.c.l.b16 %v470
    %v2779 = vunpack.c.l.b16 %v471
    %v2780 = vunpack.c.l.b16 %v472
    %v2781 = vunpack.c.l.b16 %v473
    %v2782 = vunpack.c.l.b16 %v474
    %v2783 = vunpack.c.l.b16 %v475
    %v2784 = vunpack.c.l.b16 %v476
    %v2785 = vunpack.c.l.b16 %v477
    %v2786 = vunpack.c.l.b16 %v478
    %v2787 = vunpack.c.l.b16 %v479
    %v2788 = vunpack.c.l.b16 %v480
    %v2789 = vunpack.c.l.b16 %v481
    %v2790 = vunpack.c.l.b16 %v482
    %v2791 = vunpack.c.l.b16 %v483
    %v2792 = vunpack.c.l.b16 %v484
    %v2793 = vunpack.c.l.b16 %v485
    %v2794 = vunpack.c.l.b16 %v486
    %v2795 = vunpack.c.l.b16 %v487
    %v2796 = vunpack.c.l.b16 %v488
    %v2797 = vunpack.c.l.b16 %v489
    %v2798 = vunpack.c.l.b16 %v490
    %v2799 = vunpack.c.l.b16 %v491
    %v2800 = vunpack.c.l.b16 %v492
    %v2801 = vunpack.c.l.b16 %v493
    %v2802 = vunpack.c.l.b16 %v494
    %v2803 = vunpack.c.l.b16 %v495
    %v2804 = vunpack.c.l.b16 %v496
    %v2805 = vunpack.c.l.b16 %v497
    %v2806 = vunpack.c.l.b16 %v498
    %v2807 = vunpack.c.l.b16 %v499
    %v2808 = vunpack.c.l.b16 %v500
    %v2809 = vunpack.c.l.b16 %v501
    %v2810 = vunpack.c.l.b16 %v502
    %v2811 = vunpack.c.l.b16 %v503
    %v2812 = vunpack.c.l.b16 %v504
    %v2813 = vunpack.c.l.b16 %v505
    %v2814 = vunpack.c.l.b16 %v506
    %v2815 = vunpack.c.l.b16 %v507
    %v2816 = vunpack.c.l.b16 %v508
    %v2817 = vunpack.c.l.b16 %v509
    %v2818 = vunpack.c.l.b16 %v510
    %v2819 = vunpack.c.l.b16 %v511
    %v2820 = vunpack.c.l.b16 %v512
    %v2821 = vunpack.c.l.b16 %v513
    %v2822 = vunpack.c.l.b16 %v514
    %v2823 = vunpack.c.l.b16 %v515
    %v2824 = vunpack.c.l.b16 %v516
    %v2825 = vunpack.c.l.b16 %v517
    %v2826 = vunpack.c.l.b16 %v518
    %v2827 = vunpack.c.l.b16 %v519
    %v2828 = vunpack.c.l.b16 %v520
    %v2829 = vunpack.c.l.b16 %v521
    %v2830 = vunpack.c.l.b16 %v522
    %v2831 = vunpack.c.l.b16 %v523
    %v2832 = vunpack.c.l.b16 %v524
    %v2833 = vunpack.c.l.b16 %v525
    %v2834 = vunpack.c.l.b16 %v526
    %v2835 = vunpack.c.l.b16 %v527
    %v2836 = vunpack.c.l.b16 %v528
    %v2837 = vunpack.c.l.b16 %v529
    %v2838 = vunpack.c.l.b16 %v530
    %v2839 = vunpack.c.l.b16 %v531
    %v2840 = vunpack.c.l.b16 %v532
    %v2841 = vunpack.c.l.b16 %v533
    %v2842 = vunpack.c.l.b16 %v534
    %v2843 = vunpack.c.l.b16 %v535
    %v2844 = vunpack.c.l.b16 %v536
    %v2845 = vunpack.c.l.b16 %v537
    %v2846 = vunpack.c.l.b16 %v538
    %v2847 = vunpack.c.l.b16 %v539
    %v2848 = vunpack.c.l.b16 %v540
    %v2849 = vunpack.c.l.b16 %v541
    %v2850 = vunpack.c.l.b16 %v542
    %v2851 = vunpack.c.l.b16 %v543
    %v2852 = vunpack.c.l.b16 %v544
    %v2853 = vunpack.c.l.b16 %v545
    %v2854 = vunpack.c.l.b16 %v546
    %v2855 = vunpack.c.l.b16 %v547
    %v2856 = vunpack.c.l.b16 %v548
    %v2857 = vunpack.c.l.b16 %v549
    %v2858 = vunpack.c.l.b16 %v550
    %v2859 = vunpack.c.l.b16 %v551
    %v2860 = vunpack.c.l.b16 %v552
    %v2861 = vunpack.c.l.b16 %v553
    %v2862 = vunpack.c.l.b16 %v554
    %v2863 = vunpack.c.l.b16 %v555
    %v2864 = vunpack.c.l.b16 %v556
    %v2865 = vunpack.c.l.b16 %v557
    %v2866 = vunpack.c.l.b16 %v558
    %v2867 = vunpack.c.l.b16 %v559
    %v2868 = vunpack.c.l.b16 %v560
    %v2869 = vunpack.c.l.b16 %v561
    %v2870 = vunpack.c.l.b16 %v562
    %v2871 = vunpack.c.l.b16 %v563
    %v2872 = vunpack.c.l.b16 %v564
    %v2873 = vunpack.c.l.b16 %v565
    %v2874 = vunpack.c.l.b16 %v566
    %v2875 = vunpack.c.l.b16 %v567
    %v2876 = vunpack.c.l.b16 %v568
    %v2877 = vunpack.c.l.b16 %v569
    %v2878 = vunpack.c.l.b16 %v570
    %v2879 = vunpack.c.l.b16 %v571
    %v2880 = vunpack.c.l.b16 %v572
    %v2881 = vunpack.c.l.b16 %v573
    %v2882 = vunpack.c.l.b16 %v574
    %v2883 = vunpack.c.l.b16 %v575
    %v2884 = vunpack.c.l.b16 %v576
    %v2885 = vunpack.c.l.b16 %v577
    %v2886 = vunpack.c.l.b16 %v578
    %v2887 = vunpack.c.l.b16 %v579
    %v2888 = vunpack.c.l.b16 %v580
    %v2889 = vunpack.c.l.b16 %v581
    %v2890 = vunpack.c.l.b16 %v582
    %v2891 = vunpack.c.l.b16 %v583
    %v2892 = vunpack.c.l.b16 %v584
    %v2893 = vunpack.c.l.b16 %v585
    %v2894 = vunpack.c.l.b16 %v586
    %v2895 = vunpack.c.l.b16 %v587
    %v2896 = vunpack.c.l.b16 %v588
    %v2897 = vunpack.c.l.b16 %v589
    %v2898 = vunpack.c.l.b16 %v590
    %v2899 = vunpack.c.l.b16 %v591
    %v2900 = vunpack.c.l.b16 %v592
    %v2901 = vunpack.c.l.b16 %v593
    %v2902 = vunpack.c.l.b16 %v594
    %v2903 = vunpack.c.l.b16 %v595
    %v2904 = vunpack.c.l.b16 %v596
    %v2905 = vunpack.c.l.b16 %v597
    %v2906 = vunpack.c.l.b16 %v598
    %v2907 = vunpack.c.l.b16 %v599
    %v2908 = vunpack.c.l.b16 %v600
    %v2909 = vunpack.c.l.b16 %v601
    %v2910 = vunpack.c.l.b16 %v602
    %v2911 = vunpack.c.l.b16 %v603
    %v2912 = vunpack.c.l.b16 %v604
    %v2913 = vunpack.c.l.b16 %v605
    %v2914 = vunpack.c.l.b16 %v606
    %v2915 = vunpack.c.l.b16 %v607
    %v2916 = vunpack.c.l.b16 %v608
    %v2917 = vunpack.c.l.b16 %v609
    %v2918 = vunpack.c.l.b16 %v610
    %v2919 = vunpack.c.l.b16 %v611
    %v2920 = vunpack.c.l.b16 %v612
    %v2921 = vunpack.c.l.b16 %v613
    %v2922 = vunpack.c.l.b16 %v614
    %v2923 = vunpack.c.l.b16 %v615
    %v2924 = vunpack.c.l.b16 %v616
    %v2925 = vunpack.c.l.b16 %v617
    %v2926 = vunpack.c.l.b16 %v618
    %v2927 = vunpack.c.l.b16 %v619
    %v2928 = vunpack.c.l.b16 %v620
    %v2929 = vunpack.c.l.b16 %v621
    %v2930 = vunpack.c.l.b16 %v622
    %v2931 = vunpack.c.l.b16 %v623
    %v2932 = vunpack.c.l.b16 %v624
    %v2933 = vunpack.c.l.b16 %v625
    %v2934 = vunpack.c.l.b16 %v626
    %v2935 = vunpack.c.l.b16 %v627
    %v2936 = vunpack.c.l.b16 %v628
    %v2937 = vunpack.c.l.b16 %v629
    %v2938 = vunpack.c.l.b16 %v630
    %v2939 = vunpack.c.l.b16 %v631
    %v2940 = vunpack.c.l.b16 %v632
    %v2941 = vunpack.c.l.b16 %v633
    %v2942 = vunpack.c.l.b16 %v634
    %v2943 = vunpack.c.l.b16 %v635
    %v2944 = vunpack.c.l.b16 %v636
    %v2945 = vunpack.c.l.b16 %v637
    %v2946 = vunpack.c.l.b16 %v638
    %v2947 = vunpack.c.l.b16 %v639
    %v2948 = vunpack.c.l.b16 %v640
    %v2949 = vunpack.c.l.b16 %v641
    %v2950 = vunpack.c.l.b16 %v642
    %v2951 = vunpack.c.l.b16 %v643
    %v2952 = vunpack.c.l.b16 %v644
    %v2953 = vunpack.c.l.b16 %v645
    %v2954 = vunpack.c.l.b16 %v646
    %v2955 = vunpack.c.l.b16 %v647
    %v2956 = vunpack.c.l.b16 %v648
    %v2957 = vunpack.c.l.b16 %v649
    %v2958 = vunpack.c.l.b16 %v650
    %v2959 = vunpack.c.l.b16 %v651
    %v2960 = vunpack.c.l.b16 %v652
    %v2961 = vunpack.c.l.b16 %v653
    %v2962 = vunpack.c.l.b16 %v654
    %v2963 = vunpack.c.l.b16 %v655
    %v2964 = vunpack.c.l.b16 %v656
    %v2965 = vunpack.c.l.b16 %v657
    %v2966 = vunpack.c.l.b16 %v658
    %v2967 = vunpack.c.l.b16 %v659
    %v2968 = vunpack.c.l.b16 %v660
    %v2969 = vunpack.c.l.b16 %v661
    %v2970 = vunpack.c.l.b16 %v662
    %v2971 = vunpack.c.l.b16 %v663
    %v2972 = vunpack.c.l.b16 %v664
    %v2973 = vunpack.c.l.b16 %v665
    %v2974 = vunpack.c.l.b16 %v666
    %v2975 = vunpack.c.l.b16 %v667
    %v2976 = vunpack.c.l.b16 %v668
    %v2977 = vunpack.c.l.b16 %v669
    %v2978 = vunpack.c.l.b16 %v670
    %v2979 = vunpack.c.l.b16 %v671
    %v2980 = vunpack.c.l.b16 %v672
    %v2981 = vunpack.c.l.b16 %v673
    %v2982 = vunpack.c.l.b16 %v674
    %v2983 = vunpack.c.l.b16 %v675
    %v2984 = vunpack.c.l.b16 %v676
    %v2985 = vunpack.c.l.b16 %v677
    %v2986 = vunpack.c.l.b16 %v678
    %v2987 = vunpack.c.l.b16 %v679
    %v2988 = vunpack.c.l.b16 %v680
    %v2989 = vunpack.c.l.b16 %v681
    %v2990 = vunpack.c.l.b16 %v682
    %v2991 = vunpack.c.l.b16 %v683
    %v2992 = vunpack.c.l.b16 %v684
    %v2993 = vunpack.c.l.b16 %v685
    %v2994 = vunpack.c.l.b16 %v686
    %v2995 = vunpack.c.l.b16 %v687
    %v2996 = vunpack.c.l.b16 %v688
    %v2997 = vunpack.c.l.b16 %v689
    %v2998 = vunpack.c.l.b16 %v690
    %v2999 = vunpack.c.l.b16 %v691
    %v3000 = vunpack.c.l.b16 %v692
    %v3001 = vunpack.c.l.b16 %v693
    %v3002 = vunpack.c.l.b16 %v694
    %v3003 = vunpack.c.l.b16 %v695
    %v3004 = vunpack.c.l.b16 %v696
    %v3005 = vunpack.c.l.b16 %v697
    %v3006 = vunpack.c.l.b16 %v698
    %v3007 = vunpack.c.l.b16 %v699
    %v3008 = vunpack.c.l.b16 %v700
    %v3009 = vunpack.c.l.b16 %v701
    %v3010 = vunpack.c.l.b16 %v702
    %v3011 = vunpack.c.l.b16 %v703
    %v3012 = vunpack.c.l.b16 %v704
    %v3013 = vunpack.c.l.b16 %v705
    %v3014 = vunpack.c.l.b16 %v706
    %v3015 = vunpack.c.l.b16 %v707
    %v3016 = vunpack.c.l.b16 %v708
    %v3017 = vunpack.c.l.b16 %v709
    %v3018 = vunpack.c.l.b16 %v710
    %v3019 = vunpack.c.l.b16 %v711
    %v3020 = vunpack.c.l.b16 %v712
    %v3021 = vunpack.c.l.b16 %v713
    %v3022 = vunpack.c.l.b16 %v714
    %v3023 = vunpack.c.l.b16 %v715
    %v3024 = vunpack.c.l.b16 %v716
    %v3025 = vunpack.c.l.b16 %v717
    %v3026 = vunpack.c.l.b16 %v718
    %v3027 = vunpack.c.l.b16 %v719
    %v3028 = vunpack.c.l.b16 %v720
    %v3029 = vunpack.c.l.b16 %v721
    %v3030 = vunpack.c.l.b16 %v722
    %v3031 = vunpack.c.l.b16 %v723
    %v3032 = vunpack.c.l.b16 %v724
    %v3033 = vunpack.c.l.b16 %v725
    %v3034 = vunpack.c.l.b16 %v726
    %v3035 = vunpack.c.l.b16 %v727
    %v3036 = vunpack.c.l.b16 %v728
    %v3037 = vunpack.c.l.b16 %v729
    %v3038 = vunpack.c.l.b16 %v730
    %v3039 = vunpack.c.l.b16 %v731
    %v3040 = vunpack.c.l.b16 %v732
    %v3041 = vunpack.c.l.b16 %v733
    %v3042 = vunpack.c.l.b16 %v734
    %v3043 = vunpack.c.l.b16 %v735
    %v3044 = vunpack.c.l.b16 %v736
    %v3045 = vunpack.c.l.b16 %v737
    %v3046 = vunpack.c.l.b16 %v738
    %v3047 = vunpack.c.l.b16 %v739
    %v3048 = vunpack.c.l.b16 %v740
    %v3049 = vunpack.c.l.b16 %v741
    %v3050 = vunpack.c.l.b16 %v742
    %v3051 = vunpack.c.l.b16 %v743
    %v3052 = vunpack.c.l.b16 %v744
    %v3053 = vunpack.c.l.b16 %v745
    %v3054 = vunpack.c.l.b16 %v746
    %v3055 = vunpack.c.l.b16 %v747
    %v3056 = vunpack.c.l.b16 %v748
    %v3057 = vunpack.c.l.b16 %v749
    %v3058 = vunpack.c.l.b16 %v750
    %v3059 = vunpack.c.l.b16 %v751
    %v3060 = vunpack.c.l.b16 %v752
    %v3061 = vunpack.c.l.b16 %v753
    %v3062 = vunpack.c.l.b16 %v754
    %v3063 = vunpack.c.l.b16 %v755
    %v3064 = vunpack.c.l.b16 %v756
    %v3065 = vunpack.c.l.b16 %v757
    %v3066 = vunpack.c.l.b16 %v758
    %v3067 = vunpack.c.l.b16 %v759
    %v3068 = vunpack.c.l.b16 %v760
    %v3069 = vunpack.c.l.b16 %v761
    %v3070 = vunpack.c.l.b16 %v762
    %v3071 = vunpack.c.l.b16 %v763
    %v3072 = vunpack.c.l.b16 %v764
    %v3073 = vunpack.c.l.b16 %v765
    %v3074 = vunpack.c.l.b16 %v766
    %v3075 = vunpack.c.l.b16 %v767
    %v3076 = vunpack.c.l.b16 %v768
    %v3077 = vunpack.c.l.b16 %v769
    %v3078 = vunpack.c.l.b16 %v770
    %v3079 = vunpack.c.l.b16 %v771
    %v3080 = vunpack.c.l.b16 %v772
    %v3081 = vunpack.c.l.b16 %v773
    %v3082 = vunpack.c.l.b16 %v774
    %v3083 = vunpack.c.l.b16 %v775
    %v3084 = vunpack.c.l.b16 %v776
    %v3085 = vunpack.c.l.b16 %v777
    %v3086 = vunpack.c.l.b16 %v778
    %v3087 = vunpack.c.l.b16 %v779
    %v3088 = vunpack.c.l.b16 %v780
    %v3089 = vunpack.c.l.b16 %v781
    %v3090 = vunpack.c.l.b16 %v782
    %v3091 = vunpack.c.l.b16 %v783
    %v3092 = vunpack.c.l.b16 %v784
    %v3093 = vunpack.c.l.b16 %v785
    %v3094 = vunpack.c.l.b16 %v786
    %v3095 = vunpack.c.l.b16 %v787
    %v3096 = vunpack.c.l.b16 %v788
    %v3097 = vunpack.c.l.b16 %v789
    %v3098 = vunpack.c.l.b16 %v790
    %v3099 = vunpack.c.l.b16 %v791
    %v3100 = vunpack.c.l.b16 %v792
    %v3101 = vunpack.c.l.b16 %v793
    %v3102 = vunpack.c.l.b16 %v794
    %v3103 = vunpack.c.l.b16 %v795
    %v3104 = vunpack.c.l.b16 %v796
    %v3105 = vunpack.c.l.b16 %v797
    %v3106 = vunpack.c.l.b16 %v798
    %v3107 = vunpack.c.l.b16 %v799
    %v3108 = vunpack.c.l.b16 %v800
    %v3109 = vunpack.c.l.b16 %v801
    %v3110 = vunpack.c.l.b16 %v802
    %v3111 = vunpack.c.l.b16 %v803
    %v3112 = vunpack.c.l.b16 %v804
    %v3113 = vunpack.c.l.b16 %v805
    %v3114 = vunpack.c.l.b16 %v806
    %v3115 = vunpack.c.l.b16 %v807
    %v3116 = vunpack.c.l.b16 %v808
    %v3117 = vunpack.c.l.b16 %v809
    %v3118 = vunpack.c.l.b16 %v810
    %v3119 = vunpack.c.l.b16 %v811
    %v3120 = vunpack.c.l.b16 %v812
    %v3121 = vunpack.c.l.b16 %v813
    %v3122 = vunpack.c.l.b16 %v814
    %v3123 = vunpack.c.l.b16 %v815
    %v3124 = vunpack.c.l.b16 %v816
    %v3125 = vunpack.c.l.b16 %v817
    %v3126 = vunpack.c.l.b16 %v818
    %v3127 = vunpack.c.l.b16 %v819
    %v3128 = vunpack.c.l.b16 %v820
    %v3129 = vunpack.c.l.b16 %v821
    %v3130 = vunpack.c.l.b16 %v822
    %v3131 = vunpack.c.l.b16 %v823
    %v3132 = vunpack.c.l.b16 %v824
    %v3133 = vunpack.c.l.b16 %v825
    %v3134 = vunpack.c.l.b16 %v826
    %v3135 = vunpack.c.l.b16 %v827
    %v3136 = vunpack.c.l.b16 %v828
    %v3137 = vunpack.c.l.b16 %v829
    %v3138 = vunpack.c.l.b16 %v830
    %v3139 = vunpack.c.l.b16 %v831
    %v3140 = vunpack.c.l.b16 %v832
    %v3141 = vunpack.c.l.b16 %v833
    %v3142 = vunpack.c.l.b16 %v834
    %v3143 = vunpack.c.l.b16 %v835
    %v3144 = vunpack.c.l.b16 %v836
    %v3145 = vunpack.c.l.b16 %v837
    %v3146 = vunpack.c.l.b16 %v838
    %v3147 = vunpack.c.l.b16 %v839
    %v3148 = vunpack.c.l.b16 %v840
    %v3149 = vunpack.c.l.b16 %v841
    %v3150 = vunpack.c.l.b16 %v842
    %v3151 = vunpack.c.l.b16 %v843
    %v3152 = vunpack.c.l.b16 %v844
    %v3153 = vunpack.c.l.b16 %v845
    %v3154 = vunpack.c.l.b16 %v846
    %v3155 = vunpack.c.l.b16 %v847
    %v3156 = vunpack.c.l.b16 %v848
    %v3157 = vunpack.c.l.b16 %v849
    %v3158 = vunpack.c.l.b16 %v850
    %v3159 = vunpack.c.l.b16 %v851
    %v3160 = vunpack.c.l.b16 %v852
    %v3161 = vunpack.c.l.b16 %v853
    %v3162 = vunpack.c.l.b16 %v854
    %v3163 = vunpack.c.l.b16 %v855
    %v3164 = vunpack.c.l.b16 %v856
    %v3165 = vunpack.c.l.b16 %v857
    %v3166 = vunpack.c.l.b16 %v858
    %v3167 = vunpack.c.l.b16 %v859
    %v3168 = vunpack.c.l.b16 %v860
    %v3169 = vunpack.c.l.b16 %v861
    %v3170 = vunpack.c.l.b16 %v862
    %v3171 = vunpack.c.l.b16 %v863
    %v3172 = vunpack.c.l.b16 %v864
    %v3173 = vunpack.c.l.b16 %v865
    %v3174 = vunpack.c.l.b16 %v866
    %v3175 = vunpack.c.l.b16 %v867
    %v3176 = vunpack.c.l.b16 %v868
    %v3177 = vunpack.c.l.b16 %v869
    %v3178 = vunpack.c.l.b16 %v870
    %v3179 = vunpack.c.l.b16 %v871
    %v3180 = vunpack.c.l.b16 %v872
    %v3181 = vunpack.c.l.b16 %v873
    %v3182 = vunpack.c.l.b16 %v874
    %v3183 = vunpack.c.l.b16 %v875
    %v3184 = vunpack.c.l.b16 %v876
    %v3185 = vunpack.c.l.b16 %v877
    %v3186 = vunpack.c.l.b16 %v878
    %v3187 = vunpack.c.l.b16 %v879
    %v3188 = vunpack.c.l.b16 %v880
    %v3189 = vunpack.c.l.b16 %v881
    %v3190 = vunpack.c.l.b16 %v882
    %v3191 = vunpack.c.l.b16 %v883
    %v3192 = vunpack.c.l.b16 %v884
    %v3193 = vunpack.c.l.b16 %v885
    %v3194 = vunpack.c.l.b16 %v886
    %v3195 = vunpack.c.l.b16 %v887
    %v3196 = vunpack.c.l.b16 %v888
    %v3197 = vunpack.c.l.b16 %v889
    %v3198 = vunpack.c.l.b16 %v890
    %v3199 = vunpack.c.l.b16 %v891
    %v3200 = vunpack.c.l.b16 %v892
    %v3201 = vunpack.c.l.b16 %v893
    %v3202 = vunpack.c.l.b16 %v894
    %v3203 = vunpack.c.l.b16 %v895
    %v3204 = vunpack.c.l.b16 %v896
    %v3205 = vunpack.c.l.b16 %v897
    %v3206 = vunpack.c.l.b16 %v898
    %v3207 = vunpack.c.l.b16 %v899
    %v3208 = vunpack.c.l.b16 %v900
    %v3209 = vunpack.c.l.b16 %v901
    %v3210 = vunpack.c.l.b16 %v902
    %v3211 = vunpack.c.l.b16 %v903
    %v3212 = vunpack.c.l.b16 %v904
    %v3213 = vunpack.c.l.b16 %v905
    %v3214 = vunpack.c.l.b16 %v906
    %v3215 = vunpack.c.l.b16 %v907
    %v3216 = vunpack.c.l.b16 %v908
    %v3217 = vunpack.c.l.b16 %v909
    %v3218 = vunpack.c.l.b16 %v910
    %v3219 = vunpack.c.l.b16 %v911
    %v3220 = vunpack.c.l.b16 %v912
    %v3221 = vunpack.c.l.b16 %v913
    %v3222 = vunpack.c.l.b16 %v914
    %v3223 = vunpack.c.l.b16 %v915
    %v3224 = vunpack.c.l.b16 %v916
    %v3225 = vunpack.c.l.b16 %v917
    %v3226 = vunpack.c.l.b16 %v918
    %v3227 = vunpack.c.l.b16 %v919
    %v3228 = vunpack.c.l.b16 %v920
    %v3229 = vunpack.c.l.b16 %v921
    %v3230 = vunpack.c.l.b16 %v922
    %v3231 = vunpack.c.l.b16 %v923
    %v3232 = vunpack.c.l.b16 %v924
    %v3233 = vunpack.c.l.b16 %v925
    %v3234 = vunpack.c.l.b16 %v926
    %v3235 = vunpack.c.l.b16 %v927
    %v3236 = vunpack.c.l.b16 %v928
    %v3237 = vunpack.c.l.b16 %v929
    %v3238 = vunpack.c.l.b16 %v930
    %v3239 = vunpack.c.l.b16 %v931
    %v3240 = vunpack.c.l.b16 %v932
    %v3241 = vunpack.c.l.b16 %v933
    %v3242 = vunpack.c.l.b16 %v934
    %v3243 = vunpack.c.l.b16 %v935
    %v3244 = vunpack.c.l.b16 %v936
    %v3245 = vunpack.c.l.b16 %v937
    %v3246 = vunpack.c.l.b16 %v938
    %v3247 = vunpack.c.l.b16 %v939
    %v3248 = vunpack.c.l.b16 %v940
    %v3249 = vunpack.c.l.b16 %v941
    %v3250 = vunpack.c.l.b16 %v942
    %v3251 = vunpack.c.l.b16 %v943
    %v3252 = vunpack.c.l.b16 %v944
    %v3253 = vunpack.c.l.b16 %v945
    %v3254 = vunpack.c.l.b16 %v946
    %v3255 = vunpack.c.l.b16 %v947
    %v3256 = vunpack.c.l.b16 %v948
    %v3257 = vunpack.c.l.b16 %v949
    %v3258 = vunpack.c.l.b16 %v950
    %v3259 = vunpack.c.l.b16 %v951
    %v3260 = vunpack.c.l.b16 %v952
    %v3261 = vunpack.c.l.b16 %v953
    %v3262 = vunpack.c.l.b16 %v954
    %v3263 = vunpack.c.l.b16 %v955
    %v3264 = vunpack.c.l.b16 %v956
    %v3265 = vunpack.c.l.b16 %v957
    %v3266 = vunpack.c.l.b16 %v958
    %v3267 = vunpack.c.l.b16 %v959
    %v3268 = vunpack.c.l.b16 %v960
    %v3269 = vunpack.c.l.b16 %v961
    %v3270 = vunpack.c.l.b16 %v962
    %v3271 = vunpack.c.l.b16 %v963
    %v3272 = vunpack.c.l.b16 %v964
    %v3273 = vunpack.c.l.b16 %v965
    %v3274 = vunpack.c.l.b16 %v966
    %v3275 = vunpack.c.l.b16 %v967
    %v3276 = vunpack.c.l.b16 %v968
    %v3277 = vunpack.c.l.b16 %v969
    %v3278 = vunpack.c.l.b16 %v970
    %v3279 = vunpack.c.l.b16 %v971
    %v3280 = vunpack.c.l.b16 %v972
    %v3281 = vunpack.c.l.b16 %v973
    %v3282 = vunpack.c.l.b16 %v974
    %v3283 = vunpack.c.l.b16 %v975
    %v3284 = vunpack.c.l.b16 %v976
    %v3285 = vunpack.c.l.b16 %v977
    %v3286 = vunpack.c.l.b16 %v978
    %v3287 = vunpack.c.l.b16 %v979
    %v3288 = vunpack.c.l.b16 %v980
    %v3289 = vunpack.c.l.b16 %v981
    %v3290 = vunpack.c.l.b16 %v982
    %v3291 = vunpack.c.l.b16 %v983
    %v3292 = vunpack.c.l.b16 %v984
    %v3293 = vunpack.c.l.b16 %v985
    %v3294 = vunpack.c.l.b16 %v986
    %v3295 = vunpack.c.l.b16 %v987
    %v3296 = vunpack.c.l.b16 %v988
    %v3297 = vunpack.c.l.b16 %v989
    %v3298 = vunpack.c.l.b16 %v990
    %v3299 = vunpack.c.l.b16 %v991
    %v3300 = vunpack.c.l.b16 %v992
    %v3301 = vunpack.c.l.b16 %v993
    %v3302 = vunpack.c.l.b16 %v994
    %v3303 = vunpack.c.l.b16 %v995
    %v3304 = vunpack.c.l.b16 %v996
    %v3305 = vunpack.c.l.b16 %v997
    %v3306 = vunpack.c.l.b16 %v998
    %v3307 = vunpack.c.l.b16 %v999
    %v3308 = vunpack.c.l.b16 %v1000
    %v3309 = vunpack.c.l.b16 %v1001
    %v3310 = vunpack.c.l.b16 %v1002
    %v3311 = vunpack.c.l.b16 %v1003
    %v3312 = vunpack.c.l.b16 %v1004
    %v3313 = vunpack.c.l.b16 %v1005
    %v3314 = vunpack.c.l.b16 %v1006
    %v3315 = vunpack.c.l.b16 %v1007
    %v3316 = vunpack.c.l.b16 %v1008
    %v3317 = vunpack.c.l.b16 %v1009
    %v3318 = vunpack.c.l.b16 %v1010
    %v3319 = vunpack.c.l.b16 %v1011
    %v3320 = vunpack.c.l.b16 %v1012
    %v3321 = vunpack.c.l.b16 %v1013
    %v3322 = vunpack.c.l.b16 %v1014
    %v3323 = vunpack.c.l.b16 %v1015
    %v3324 = vunpack.c.l.b16 %v1016
    %v3325 = vunpack.c.l.b16 %v1017
    %v3326 = vunpack.c.l.b16 %v1018
    %v3327 = vunpack.c.l.b16 %v1019
    %v3328 = vunpack.c.l.b16 %v1020
    %v3329 = vunpack.c.l.b16 %v1021
    %v3330 = vunpack.c.l.b16 %v1022
    %v3331 = vunpack.c.l.b16 %v1023
    %v3332 = vunpack.c.l.b16 %v1024
    %v3333 = vunpack.c.l.b16 %v1025
    %v3334 = vunpack.c.l.b16 %v1026
    %v3335 = vunpack.c.l.b16 %v1027
    %v3336 = vunpack.c.l.b16 %v1028
    %v3337 = vunpack.c.l.b16 %v1029
    %v3338 = vunpack.c.l.b16 %v1030
    %v3339 = vunpack.c.l.b16 %v1031
    %v3340 = vunpack.c.l.b16 %v1032
    %v3341 = vunpack.c.l.b16 %v1033
    %v3342 = vunpack.c.l.b16 %v1034
    %v3343 = vunpack.c.l.b16 %v1035
    %v3344 = vunpack.c.l.b16 %v1036
    %v3345 = vunpack.c.l.b16 %v1037
    %v3346 = vunpack.c.l.b16 %v1038
    %v3347 = vunpack.c.l.b16 %v1039
    %v3348 = vunpack.c.l.b16 %v1040
    %v3349 = vunpack.c.l.b16 %v1041
    %v3350 = vunpack.c.l.b16 %v1042
    %v3351 = vunpack.c.l.b16 %v1043
    %v3352 = vunpack.c.l.b16 %v1044
    %v3353 = vunpack.c.l.b16 %v1045
    %v3354 = vunpack.c.l.b16 %v1046
    %v3355 = vunpack.c.l.b16 %v1047
    %v3356 = vunpack.c.l.b16 %v1048
    %v3357 = vunpack.c.l.b16 %v1049
    %v3358 = vunpack.c.l.b16 %v1050
    %v3359 = vunpack.c.l.b16 %v1051
    %v3360 = vunpack.c.l.b16 %v1052
    %v3361 = vunpack.c.l.b16 %v1053
    %v3362 = vunpack.c.l.b16 %v1054
    %v3363 = vunpack.c.l.b16 %v1055
    %v3364 = vunpack.c.l.b16 %v1056
    %v3365 = vunpack.c.l.b16 %v1057
    %v3366 = vunpack.c.l.b16 %v1058
    %v3367 = vunpack.c.l.b16 %v1059
    %v3368 = vunpack.c.l.b16 %v1060
    %v3369 = vunpack.c.l.b16 %v1061
    %v3370 = vunpack.c.l.b16 %v1062
    %v3371 = vunpack.c.l.b16 %v1063
    %v3372 = vunpack.c.l.b16 %v1064
    %v3373 = vunpack.c.l.b16 %v1065
    %v3374 = vunpack.c.l.b16 %v1066
    %v3375 = vunpack.c.l.b16 %v1067
    %v3376 = vunpack.c.l.b16 %v1068
    %v3377 = vunpack.c.l.b16 %v1069
    %v3378 = vunpack.c.l.b16 %v1070
    %v3379 = vunpack.c.l.b16 %v1071
    %v3380 = vunpack.c.l.b16 %v1072
    %v3381 = vunpack.c.l.b16 %v1073
    %v3382 = vunpack.c.l.b16 %v1074
    %v3383 = vunpack.c.l.b16 %v1075
    %v3384 = vunpack.c.l.b16 %v1076
    %v3385 = vunpack.c.l.b16 %v1077
    %v3386 = vunpack.c.l.b16 %v1078
    %v3387 = vunpack.c.l.b16 %v1079
    %v3388 = vunpack.c.l.b16 %v1080
    %v3389 = vunpack.c.l.b16 %v1081
    %v3390 = vunpack.c.l.b16 %v1082
    %v3391 = vunpack.c.l.b16 %v1083
    %v3392 = vunpack.c.l.b16 %v1084
    %v3393 = vunpack.c.l.b16 %v1085
    %v3394 = vunpack.c.l.b16 %v1086
    %v3395 = vunpack.c.l.b16 %v1087
    %v3396 = vunpack.c.l.b16 %v1088
    %v3397 = vunpack.c.l.b16 %v1089
    %v3398 = vunpack.c.l.b16 %v1090
    %v3399 = vunpack.c.l.b16 %v1091
    %v3400 = vunpack.c.l.b16 %v1092
    %v3401 = vunpack.c.l.b16 %v1093
    %v3402 = vunpack.c.l.b16 %v1094
    %v3403 = vunpack.c.l.b16 %v1095
    %v3404 = vunpack.c.l.b16 %v1096
    %v3405 = vunpack.c.l.b16 %v1097
    %v3406 = vunpack.c.l.b16 %v1098
    %v3407 = vunpack.c.l.b16 %v1099
    %v3408 = vunpack.c.l.b16 %v1100
    %v3409 = vunpack.c.l.b16 %v1101
    %v3410 = vunpack.c.l.b16 %v1102
    %v3411 = vunpack.c.l.b16 %v1103
    %v3412 = vunpack.c.l.b16 %v1104
    %v3413 = vunpack.c.l.b16 %v1105
    %v3414 = vunpack.c.l.b16 %v1106
    %v3415 = vunpack.c.l.b16 %v1107
    %v3416 = vunpack.c.l.b16 %v1108
    %v3417 = vunpack.c.l.b16 %v1109
    %v3418 = vunpack.c.l.b16 %v1110
    %v3419 = vunpack.c.l.b16 %v1111
    %v3420 = vunpack.c.l.b16 %v1112
    %v3421 = vunpack.c.l.b16 %v1113
    %v3422 = vunpack.c.l.b16 %v1114
    %v3423 = vunpack.c.l.b16 %v1115
    %v3424 = vunpack.c.l.b16 %v1116
    %v3425 = vunpack.c.l.b16 %v1117
    %v3426 = vunpack.c.l.b16 %v1118
    %v3427 = vunpack.c.l.b16 %v1119
    %v3428 = vunpack.c.l.b16 %v1120
    %v3429 = vunpack.c.l.b16 %v1121
    %v3430 = vunpack.c.l.b16 %v1122
    %v3431 = vunpack.c.l.b16 %v1123
    %v3432 = vunpack.c.l.b16 %v1124
    %v3433 = vunpack.c.l.b16 %v1125
    %v3434 = vunpack.c.l.b16 %v1126
    %v3435 = vunpack.c.l.b16 %v1127
    %v3436 = vunpack.c.l.b16 %v1128
    %v3437 = vunpack.c.l.b16 %v1129
    %v3438 = vunpack.c.l.b16 %v1130
    %v3439 = vunpack.c.l.b16 %v1131
    %v3440 = vunpack.c.l.b16 %v1132
    %v3441 = vunpack.c.l.b16 %v1133
    %v3442 = vunpack.c.l.b16 %v1134
    %v3443 = vunpack.c.l.b16 %v1135
    %v3444 = vunpack.c.l.b16 %v1136
    %v3445 = vunpack.c.l.b16 %v1137
    %v3446 = vunpack.c.l.b16 %v1138
    %v3447 = vunpack.c.l.b16 %v1139
    %v3448 = vunpack.c.l.b16 %v1140
    %v3449 = vunpack.c.l.b16 %v1141
    %v3450 = vunpack.c.l.b16 %v1142
    %v3451 = vunpack.c.l.b16 %v1143
    %v3452 = vunpack.c.l.b16 %v1144
    %v3453 = vunpack.c.l.b16 %v1145
    %v3454 = vunpack.c.l.b16 %v1146
    %v3455 = vunpack.c.l.b16 %v1147
    %v3456 = vunpack.c.l.b16 %v1148
    %v3457 = vunpack.c.l.b16 %v1149
    %v3458 = vunpack.c.l.b16 %v1150
    %v3459 = vunpack.c.l.b16 %v1151
    %v3460 = vunpack.c.l.b16 %v1152
    %v3461 = vunpack.c.l.b16 %v1153
    %v3462 = vunpack.c.l.b16 %v1154
    %v3463 = vunpack.c.l.b16 %v1155
    %v3464 = vunpack.c.l.b16 %v1156
    %v3465 = vunpack.c.l.b16 %v1157
    %v3466 = vunpack.c.l.b16 %v1158
    %v3467 = vunpack.c.l.b16 %v1159
    %v3468 = vunpack.c.l.b16 %v1160
    %v3469 = vunpack.c.l.b16 %v1161
    %v3470 = vunpack.c.l.b16 %v1162
    %v3471 = vunpack.c.l.b16 %v1163
    %v3472 = vunpack.c.l.b16 %v1164
    %v3473 = vunpack.c.l.b16 %v1165
    %v3474 = vunpack.c.l.b16 %v1166
    %v3475 = vunpack.c.l.b16 %v1167
    %v3476 = vunpack.c.l.b16 %v1168
    %v3477 = vunpack.c.l.b16 %v1169
    %v3478 = vunpack.c.l.b16 %v1170
    %v3479 = vunpack.c.l.b16 %v1171
    %v3480 = vunpack.c.l.b16 %v1172
    %v3481 = vunpack.c.l.b16 %v1173
    %v3482 = vunpack.c.l.b16 %v1174
    %v3483 = vunpack.c.l.b16 %v1175
    %v3484 = vunpack.c.l.b16 %v1176
    %v3485 = vunpack.c.l.b16 %v1177
    %v3486 = vunpack.c.l.b16 %v1178
    %v3487 = vunpack.c.l.b16 %v1179
    %v3488 = vunpack.c.l.b16 %v1180
    %v3489 = vunpack.c.l.b16 %v1181
    %v3490 = vunpack.c.l.b16 %v1182
    %v3491 = vunpack.c.l.b16 %v1183
    %v3492 = vunpack.c.l.b16 %v1184
    %v3493 = vunpack.c.l.b16 %v1185
    %v3494 = vunpack.c.l.b16 %v1186
    %v3495 = vunpack.c.l.b16 %v1187
    %v3496 = vunpack.c.l.b16 %v1188
    %v3497 = vunpack.c.l.b16 %v1189
    %v3498 = vunpack.c.l.b16 %v1190
    %v3499 = vunpack.c.l.b16 %v1191
    %v3500 = vunpack.c.l.b16 %v1192
    %v3501 = vunpack.c.l.b16 %v1193
    %v3502 = vunpack.c.l.b16 %v1194
    %v3503 = vunpack.c.l.b16 %v1195
    %v3504 = vunpack.c.l.b16 %v1196
    %v3505 = vunpack.c.l.b16 %v1197
    %v3506 = vunpack.c.l.b16 %v1198
    %v3507 = vunpack.c.l.b16 %v1199
    %v3508 = vunpack.c.l.b16 %v1200
    %v3509 = vunpack.c.l.b16 %v1201
    %v3510 = vunpack.c.l.b16 %v1202
    %v3511 = vunpack.c.l.b16 %v1203
    %v3512 = vunpack.c.l.b16 %v1204
    %v3513 = vunpack.c.l.b16 %v1205
    %v3514 = vunpack.c.l.b16 %v1206
    %v3515 = vunpack.c.l.b16 %v1207
    %v3516 = vunpack.c.l.b16 %v1208
    %v3517 = vunpack.c.l.b16 %v1209
    %v3518 = vunpack.c.l.b16 %v1210
    %v3519 = vunpack.c.l.b16 %v1211
    %v3520 = vunpack.c.l.b16 %v1212
    %v3521 = vunpack.c.l.b16 %v1213
    %v3522 = vunpack.c.l.b16 %v1214
    %v3523 = vunpack.c.l.b16 %v1215
    %v3524 = vunpack.c.l.b16 %v1216
    %v3525 = vunpack.c.l.b16 %v1217
    %v3526 = vunpack.c.l.b16 %v1218
    %v3527 = vunpack.c.l.b16 %v1219
    %v3528 = vunpack.c.l.b16 %v1220
    %v3529 = vunpack.c.l.b16 %v1221
    %v3530 = vunpack.c.l.b16 %v1222
    %v3531 = vunpack.c.l.b16 %v1223
    %v3532 = vunpack.c.l.b16 %v1224
    %v3533 = vunpack.c.l.b16 %v1225
    %v3534 = vunpack.c.l.b16 %v1226
    %v3535 = vunpack.c.l.b16 %v1227
    %v3536 = vunpack.c.l.b16 %v1228
    %v3537 = vunpack.c.l.b16 %v1229
    %v3538 = vunpack.c.l.b16 %v1230
    %v3539 = vunpack.c.l.b16 %v1231
    %v3540 = vunpack.c.l.b16 %v1232
    %v3541 = vunpack.c.l.b16 %v1233
    %v3542 = vunpack.c.l.b16 %v1234
    %v3543 = vunpack.c.l.b16 %v1235
    %v3544 = vunpack.c.l.b16 %v1236
    %v3545 = vunpack.c.l.b16 %v1237
    %v3546 = vunpack.c.l.b16 %v1238
    %v3547 = vunpack.c.l.b16 %v1239
    %v3548 = vunpack.c.l.b16 %v1240
    %v3549 = vunpack.c.l.b16 %v1241
    %v3550 = vunpack.c.l.b16 %v1242
    %v3551 = vunpack.c.l.b16 %v1243
    %v3552 = vunpack.c.l.b16 %v1244
    %v3553 = vunpack.c.l.b16 %v1245
    %v3554 = vunpack.c.l.b16 %v1246
    %v3555 = vunpack.c.l.b16 %v1247
    %v3556 = vunpack.c.l.b16 %v1248
    %v3557 = vunpack.c.l.b16 %v1249
    %v3558 = vunpack.c.l.b16 %v1250
    %v3559 = vunpack.c.l.b16 %v1251
    %v3560 = vunpack.c.l.b16 %v1252
    %v3561 = vunpack.c.l.b16 %v1253
    %v3562 = vunpack.c.l.b16 %v1254
    %v3563 = vunpack.c.l.b16 %v1255
    %v3564 = vunpack.c.l.b16 %v1256
    %v3565 = vunpack.c.l.b16 %v1257
    %v3566 = vunpack.c.l.b16 %v1258
    %v3567 = vunpack.c.l.b16 %v1259
    %v3568 = vunpack.c.l.b16 %v1260
    %v3569 = vunpack.c.l.b16 %v1261
    %v3570 = vunpack.c.l.b16 %v1262
    %v3571 = vunpack.c.l.b16 %v1263
    %v3572 = vunpack.c.l.b16 %v1264
    %v3573 = vunpack.c.l.b16 %v1265
    %v3574 = vunpack.c.l.b16 %v1266
    %v3575 = vunpack.c.l.b16 %v1267
    %v3576 = vunpack.c.l.b16 %v1268
    %v3577 = vunpack.c.l.b16 %v1269
    %v3578 = vunpack.c.l.b16 %v1270
    %v3579 = vunpack.c.l.b16 %v1271
    %v3580 = vunpack.c.l.b16 %v1272
    %v3581 = vunpack.c.l.b16 %v1273
    %v3582 = vunpack.c.l.b16 %v1274
    %v3583 = vunpack.c.l.b16 %v1275
    %v3584 = vunpack.c.l.b16 %v1276
    %v3585 = vunpack.c.l.b16 %v1277
    %v3586 = vunpack.c.l.b16 %v1278
    %v3587 = vunpack.c.l.b16 %v1279
    %v3588 = vunpack.c.l.b16 %v1280
    %v3589 = vunpack.c.l.b16 %v1281
    %v3590 = vunpack.c.l.b16 %v1282
    %v3591 = vunpack.c.l.b16 %v1283
    %v3592 = vunpack.c.l.b16 %v1284
    %v3593 = vunpack.c.l.b16 %v1285
    %v3594 = vunpack.c.l.b16 %v1286
    %v3595 = vunpack.c.l.b16 %v1287
    %v3596 = vunpack.c.l.b16 %v1288
    %v3597 = vunpack.c.l.b16 %v1289
    %v3598 = vunpack.c.l.b16 %v1290
    %v3599 = vunpack.c.l.b16 %v1291
    %v3600 = vunpack.c.l.b16 %v1292
    %v3601 = vunpack.c.l.b16 %v1293
    %v3602 = vunpack.c.l.b16 %v1294
    %v3603 = vunpack.c.l.b16 %v1295
    %v3604 = vunpack.c.l.b16 %v1296
    %v3605 = vunpack.c.l.b16 %v1297
    %v3606 = vunpack.c.l.b16 %v1298
    %v3607 = vunpack.c.l.b16 %v1299
    %v3608 = vunpack.c.l.b16 %v1300
    %v3609 = vunpack.c.l.b16 %v1301
    %v3610 = vunpack.c.l.b16 %v1302
    %v3611 = vunpack.c.l.b16 %v1303
    %v3612 = vunpack.c.l.b16 %v1304
    %v3613 = vunpack.c.l.b16 %v1305
    %v3614 = vunpack.c.l.b16 %v1306
    %v3615 = vunpack.c.l.b16 %v1307
    %v3616 = vunpack.c.l.b16 %v1308
    %v3617 = vunpack.c.l.b16 %v1309
    %v3618 = vunpack.c.l.b16 %v1310
    %v3619 = vunpack.c.l.b16 %v1311
    %v3620 = vunpack.c.l.b16 %v1312
    %v3621 = vunpack.c.l.b16 %v1313
    %v3622 = vunpack.c.l.b16 %v1314
    %v3623 = vunpack.c.l.b16 %v1315
    %v3624 = vunpack.c.l.b16 %v1316
    %v3625 = vunpack.c.l.b16 %v1317
    %v3626 = vunpack.c.l.b16 %v1318
    %v3627 = vunpack.c.l.b16 %v1319
    %v3628 = vunpack.c.l.b16 %v1320
    %v3629 = vunpack.c.l.b16 %v1321
    %v3630 = vunpack.c.l.b16 %v1322
    %v3631 = vunpack.c.l.b16 %v1323
    %v3632 = vunpack.c.l.b16 %v1324
    %v3633 = vunpack.c.l.b16 %v1325
    %v3634 = vunpack.c.l.b16 %v1326
    %v3635 = vunpack.c.l.b16 %v1327
    %v3636 = vunpack.c.l.b16 %v1328
    %v3637 = vunpack.c.l.b16 %v1329
    %v3638 = vunpack.c.l.b16 %v1330
    %v3639 = vunpack.c.l.b16 %v1331
    %v3640 = vunpack.c.l.b16 %v1332
    %v3641 = vunpack.c.l.b16 %v1333
    %v3642 = vunpack.c.l.b16 %v1334
    %v3643 = vunpack.c.l.b16 %v1335
    %v3644 = vunpack.c.l.b16 %v1336
    %v3645 = vunpack.c.l.b16 %v1337
    %v3646 = vunpack.c.l.b16 %v1338
    %v3647 = vunpack.c.l.b16 %v1339
    %v3648 = vunpack.c.l.b16 %v1340
    %v3649 = vunpack.c.l.b16 %v1341
    %v3650 = vunpack.c.l.b16 %v1342
    %v3651 = vunpack.c.l.b16 %v1343
    %v3652 = vunpack.c.l.b16 %v1344
    %v3653 = vunpack.c.l.b16 %v1345
    %v3654 = vunpack.c.l.b16 %v1346
    %v3655 = vunpack.c.l.b16 %v1347
    %v3656 = vunpack.c.l.b16 %v1348
    %v3657 = vunpack.c.l.b16 %v1349
    %v3658 = vunpack.c.l.b16 %v1350
    %v3659 = vunpack.c.l.b16 %v1351
    %v3660 = vunpack.c.l.b16 %v1352
    %v3661 = vunpack.c.l.b16 %v1353
    %v3662 = vunpack.c.l.b16 %v1354
    %v3663 = vunpack.c.l.b16 %v1355
    %v3664 = vunpack.c.l.b16 %v1356
    %v3665 = vunpack.c.l.b16 %v1357
    %v3666 = vunpack.c.l.b16 %v1358
    %v3667 = vunpack.c.l.b16 %v1359
    %v3668 = vunpack.c.l.b16 %v1360
    %v3669 = vunpack.c.l.b16 %v1361
    %v3670 = vunpack.c.l.b16 %v1362
    %v3671 = vunpack.c.l.b16 %v1363
    %v3672 = vunpack.c.l.b16 %v1364
    %v3673 = vunpack.c.l.b16 %v1365
    %v3674 = vunpack.c.l.b16 %v1366
    %v3675 = vunpack.c.l.b16 %v1367
    %v3676 = vunpack.c.l.b16 %v1368
    %v3677 = vunpack.c.l.b16 %v1369
    %v3678 = vunpack.c.l.b16 %v1370
    %v3679 = vunpack.c.l.b16 %v1371
    %v3680 = vunpack.c.l.b16 %v1372
    %v3681 = vunpack.c.l.b16 %v1373
    %v3682 = vunpack.c.l.b16 %v1374
    %v3683 = vunpack.c.l.b16 %v1375
    %v3684 = vunpack.c.l.b16 %v1376
    %v3685 = vunpack.c.l.b16 %v1377
    %v3686 = vunpack.c.l.b16 %v1378
    %v3687 = vunpack.c.l.b16 %v1379
    %v3688 = vunpack.c.l.b16 %v1380
    %v3689 = vunpack.c.l.b16 %v1381
    %v3690 = vunpack.c.l.b16 %v1382
    %v3691 = vunpack.c.l.b16 %v1383
    %v3692 = vunpack.c.l.b16 %v1384
    %v3693 = vunpack.c.l.b16 %v1385
    %v3694 = vunpack.c.l.b16 %v1386
    %v3695 = vunpack.c.l.b16 %v1387
    %v3696 = vunpack.c.l.b16 %v1388
    %v3697 = vunpack.c.l.b16 %v1389
    %v3698 = vunpack.c.l.b16 %v1390
    %v3699 = vunpack.c.l.b16 %v1391
    %v3700 = vunpack.c.l.b16 %v1392
    %v3701 = vunpack.c.l.b16 %v1393
    %v3702 = vunpack.c.l.b16 %v1394
    %v3703 = vunpack.c.l.b16 %v1395
    %v3704 = vunpack.c.l.b16 %v1396
    %v3705 = vunpack.c.l.b16 %v1397
    %v3706 = vunpack.c.l.b16 %v1398
    %v3707 = vunpack.c.l.b16 %v1399
    %v3708 = vunpack.c.l.b16 %v1400
    %v3709 = vunpack.c.l.b16 %v1401
    %v3710 = vunpack.c.l.b16 %v1402
    %v3711 = vunpack.c.l.b16 %v1403
    %v3712 = vunpack.c.l.b16 %v1404
    %v3713 = vunpack.c.l.b16 %v1405
    %v3714 = vunpack.c.l.b16 %v1406
    %v3715 = vunpack.c.l.b16 %v1407
    %v3716 = vunpack.c.l.b16 %v1408
    %v3717 = vunpack.c.l.b16 %v1409
    %v3718 = vunpack.c.l.b16 %v1410
    %v3719 = vunpack.c.l.b16 %v1411
    %v3720 = vunpack.c.l.b16 %v1412
    %v3721 = vunpack.c.l.b16 %v1413
    %v3722 = vunpack.c.l.b16 %v1414
    %v3723 = vunpack.c.l.b16 %v1415
    %v3724 = vunpack.c.l.b16 %v1416
    %v3725 = vunpack.c.l.b16 %v1417
    %v3726 = vunpack.c.l.b16 %v1418
    %v3727 = vunpack.c.l.b16 %v1419
    %v3728 = vunpack.c.l.b16 %v1420
    %v3729 = vunpack.c.l.b16 %v1421
    %v3730 = vunpack.c.l.b16 %v1422
    %v3731 = vunpack.c.l.b16 %v1423
    %v3732 = vunpack.c.l.b16 %v1424
    %v3733 = vunpack.c.l.b16 %v1425
    %v3734 = vunpack.c.l.b16 %v1426
    %v3735 = vunpack.c.l.b16 %v1427
    %v3736 = vunpack.c.l.b16 %v1428
    %v3737 = vunpack.c.l.b16 %v1429
    %v3738 = vunpack.c.l.b16 %v1430
    %v3739 = vunpack.c.l.b16 %v1431
    %v3740 = vunpack.c.l.b16 %v1432
    %v3741 = vunpack.c.l.b16 %v1433
    %v3742 = vunpack.c.l.b16 %v1434
    %v3743 = vunpack.c.l.b16 %v1435
    %v3744 = vunpack.c.l.b16 %v1436
    %v3745 = vunpack.c.l.b16 %v1437
    %v3746 = vunpack.c.l.b16 %v1438
    %v3747 = vunpack.c.l.b16 %v1439
    %v3748 = vunpack.c.l.b16 %v1440
    %v3749 = vunpack.c.l.b16 %v1441
    %v3750 = vunpack.c.l.b16 %v1442
    %v3751 = vunpack.c.l.b16 %v1443
    %v3752 = vpack.c.b16 %v2601, %v2600
    %v3753 = vpack.c.b16 %v2603, %v2602
    %v3754 = vpack.c.b16 %v2605, %v2604
    %v3755 = vpack.c.b16 %v2607, %v2606
    %v3756 = vpack.c.b16 %v2609, %v2608
    %v3757 = vpack.c.b16 %v2611, %v2610
    %v3758 = vpack.c.b16 %v2613, %v2612
    %v3759 = vpack.c.b16 %v2615, %v2614
    %v3760 = vpack.c.b16 %v2617, %v2616
    %v3761 = vpack.c.b16 %v2619, %v2618
    %v3762 = vpack.c.b16 %v2621, %v2620
    %v3763 = vpack.c.b16 %v2623, %v2622
    %v3764 = vpack.c.b16 %v2625, %v2624
    %v3765 = vpack.c.b16 %v2627, %v2626
    %v3766 = vpack.c.b16 %v2629, %v2628
    %v3767 = vpack.c.b16 %v2631, %v2630
    %v3768 = vpack.c.b16 %v2633, %v2632
    %v3769 = vpack.c.b16 %v2635, %v2634
    %v3770 = vpack.c.b16 %v2637, %v2636
    %v3771 = vpack.c.b16 %v2639, %v2638
    %v3772 = vpack.c.b16 %v2641, %v2640
    %v3773 = vpack.c.b16 %v2643, %v2642
    %v3774 = vpack.c.b16 %v2645, %v2644
    %v3775 = vpack.c.b16 %v2647, %v2646
    %v3776 = vpack.c.b16 %v2649, %v2648
    %v3777 = vpack.c.b16 %v2651, %v2650
    %v3778 = vpack.c.b16 %v2653, %v2652
    %v3779 = vpack.c.b16 %v2655, %v2654
    %v3780 = vpack.c.b16 %v2657, %v2656
    %v3781 = vpack.c.b16 %v2659, %v2658
    %v3782 = vpack.c.b16 %v2661, %v2660
    %v3783 = vpack.c.b16 %v2663, %v2662
    %v3784 = vpack.c.b16 %v2665, %v2664
    %v3785 = vpack.c.b16 %v2667, %v2666
    %v3786 = vpack.c.b16 %v2669, %v2668
    %v3787 = vpack.c.b16 %v2671, %v2670
    %v3788 = vpack.c.b16 %v2673, %v2672
    %v3789 = vpack.c.b16 %v2675, %v2674
    %v3790 = vpack.c.b16 %v2677, %v2676
    %v3791 = vpack.c.b16 %v2679, %v2678
    %v3792 = vpack.c.b16 %v2681, %v2680
    %v3793 = vpack.c.b16 %v2683, %v2682
    %v3794 = vpack.c.b16 %v2685, %v2684
    %v3795 = vpack.c.b16 %v2687, %v2686
    %v3796 = vpack.c.b16 %v2689, %v2688
    %v3797 = vpack.c.b16 %v2691, %v2690
    %v3798 = vpack.c.b16 %v2693, %v2692
    %v3799 = vpack.c.b16 %v2695, %v2694
    %v3800 = vpack.c.b16 %v2697, %v2696
    %v3801 = vpack.c.b16 %v2699, %v2698
    %v3802 = vpack.c.b16 %v2701, %v2700
    %v3803 = vpack.c.b16 %v2703, %v2702
    %v3804 = vpack.c.b16 %v2705, %v2704
    %v3805 = vpack.c.b16 %v2707, %v2706
    %v3806 = vpack.c.b16 %v2709, %v2708
    %v3807 = vpack.c.b16 %v2711, %v2710
    %v3808 = vpack.c.b16 %v2713, %v2712
    %v3809 = vpack.c.b16 %v2715, %v2714
    %v3810 = vpack.c.b16 %v2717, %v2716
    %v3811 = vpack.c.b16 %v2719, %v2718
    %v3812 = vpack.c.b16 %v2721, %v2720
    %v3813 = vpack.c.b16 %v2723, %v2722
    %v3814 = vpack.c.b16 %v2725, %v2724
    %v3815 = vpack.c.b16 %v2727, %v2726
    %v3816 = vpack.c.b16 %v2729, %v2728
    %v3817 = vpack.c.b16 %v2731, %v2730
    %v3818 = vpack.c.b16 %v2733, %v2732
    %v3819 = vpack.c.b16 %v2735, %v2734
    %v3820 = vpack.c.b16 %v2737, %v2736
    %v3821 = vpack.c.b16 %v2739, %v2738
    %v3822 = vpack.c.b16 %v2741, %v2740
    %v3823 = vpack.c.b16 %v2743, %v2742
    %v3824 = vpack.c.b16 %v2745, %v2744
    %v3825 = vpack.c.b16 %v2747, %v2746
    %v3826 = vpack.c.b16 %v2749, %v2748
    %v3827 = vpack.c.b16 %v2751, %v2750
    %v3828 = vpack.c.b16 %v2753, %v2752
    %v3829 = vpack.c.b16 %v2755, %v2754
    %v3830 = vpack.c.b16 %v2757, %v2756
    %v3831 = vpack.c.b16 %v2759, %v2758
    %v3832 = vpack.c.b16 %v2761, %v2760
    %v3833 = vpack.c.b16 %v2763, %v2762
    %v3834 = vpack.c.b16 %v2765, %v2764
    %v3835 = vpack.c.b16 %v2767, %v2766
    %v3836 = vpack.c.b16 %v2769, %v2768
    %v3837 = vpack.c.b16 %v2771, %v2770
    %v3838 = vpack.c.b16 %v2773, %v2772
    %v3839 = vpack.c.b16 %v2775, %v2774
    %v3840 = vpack.c.b16 %v2777, %v2776
    %v3841 = vpack.c.b16 %v2779, %v2778
    %v3842 = vpack.c.b16 %v2781, %v2780
    %v3843 = vpack.c.b16 %v2783, %v2782
    %v3844 = vpack.c.b16 %v2785, %v2784
    %v3845 = vpack.c.b16 %v2787, %v2786
    %v3846 = vpack.c.b16 %v2789, %v2788
    %v3847 = vpack.c.b16 %v2791, %v2790
    %v3848 = vpack.c.b16 %v2793, %v2792
    %v3849 = vpack.c.b16 %v2795, %v2794
    %v3850 = vpack.c.b16 %v2797, %v2796
    %v3851 = vpack.c.b16 %v2799, %v2798
    %v3852 = vpack.c.b16 %v2801, %v2800
    %v3853 = vpack.c.b16 %v2803, %v2802
    %v3854 = vpack.c.b16 %v2805, %v2804
    %v3855 = vpack.c.b16 %v2807, %v2806
    %v3856 = vpack.c.b16 %v2809, %v2808
    %v3857 = vpack.c.b16 %v2811, %v2810
    %v3858 = vpack.c.b16 %v2813, %v2812
    %v3859 = vpack.c.b16 %v2815, %v2814
    %v3860 = vpack.c.b16 %v2817, %v2816
    %v3861 = vpack.c.b16 %v2819, %v2818
    %v3862 = vpack.c.b16 %v2821, %v2820
    %v3863 = vpack.c.b16 %v2823, %v2822
    %v3864 = vpack.c.b16 %v2825, %v2824
    %v3865 = vpack.c.b16 %v2827, %v2826
    %v3866 = vpack.c.b16 %v2829, %v2828
    %v3867 = vpack.c.b16 %v2831, %v2830
    %v3868 = vpack.c.b16 %v2833, %v2832
    %v3869 = vpack.c.b16 %v2835, %v2834
    %v3870 = vpack.c.b16 %v2837, %v2836
    %v3871 = vpack.c.b16 %v2839, %v2838
    %v3872 = vpack.c.b16 %v2841, %v2840
    %v3873 = vpack.c.b16 %v2843, %v2842
    %v3874 = vpack.c.b16 %v2845, %v2844
    %v3875 = vpack.c.b16 %v2847, %v2846
    %v3876 = vpack.c.b16 %v2849, %v2848
    %v3877 = vpack.c.b16 %v2851, %v2850
    %v3878 = vpack.c.b16 %v2853, %v2852
    %v3879 = vpack.c.b16 %v2855, %v2854
    %v3880 = vpack.c.b16 %v2857, %v2856
    %v3881 = vpack.c.b16 %v2859, %v2858
    %v3882 = vpack.c.b16 %v2861, %v2860
    %v3883 = vpack.c.b16 %v2863, %v2862
    %v3884 = vpack.c.b16 %v2865, %v2864
    %v3885 = vpack.c.b16 %v2867, %v2866
    %v3886 = vpack.c.b16 %v2869, %v2868
    %v3887 = vpack.c.b16 %v2871, %v2870
    %v3888 = vpack.c.b16 %v2873, %v2872
    %v3889 = vpack.c.b16 %v2875, %v2874
    %v3890 = vpack.c.b16 %v2877, %v2876
    %v3891 = vpack.c.b16 %v2879, %v2878
    %v3892 = vpack.c.b16 %v2881, %v2880
    %v3893 = vpack.c.b16 %v2883, %v2882
    %v3894 = vpack.c.b16 %v2885, %v2884
    %v3895 = vpack.c.b16 %v2887, %v2886
    %v3896 = vpack.c.b16 %v2889, %v2888
    %v3897 = vpack.c.b16 %v2891, %v2890
    %v3898 = vpack.c.b16 %v2893, %v2892
    %v3899 = vpack.c.b16 %v2895, %v2894
    %v3900 = vpack.c.b16 %v2897, %v2896
    %v3901 = vpack.c.b16 %v2899, %v2898
    %v3902 = vpack.c.b16 %v2901, %v2900
    %v3903 = vpack.c.b16 %v2903, %v2902
    %v3904 = vpack.c.b16 %v2905, %v2904
    %v3905 = vpack.c.b16 %v2907, %v2906
    %v3906 = vpack.c.b16 %v2909, %v2908
    %v3907 = vpack.c.b16 %v2911, %v2910
    %v3908 = vpack.c.b16 %v2913, %v2912
    %v3909 = vpack.c.b16 %v2915, %v2914
    %v3910 = vpack.c.b16 %v2917, %v2916
    %v3911 = vpack.c.b16 %v2919, %v2918
    %v3912 = vpack.c.b16 %v2921, %v2920
    %v3913 = vpack.c.b16 %v2923, %v2922
    %v3914 = vpack.c.b16 %v2925, %v2924
    %v3915 = vpack.c.b16 %v2927, %v2926
    %v3916 = vpack.c.b16 %v2929, %v2928
    %v3917 = vpack.c.b16 %v2931, %v2930
    %v3918 = vpack.c.b16 %v2933, %v2932
    %v3919 = vpack.c.b16 %v2935, %v2934
    %v3920 = vpack.c.b16 %v2937, %v2936
    %v3921 = vpack.c.b16 %v2939, %v2938
    %v3922 = vpack.c.b16 %v2941, %v2940
    %v3923 = vpack.c.b16 %v2943, %v2942
    %v3924 = vpack.c.b16 %v2945, %v2944
    %v3925 = vpack.c.b16 %v2947, %v2946
    %v3926 = vpack.c.b16 %v2949, %v2948
    %v3927 = vpack.c.b16 %v2951, %v2950
    %v3928 = vpack.c.b16 %v2953, %v2952
    %v3929 = vpack.c.b16 %v2955, %v2954
    %v3930 = vpack.c.b16 %v2957, %v2956
    %v3931 = vpack.c.b16 %v2959, %v2958
    %v3932 = vpack.c.b16 %v2961, %v2960
    %v3933 = vpack.c.b16 %v2963, %v2962
    %v3934 = vpack.c.b16 %v2965, %v2964
    %v3935 = vpack.c.b16 %v2967, %v2966
    %v3936 = vpack.c.b16 %v2969, %v2968
    %v3937 = vpack.c.b16 %v2971, %v2970
    %v3938 = vpack.c.b16 %v2973, %v2972
    %v3939 = vpack.c.b16 %v2975, %v2974
    %v3940 = vpack.c.b16 %v2977, %v2976
    %v3941 = vpack.c.b16 %v2979, %v2978
    %v3942 = vpack.c.b16 %v2981, %v2980
    %v3943 = vpack.c.b16 %v2983, %v2982
    %v3944 = vpack.c.b16 %v2985, %v2984
    %v3945 = vpack.c.b16 %v2987, %v2986
    %v3946 = vpack.c.b16 %v2989, %v2988
    %v3947 = vpack.c.b16 %v2991, %v2990
    %v3948 = vpack.c.b16 %v2993, %v2992
    %v3949 = vpack.c.b16 %v2995, %v2994
    %v3950 = vpack.c.b16 %v2997, %v2996
    %v3951 = vpack.c.b16 %v2999, %v2998
    %v3952 = vpack.c.b16 %v3001, %v3000
    %v3953 = vpack.c.b16 %v3003, %v3002
    %v3954 = vpack.c.b16 %v3005, %v3004
    %v3955 = vpack.c.b16 %v3007, %v3006
    %v3956 = vpack.c.b16 %v3009, %v3008
    %v3957 = vpack.c.b16 %v3011, %v3010
    %v3958 = vpack.c.b16 %v3013, %v3012
    %v3959 = vpack.c.b16 %v3015, %v3014
    %v3960 = vpack.c.b16 %v3017, %v3016
    %v3961 = vpack.c.b16 %v3019, %v3018
    %v3962 = vpack.c.b16 %v3021, %v3020
    %v3963 = vpack.c.b16 %v3023, %v3022
    %v3964 = vpack.c.b16 %v3025, %v3024
    %v3965 = vpack.c.b16 %v3027, %v3026
    %v3966 = vpack.c.b16 %v3029, %v3028
    %v3967 = vpack.c.b16 %v3031, %v3030
    %v3968 = vpack.c.b16 %v3033, %v3032
    %v3969 = vpack.c.b16 %v3035, %v3034
    %v3970 = vpack.c.b16 %v3037, %v3036
    %v3971 = vpack.c.b16 %v3039, %v3038
    %v3972 = vpack.c.b16 %v3041, %v3040
    %v3973 = vpack.c.b16 %v3043, %v3042
    %v3974 = vpack.c.b16 %v3045, %v3044
    %v3975 = vpack.c.b16 %v3047, %v3046
    %v3976 = vpack.c.b16 %v3049, %v3048
    %v3977 = vpack.c.b16 %v3051, %v3050
    %v3978 = vpack.c.b16 %v3053, %v3052
    %v3979 = vpack.c.b16 %v3055, %v3054
    %v3980 = vpack.c.b16 %v3057, %v3056
    %v3981 = vpack.c.b16 %v3059, %v3058
    %v3982 = vpack.c.b16 %v3061, %v3060
    %v3983 = vpack.c.b16 %v3063, %v3062
    %v3984 = vpack.c.b16 %v3065, %v3064
    %v3985 = vpack.c.b16 %v3067, %v3066
    %v3986 = vpack.c.b16 %v3069, %v3068
    %v3987 = vpack.c.b16 %v3071, %v3070
    %v3988 = vpack.c.b16 %v3073, %v3072
    %v3989 = vpack.c.b16 %v3075, %v3074
    %v3990 = vpack.c.b16 %v3077, %v3076
    %v3991 = vpack.c.b16 %v3079, %v3078
    %v3992 = vpack.c.b16 %v3081, %v3080
    %v3993 = vpack.c.b16 %v3083, %v3082
    %v3994 = vpack.c.b16 %v3085, %v3084
    %v3995 = vpack.c.b16 %v3087, %v3086
    %v3996 = vpack.c.b16 %v3089, %v3088
    %v3997 = vpack.c.b16 %v3091, %v3090
    %v3998 = vpack.c.b16 %v3093, %v3092
    %v3999 = vpack.c.b16 %v3095, %v3094
    %v4000 = vpack.c.b16 %v3097, %v3096
    %v4001 = vpack.c.b16 %v3099, %v3098
    %v4002 = vpack.c.b16 %v3101, %v3100
    %v4003 = vpack.c.b16 %v3103, %v3102
    %v4004 = vpack.c.b16 %v3105, %v3104
    %v4005 = vpack.c.b16 %v3107, %v3106
    %v4006 = vpack.c.b16 %v3109, %v3108
    %v4007 = vpack.c.b16 %v3111, %v3110
    %v4008 = vpack.c.b16 %v3113, %v3112
    %v4009 = vpack.c.b16 %v3115, %v3114
    %v4010 = vpack.c.b16 %v3117, %v3116
    %v4011 = vpack.c.b16 %v3119, %v3118
    %v4012 = vpack.c.b16 %v3121, %v3120
    %v4013 = vpack.c.b16 %v3123, %v3122
    %v4014 = vpack.c.b16 %v3125, %v3124
    %v4015 = vpack.c.b16 %v3127, %v3126
    %v4016 = vpack.c.b16 %v3129, %v3128
    %v4017 = vpack.c.b16 %v3131, %v3130
    %v4018 = vpack.c.b16 %v3133, %v3132
    %v4019 = vpack.c.b16 %v3135, %v3134
    %v4020 = vpack.c.b16 %v3137, %v3136
    %v4021 = vpack.c.b16 %v3139, %v3138
    %v4022 = vpack.c.b16 %v3141, %v3140
    %v4023 = vpack.c.b16 %v3143, %v3142
    %v4024 = vpack.c.b16 %v3145, %v3144
    %v4025 = vpack.c.b16 %v3147, %v3146
    %v4026 = vpack.c.b16 %v3149, %v3148
    %v4027 = vpack.c.b16 %v3151, %v3150
    %v4028 = vpack.c.b16 %v3153, %v3152
    %v4029 = vpack.c.b16 %v3155, %v3154
    %v4030 = vpack.c.b16 %v3157, %v3156
    %v4031 = vpack.c.b16 %v3159, %v3158
    %v4032 = vpack.c.b16 %v3161, %v3160
    %v4033 = vpack.c.b16 %v3163, %v3162
    %v4034 = vpack.c.b16 %v3165, %v3164
    %v4035 = vpack.c.b16 %v3167, %v3166
    %v4036 = vpack.c.b16 %v3169, %v3168
    %v4037 = vpack.c.b16 %v3171, %v3170
    %v4038 = vpack.c.b16 %v3173, %v3172
    %v4039 = vpack.c.b16 %v3175, %v3174
    %v4040 = vpack.c.b16 %v3177, %v3176
    %v4041 = vpack.c.b16 %v3179, %v3178
    %v4042 = vpack.c.b16 %v3181, %v3180
    %v4043 = vpack.c.b16 %v3183, %v3182
    %v4044 = vpack.c.b16 %v3185, %v3184
    %v4045 = vpack.c.b16 %v3187, %v3186
    %v4046 = vpack.c.b16 %v3189, %v3188
    %v4047 = vpack.c.b16 %v3191, %v3190
    %v4048 = vpack.c.b16 %v3193, %v3192
    %v4049 = vpack.c.b16 %v3195, %v3194
    %v4050 = vpack.c.b16 %v3197, %v3196
    %v4051 = vpack.c.b16 %v3199, %v3198
    %v4052 = vpack.c.b16 %v3201, %v3200
    %v4053 = vpack.c.b16 %v3203, %v3202
    %v4054 = vpack.c.b16 %v3205, %v3204
    %v4055 = vpack.c.b16 %v3207, %v3206
    %v4056 = vpack.c.b16 %v3209, %v3208
    %v4057 = vpack.c.b16 %v3211, %v3210
    %v4058 = vpack.c.b16 %v3213, %v3212
    %v4059 = vpack.c.b16 %v3215, %v3214
    %v4060 = vpack.c.b16 %v3217, %v3216
    %v4061 = vpack.c.b16 %v3219, %v3218
    %v4062 = vpack.c.b16 %v3221, %v3220
    %v4063 = vpack.c.b16 %v3223, %v3222
    %v4064 = vpack.c.b16 %v3225, %v3224
    %v4065 = vpack.c.b16 %v3227, %v3226
    %v4066 = vpack.c.b16 %v3229, %v3228
    %v4067 = vpack.c.b16 %v3231, %v3230
    %v4068 = vpack.c.b16 %v3233, %v3232
    %v4069 = vpack.c.b16 %v3235, %v3234
    %v4070 = vpack.c.b16 %v3237, %v3236
    %v4071 = vpack.c.b16 %v3239, %v3238
    %v4072 = vpack.c.b16 %v3241, %v3240
    %v4073 = vpack.c.b16 %v3243, %v3242
    %v4074 = vpack.c.b16 %v3245, %v3244
    %v4075 = vpack.c.b16 %v3247, %v3246
    %v4076 = vpack.c.b16 %v3249, %v3248
    %v4077 = vpack.c.b16 %v3251, %v3250
    %v4078 = vpack.c.b16 %v3253, %v3252
    %v4079 = vpack.c.b16 %v3255, %v3254
    %v4080 = vpack.c.b16 %v3257, %v3256
    %v4081 = vpack.c.b16 %v3259, %v3258
    %v4082 = vpack.c.b16 %v3261, %v3260
    %v4083 = vpack.c.b16 %v3263, %v3262
    %v4084 = vpack.c.b16 %v3265, %v3264
    %v4085 = vpack.c.b16 %v3267, %v3266
    %v4086 = vpack.c.b16 %v3269, %v3268
    %v4087 = vpack.c.b16 %v3271, %v3270
    %v4088 = vpack.c.b16 %v3273, %v3272
    %v4089 = vpack.c.b16 %v3275, %v3274
    %v4090 = vpack.c.b16 %v3277, %v3276
    %v4091 = vpack.c.b16 %v3279, %v3278
    %v4092 = vpack.c.b16 %v3281, %v3280
    %v4093 = vpack.c.b16 %v3283, %v3282
    %v4094 = vpack.c.b16 %v3285, %v3284
    %v4095 = vpack.c.b16 %v3287, %v3286
    %v4096 = vpack.c.b16 %v3289, %v3288
    %v4097 = vpack.c.b16 %v3291, %v3290
    %v4098 = vpack.c.b16 %v3293, %v3292
    %v4099 = vpack.c.b16 %v3295, %v3294
    %v4100 = vpack.c.b16 %v3297, %v3296
    %v4101 = vpack.c.b16 %v3299, %v3298
    %v4102 = vpack.c.b16 %v3301, %v3300
    %v4103 = vpack.c.b16 %v3303, %v3302
    %v4104 = vpack.c.b16 %v3305, %v3304
    %v4105 = vpack.c.b16 %v3307, %v3306
    %v4106 = vpack.c.b16 %v3309, %v3308
    %v4107 = vpack.c.b16 %v3311, %v3310
    %v4108 = vpack.c.b16 %v3313, %v3312
    %v4109 = vpack.c.b16 %v3315, %v3314
    %v4110 = vpack.c.b16 %v3317, %v3316
    %v4111 = vpack.c.b16 %v3319, %v3318
    %v4112 = vpack.c.b16 %v3321, %v3320
    %v4113 = vpack.c.b16 %v3323, %v3322
    %v4114 = vpack.c.b16 %v3325, %v3324
    %v4115 = vpack.c.b16 %v3327, %v3326
    %v4116 = vpack.c.b16 %v3329, %v3328
    %v4117 = vpack.c.b16 %v3331, %v3330
    %v4118 = vpack.c.b16 %v3333, %v3332
    %v4119 = vpack.c.b16 %v3335, %v3334
    %v4120 = vpack.c.b16 %v3337, %v3336
    %v4121 = vpack.c.b16 %v3339, %v3338
    %v4122 = vpack.c.b16 %v3341, %v3340
    %v4123 = vpack.c.b16 %v3343, %v3342
    %v4124 = vpack.c.b16 %v3345, %v3344
    %v4125 = vpack.c.b16 %v3347, %v3346
    %v4126 = vpack.c.b16 %v3349, %v3348
    %v4127 = vpack.c.b16 %v3351, %v3350
    %v4128 = vpack.c.b16 %v3353, %v3352
    %v4129 = vpack.c.b16 %v3355, %v3354
    %v4130 = vpack.c.b16 %v3357, %v3356
    %v4131 = vpack.c.b16 %v3359, %v3358
    %v4132 = vpack.c.b16 %v3361, %v3360
    %v4133 = vpack.c.b16 %v3363, %v3362
    %v4134 = vpack.c.b16 %v3365, %v3364
    %v4135 = vpack.c.b16 %v3367, %v3366
    %v4136 = vpack.c.b16 %v3369, %v3368
    %v4137 = vpack.c.b16 %v3371, %v3370
    %v4138 = vpack.c.b16 %v3373, %v3372
    %v4139 = vpack.c.b16 %v3375, %v3374
    %v4140 = vpack.c.b16 %v3377, %v3376
    %v4141 = vpack.c.b16 %v3379, %v3378
    %v4142 = vpack.c.b16 %v3381, %v3380
    %v4143 = vpack.c.b16 %v3383, %v3382
    %v4144 = vpack.c.b16 %v3385, %v3384
    %v4145 = vpack.c.b16 %v3387, %v3386
    %v4146 = vpack.c.b16 %v3389, %v3388
    %v4147 = vpack.c.b16 %v3391, %v3390
    %v4148 = vpack.c.b16 %v3393, %v3392
    %v4149 = vpack.c.b16 %v3395, %v3394
    %v4150 = vpack.c.b16 %v3397, %v3396
    %v4151 = vpack.c.b16 %v3399, %v3398
    %v4152 = vpack.c.b16 %v3401, %v3400
    %v4153 = vpack.c.b16 %v3403, %v3402
    %v4154 = vpack.c.b16 %v3405, %v3404
    %v4155 = vpack.c.b16 %v3407, %v3406
    %v4156 = vpack.c.b16 %v3409, %v3408
    %v4157 = vpack.c.b16 %v3411, %v3410
    %v4158 = vpack.c.b16 %v3413, %v3412
    %v4159 = vpack.c.b16 %v3415, %v3414
    %v4160 = vpack.c.b16 %v3417, %v3416
    %v4161 = vpack.c.b16 %v3419, %v3418
    %v4162 = vpack.c.b16 %v3421, %v3420
    %v4163 = vpack.c.b16 %v3423, %v3422
    %v4164 = vpack.c.b16 %v3425, %v3424
    %v4165 = vpack.c.b16 %v3427, %v3426
    %v4166 = vpack.c.b16 %v3429, %v3428
    %v4167 = vpack.c.b16 %v3431, %v3430
    %v4168 = vpack.c.b16 %v3433, %v3432
    %v4169 = vpack.c.b16 %v3435, %v3434
    %v4170 = vpack.c.b16 %v3437, %v3436
    %v4171 = vpack.c.b16 %v3439, %v3438
    %v4172 = vpack.c.b16 %v3441, %v3440
    %v4173 = vpack.c.b16 %v3443, %v3442
    %v4174 = vpack.c.b16 %v3445, %v3444
    %v4175 = vpack.c.b16 %v3447, %v3446
    %v4176 = vpack.c.b16 %v3449, %v3448
    %v4177 = vpack.c.b16 %v3451, %v3450
    %v4178 = vpack.c.b16 %v3453, %v3452
    %v4179 = vpack.c.b16 %v3455, %v3454
    %v4180 = vpack.c.b16 %v3457, %v3456
    %v4181 = vpack.c.b16 %v3459, %v3458
    %v4182 = vpack.c.b16 %v3461, %v3460
    %v4183 = vpack.c.b16 %v3463, %v3462
    %v4184 = vpack.c.b16 %v3465, %v3464
    %v4185 = vpack.c.b16 %v3467, %v3466
    %v4186 = vpack.c.b16 %v3469, %v3468
    %v4187 = vpack.c.b16 %v3471, %v3470
    %v4188 = vpack.c.b16 %v3473, %v3472
    %v4189 = vpack.c.b16 %v3475, %v3474
    %v4190 = vpack.c.b16 %v3477, %v3476
    %v4191 = vpack.c.b16 %v3479, %v3478
    %v4192 = vpack.c.b16 %v3481, %v3480
    %v4193 = vpack.c.b16 %v3483, %v3482
    %v4194 = vpack.c.b16 %v3485, %v3484
    %v4195 = vpack.c.b16 %v3487, %v3486
    %v4196 = vpack.c.b16 %v3489, %v3488
    %v4197 = vpack.c.b16 %v3491, %v3490
    %v4198 = vpack.c.b16 %v3493, %v3492
    %v4199 = vpack.c.b16 %v3495, %v3494
    %v4200 = vpack.c.b16 %v3497, %v3496
    %v4201 = vpack.c.b16 %v3499, %v3498
    %v4202 = vpack.c.b16 %v3501, %v3500
    %v4203 = vpack.c.b16 %v3503, %v3502
    %v4204 = vpack.c.b16 %v3505, %v3504
    %v4205 = vpack.c.b16 %v3507, %v3506
    %v4206 = vpack.c.b16 %v3509, %v3508
    %v4207 = vpack.c.b16 %v3511, %v3510
    %v4208 = vpack.c.b16 %v3513, %v3512
    %v4209 = vpack.c.b16 %v3515, %v3514
    %v4210 = vpack.c.b16 %v3517, %v3516
    %v4211 = vpack.c.b16 %v3519, %v3518
    %v4212 = vpack.c.b16 %v3521, %v3520
    %v4213 = vpack.c.b16 %v3523, %v3522
    %v4214 = vpack.c.b16 %v3525, %v3524
    %v4215 = vpack.c.b16 %v3527, %v3526
    %v4216 = vpack.c.b16 %v3529, %v3528
    %v4217 = vpack.c.b16 %v3531, %v3530
    %v4218 = vpack.c.b16 %v3533, %v3532
    %v4219 = vpack.c.b16 %v3535, %v3534
    %v4220 = vpack.c.b16 %v3537, %v3536
    %v4221 = vpack.c.b16 %v3539, %v3538
    %v4222 = vpack.c.b16 %v3541, %v3540
    %v4223 = vpack.c.b16 %v3543, %v3542
    %v4224 = vpack.c.b16 %v3545, %v3544
    %v4225 = vpack.c.b16 %v3547, %v3546
    %v4226 = vpack.c.b16 %v3549, %v3548
    %v4227 = vpack.c.b16 %v3551, %v3550
    %v4228 = vpack.c.b16 %v3553, %v3552
    %v4229 = vpack.c.b16 %v3555, %v3554
    %v4230 = vpack.c.b16 %v3557, %v3556
    %v4231 = vpack.c.b16 %v3559, %v3558
    %v4232 = vpack.c.b16 %v3561, %v3560
    %v4233 = vpack.c.b16 %v3563, %v3562
    %v4234 = vpack.c.b16 %v3565, %v3564
    %v4235 = vpack.c.b16 %v3567, %v3566
    %v4236 = vpack.c.b16 %v3569, %v3568
    %v4237 = vpack.c.b16 %v3571, %v3570
    %v4238 = vpack.c.b16 %v3573, %v3572
    %v4239 = vpack.c.b16 %v3575, %v3574
    %v4240 = vpack.c.b16 %v3577, %v3576
    %v4241 = vpack.c.b16 %v3579, %v3578
    %v4242 = vpack.c.b16 %v3581, %v3580
    %v4243 = vpack.c.b16 %v3583, %v3582
    %v4244 = vpack.c.b16 %v3585, %v3584
    %v4245 = vpack.c.b16 %v3587, %v3586
    %v4246 = vpack.c.b16 %v3589, %v3588
    %v4247 = vpack.c.b16 %v3591, %v3590
    %v4248 = vpack.c.b16 %v3593, %v3592
    %v4249 = vpack.c.b16 %v3595, %v3594
    %v4250 = vpack.c.b16 %v3597, %v3596
    %v4251 = vpack.c.b16 %v3599, %v3598
    %v4252 = vpack.c.b16 %v3601, %v3600
    %v4253 = vpack.c.b16 %v3603, %v3602
    %v4254 = vpack.c.b16 %v3605, %v3604
    %v4255 = vpack.c.b16 %v3607, %v3606
    %v4256 = vpack.c.b16 %v3609, %v3608
    %v4257 = vpack.c.b16 %v3611, %v3610
    %v4258 = vpack.c.b16 %v3613, %v3612
    %v4259 = vpack.c.b16 %v3615, %v3614
    %v4260 = vpack.c.b16 %v3617, %v3616
    %v4261 = vpack.c.b16 %v3619, %v3618
    %v4262 = vpack.c.b16 %v3621, %v3620
    %v4263 = vpack.c.b16 %v3623, %v3622
    %v4264 = vpack.c.b16 %v3625, %v3624
    %v4265 = vpack.c.b16 %v3627, %v3626
    %v4266 = vpack.c.b16 %v3629, %v3628
    %v4267 = vpack.c.b16 %v3631, %v3630
    %v4268 = vpack.c.b16 %v3633, %v3632
    %v4269 = vpack.c.b16 %v3635, %v3634
    %v4270 = vpack.c.b16 %v3637, %v3636
    %v4271 = vpack.c.b16 %v3639, %v3638
    %v4272 = vpack.c.b16 %v3641, %v3640
    %v4273 = vpack.c.b16 %v3643, %v3642
    %v4274 = vpack.c.b16 %v3645, %v3644
    %v4275 = vpack.c.b16 %v3647, %v3646
    %v4276 = vpack.c.b16 %v3649, %v3648
    %v4277 = vpack.c.b16 %v3651, %v3650
    %v4278 = vpack.c.b16 %v3653, %v3652
    %v4279 = vpack.c.b16 %v3655, %v3654
    %v4280 = vpack.c.b16 %v3657, %v3656
    %v4281 = vpack.c.b16 %v3659, %v3658
    %v4282 = vpack.c.b16 %v3661, %v3660
    %v4283 = vpack.c.b16 %v3663, %v3662
    %v4284 = vpack.c.b16 %v3665, %v3664
    %v4285 = vpack.c.b16 %v3667, %v3666
    %v4286 = vpack.c.b16 %v3669, %v3668
    %v4287 = vpack.c.b16 %v3671, %v3670
    %v4288 = vpack.c.b16 %v3673, %v3672
    %v4289 = vpack.c.b16 %v3675, %v3674
    %v4290 = vpack.c.b16 %v3677, %v3676
    %v4291 = vpack.c.b16 %v3679, %v3678
    %v4292 = vpack.c.b16 %v3681, %v3680
    %v4293 = vpack.c.b16 %v3683, %v3682
    %v4294 = vpack.c.b16 %v3685, %v3684
    %v4295 = vpack.c.b16 %v3687, %v3686
    %v4296 = vpack.c.b16 %v3689, %v3688
    %v4297 = vpack.c.b16 %v3691, %v3690
    %v4298 = vpack.c.b16 %v3693, %v3692
    %v4299 = vpack.c.b16 %v3695, %v3694
    %v4300 = vpack.c.b16 %v3697, %v3696
    %v4301 = vpack.c.b16 %v3699, %v3698
    %v4302 = vpack.c.b16 %v3701, %v3700
    %v4303 = vpack.c.b16 %v3703, %v3702
    %v4304 = vpack.c.b16 %v3705, %v3704
    %v4305 = vpack.c.b16 %v3707, %v3706
    %v4306 = vpack.c.b16 %v3709, %v3708
    %v4307 = vpack.c.b16 %v3711, %v3710
    %v4308 = vpack.c.b16 %v3713, %v3712
    %v4309 = vpack.c.b16 %v3715, %v3714
    %v4310 = vpack.c.b16 %v3717, %v3716
    %v4311 = vpack.c.b16 %v3719, %v3718
    %v4312 = vpack.c.b16 %v3721, %v3720
    %v4313 = vpack.c.b16 %v3723, %v3722
    %v4314 = vpack.c.b16 %v3725, %v3724
    %v4315 = vpack.c.b16 %v3727, %v3726
    %v4316 = vpack.c.b16 %v3729, %v3728
    %v4317 = vpack.c.b16 %v3731, %v3730
    %v4318 = vpack.c.b16 %v3733, %v3732
    %v4319 = vpack.c.b16 %v3735, %v3734
    %v4320 = vpack.c.b16 %v3737, %v3736
    %v4321 = vpack.c.b16 %v3739, %v3738
    %v4322 = vpack.c.b16 %v3741, %v3740
    %v4323 = vpack.c.b16 %v3743, %v3742
    %v4324 = vpack.c.b16 %v3745, %v3744
    %v4325 = vpack.c.b16 %v3747, %v3746
    %v4326 = vpack.c.b16 %v3749, %v3748
    %v4327 = vpack.c.b16 %v3751, %v3750
    %4904 = vmatpush.bf16.msra.mxu0 %v3759
    %4905 = vmatpush.bf16.msra.mxu0 %v3758
    %4906 = vmatpush.bf16.msra.mxu0 %v3757
    %4907 = vmatpush.bf16.msra.mxu0 %v3756
    %4908 = vmatpush.bf16.msra.mxu0 %v3755
    %4909 = vmatpush.bf16.msra.mxu0 %v3754
    %4910 = vmatpush.bf16.msra.mxu0 %v3753
    %4911 = vmatpush.bf16.msra.mxu0 %v3752
    %4912 = vmatmul.bf16.gmra.mxu0 %v220
    %v4913 = vpop.f32.mrf.mxu0
    %v4914 = vadd.f32 %v1446, %v4913
    %v4915 = vpop.f32.mrf.mxu0
    %4916 = vdwg.mxu0
    %4917 = vmatpush.bf16.msra.mxu0 %v3767
    %4918 = vmatpush.bf16.msra.mxu0 %v3766
    %4919 = vmatpush.bf16.msra.mxu0 %v3765
    %4920 = vmatpush.bf16.msra.mxu0 %v3764
    %4921 = vmatpush.bf16.msra.mxu0 %v3763
    %4922 = vmatpush.bf16.msra.mxu0 %v3762
    %4923 = vmatpush.bf16.msra.mxu0 %v3761
    %4924 = vmatpush.bf16.msra.mxu0 %v3760
    %4925 = vmatmul.bf16.gmra.mxu0 %v221
    %v4926 = vpop.f32.mrf.mxu0
    %v4927 = vadd.f32 %v4914, %v4926
    %v4928 = vpop.f32.mrf.mxu0
    %4929 = vdwg.mxu0
    %4930 = vmatpush.bf16.msra.mxu0 %v3775
    %4931 = vmatpush.bf16.msra.mxu0 %v3774
    %4932 = vmatpush.bf16.msra.mxu0 %v3773
    %4933 = vmatpush.bf16.msra.mxu0 %v3772
    %4934 = vmatpush.bf16.msra.mxu0 %v3771
    %4935 = vmatpush.bf16.msra.mxu0 %v3770
    %4936 = vmatpush.bf16.msra.mxu0 %v3769
    %4937 = vmatpush.bf16.msra.mxu0 %v3768
    %4938 = vmatmul.bf16.gmra.mxu0 %v222
    %v4939 = vpop.f32.mrf.mxu0
    %v4940 = vadd.f32 %v4927, %v4939
    %v4941 = vpop.f32.mrf.mxu0
    %4942 = vdwg.mxu0
    %4943 = vmatpush.bf16.msra.mxu0 %v3783
    %4944 = vmatpush.bf16.msra.mxu0 %v3782
    %4945 = vmatpush.bf16.msra.mxu0 %v3781
    %4946 = vmatpush.bf16.msra.mxu0 %v3780
    %4947 = vmatpush.bf16.msra.mxu0 %v3779
    %4948 = vmatpush.bf16.msra.mxu0 %v3778
    %4949 = vmatpush.bf16.msra.mxu0 %v3777
    %4950 = vmatpush.bf16.msra.mxu0 %v3776
    %4951 = vmatmul.bf16.gmra.mxu0 %v223
    %v4952 = vpop.f32.mrf.mxu0
    %v4953 = vadd.f32 %v4940, %v4952
    %v4954 = vpop.f32.mrf.mxu0
    %4955 = vdwg.mxu0
    %4956 = vmatpush.bf16.msra.mxu0 %v3791
    %4957 = vmatpush.bf16.msra.mxu0 %v3790
    %4958 = vmatpush.bf16.msra.mxu0 %v3789
    %4959 = vmatpush.bf16.msra.mxu0 %v3788
    %4960 = vmatpush.bf16.msra.mxu0 %v3787
    %4961 = vmatpush.bf16.msra.mxu0 %v3786
    %4962 = vmatpush.bf16.msra.mxu0 %v3785
    %4963 = vmatpush.bf16.msra.mxu0 %v3784
    %4964 = vmatmul.bf16.gmra.mxu0 %v224
    %v4965 = vpop.f32.mrf.mxu0
    %v4966 = vadd.f32 %v4953, %v4965
    %v4967 = vpop.f32.mrf.mxu0
    %4968 = vdwg.mxu0
    %4969 = vmatpush.bf16.msra.mxu0 %v3799
    %4970 = vmatpush.bf16.msra.mxu0 %v3798
    %4971 = vmatpush.bf16.msra.mxu0 %v3797
    %4972 = vmatpush.bf16.msra.mxu0 %v3796
    %4973 = vmatpush.bf16.msra.mxu0 %v3795
    %4974 = vmatpush.bf16.msra.mxu0 %v3794
    %4975 = vmatpush.bf16.msra.mxu0 %v3793
    %4976 = vmatpush.bf16.msra.mxu0 %v3792
    %4977 = vmatmul.bf16.gmra.mxu0 %v225
    %v4978 = vpop.f32.mrf.mxu0
    %v4979 = vadd.f32 %v4966, %v4978
    %v4980 = vpop.f32.mrf.mxu0
    %4981 = vdwg.mxu0
    %4982 = vmatpush.bf16.msra.mxu0 %v3807
    %4983 = vmatpush.bf16.msra.mxu0 %v3806
    %4984 = vmatpush.bf16.msra.mxu0 %v3805
    %4985 = vmatpush.bf16.msra.mxu0 %v3804
    %4986 = vmatpush.bf16.msra.mxu0 %v3803
    %4987 = vmatpush.bf16.msra.mxu0 %v3802
    %4988 = vmatpush.bf16.msra.mxu0 %v3801
    %4989 = vmatpush.bf16.msra.mxu0 %v3800
    %4990 = vmatmul.bf16.gmra.mxu0 %v226
    %v4991 = vpop.f32.mrf.mxu0
    %v4992 = vadd.f32 %v4979, %v4991
    %v4993 = vpop.f32.mrf.mxu0
    %4994 = vdwg.mxu0
    %4995 = vmatpush.bf16.msra.mxu0 %v3815
    %4996 = vmatpush.bf16.msra.mxu0 %v3814
    %4997 = vmatpush.bf16.msra.mxu0 %v3813
    %4998 = vmatpush.bf16.msra.mxu0 %v3812
    %4999 = vmatpush.bf16.msra.mxu0 %v3811
    %5000 = vmatpush.bf16.msra.mxu0 %v3810
    %5001 = vmatpush.bf16.msra.mxu0 %v3809
    %5002 = vmatpush.bf16.msra.mxu0 %v3808
    %5003 = vmatmul.bf16.gmra.mxu0 %v227
    %v5004 = vpop.f32.mrf.mxu0
    %v5005 = vadd.f32 %v4992, %v5004
    %v5006 = vpop.f32.mrf.mxu0
    %5007 = vdwg.mxu0
    %5008 = vmatpush.bf16.msra.mxu0 %v3823
    %5009 = vmatpush.bf16.msra.mxu0 %v3822
    %5010 = vmatpush.bf16.msra.mxu0 %v3821
    %5011 = vmatpush.bf16.msra.mxu0 %v3820
    %5012 = vmatpush.bf16.msra.mxu0 %v3819
    %5013 = vmatpush.bf16.msra.mxu0 %v3818
    %5014 = vmatpush.bf16.msra.mxu0 %v3817
    %5015 = vmatpush.bf16.msra.mxu0 %v3816
    %5016 = vmatmul.bf16.gmra.mxu0 %v228
    %v5017 = vpop.f32.mrf.mxu0
    %v5018 = vadd.f32 %v5005, %v5017
    %v5019 = vpop.f32.mrf.mxu0
    %5020 = vdwg.mxu0
    %5021 = vmatpush.bf16.msra.mxu0 %v3831
    %5022 = vmatpush.bf16.msra.mxu0 %v3830
    %5023 = vmatpush.bf16.msra.mxu0 %v3829
    %5024 = vmatpush.bf16.msra.mxu0 %v3828
    %5025 = vmatpush.bf16.msra.mxu0 %v3827
    %5026 = vmatpush.bf16.msra.mxu0 %v3826
    %5027 = vmatpush.bf16.msra.mxu0 %v3825
    %5028 = vmatpush.bf16.msra.mxu0 %v3824
    %5029 = vmatmul.bf16.gmra.mxu0 %v229
    %v5030 = vpop.f32.mrf.mxu0
    %v5031 = vadd.f32 %v5018, %v5030
    %v5032 = vpop.f32.mrf.mxu0
    %5033 = vdwg.mxu0
    %5034 = vmatpush.bf16.msra.mxu0 %v3839
    %5035 = vmatpush.bf16.msra.mxu0 %v3838
    %5036 = vmatpush.bf16.msra.mxu0 %v3837
    %5037 = vmatpush.bf16.msra.mxu0 %v3836
    %5038 = vmatpush.bf16.msra.mxu0 %v3835
    %5039 = vmatpush.bf16.msra.mxu0 %v3834
    %5040 = vmatpush.bf16.msra.mxu0 %v3833
    %5041 = vmatpush.bf16.msra.mxu0 %v3832
    %5042 = vmatmul.bf16.gmra.mxu0 %v230
    %v5043 = vpop.f32.mrf.mxu0
    %v5044 = vadd.f32 %v5031, %v5043
    %v5045 = vpop.f32.mrf.mxu0
    %5046 = vdwg.mxu0
    %5047 = vmatpush.bf16.msra.mxu0 %v3847
    %5048 = vmatpush.bf16.msra.mxu0 %v3846
    %5049 = vmatpush.bf16.msra.mxu0 %v3845
    %5050 = vmatpush.bf16.msra.mxu0 %v3844
    %5051 = vmatpush.bf16.msra.mxu0 %v3843
    %5052 = vmatpush.bf16.msra.mxu0 %v3842
    %5053 = vmatpush.bf16.msra.mxu0 %v3841
    %5054 = vmatpush.bf16.msra.mxu0 %v3840
    %5055 = vmatmul.bf16.gmra.mxu0 %v231
    %v5056 = vpop.f32.mrf.mxu0
    %v5057 = vadd.f32 %v5044, %v5056
    %v5058 = vpop.f32.mrf.mxu0
    %5059 = vdwg.mxu0
    %5060 = vmatpush.bf16.msra.mxu0 %v3855
    %5061 = vmatpush.bf16.msra.mxu0 %v3854
    %5062 = vmatpush.bf16.msra.mxu0 %v3853
    %5063 = vmatpush.bf16.msra.mxu0 %v3852
    %5064 = vmatpush.bf16.msra.mxu0 %v3851
    %5065 = vmatpush.bf16.msra.mxu0 %v3850
    %5066 = vmatpush.bf16.msra.mxu0 %v3849
    %5067 = vmatpush.bf16.msra.mxu0 %v3848
    %5068 = vmatmul.bf16.gmra.mxu0 %v232
    %v5069 = vpop.f32.mrf.mxu0
    %v5070 = vadd.f32 %v5057, %v5069
    %v5071 = vpop.f32.mrf.mxu0
    %5072 = vdwg.mxu0
    %5073 = vmatpush.bf16.msra.mxu0 %v3863
    %5074 = vmatpush.bf16.msra.mxu0 %v3862
    %5075 = vmatpush.bf16.msra.mxu0 %v3861
    %5076 = vmatpush.bf16.msra.mxu0 %v3860
    %5077 = vmatpush.bf16.msra.mxu0 %v3859
    %5078 = vmatpush.bf16.msra.mxu0 %v3858
    %5079 = vmatpush.bf16.msra.mxu0 %v3857
    %5080 = vmatpush.bf16.msra.mxu0 %v3856
    %5081 = vmatmul.bf16.gmra.mxu0 %v233
    %v5082 = vpop.f32.mrf.mxu0
    %v5083 = vadd.f32 %v5070, %v5082
    %v5084 = vpop.f32.mrf.mxu0
    %5085 = vdwg.mxu0
    %5086 = vmatpush.bf16.msra.mxu0 %v3871
    %5087 = vmatpush.bf16.msra.mxu0 %v3870
    %5088 = vmatpush.bf16.msra.mxu0 %v3869
    %5089 = vmatpush.bf16.msra.mxu0 %v3868
    %5090 = vmatpush.bf16.msra.mxu0 %v3867
    %5091 = vmatpush.bf16.msra.mxu0 %v3866
    %5092 = vmatpush.bf16.msra.mxu0 %v3865
    %5093 = vmatpush.bf16.msra.mxu0 %v3864
    %5094 = vmatmul.bf16.gmra.mxu0 %v234
    %v5095 = vpop.f32.mrf.mxu0
    %v5096 = vadd.f32 %v5083, %v5095
    %v5097 = vpop.f32.mrf.mxu0
    %5098 = vdwg.mxu0
    %5099 = vmatpush.bf16.msra.mxu0 %v3879
    %5100 = vmatpush.bf16.msra.mxu0 %v3878
    %5101 = vmatpush.bf16.msra.mxu0 %v3877
    %5102 = vmatpush.bf16.msra.mxu0 %v3876
    %5103 = vmatpush.bf16.msra.mxu0 %v3875
    %5104 = vmatpush.bf16.msra.mxu0 %v3874
    %5105 = vmatpush.bf16.msra.mxu0 %v3873
    %5106 = vmatpush.bf16.msra.mxu0 %v3872
    %5107 = vmatmul.bf16.gmra.mxu0 %v235
    %v5108 = vpop.f32.mrf.mxu0
    %v5109 = vadd.f32 %v5096, %v5108
    %v5110 = vpop.f32.mrf.mxu0
    %5111 = vdwg.mxu0
    %5112 = vmatpush.bf16.msra.mxu0 %v3887
    %5113 = vmatpush.bf16.msra.mxu0 %v3886
    %5114 = vmatpush.bf16.msra.mxu0 %v3885
    %5115 = vmatpush.bf16.msra.mxu0 %v3884
    %5116 = vmatpush.bf16.msra.mxu0 %v3883
    %5117 = vmatpush.bf16.msra.mxu0 %v3882
    %5118 = vmatpush.bf16.msra.mxu0 %v3881
    %5119 = vmatpush.bf16.msra.mxu0 %v3880
    %5120 = vmatmul.bf16.gmra.mxu0 %v236
    %v5121 = vpop.f32.mrf.mxu0
    %v5122 = vadd.f32 %v5109, %v5121
    %v5123 = vpop.f32.mrf.mxu0
    %5124 = vdwg.mxu0
    %5125 = vmatpush.bf16.msra.mxu0 %v3895
    %5126 = vmatpush.bf16.msra.mxu0 %v3894
    %5127 = vmatpush.bf16.msra.mxu0 %v3893
    %5128 = vmatpush.bf16.msra.mxu0 %v3892
    %5129 = vmatpush.bf16.msra.mxu0 %v3891
    %5130 = vmatpush.bf16.msra.mxu0 %v3890
    %5131 = vmatpush.bf16.msra.mxu0 %v3889
    %5132 = vmatpush.bf16.msra.mxu0 %v3888
    %5133 = vmatmul.bf16.gmra.mxu0 %v237
    %v5134 = vpop.f32.mrf.mxu0
    %v5135 = vadd.f32 %v5122, %v5134
    %v5136 = vpop.f32.mrf.mxu0
    %5137 = vdwg.mxu0
    %5138 = vmatpush.bf16.msra.mxu0 %v3903
    %5139 = vmatpush.bf16.msra.mxu0 %v3902
    %5140 = vmatpush.bf16.msra.mxu0 %v3901
    %5141 = vmatpush.bf16.msra.mxu0 %v3900
    %5142 = vmatpush.bf16.msra.mxu0 %v3899
    %5143 = vmatpush.bf16.msra.mxu0 %v3898
    %5144 = vmatpush.bf16.msra.mxu0 %v3897
    %5145 = vmatpush.bf16.msra.mxu0 %v3896
    %5146 = vmatmul.bf16.gmra.mxu0 %v238
    %v5147 = vpop.f32.mrf.mxu0
    %v5148 = vadd.f32 %v5135, %v5147
    %v5149 = vpop.f32.mrf.mxu0
    %5150 = vdwg.mxu0
    %5151 = vmatpush.bf16.msra.mxu0 %v3911
    %5152 = vmatpush.bf16.msra.mxu0 %v3910
    %5153 = vmatpush.bf16.msra.mxu0 %v3909
    %5154 = vmatpush.bf16.msra.mxu0 %v3908
    %5155 = vmatpush.bf16.msra.mxu0 %v3907
    %5156 = vmatpush.bf16.msra.mxu0 %v3906
    %5157 = vmatpush.bf16.msra.mxu0 %v3905
    %5158 = vmatpush.bf16.msra.mxu0 %v3904
    %5159 = vmatmul.bf16.gmra.mxu0 %v239
    %v5160 = vpop.f32.mrf.mxu0
    %v5161 = vadd.f32 %v5148, %v5160
    %v5162 = vpop.f32.mrf.mxu0
    %5163 = vdwg.mxu0
    %5164 = vmatpush.bf16.msra.mxu0 %v3919
    %5165 = vmatpush.bf16.msra.mxu0 %v3918
    %5166 = vmatpush.bf16.msra.mxu0 %v3917
    %5167 = vmatpush.bf16.msra.mxu0 %v3916
    %5168 = vmatpush.bf16.msra.mxu0 %v3915
    %5169 = vmatpush.bf16.msra.mxu0 %v3914
    %5170 = vmatpush.bf16.msra.mxu0 %v3913
    %5171 = vmatpush.bf16.msra.mxu0 %v3912
    %5172 = vmatmul.bf16.gmra.mxu0 %v240
    %v5173 = vpop.f32.mrf.mxu0
    %v5174 = vadd.f32 %v5161, %v5173
    %v5175 = vpop.f32.mrf.mxu0
    %5176 = vdwg.mxu0
    %5177 = vmatpush.bf16.msra.mxu0 %v3927
    %5178 = vmatpush.bf16.msra.mxu0 %v3926
    %5179 = vmatpush.bf16.msra.mxu0 %v3925
    %5180 = vmatpush.bf16.msra.mxu0 %v3924
    %5181 = vmatpush.bf16.msra.mxu0 %v3923
    %5182 = vmatpush.bf16.msra.mxu0 %v3922
    %5183 = vmatpush.bf16.msra.mxu0 %v3921
    %5184 = vmatpush.bf16.msra.mxu0 %v3920
    %5185 = vmatmul.bf16.gmra.mxu0 %v241
    %v5186 = vpop.f32.mrf.mxu0
    %v5187 = vadd.f32 %v5174, %v5186
    %v5188 = vpop.f32.mrf.mxu0
    %5189 = vdwg.mxu0
    %5190 = vmatpush.bf16.msra.mxu0 %v3935
    %5191 = vmatpush.bf16.msra.mxu0 %v3934
    %5192 = vmatpush.bf16.msra.mxu0 %v3933
    %5193 = vmatpush.bf16.msra.mxu0 %v3932
    %5194 = vmatpush.bf16.msra.mxu0 %v3931
    %5195 = vmatpush.bf16.msra.mxu0 %v3930
    %5196 = vmatpush.bf16.msra.mxu0 %v3929
    %5197 = vmatpush.bf16.msra.mxu0 %v3928
    %5198 = vmatmul.bf16.gmra.mxu0 %v242
    %v5199 = vpop.f32.mrf.mxu0
    %v5200 = vadd.f32 %v5187, %v5199
    %v5201 = vpop.f32.mrf.mxu0
    %5202 = vdwg.mxu0
    %5203 = vmatpush.bf16.msra.mxu0 %v3943
    %5204 = vmatpush.bf16.msra.mxu0 %v3942
    %5205 = vmatpush.bf16.msra.mxu0 %v3941
    %5206 = vmatpush.bf16.msra.mxu0 %v3940
    %5207 = vmatpush.bf16.msra.mxu0 %v3939
    %5208 = vmatpush.bf16.msra.mxu0 %v3938
    %5209 = vmatpush.bf16.msra.mxu0 %v3937
    %5210 = vmatpush.bf16.msra.mxu0 %v3936
    %5211 = vmatmul.bf16.gmra.mxu0 %v243
    %v5212 = vpop.f32.mrf.mxu0
    %v5213 = vadd.f32 %v5200, %v5212
    %v5214 = vpop.f32.mrf.mxu0
    %5215 = vdwg.mxu0
    %5216 = vmatpush.bf16.msra.mxu0 %v3951
    %5217 = vmatpush.bf16.msra.mxu0 %v3950
    %5218 = vmatpush.bf16.msra.mxu0 %v3949
    %5219 = vmatpush.bf16.msra.mxu0 %v3948
    %5220 = vmatpush.bf16.msra.mxu0 %v3947
    %5221 = vmatpush.bf16.msra.mxu0 %v3946
    %5222 = vmatpush.bf16.msra.mxu0 %v3945
    %5223 = vmatpush.bf16.msra.mxu0 %v3944
    %5224 = vmatmul.bf16.gmra.mxu0 %v244
    %v5225 = vpop.f32.mrf.mxu0
    %v5226 = vadd.f32 %v5213, %v5225
    %v5227 = vpop.f32.mrf.mxu0
    %5228 = vdwg.mxu0
    %5229 = vmatpush.bf16.msra.mxu0 %v3959
    %5230 = vmatpush.bf16.msra.mxu0 %v3958
    %5231 = vmatpush.bf16.msra.mxu0 %v3957
    %5232 = vmatpush.bf16.msra.mxu0 %v3956
    %5233 = vmatpush.bf16.msra.mxu0 %v3955
    %5234 = vmatpush.bf16.msra.mxu0 %v3954
    %5235 = vmatpush.bf16.msra.mxu0 %v3953
    %5236 = vmatpush.bf16.msra.mxu0 %v3952
    %5237 = vmatmul.bf16.gmra.mxu0 %v245
    %v5238 = vpop.f32.mrf.mxu0
    %v5239 = vadd.f32 %v5226, %v5238
    %v5240 = vpop.f32.mrf.mxu0
    %5241 = vdwg.mxu0
    %5242 = vmatpush.bf16.msra.mxu0 %v3967
    %5243 = vmatpush.bf16.msra.mxu0 %v3966
    %5244 = vmatpush.bf16.msra.mxu0 %v3965
    %5245 = vmatpush.bf16.msra.mxu0 %v3964
    %5246 = vmatpush.bf16.msra.mxu0 %v3963
    %5247 = vmatpush.bf16.msra.mxu0 %v3962
    %5248 = vmatpush.bf16.msra.mxu0 %v3961
    %5249 = vmatpush.bf16.msra.mxu0 %v3960
    %5250 = vmatmul.bf16.gmra.mxu0 %v246
    %v5251 = vpop.f32.mrf.mxu0
    %v5252 = vadd.f32 %v5239, %v5251
    %v5253 = vpop.f32.mrf.mxu0
    %5254 = vdwg.mxu0
    %5255 = vmatpush.bf16.msra.mxu0 %v3975
    %5256 = vmatpush.bf16.msra.mxu0 %v3974
    %5257 = vmatpush.bf16.msra.mxu0 %v3973
    %5258 = vmatpush.bf16.msra.mxu0 %v3972
    %5259 = vmatpush.bf16.msra.mxu0 %v3971
    %5260 = vmatpush.bf16.msra.mxu0 %v3970
    %5261 = vmatpush.bf16.msra.mxu0 %v3969
    %5262 = vmatpush.bf16.msra.mxu0 %v3968
    %5263 = vmatmul.bf16.gmra.mxu0 %v247
    %v5264 = vpop.f32.mrf.mxu0
    %v5265 = vadd.f32 %v5252, %v5264
    %v5266 = vpop.f32.mrf.mxu0
    %5267 = vdwg.mxu0
    %5268 = vmatpush.bf16.msra.mxu0 %v3983
    %5269 = vmatpush.bf16.msra.mxu0 %v3982
    %5270 = vmatpush.bf16.msra.mxu0 %v3981
    %5271 = vmatpush.bf16.msra.mxu0 %v3980
    %5272 = vmatpush.bf16.msra.mxu0 %v3979
    %5273 = vmatpush.bf16.msra.mxu0 %v3978
    %5274 = vmatpush.bf16.msra.mxu0 %v3977
    %5275 = vmatpush.bf16.msra.mxu0 %v3976
    %5276 = vmatmul.bf16.gmra.mxu0 %v248
    %v5277 = vpop.f32.mrf.mxu0
    %v5278 = vadd.f32 %v5265, %v5277
    %v5279 = vpop.f32.mrf.mxu0
    %5280 = vdwg.mxu0
    %5281 = vmatpush.bf16.msra.mxu0 %v3991
    %5282 = vmatpush.bf16.msra.mxu0 %v3990
    %5283 = vmatpush.bf16.msra.mxu0 %v3989
    %5284 = vmatpush.bf16.msra.mxu0 %v3988
    %5285 = vmatpush.bf16.msra.mxu0 %v3987
    %5286 = vmatpush.bf16.msra.mxu0 %v3986
    %5287 = vmatpush.bf16.msra.mxu0 %v3985
    %5288 = vmatpush.bf16.msra.mxu0 %v3984
    %5289 = vmatmul.bf16.gmra.mxu0 %v249
    %v5290 = vpop.f32.mrf.mxu0
    %v5291 = vadd.f32 %v5278, %v5290
    %v5292 = vpop.f32.mrf.mxu0
    %5293 = vdwg.mxu0
    %5294 = vmatpush.bf16.msra.mxu0 %v3999
    %5295 = vmatpush.bf16.msra.mxu0 %v3998
    %5296 = vmatpush.bf16.msra.mxu0 %v3997
    %5297 = vmatpush.bf16.msra.mxu0 %v3996
    %5298 = vmatpush.bf16.msra.mxu0 %v3995
    %5299 = vmatpush.bf16.msra.mxu0 %v3994
    %5300 = vmatpush.bf16.msra.mxu0 %v3993
    %5301 = vmatpush.bf16.msra.mxu0 %v3992
    %5302 = vmatmul.bf16.gmra.mxu0 %v250
    %v5303 = vpop.f32.mrf.mxu0
    %v5304 = vadd.f32 %v5291, %v5303
    %v5305 = vpop.f32.mrf.mxu0
    %5306 = vdwg.mxu0
    %5307 = vmatpush.bf16.msra.mxu0 %v4007
    %5308 = vmatpush.bf16.msra.mxu0 %v4006
    %5309 = vmatpush.bf16.msra.mxu0 %v4005
    %5310 = vmatpush.bf16.msra.mxu0 %v4004
    %5311 = vmatpush.bf16.msra.mxu0 %v4003
    %5312 = vmatpush.bf16.msra.mxu0 %v4002
    %5313 = vmatpush.bf16.msra.mxu0 %v4001
    %5314 = vmatpush.bf16.msra.mxu0 %v4000
    %5315 = vmatmul.bf16.gmra.mxu0 %v251
    %v5316 = vpop.f32.mrf.mxu0
    %v5317 = vadd.f32 %v5304, %v5316
    %v5318 = vpop.f32.mrf.mxu0
    %5319 = vdwg.mxu0
    %5320 = vmatpush.bf16.msra.mxu0 %v4015
    %5321 = vmatpush.bf16.msra.mxu0 %v4014
    %5322 = vmatpush.bf16.msra.mxu0 %v4013
    %5323 = vmatpush.bf16.msra.mxu0 %v4012
    %5324 = vmatpush.bf16.msra.mxu0 %v4011
    %5325 = vmatpush.bf16.msra.mxu0 %v4010
    %5326 = vmatpush.bf16.msra.mxu0 %v4009
    %5327 = vmatpush.bf16.msra.mxu0 %v4008
    %5328 = vmatmul.bf16.gmra.mxu0 %v252
    %v5329 = vpop.f32.mrf.mxu0
    %v5330 = vadd.f32 %v5317, %v5329
    %v5331 = vpop.f32.mrf.mxu0
    %5332 = vdwg.mxu0
    %5333 = vmatpush.bf16.msra.mxu0 %v4023
    %5334 = vmatpush.bf16.msra.mxu0 %v4022
    %5335 = vmatpush.bf16.msra.mxu0 %v4021
    %5336 = vmatpush.bf16.msra.mxu0 %v4020
    %5337 = vmatpush.bf16.msra.mxu0 %v4019
    %5338 = vmatpush.bf16.msra.mxu0 %v4018
    %5339 = vmatpush.bf16.msra.mxu0 %v4017
    %5340 = vmatpush.bf16.msra.mxu0 %v4016
    %5341 = vmatmul.bf16.gmra.mxu0 %v253
    %v5342 = vpop.f32.mrf.mxu0
    %v5343 = vadd.f32 %v5330, %v5342
    %v5344 = vpop.f32.mrf.mxu0
    %5345 = vdwg.mxu0
    %5346 = vmatpush.bf16.msra.mxu0 %v4031
    %5347 = vmatpush.bf16.msra.mxu0 %v4030
    %5348 = vmatpush.bf16.msra.mxu0 %v4029
    %5349 = vmatpush.bf16.msra.mxu0 %v4028
    %5350 = vmatpush.bf16.msra.mxu0 %v4027
    %5351 = vmatpush.bf16.msra.mxu0 %v4026
    %5352 = vmatpush.bf16.msra.mxu0 %v4025
    %5353 = vmatpush.bf16.msra.mxu0 %v4024
    %5354 = vmatmul.bf16.gmra.mxu0 %v254
    %v5355 = vpop.f32.mrf.mxu0
    %v5356 = vadd.f32 %v5343, %v5355
    %v5357 = vpop.f32.mrf.mxu0
    %5358 = vdwg.mxu0
    %5359 = vmatpush.bf16.msra.mxu0 %v4039
    %5360 = vmatpush.bf16.msra.mxu0 %v4038
    %5361 = vmatpush.bf16.msra.mxu0 %v4037
    %5362 = vmatpush.bf16.msra.mxu0 %v4036
    %5363 = vmatpush.bf16.msra.mxu0 %v4035
    %5364 = vmatpush.bf16.msra.mxu0 %v4034
    %5365 = vmatpush.bf16.msra.mxu0 %v4033
    %5366 = vmatpush.bf16.msra.mxu0 %v4032
    %5367 = vmatmul.bf16.gmra.mxu0 %v255
    %v5368 = vpop.f32.mrf.mxu0
    %v5369 = vadd.f32 %v5356, %v5368
    %v5370 = vpop.f32.mrf.mxu0
    %5371 = vdwg.mxu0
    %5372 = vmatpush.bf16.msra.mxu0 %v4047
    %5373 = vmatpush.bf16.msra.mxu0 %v4046
    %5374 = vmatpush.bf16.msra.mxu0 %v4045
    %5375 = vmatpush.bf16.msra.mxu0 %v4044
    %5376 = vmatpush.bf16.msra.mxu0 %v4043
    %5377 = vmatpush.bf16.msra.mxu0 %v4042
    %5378 = vmatpush.bf16.msra.mxu0 %v4041
    %5379 = vmatpush.bf16.msra.mxu0 %v4040
    %5380 = vmatmul.bf16.gmra.mxu0 %v256
    %v5381 = vpop.f32.mrf.mxu0
    %v5382 = vadd.f32 %v5369, %v5381
    %v5383 = vpop.f32.mrf.mxu0
    %5384 = vdwg.mxu0
    %5385 = vmatpush.bf16.msra.mxu0 %v4055
    %5386 = vmatpush.bf16.msra.mxu0 %v4054
    %5387 = vmatpush.bf16.msra.mxu0 %v4053
    %5388 = vmatpush.bf16.msra.mxu0 %v4052
    %5389 = vmatpush.bf16.msra.mxu0 %v4051
    %5390 = vmatpush.bf16.msra.mxu0 %v4050
    %5391 = vmatpush.bf16.msra.mxu0 %v4049
    %5392 = vmatpush.bf16.msra.mxu0 %v4048
    %5393 = vmatmul.bf16.gmra.mxu0 %v257
    %v5394 = vpop.f32.mrf.mxu0
    %v5395 = vadd.f32 %v5382, %v5394
    %v5396 = vpop.f32.mrf.mxu0
    %5397 = vdwg.mxu0
    %5398 = vmatpush.bf16.msra.mxu0 %v4063
    %5399 = vmatpush.bf16.msra.mxu0 %v4062
    %5400 = vmatpush.bf16.msra.mxu0 %v4061
    %5401 = vmatpush.bf16.msra.mxu0 %v4060
    %5402 = vmatpush.bf16.msra.mxu0 %v4059
    %5403 = vmatpush.bf16.msra.mxu0 %v4058
    %5404 = vmatpush.bf16.msra.mxu0 %v4057
    %5405 = vmatpush.bf16.msra.mxu0 %v4056
    %5406 = vmatmul.bf16.gmra.mxu0 %v258
    %v5407 = vpop.f32.mrf.mxu0
    %v5408 = vadd.f32 %v5395, %v5407
    %v5409 = vpop.f32.mrf.mxu0
    %5410 = vdwg.mxu0
    %5411 = vmatpush.bf16.msra.mxu0 %v4071
    %5412 = vmatpush.bf16.msra.mxu0 %v4070
    %5413 = vmatpush.bf16.msra.mxu0 %v4069
    %5414 = vmatpush.bf16.msra.mxu0 %v4068
    %5415 = vmatpush.bf16.msra.mxu0 %v4067
    %5416 = vmatpush.bf16.msra.mxu0 %v4066
    %5417 = vmatpush.bf16.msra.mxu0 %v4065
    %5418 = vmatpush.bf16.msra.mxu0 %v4064
    %5419 = vmatmul.bf16.gmra.mxu0 %v259
    %v5420 = vpop.f32.mrf.mxu0
    %v5421 = vadd.f32 %v5408, %v5420
    %v5422 = vpop.f32.mrf.mxu0
    %5423 = vdwg.mxu0
    %5424 = vmatpush.bf16.msra.mxu0 %v4079
    %5425 = vmatpush.bf16.msra.mxu0 %v4078
    %5426 = vmatpush.bf16.msra.mxu0 %v4077
    %5427 = vmatpush.bf16.msra.mxu0 %v4076
    %5428 = vmatpush.bf16.msra.mxu0 %v4075
    %5429 = vmatpush.bf16.msra.mxu0 %v4074
    %5430 = vmatpush.bf16.msra.mxu0 %v4073
    %5431 = vmatpush.bf16.msra.mxu0 %v4072
    %5432 = vmatmul.bf16.gmra.mxu0 %v260
    %v5433 = vpop.f32.mrf.mxu0
    %v5434 = vadd.f32 %v5421, %v5433
    %v5435 = vpop.f32.mrf.mxu0
    %5436 = vdwg.mxu0
    %5437 = vmatpush.bf16.msra.mxu0 %v4087
    %5438 = vmatpush.bf16.msra.mxu0 %v4086
    %5439 = vmatpush.bf16.msra.mxu0 %v4085
    %5440 = vmatpush.bf16.msra.mxu0 %v4084
    %5441 = vmatpush.bf16.msra.mxu0 %v4083
    %5442 = vmatpush.bf16.msra.mxu0 %v4082
    %5443 = vmatpush.bf16.msra.mxu0 %v4081
    %5444 = vmatpush.bf16.msra.mxu0 %v4080
    %5445 = vmatmul.bf16.gmra.mxu0 %v261
    %v5446 = vpop.f32.mrf.mxu0
    %v5447 = vadd.f32 %v5434, %v5446
    %v5448 = vpop.f32.mrf.mxu0
    %5449 = vdwg.mxu0
    %5450 = vmatpush.bf16.msra.mxu0 %v4095
    %5451 = vmatpush.bf16.msra.mxu0 %v4094
    %5452 = vmatpush.bf16.msra.mxu0 %v4093
    %5453 = vmatpush.bf16.msra.mxu0 %v4092
    %5454 = vmatpush.bf16.msra.mxu0 %v4091
    %5455 = vmatpush.bf16.msra.mxu0 %v4090
    %5456 = vmatpush.bf16.msra.mxu0 %v4089
    %5457 = vmatpush.bf16.msra.mxu0 %v4088
    %5458 = vmatmul.bf16.gmra.mxu0 %v262
    %v5459 = vpop.f32.mrf.mxu0
    %v5460 = vadd.f32 %v5447, %v5459
    %v5461 = vpop.f32.mrf.mxu0
    %5462 = vdwg.mxu0
    %5463 = vmatpush.bf16.msra.mxu0 %v4103
    %5464 = vmatpush.bf16.msra.mxu0 %v4102
    %5465 = vmatpush.bf16.msra.mxu0 %v4101
    %5466 = vmatpush.bf16.msra.mxu0 %v4100
    %5467 = vmatpush.bf16.msra.mxu0 %v4099
    %5468 = vmatpush.bf16.msra.mxu0 %v4098
    %5469 = vmatpush.bf16.msra.mxu0 %v4097
    %5470 = vmatpush.bf16.msra.mxu0 %v4096
    %5471 = vmatmul.bf16.gmra.mxu0 %v263
    %v5472 = vpop.f32.mrf.mxu0
    %v5473 = vadd.f32 %v5460, %v5472
    %v5474 = vpop.f32.mrf.mxu0
    %5475 = vdwg.mxu0
    %5476 = vmatpush.bf16.msra.mxu0 %v4111
    %5477 = vmatpush.bf16.msra.mxu0 %v4110
    %5478 = vmatpush.bf16.msra.mxu0 %v4109
    %5479 = vmatpush.bf16.msra.mxu0 %v4108
    %5480 = vmatpush.bf16.msra.mxu0 %v4107
    %5481 = vmatpush.bf16.msra.mxu0 %v4106
    %5482 = vmatpush.bf16.msra.mxu0 %v4105
    %5483 = vmatpush.bf16.msra.mxu0 %v4104
    %5484 = vmatmul.bf16.gmra.mxu0 %v264
    %v5485 = vpop.f32.mrf.mxu0
    %v5486 = vadd.f32 %v5473, %v5485
    %v5487 = vpop.f32.mrf.mxu0
    %5488 = vdwg.mxu0
    %5489 = vmatpush.bf16.msra.mxu0 %v4119
    %5490 = vmatpush.bf16.msra.mxu0 %v4118
    %5491 = vmatpush.bf16.msra.mxu0 %v4117
    %5492 = vmatpush.bf16.msra.mxu0 %v4116
    %5493 = vmatpush.bf16.msra.mxu0 %v4115
    %5494 = vmatpush.bf16.msra.mxu0 %v4114
    %5495 = vmatpush.bf16.msra.mxu0 %v4113
    %5496 = vmatpush.bf16.msra.mxu0 %v4112
    %5497 = vmatmul.bf16.gmra.mxu0 %v265
    %v5498 = vpop.f32.mrf.mxu0
    %v5499 = vadd.f32 %v5486, %v5498
    %v5500 = vpop.f32.mrf.mxu0
    %5501 = vdwg.mxu0
    %5502 = vmatpush.bf16.msra.mxu0 %v4127
    %5503 = vmatpush.bf16.msra.mxu0 %v4126
    %5504 = vmatpush.bf16.msra.mxu0 %v4125
    %5505 = vmatpush.bf16.msra.mxu0 %v4124
    %5506 = vmatpush.bf16.msra.mxu0 %v4123
    %5507 = vmatpush.bf16.msra.mxu0 %v4122
    %5508 = vmatpush.bf16.msra.mxu0 %v4121
    %5509 = vmatpush.bf16.msra.mxu0 %v4120
    %5510 = vmatmul.bf16.gmra.mxu0 %v266
    %v5511 = vpop.f32.mrf.mxu0
    %v5512 = vadd.f32 %v5499, %v5511
    %v5513 = vpop.f32.mrf.mxu0
    %5514 = vdwg.mxu0
    %5515 = vmatpush.bf16.msra.mxu0 %v4135
    %5516 = vmatpush.bf16.msra.mxu0 %v4134
    %5517 = vmatpush.bf16.msra.mxu0 %v4133
    %5518 = vmatpush.bf16.msra.mxu0 %v4132
    %5519 = vmatpush.bf16.msra.mxu0 %v4131
    %5520 = vmatpush.bf16.msra.mxu0 %v4130
    %5521 = vmatpush.bf16.msra.mxu0 %v4129
    %5522 = vmatpush.bf16.msra.mxu0 %v4128
    %5523 = vmatmul.bf16.gmra.mxu0 %v267
    %v5524 = vpop.f32.mrf.mxu0
    %v5525 = vadd.f32 %v5512, %v5524
    %v5526 = vpop.f32.mrf.mxu0
    %5527 = vdwg.mxu0
    %5528 = vmatpush.bf16.msra.mxu0 %v4143
    %5529 = vmatpush.bf16.msra.mxu0 %v4142
    %5530 = vmatpush.bf16.msra.mxu0 %v4141
    %5531 = vmatpush.bf16.msra.mxu0 %v4140
    %5532 = vmatpush.bf16.msra.mxu0 %v4139
    %5533 = vmatpush.bf16.msra.mxu0 %v4138
    %5534 = vmatpush.bf16.msra.mxu0 %v4137
    %5535 = vmatpush.bf16.msra.mxu0 %v4136
    %5536 = vmatmul.bf16.gmra.mxu0 %v268
    %v5537 = vpop.f32.mrf.mxu0
    %v5538 = vadd.f32 %v5525, %v5537
    %v5539 = vpop.f32.mrf.mxu0
    %5540 = vdwg.mxu0
    %5541 = vmatpush.bf16.msra.mxu0 %v4151
    %5542 = vmatpush.bf16.msra.mxu0 %v4150
    %5543 = vmatpush.bf16.msra.mxu0 %v4149
    %5544 = vmatpush.bf16.msra.mxu0 %v4148
    %5545 = vmatpush.bf16.msra.mxu0 %v4147
    %5546 = vmatpush.bf16.msra.mxu0 %v4146
    %5547 = vmatpush.bf16.msra.mxu0 %v4145
    %5548 = vmatpush.bf16.msra.mxu0 %v4144
    %5549 = vmatmul.bf16.gmra.mxu0 %v269
    %v5550 = vpop.f32.mrf.mxu0
    %v5551 = vadd.f32 %v5538, %v5550
    %v5552 = vpop.f32.mrf.mxu0
    %5553 = vdwg.mxu0
    %5554 = vmatpush.bf16.msra.mxu0 %v4159
    %5555 = vmatpush.bf16.msra.mxu0 %v4158
    %5556 = vmatpush.bf16.msra.mxu0 %v4157
    %5557 = vmatpush.bf16.msra.mxu0 %v4156
    %5558 = vmatpush.bf16.msra.mxu0 %v4155
    %5559 = vmatpush.bf16.msra.mxu0 %v4154
    %5560 = vmatpush.bf16.msra.mxu0 %v4153
    %5561 = vmatpush.bf16.msra.mxu0 %v4152
    %5562 = vmatmul.bf16.gmra.mxu0 %v270
    %v5563 = vpop.f32.mrf.mxu0
    %v5564 = vadd.f32 %v5551, %v5563
    %v5565 = vpop.f32.mrf.mxu0
    %5566 = vdwg.mxu0
    %5567 = vmatpush.bf16.msra.mxu0 %v4167
    %5568 = vmatpush.bf16.msra.mxu0 %v4166
    %5569 = vmatpush.bf16.msra.mxu0 %v4165
    %5570 = vmatpush.bf16.msra.mxu0 %v4164
    %5571 = vmatpush.bf16.msra.mxu0 %v4163
    %5572 = vmatpush.bf16.msra.mxu0 %v4162
    %5573 = vmatpush.bf16.msra.mxu0 %v4161
    %5574 = vmatpush.bf16.msra.mxu0 %v4160
    %5575 = vmatmul.bf16.gmra.mxu0 %v271
    %v5576 = vpop.f32.mrf.mxu0
    %v5577 = vadd.f32 %v5564, %v5576
    %v5578 = vpop.f32.mrf.mxu0
    %5579 = vdwg.mxu0
    %5580 = vmatpush.bf16.msra.mxu0 %v4175
    %5581 = vmatpush.bf16.msra.mxu0 %v4174
    %5582 = vmatpush.bf16.msra.mxu0 %v4173
    %5583 = vmatpush.bf16.msra.mxu0 %v4172
    %5584 = vmatpush.bf16.msra.mxu0 %v4171
    %5585 = vmatpush.bf16.msra.mxu0 %v4170
    %5586 = vmatpush.bf16.msra.mxu0 %v4169
    %5587 = vmatpush.bf16.msra.mxu0 %v4168
    %5588 = vmatmul.bf16.gmra.mxu0 %v272
    %v5589 = vpop.f32.mrf.mxu0
    %v5590 = vadd.f32 %v5577, %v5589
    %v5591 = vpop.f32.mrf.mxu0
    %5592 = vdwg.mxu0
    %5593 = vmatpush.bf16.msra.mxu0 %v4183
    %5594 = vmatpush.bf16.msra.mxu0 %v4182
    %5595 = vmatpush.bf16.msra.mxu0 %v4181
    %5596 = vmatpush.bf16.msra.mxu0 %v4180
    %5597 = vmatpush.bf16.msra.mxu0 %v4179
    %5598 = vmatpush.bf16.msra.mxu0 %v4178
    %5599 = vmatpush.bf16.msra.mxu0 %v4177
    %5600 = vmatpush.bf16.msra.mxu0 %v4176
    %5601 = vmatmul.bf16.gmra.mxu0 %v273
    %v5602 = vpop.f32.mrf.mxu0
    %v5603 = vadd.f32 %v5590, %v5602
    %v5604 = vpop.f32.mrf.mxu0
    %5605 = vdwg.mxu0
    %5606 = vmatpush.bf16.msra.mxu0 %v4191
    %5607 = vmatpush.bf16.msra.mxu0 %v4190
    %5608 = vmatpush.bf16.msra.mxu0 %v4189
    %5609 = vmatpush.bf16.msra.mxu0 %v4188
    %5610 = vmatpush.bf16.msra.mxu0 %v4187
    %5611 = vmatpush.bf16.msra.mxu0 %v4186
    %5612 = vmatpush.bf16.msra.mxu0 %v4185
    %5613 = vmatpush.bf16.msra.mxu0 %v4184
    %5614 = vmatmul.bf16.gmra.mxu0 %v274
    %v5615 = vpop.f32.mrf.mxu0
    %v5616 = vadd.f32 %v5603, %v5615
    %v5617 = vpop.f32.mrf.mxu0
    %5618 = vdwg.mxu0
    %5619 = vmatpush.bf16.msra.mxu0 %v4199
    %5620 = vmatpush.bf16.msra.mxu0 %v4198
    %5621 = vmatpush.bf16.msra.mxu0 %v4197
    %5622 = vmatpush.bf16.msra.mxu0 %v4196
    %5623 = vmatpush.bf16.msra.mxu0 %v4195
    %5624 = vmatpush.bf16.msra.mxu0 %v4194
    %5625 = vmatpush.bf16.msra.mxu0 %v4193
    %5626 = vmatpush.bf16.msra.mxu0 %v4192
    %5627 = vmatmul.bf16.gmra.mxu0 %v275
    %v5628 = vpop.f32.mrf.mxu0
    %v5629 = vadd.f32 %v5616, %v5628
    %v5630 = vpop.f32.mrf.mxu0
    %5631 = vdwg.mxu0
    %5632 = vmatpush.bf16.msra.mxu0 %v4207
    %5633 = vmatpush.bf16.msra.mxu0 %v4206
    %5634 = vmatpush.bf16.msra.mxu0 %v4205
    %5635 = vmatpush.bf16.msra.mxu0 %v4204
    %5636 = vmatpush.bf16.msra.mxu0 %v4203
    %5637 = vmatpush.bf16.msra.mxu0 %v4202
    %5638 = vmatpush.bf16.msra.mxu0 %v4201
    %5639 = vmatpush.bf16.msra.mxu0 %v4200
    %5640 = vmatmul.bf16.gmra.mxu0 %v276
    %v5641 = vpop.f32.mrf.mxu0
    %v5642 = vadd.f32 %v5629, %v5641
    %v5643 = vpop.f32.mrf.mxu0
    %5644 = vdwg.mxu0
    %5645 = vmatpush.bf16.msra.mxu0 %v4215
    %5646 = vmatpush.bf16.msra.mxu0 %v4214
    %5647 = vmatpush.bf16.msra.mxu0 %v4213
    %5648 = vmatpush.bf16.msra.mxu0 %v4212
    %5649 = vmatpush.bf16.msra.mxu0 %v4211
    %5650 = vmatpush.bf16.msra.mxu0 %v4210
    %5651 = vmatpush.bf16.msra.mxu0 %v4209
    %5652 = vmatpush.bf16.msra.mxu0 %v4208
    %5653 = vmatmul.bf16.gmra.mxu0 %v277
    %v5654 = vpop.f32.mrf.mxu0
    %v5655 = vadd.f32 %v5642, %v5654
    %v5656 = vpop.f32.mrf.mxu0
    %5657 = vdwg.mxu0
    %5658 = vmatpush.bf16.msra.mxu0 %v4223
    %5659 = vmatpush.bf16.msra.mxu0 %v4222
    %5660 = vmatpush.bf16.msra.mxu0 %v4221
    %5661 = vmatpush.bf16.msra.mxu0 %v4220
    %5662 = vmatpush.bf16.msra.mxu0 %v4219
    %5663 = vmatpush.bf16.msra.mxu0 %v4218
    %5664 = vmatpush.bf16.msra.mxu0 %v4217
    %5665 = vmatpush.bf16.msra.mxu0 %v4216
    %5666 = vmatmul.bf16.gmra.mxu0 %v278
    %v5667 = vpop.f32.mrf.mxu0
    %v5668 = vadd.f32 %v5655, %v5667
    %v5669 = vpop.f32.mrf.mxu0
    %5670 = vdwg.mxu0
    %5671 = vmatpush.bf16.msra.mxu0 %v4231
    %5672 = vmatpush.bf16.msra.mxu0 %v4230
    %5673 = vmatpush.bf16.msra.mxu0 %v4229
    %5674 = vmatpush.bf16.msra.mxu0 %v4228
    %5675 = vmatpush.bf16.msra.mxu0 %v4227
    %5676 = vmatpush.bf16.msra.mxu0 %v4226
    %5677 = vmatpush.bf16.msra.mxu0 %v4225
    %5678 = vmatpush.bf16.msra.mxu0 %v4224
    %5679 = vmatmul.bf16.gmra.mxu0 %v279
    %v5680 = vpop.f32.mrf.mxu0
    %v5681 = vadd.f32 %v5668, %v5680
    %v5682 = vpop.f32.mrf.mxu0
    %5683 = vdwg.mxu0
    %5684 = vmatpush.bf16.msra.mxu0 %v4239
    %5685 = vmatpush.bf16.msra.mxu0 %v4238
    %5686 = vmatpush.bf16.msra.mxu0 %v4237
    %5687 = vmatpush.bf16.msra.mxu0 %v4236
    %5688 = vmatpush.bf16.msra.mxu0 %v4235
    %5689 = vmatpush.bf16.msra.mxu0 %v4234
    %5690 = vmatpush.bf16.msra.mxu0 %v4233
    %5691 = vmatpush.bf16.msra.mxu0 %v4232
    %5692 = vmatmul.bf16.gmra.mxu0 %v280
    %v5693 = vpop.f32.mrf.mxu0
    %v5694 = vadd.f32 %v5681, %v5693
    %v5695 = vpop.f32.mrf.mxu0
    %5696 = vdwg.mxu0
    %5697 = vmatpush.bf16.msra.mxu0 %v4247
    %5698 = vmatpush.bf16.msra.mxu0 %v4246
    %5699 = vmatpush.bf16.msra.mxu0 %v4245
    %5700 = vmatpush.bf16.msra.mxu0 %v4244
    %5701 = vmatpush.bf16.msra.mxu0 %v4243
    %5702 = vmatpush.bf16.msra.mxu0 %v4242
    %5703 = vmatpush.bf16.msra.mxu0 %v4241
    %5704 = vmatpush.bf16.msra.mxu0 %v4240
    %5705 = vmatmul.bf16.gmra.mxu0 %v281
    %v5706 = vpop.f32.mrf.mxu0
    %v5707 = vadd.f32 %v5694, %v5706
    %v5708 = vpop.f32.mrf.mxu0
    %5709 = vdwg.mxu0
    %5710 = vmatpush.bf16.msra.mxu0 %v4255
    %5711 = vmatpush.bf16.msra.mxu0 %v4254
    %5712 = vmatpush.bf16.msra.mxu0 %v4253
    %5713 = vmatpush.bf16.msra.mxu0 %v4252
    %5714 = vmatpush.bf16.msra.mxu0 %v4251
    %5715 = vmatpush.bf16.msra.mxu0 %v4250
    %5716 = vmatpush.bf16.msra.mxu0 %v4249
    %5717 = vmatpush.bf16.msra.mxu0 %v4248
    %5718 = vmatmul.bf16.gmra.mxu0 %v282
    %v5719 = vpop.f32.mrf.mxu0
    %v5720 = vadd.f32 %v5707, %v5719
    %v5721 = vpop.f32.mrf.mxu0
    %5722 = vdwg.mxu0
    %5723 = vmatpush.bf16.msra.mxu0 %v4263
    %5724 = vmatpush.bf16.msra.mxu0 %v4262
    %5725 = vmatpush.bf16.msra.mxu0 %v4261
    %5726 = vmatpush.bf16.msra.mxu0 %v4260
    %5727 = vmatpush.bf16.msra.mxu0 %v4259
    %5728 = vmatpush.bf16.msra.mxu0 %v4258
    %5729 = vmatpush.bf16.msra.mxu0 %v4257
    %5730 = vmatpush.bf16.msra.mxu0 %v4256
    %5731 = vmatmul.bf16.gmra.mxu0 %v283
    %v5732 = vpop.f32.mrf.mxu0
    %v5733 = vadd.f32 %v5720, %v5732
    %v5734 = vpop.f32.mrf.mxu0
    %5735 = vdwg.mxu0
    %5736 = vmatpush.bf16.msra.mxu0 %v4271
    %5737 = vmatpush.bf16.msra.mxu0 %v4270
    %5738 = vmatpush.bf16.msra.mxu0 %v4269
    %5739 = vmatpush.bf16.msra.mxu0 %v4268
    %5740 = vmatpush.bf16.msra.mxu0 %v4267
    %5741 = vmatpush.bf16.msra.mxu0 %v4266
    %5742 = vmatpush.bf16.msra.mxu0 %v4265
    %5743 = vmatpush.bf16.msra.mxu0 %v4264
    %5744 = vmatmul.bf16.gmra.mxu0 %v284
    %v5745 = vpop.f32.mrf.mxu0
    %v5746 = vadd.f32 %v5733, %v5745
    %v5747 = vpop.f32.mrf.mxu0
    %5748 = vdwg.mxu0
    %5749 = vmatpush.bf16.msra.mxu0 %v4279
    %5750 = vmatpush.bf16.msra.mxu0 %v4278
    %5751 = vmatpush.bf16.msra.mxu0 %v4277
    %5752 = vmatpush.bf16.msra.mxu0 %v4276
    %5753 = vmatpush.bf16.msra.mxu0 %v4275
    %5754 = vmatpush.bf16.msra.mxu0 %v4274
    %5755 = vmatpush.bf16.msra.mxu0 %v4273
    %5756 = vmatpush.bf16.msra.mxu0 %v4272
    %5757 = vmatmul.bf16.gmra.mxu0 %v285
    %v5758 = vpop.f32.mrf.mxu0
    %v5759 = vadd.f32 %v5746, %v5758
    %v5760 = vpop.f32.mrf.mxu0
    %5761 = vdwg.mxu0
    %5762 = vmatpush.bf16.msra.mxu0 %v4287
    %5763 = vmatpush.bf16.msra.mxu0 %v4286
    %5764 = vmatpush.bf16.msra.mxu0 %v4285
    %5765 = vmatpush.bf16.msra.mxu0 %v4284
    %5766 = vmatpush.bf16.msra.mxu0 %v4283
    %5767 = vmatpush.bf16.msra.mxu0 %v4282
    %5768 = vmatpush.bf16.msra.mxu0 %v4281
    %5769 = vmatpush.bf16.msra.mxu0 %v4280
    %5770 = vmatmul.bf16.gmra.mxu0 %v286
    %v5771 = vpop.f32.mrf.mxu0
    %v5772 = vadd.f32 %v5759, %v5771
    %v5773 = vpop.f32.mrf.mxu0
    %5774 = vdwg.mxu0
    %5775 = vmatpush.bf16.msra.mxu0 %v4295
    %5776 = vmatpush.bf16.msra.mxu0 %v4294
    %5777 = vmatpush.bf16.msra.mxu0 %v4293
    %5778 = vmatpush.bf16.msra.mxu0 %v4292
    %5779 = vmatpush.bf16.msra.mxu0 %v4291
    %5780 = vmatpush.bf16.msra.mxu0 %v4290
    %5781 = vmatpush.bf16.msra.mxu0 %v4289
    %5782 = vmatpush.bf16.msra.mxu0 %v4288
    %5783 = vmatmul.bf16.gmra.mxu0 %v287
    %v5784 = vpop.f32.mrf.mxu0
    %v5785 = vadd.f32 %v5772, %v5784
    %v5786 = vpop.f32.mrf.mxu0
    %5787 = vdwg.mxu0
    %5788 = vmatpush.bf16.msra.mxu0 %v4303
    %5789 = vmatpush.bf16.msra.mxu0 %v4302
    %5790 = vmatpush.bf16.msra.mxu0 %v4301
    %5791 = vmatpush.bf16.msra.mxu0 %v4300
    %5792 = vmatpush.bf16.msra.mxu0 %v4299
    %5793 = vmatpush.bf16.msra.mxu0 %v4298
    %5794 = vmatpush.bf16.msra.mxu0 %v4297
    %5795 = vmatpush.bf16.msra.mxu0 %v4296
    %5796 = vmatmul.bf16.gmra.mxu0 %v288
    %v5797 = vpop.f32.mrf.mxu0
    %v5798 = vadd.f32 %v5785, %v5797
    %v5799 = vpop.f32.mrf.mxu0
    %5800 = vdwg.mxu0
    %5801 = vmatpush.bf16.msra.mxu0 %v4311
    %5802 = vmatpush.bf16.msra.mxu0 %v4310
    %5803 = vmatpush.bf16.msra.mxu0 %v4309
    %5804 = vmatpush.bf16.msra.mxu0 %v4308
    %5805 = vmatpush.bf16.msra.mxu0 %v4307
    %5806 = vmatpush.bf16.msra.mxu0 %v4306
    %5807 = vmatpush.bf16.msra.mxu0 %v4305
    %5808 = vmatpush.bf16.msra.mxu0 %v4304
    %5809 = vmatmul.bf16.gmra.mxu0 %v289
    %v5810 = vpop.f32.mrf.mxu0
    %v5811 = vadd.f32 %v5798, %v5810
    %v5812 = vpop.f32.mrf.mxu0
    %5813 = vdwg.mxu0
    %5814 = vmatpush.bf16.msra.mxu0 %v4319
    %5815 = vmatpush.bf16.msra.mxu0 %v4318
    %5816 = vmatpush.bf16.msra.mxu0 %v4317
    %5817 = vmatpush.bf16.msra.mxu0 %v4316
    %5818 = vmatpush.bf16.msra.mxu0 %v4315
    %5819 = vmatpush.bf16.msra.mxu0 %v4314
    %5820 = vmatpush.bf16.msra.mxu0 %v4313
    %5821 = vmatpush.bf16.msra.mxu0 %v4312
    %5822 = vmatmul.bf16.gmra.mxu0 %v290
    %v5823 = vpop.f32.mrf.mxu0
    %v5824 = vadd.f32 %v5811, %v5823
    %v5825 = vpop.f32.mrf.mxu0
    %5826 = vdwg.mxu0
    %5827 = vmatpush.bf16.msra.mxu0 %v4327
    %5828 = vmatpush.bf16.msra.mxu0 %v4326
    %5829 = vmatpush.bf16.msra.mxu0 %v4325
    %5830 = vmatpush.bf16.msra.mxu0 %v4324
    %5831 = vmatpush.bf16.msra.mxu0 %v4323
    %5832 = vmatpush.bf16.msra.mxu0 %v4322
    %5833 = vmatpush.bf16.msra.mxu0 %v4321
    %5834 = vmatpush.bf16.msra.mxu0 %v4320
    %5835 = vmatmul.bf16.gmra.mxu0 %v291
    %v5836 = vpop.f32.mrf.mxu0
    %v5837 = vadd.f32 %v5824, %v5836
    %v5838 = vpop.f32.mrf.mxu0
    %5839 = vdwg.mxu0
    %v5840 = vmax.f32 %v5837, 0.0
    %v5841 = vld [vmem:[%s3] sm:$0xff]
    %v5842 = vld [vmem:[%s3 + $0x8] sm:$0xff]
    %v5843 = vld [vmem:[%s3 + $0x10] sm:$0xff]
    %v5844 = vld [vmem:[%s3 + $0x18] sm:$0xff]
    %v5845 = vld [vmem:[%s3 + $0x20] sm:$0xff]
    %v5846 = vld [vmem:[%s3 + $0x28] sm:$0xff]
    %v5847 = vld [vmem:[%s3 + $0x30] sm:$0xff]
    %v5848 = vld [vmem:[%s3 + $0x38] sm:$0xff]
    %v5849 = vld [vmem:[%s3 + $0x40] sm:$0xff]
    %v5850 = vld [vmem:[%s3 + $0x48] sm:$0xff]
    %v5851 = vld [vmem:[%s3 + $0x50] sm:$0xff]
    %v5852 = vld [vmem:[%s3 + $0x58] sm:$0xff]
    %v5853 = vld [vmem:[%s3 + $0x60] sm:$0xff]
    %v5854 = vld [vmem:[%s3 + $0x68] sm:$0xff]
    %v5855 = vld [vmem:[%s3 + $0x70] sm:$0xff]
    %v5856 = vld [vmem:[%s3 + $0x78] sm:$0xff]
    %v5857 = vld [vmem:[%s4] sm:$0x1]
    %v5859 = vperm.slane %v5857, 0
    %5861 = vmatpush.msra.mxu0 %v5856
    %5862 = vmatpush.msra.mxu0 %v5855
    %5863 = vmatpush.msra.mxu0 %v5854
    %5864 = vmatpush.msra.mxu0 %v5853
    %5865 = vmatpush.msra.mxu0 %v5852
    %5866 = vmatpush.msra.mxu0 %v5851
    %5867 = vmatpush.msra.mxu0 %v5850
    %5868 = vmatpush.msra.mxu0 %v5849
    %5869 = vmatpush.msra.mxu0 %v5848
    %5870 = vmatpush.msra.mxu0 %v5847
    %5871 = vmatpush.msra.mxu0 %v5846
    %5872 = vmatpush.msra.mxu0 %v5845
    %5873 = vmatpush.msra.mxu0 %v5844
    %5874 = vmatpush.msra.mxu0 %v5843
    %5875 = vmatpush.msra.mxu0 %v5842
    %5876 = vmatpush.msra.mxu0 %v5841
    %5877 = vmatmul.f32.gmra.mxu0 %v5840
    %v5878 = vpop.f32.mrf.mxu0
    %v5879 = vadd.f32 %v5859, %v5878
    %5880 = vdwg.mxu0
    %vm5881 = vcmask 74752
    %5882 = vst.msk [vmem:[#allocation2] sm:$0x3] %vm5881, %v5879
    // Predicated region
    $region22: #{net_forward.3} parent=1 // pred_check
      _
    $region23: #{net_forward.3} parent=1 // pred_check_branch
      %5884 = sbr.rel (0) target = $region25
    $region24: #{net_forward.3} parent=1 // pred_region
      %5886 = vsyncadd [#allocation3], 0
      %s5888 = sshll.u32 [#allocation2], 4
      %s5889 = int_to_ptr.vmem [resolvable:$true] %s5888
      %s5890 = sshll.u32 %s5, 4
      %s5891 = int_to_ptr.hbm [resolvable:$true] %s5890
      %5893 = dma.vmem_to_hbm [thread:$0]  %s5889, 32, %s5891, [#allocation3]
    $region25: #{net_forward.3} parent=1 // pred_fallthru
      _
    // Predicated region
    $region26: #{net_forward.3} parent=1 // pred_check
      _
    $region27: #{net_forward.3} parent=1 // pred_check_branch
      %5895 = sbr.rel (0) target = $region29
    $region28: #{net_forward.3} parent=1 // pred_region
      %5897 = dma.done [#allocation3], 32
    $region29: #{net_forward.3} parent=1 // pred_fallthru
      _
    %5898 = vsyncpa [#allocation3], 1

</llo_original>
